<compile_context>
chip_gen: v7x
topology: tpu7x:2x2x1
jax: 0.10.0
libtpu: 0.0.40
codegen_flags: <defaults>
</compile_context>

<pallas_src>
import numpy as np
import jax
import jax.numpy as jnp
from jax.experimental import pallas as pl
from jax.experimental.pallas import tpu as pltpu

EPS = 1e-5


# ---------------------------------------------------------------------------
# Bilinear interpolation matrices (align_corners=True), built with numpy.
# ---------------------------------------------------------------------------
def bilinear_matrix(n_in: int, n_out: int) -> np.ndarray:
    i = np.arange(n_out)
    src = i * (n_in - 1) / (n_out - 1) if n_out > 1 else np.zeros(n_out)
    lo = np.clip(np.floor(src).astype(np.int64), 0, n_in - 1)
    hi = np.minimum(lo + 1, n_in - 1)
    w = (src - lo).astype(np.float32)
    M = np.zeros((n_out, n_in), np.float32)
    M[np.arange(n_out), lo] += 1.0 - w
    M[np.arange(n_out), hi] += w
    return M


# ---------------------------------------------------------------------------
# Kernel 1: bilinear upsample x2 as two MXU matmuls on lane-dense slabs
# ---------------------------------------------------------------------------
def _upsample_kernel(x_ref, uh_ref, kw_ref, o_ref):
    # x_ref: (1, H, W*C)   uh: (H2, H)   kw: (W*C, W2*C)   o: (1, H2, W2*C)
    a = jnp.dot(uh_ref[...], x_ref[0].astype(jnp.float32),
                preferred_element_type=jnp.float32)            # (H2, W*C)  MXU
    o_ref[0] = jnp.dot(a, kw_ref[...],
                       preferred_element_type=jnp.float32).astype(o_ref.dtype)


def upsample_bilinear_x2(x_nhwc):
    N, H, W, C = x_nhwc.shape
    H2, W2 = 2 * H, 2 * W
    uh = jnp.asarray(bilinear_matrix(H, H2))
    # W-interp folded with a channel identity so the kernel stays a plain 2-D matmul
    # with a lane-dense (W2*C) output; see TODO(synk) above for large C.
    kw = jnp.asarray(np.kron(bilinear_matrix(W, W2),
                             np.eye(C, dtype=np.float32)).T)   # (W*C, W2*C)
    x2d = x_nhwc.reshape(N, H, W * C)
    out = pl.pallas_call(
        _upsample_kernel,
        out_shape=jax.ShapeDtypeStruct((N, H2, W2 * C), x_nhwc.dtype),
        grid=(N,),
        in_specs=[
            pl.BlockSpec((1, H, W * C), lambda n: (n, 0, 0)),
            pl.BlockSpec((H2, H), lambda n: (0, 0)),
            pl.BlockSpec((W * C, W2 * C), lambda n: (0, 0)),
        ],
        out_specs=pl.BlockSpec((1, H2, W2 * C), lambda n: (n, 0, 0)),
        compiler_params=pltpu.CompilerParams(dimension_semantics=("parallel",)),
        cost_estimate=pl.CostEstimate(
            flops=int(2 * N * (H2 * H * W * C + H2 * (W * C) * (W2 * C))),
            transcendentals=0,
            bytes_accessed=int(4 * N * (H * W * C + H2 * W2 * C))),
    )(x2d, uh, kw)
    return out.reshape(N, H2, W2, C)


# ---------------------------------------------------------------------------
# Kernel 2: conv1 (fused channel-concat) + bias, tiled over (N, H-tiles).
#           Emits pre-BN activations + per-tile per-channel sum / sumsq partials.
# ---------------------------------------------------------------------------
def _make_conv1_kernel(TH, W2, Cu, Cs, Co):
    def kernel(uc_ref, up_ref, un_ref, skc_ref, skp_ref, skn_ref,
               wu_ref, ws_ref, b_ref, y_ref, st_ref, xu_sc, xs_sc):
        f32 = jnp.float32
        t = pl.program_id(1)
        nt = pl.num_programs(1)

        def assemble(dst, c_ref, p_ref, n_ref):
            # zero-padded (TH+2, W2+2, C) tile built entirely in VMEM scratch
            dst[...] = jnp.zeros(dst.shape, f32)
            dst[1:TH + 1, 1:W2 + 1, :] = c_ref[0].astype(f32)
            dst[0:1, 1:W2 + 1, :] = jnp.where(t > 0, p_ref[0].astype(f32), 0.0)
            dst[TH + 1:TH + 2, 1:W2 + 1, :] = jnp.where(
                t < nt - 1, n_ref[0].astype(f32), 0.0)

        assemble(xu_sc, uc_ref, up_ref, un_ref)
        assemble(xs_sc, skc_ref, skp_ref, skn_ref)

        wu = wu_ref[...]                       # (9, Cu, Co)
        ws = ws_ref[...]                       # (9, Cs, Co)
        acc = jnp.zeros((TH * W2, Co), f32)
        for kh in range(3):
            for kw in range(3):
                k = kh * 3 + kw
                pu = xu_sc[kh:kh + TH, kw:kw + W2, :].reshape(TH * W2, Cu)
                ps = xs_sc[kh:kh + TH, kw:kw + W2, :].reshape(TH * W2, Cs)
                acc = acc + jnp.dot(pu, wu[k], preferred_element_type=f32)   # MXU
                acc = acc + jnp.dot(ps, ws[k], preferred_element_type=f32)   # MXU
        y = acc + b_ref[...]                   # (TH*W2, Co)

        st_ref[0, 0, 0:1, :] = jnp.sum(y, axis=0, keepdims=True)
        st_ref[0, 0, 1:2, :] = jnp.sum(y * y, axis=0, keepdims=True)
        y_ref[0] = y.reshape(TH, W2, Co).astype(y_ref.dtype)
    return kernel


# ---------------------------------------------------------------------------
# Kernel 3: conv2 with BN1+ReLU1 fused into its input path (pre-BN y1 never
#           round-trips HBM in normalized form).
# ---------------------------------------------------------------------------
def _make_conv2_kernel(TH, W2, Ci, Co):
    def kernel(yc_ref, yp_ref, yn_ref, scale_ref, shift_ref, w_ref, b_ref,
               y_ref, st_ref, x_sc):
        f32 = jnp.float32
        t = pl.program_id(1)
        nt = pl.num_programs(1)
        scale = scale_ref[...]                 # (1, Ci)
        shift = shift_ref[...]

        def norm(v):                           # fused BN1 + ReLU1
            return jnp.maximum(v.astype(f32) * scale + shift, 0.0)

        x_sc[...] = jnp.zeros(x_sc.shape, f32)
        x_sc[1:TH + 1, 1:W2 + 1, :] = norm(yc_ref[0])
        x_sc[0:1, 1:W2 + 1, :] = jnp.where(t > 0, norm(yp_ref[0]), 0.0)
        x_sc[TH + 1:TH + 2, 1:W2 + 1, :] = jnp.where(
            t < nt - 1, norm(yn_ref[0]), 0.0)

        w = w_ref[...]                         # (9, Ci, Co)
        acc = jnp.zeros((TH * W2, Co), f32)
        for kh in range(3):
            for kw in range(3):
                p = x_sc[kh:kh + TH, kw:kw + W2, :].reshape(TH * W2, Ci)
                acc = acc + jnp.dot(p, w[kh * 3 + kw],
                                    preferred_element_type=f32)              # MXU
        y = acc + b_ref[...]
        st_ref[0, 0, 0:1, :] = jnp.sum(y, axis=0, keepdims=True)
        st_ref[0, 0, 1:2, :] = jnp.sum(y * y, axis=0, keepdims=True)
        y_ref[0] = y.reshape(TH, W2, Co).astype(y_ref.dtype)
    return kernel


# ---------------------------------------------------------------------------
# Kernel 4: final BN2 + ReLU2, elementwise on a lane-dense (N, H2, W2*C) slab
# ---------------------------------------------------------------------------
def _bn_relu_kernel(x_ref, scale_ref, shift_ref, o_ref):
    o_ref[...] = jnp.maximum(
        x_ref[...].astype(jnp.float32) * scale_ref[...] + shift_ref[...], 0.0
    ).astype(o_ref.dtype)


# ---------------------------------------------------------------------------
# Wrappers
# ---------------------------------------------------------------------------
def _halo_specs(tile_h, H2, W2, C):
    center = pl.BlockSpec((1, tile_h, W2, C), lambda n, t: (n, t, 0, 0))
    prev = pl.BlockSpec((1, 1, W2, C),
                        lambda n, t: (n, jnp.maximum(t * tile_h - 1, 0), 0, 0))
    nxt = pl.BlockSpec((1, 1, W2, C),
                       lambda n, t: (n, jnp.minimum(t * tile_h + tile_h, H2 - 1), 0, 0))
    return center, prev, nxt


def _full_spec(shape):
    return pl.BlockSpec(shape, lambda n, t, _s=len(shape): (0,) * _s)


def conv_pass1(up, skip, w_up, w_sk, bias, tile_h):
    N, H2, W2, Cu = up.shape
    Cs = skip.shape[-1]
    Co = w_up.shape[-1]
    NT = H2 // tile_h
    wu9 = w_up.reshape(9, Cu, Co)
    ws9 = w_sk.reshape(9, Cs, Co)
    b2d = bias.reshape(1, Co)

    uc, up_, un = _halo_specs(tile_h, H2, W2, Cu)
    sc, sp, sn = _halo_specs(tile_h, H2, W2, Cs)

    y, st = pl.pallas_call(
        _make_conv1_kernel(tile_h, W2, Cu, Cs, Co),
        out_shape=(jax.ShapeDtypeStruct((N, H2, W2, Co), jnp.float32),
                   jax.ShapeDtypeStruct((N, NT, 2, Co), jnp.float32)),
        grid=(N, NT),
        in_specs=[uc, up_, un, sc, sp, sn,
                  _full_spec((9, Cu, Co)), _full_spec((9, Cs, Co)),
                  _full_spec((1, Co))],
        out_specs=(pl.BlockSpec((1, tile_h, W2, Co), lambda n, t: (n, t, 0, 0)),
                   pl.BlockSpec((1, 1, 2, Co), lambda n, t: (n, t, 0, 0))),
        scratch_shapes=[pltpu.VMEM((tile_h + 2, W2 + 2, Cu), jnp.float32),
                        pltpu.VMEM((tile_h + 2, W2 + 2, Cs), jnp.float32)],
        compiler_params=pltpu.CompilerParams(
            dimension_semantics=("parallel", "parallel")),
        cost_estimate=pl.CostEstimate(
            flops=int(2 * N * H2 * W2 * 9 * (Cu + Cs) * Co),
            transcendentals=0,
            bytes_accessed=int(4 * N * H2 * W2 * (Cu + Cs + Co))),
    )(up, up, up, skip, skip, skip, wu9, ws9, b2d)
    return y, st


def conv_pass2(y1, scale1, shift1, w, bias, tile_h):
    N, H2, W2, Ci = y1.shape
    Co = w.shape[-1]
    NT = H2 // tile_h
    w9 = w.reshape(9, Ci, Co)
    b2d = bias.reshape(1, Co)
    sc2d = scale1.reshape(1, Ci)
    sh2d = shift1.reshape(1, Ci)

    yc, yp, yn = _halo_specs(tile_h, H2, W2, Ci)

    y, st = pl.pallas_call(
        _make_conv2_kernel(tile_h, W2, Ci, Co),
        out_shape=(jax.ShapeDtypeStruct((N, H2, W2, Co), jnp.float32),
                   jax.ShapeDtypeStruct((N, NT, 2, Co), jnp.float32)),
        grid=(N, NT),
        in_specs=[yc, yp, yn,
                  _full_spec((1, Ci)), _full_spec((1, Ci)),
                  _full_spec((9, Ci, Co)), _full_spec((1, Co))],
        out_specs=(pl.BlockSpec((1, tile_h, W2, Co), lambda n, t: (n, t, 0, 0)),
                   pl.BlockSpec((1, 1, 2, Co), lambda n, t: (n, t, 0, 0))),
        scratch_shapes=[pltpu.VMEM((tile_h + 2, W2 + 2, Ci), jnp.float32)],
        compiler_params=pltpu.CompilerParams(
            dimension_semantics=("parallel", "parallel")),
        cost_estimate=pl.CostEstimate(
            flops=int(2 * N * H2 * W2 * 9 * Ci * Co),
            transcendentals=0,
            bytes_accessed=int(4 * N * H2 * W2 * (Ci + Co))),
    )(y1, y1, y1, sc2d, sh2d, w9, b2d)
    return y, st


def bn_relu(y, scale, shift, tile_h):
    N, H2, W2, C = y.shape
    NT = H2 // tile_h
    x = y.reshape(N, H2, W2 * C)                       # free in HBM (NHWC contiguous)
    sc = jnp.tile(scale, W2).reshape(1, W2 * C)
    sh = jnp.tile(shift, W2).reshape(1, W2 * C)
    out = pl.pallas_call(
        _bn_relu_kernel,
        out_shape=jax.ShapeDtypeStruct((N, H2, W2 * C), y.dtype),
        grid=(N, NT),
        in_specs=[pl.BlockSpec((1, tile_h, W2 * C), lambda n, t: (n, t, 0)),
                  pl.BlockSpec((1, W2 * C), lambda n, t: (0, 0)),
                  pl.BlockSpec((1, W2 * C), lambda n, t: (0, 0))],
        out_specs=pl.BlockSpec((1, tile_h, W2 * C), lambda n, t: (n, t, 0)),
        compiler_params=pltpu.CompilerParams(
            dimension_semantics=("parallel", "parallel")),
    )(x, sc, sh)
    return out.reshape(N, H2, W2, C)


def finalize_bn(partials, gamma, beta, count):
    # partials: (N, NT, 2, C) -> global training-mode BN stats (biased variance)
    s = jnp.sum(partials[:, :, 0, :], axis=(0, 1))
    ss = jnp.sum(partials[:, :, 1, :], axis=(0, 1))
    mean = s / count
    var = ss / count - mean * mean
    scale = gamma * jax.lax.rsqrt(var + EPS)
    shift = beta - mean * scale
    return scale, shift


# ---------------------------------------------------------------------------
# Up.forward (external interface NCHW, like PyTorch)
# ---------------------------------------------------------------------------
def up_forward(X, skip, params):
    x = jnp.transpose(X, (0, 2, 3, 1))                 # -> NHWC
    sk = jnp.transpose(skip, (0, 2, 3, 1))
    N, H, W, Cin = x.shape
    H2, W2 = 2 * H, 2 * W
    assert sk.shape[1] == H2 and sk.shape[2] == W2

    # H-tile: at toy sizes 8 rows; at production sizes pick the largest multiple
    # of 8 whose double-buffered tiles fit ~half the scoped VMEM (halve on v7x).
    tile_h = 8 if (H2 % 8 == 0) else H2
    assert H2 % tile_h == 0

    up = upsample_bilinear_x2(x)                       # (N, H2, W2, Cin)

    w1 = params["w1"]                                  # (3,3,Cin+Cskip,Co)
    w1_up, w1_sk = w1[:, :, :Cin, :], w1[:, :, Cin:, :]
    y1, st1 = conv_pass1(up, sk, w1_up, w1_sk, params["b1"], tile_h)
    sc1, sh1 = finalize_bn(st1, params["g1"], params["be1"], N * H2 * W2)

    y2, st2 = conv_pass2(y1, sc1, sh1, params["w2"], params["b2"], tile_h)
    sc2, sh2 = finalize_bn(st2, params["g2"], params["be2"], N * H2 * W2)

    out = bn_relu(y2, sc2, sh2, tile_h)
    return jnp.transpose(out, (0, 3, 1, 2))            # back to NCHW


# ---------------------------------------------------------------------------
# Pure-JAX reference (numerical sanity check)
# ---------------------------------------------------------------------------
def ref_forward(X, skip, params):
    x = jnp.transpose(X, (0, 2, 3, 1))
    sk = jnp.transpose(skip, (0, 2, 3, 1))
    N, H, W, _ = x.shape
    uh = jnp.asarray(bilinear_matrix(H, 2 * H))
    uw = jnp.asarray(bilinear_matrix(W, 2 * W))
    hi = jax.lax.Precision.HIGHEST
    up = jnp.einsum("ph,nhwc->npwc", uh, x, precision=hi)
    up = jnp.einsum("qw,npwc->npqc", uw, up, precision=hi)
    cat = jnp.concatenate([up, sk], axis=-1)

    def cbr(z, w, b, g, be):
        y = jax.lax.conv_general_dilated(
            z, w, (1, 1), "SAME",
            dimension_numbers=("NHWC", "HWIO", "NHWC"), precision=hi) + b
        mean = jnp.mean(y, axis=(0, 1, 2))
        var = jnp.mean((y - mean) ** 2, axis=(0, 1, 2))
        y = (y - mean) / jnp.sqrt(var + EPS) * g + be
        return jnp.maximum(y, 0.0)

    h = cbr(cat, params["w1"], params["b1"], params["g1"], params["be1"])
    h = cbr(h, params["w2"], params["b2"], params["g2"], params["be2"])
    return jnp.transpose(h, (0, 3, 1, 2))


if __name__ == "__main__":
    N, Cin, Cskip, Cout = 2, 4, 4, 8
    H = W = 8  # X spatial; skip is 2x spatial

    key = jax.random.PRNGKey(0)
    kX, kS, kw1, kb1, kw2, kb2 = jax.random.split(key, 6)
    X = jax.random.normal(kX, (N, Cin, H, W), jnp.float32)
    skip = jax.random.normal(kS, (N, Cskip, 2 * H, 2 * W), jnp.float32)

    Ccat = Cin + Cskip
    bnd1 = 1.0 / np.sqrt(Ccat * 9)
    w1 = jax.random.uniform(kw1, (3, 3, Ccat, Cout), jnp.float32, -bnd1, bnd1)
    b1 = jax.random.uniform(kb1, (Cout,), jnp.float32, -bnd1, bnd1)
    bnd2 = 1.0 / np.sqrt(Cout * 9)
    w2 = jax.random.uniform(kw2, (3, 3, Cout, Cout), jnp.float32, -bnd2, bnd2)
    b2 = jax.random.uniform(kb2, (Cout,), jnp.float32, -bnd2, bnd2)
    params = dict(
        w1=w1, b1=b1, g1=jnp.ones((Cout,), jnp.float32), be1=jnp.zeros((Cout,), jnp.float32),
        w2=w2, b2=b2, g2=jnp.ones((Cout,), jnp.float32), be2=jnp.zeros((Cout,), jnp.float32),
    )

    up_fn = jax.jit(up_forward)
    out = jax.block_until_ready(up_fn(X, skip, params))
    assert out.shape == (N, Cout, 2 * H, 2 * W), out.shape

    ref = jax.block_until_ready(ref_forward(X, skip, params))
    max_err = float(jnp.max(jnp.abs(out - ref)))
    # MXU default-precision matmuls vs HIGHEST-precision reference -> small tolerance.
    assert np.isfinite(max_err) and max_err < 2e-2, f"max abs err {max_err}"

    print("KERNEL_OK")
</pallas_src>

<mosaic_0001>
module attributes {stable_mosaic.version = 11 : i64} {
  func.func @_upsample_kernel(%arg0: i32, %arg1: memref<1x8x32xf32, #tpu.memory_space<vmem>>, %arg2: memref<16x8xf32, #tpu.memory_space<vmem>>, %arg3: memref<32x64xf32, #tpu.memory_space<vmem>>, %arg4: memref<1x16x64xf32, #tpu.memory_space<vmem>>) attributes {dimension_semantics = [#tpu.dimension_semantics<parallel>], iteration_bounds = array<i64: 2>, scalar_prefetch = 0 : i64, scratch_operands = 0 : i64, tpu.core_type = #tpu.core_type<tc>, window_params = [{transform_indices = @transform_0, window_bounds = array<i64: 1, 8, 32>}, {pipeline_mode = #tpu.pipeline_mode<synchronous>, transform_indices = @transform_1, window_bounds = array<i64: 16, 8>}, {pipeline_mode = #tpu.pipeline_mode<synchronous>, transform_indices = @transform_2, window_bounds = array<i64: 32, 64>}, {transform_indices = @transform_3, window_bounds = array<i64: 1, 16, 64>}]} {
    %c0 = arith.constant 0 : index
    %c0_0 = arith.constant 0 : index
    %0 = vector.load %arg2[%c0, %c0_0] : memref<16x8xf32, #tpu.memory_space<vmem>>, vector<16x8xf32>
    %c0_1 = arith.constant 0 : index
    %c0_2 = arith.constant 0 : index
    %c0_3 = arith.constant 0 : index
    %1 = vector.load %arg1[%c0_1, %c0_2, %c0_3] : memref<1x8x32xf32, #tpu.memory_space<vmem>>, vector<1x8x32xf32>
    %2 = vector.shape_cast %1 : vector<1x8x32xf32> to vector<8x32xf32>
    %cst = arith.constant dense<0.000000e+00> : vector<16x32xf32>
    %3 = tpu.matmul %0, %2, %cst {dimension_numbers = #tpu.dot_dimension_numbers<[1], [0], [0], [1], [0, 0, 1, 1], [], []>} : vector<16x8xf32>, vector<8x32xf32>, vector<16x32xf32> -> vector<16x32xf32>
    %c0_4 = arith.constant 0 : index
    %c0_5 = arith.constant 0 : index
    %4 = vector.load %arg3[%c0_4, %c0_5] : memref<32x64xf32, #tpu.memory_space<vmem>>, vector<32x64xf32>
    %cst_6 = arith.constant dense<0.000000e+00> : vector<16x64xf32>
    %5 = tpu.matmul %3, %4, %cst_6 {dimension_numbers = #tpu.dot_dimension_numbers<[1], [0], [0], [1], [0, 0, 1, 1], [], []>} : vector<16x32xf32>, vector<32x64xf32>, vector<16x64xf32> -> vector<16x64xf32>
    %c0_7 = arith.constant 0 : index
    %c0_8 = arith.constant 0 : index
    %c0_9 = arith.constant 0 : index
    %6 = vector.load %arg4[%c0_7, %c0_8, %c0_9] : memref<1x16x64xf32, #tpu.memory_space<vmem>>, vector<1x16x64xf32>
    %7 = vector.shape_cast %6 : vector<1x16x64xf32> to vector<16x64xf32>
    %8 = vector.shape_cast %5 : vector<16x64xf32> to vector<1x16x64xf32>
    tpu.vector_store %arg4[%c0_7, %c0_8, %c0_9], %8 {strides = array<i32>} : memref<1x16x64xf32, #tpu.memory_space<vmem>>, vector<1x16x64xf32>,
    return
  }
  func.func @transform_0(%arg0: i32) -> (i32, i32, i32) {
    %c0_i32 = arith.constant 0 : i32
    %c0_i32_0 = arith.constant 0 : i32
    %c0_i32_1 = arith.constant 0 : i32
    return %arg0, %c0_i32, %c0_i32_0 : i32, i32, i32
  }
  func.func @transform_1(%arg0: i32) -> (i32, i32) {
    %c0_i32 = arith.constant 0 : i32
    %c0_i32_0 = arith.constant 0 : i32
    %c0_i32_1 = arith.constant 0 : i32
    return %c0_i32, %c0_i32_0 : i32, i32
  }
  func.func @transform_2(%arg0: i32) -> (i32, i32) {
    %c0_i32 = arith.constant 0 : i32
    %c0_i32_0 = arith.constant 0 : i32
    %c0_i32_1 = arith.constant 0 : i32
    return %c0_i32, %c0_i32_0 : i32, i32
  }
  func.func @transform_3(%arg0: i32) -> (i32, i32, i32) {
    %c0_i32 = arith.constant 0 : i32
    %c0_i32_0 = arith.constant 0 : i32
    %c0_i32_1 = arith.constant 0 : i32
    return %arg0, %c0_i32, %c0_i32_0 : i32, i32, i32
  }
}

module attributes {stable_mosaic.version = 11 : i64} {
  func.func @kernel(%arg0: i32, %arg1: i32, %arg2: memref<1x8x16x4xf32, #tpu.memory_space<vmem>>, %arg3: memref<1x1x16x4xf32, #tpu.memory_space<vmem>>, %arg4: memref<1x1x16x4xf32, #tpu.memory_space<vmem>>, %arg5: memref<1x8x16x4xf32, #tpu.memory_space<vmem>>, %arg6: memref<1x1x16x4xf32, #tpu.memory_space<vmem>>, %arg7: memref<1x1x16x4xf32, #tpu.memory_space<vmem>>, %arg8: memref<9x4x8xf32, #tpu.memory_space<vmem>>, %arg9: memref<9x4x8xf32, #tpu.memory_space<vmem>>, %arg10: memref<1x8xf32, #tpu.memory_space<vmem>>, %arg11: memref<1x8x16x8xf32, #tpu.memory_space<vmem>>, %arg12: memref<1x1x2x8xf32, #tpu.memory_space<vmem>>, %arg13: memref<10x18x4xf32, #tpu.memory_space<vmem>>, %arg14: memref<10x18x4xf32, #tpu.memory_space<vmem>>) attributes {dimension_semantics = [#tpu.dimension_semantics<parallel>, #tpu.dimension_semantics<parallel>], iteration_bounds = array<i64: 2, 2>, scalar_prefetch = 0 : i64, scratch_operands = 2 : i64, tpu.core_type = #tpu.core_type<tc>, window_params = [{transform_indices = @transform_0, window_bounds = array<i64: 1, 8, 16, 4>}, {transform_indices = @transform_1, window_bounds = array<i64: 1, 1, 16, 4>}, {transform_indices = @transform_2, window_bounds = array<i64: 1, 1, 16, 4>}, {transform_indices = @transform_3, window_bounds = array<i64: 1, 8, 16, 4>}, {transform_indices = @transform_4, window_bounds = array<i64: 1, 1, 16, 4>}, {transform_indices = @transform_5, window_bounds = array<i64: 1, 1, 16, 4>}, {pipeline_mode = #tpu.pipeline_mode<synchronous>, transform_indices = @transform_6, window_bounds = array<i64: 9, 4, 8>}, {pipeline_mode = #tpu.pipeline_mode<synchronous>, transform_indices = @transform_7, window_bounds = array<i64: 9, 4, 8>}, {pipeline_mode = #tpu.pipeline_mode<synchronous>, transform_indices = @transform_8, window_bounds = array<i64: 1, 8>}, {transform_indices = @transform_9, window_bounds = array<i64: 1, 8, 16, 8>}, {transform_indices = @transform_10, window_bounds = array<i64: 1, 1, 2, 8>}]} {
    %cst = arith.constant 0.000000e+00 : f32
    %0 = vector.broadcast %cst : f32 to vector<10x18x4xf32>
    %c0 = arith.constant 0 : index
    %c0_0 = arith.constant 0 : index
    %c0_1 = arith.constant 0 : index
    %1 = vector.load %arg13[%c0, %c0_0, %c0_1] : memref<10x18x4xf32, #tpu.memory_space<vmem>>, vector<10x18x4xf32>
    tpu.vector_store %arg13[%c0, %c0_0, %c0_1], %0 {strides = array<i32>} : memref<10x18x4xf32, #tpu.memory_space<vmem>>, vector<10x18x4xf32>,
    %c0_2 = arith.constant 0 : index
    %c0_3 = arith.constant 0 : index
    %c0_4 = arith.constant 0 : index
    %c0_5 = arith.constant 0 : index
    %2 = vector.load %arg2[%c0_2, %c0_3, %c0_4, %c0_5] : memref<1x8x16x4xf32, #tpu.memory_space<vmem>>, vector<1x8x16x4xf32>
    %3 = vector.shape_cast %2 : vector<1x8x16x4xf32> to vector<8x16x4xf32>
    %c1 = arith.constant 1 : index
    %c1_6 = arith.constant 1 : index
    %c0_7 = arith.constant 0 : index
    %4 = vector.load %arg13[%c1, %c1_6, %c0_7] : memref<10x18x4xf32, #tpu.memory_space<vmem>>, vector<8x16x4xf32>
    tpu.vector_store %arg13[%c1, %c1_6, %c0_7], %3 {strides = array<i32>} : memref<10x18x4xf32, #tpu.memory_space<vmem>>, vector<8x16x4xf32>,
    %c0_i32 = arith.constant 0 : i32
    %5 = arith.cmpi sgt, %arg1, %c0_i32 : i32
    %c0_8 = arith.constant 0 : index
    %c0_9 = arith.constant 0 : index
    %c0_10 = arith.constant 0 : index
    %c0_11 = arith.constant 0 : index
    %6 = vector.load %arg3[%c0_8, %c0_9, %c0_10, %c0_11] : memref<1x1x16x4xf32, #tpu.memory_space<vmem>>, vector<1x1x16x4xf32>
    %7 = vector.shape_cast %6 : vector<1x1x16x4xf32> to vector<1x16x4xf32>
    %cst_12 = arith.constant 0.000000e+00 : f32
    %8 = vector.broadcast %cst_12 : f32 to vector<1x16x4xf32>
    %9 = arith.select %5, %7, %8 : vector<1x16x4xf32>
    %c0_13 = arith.constant 0 : index
    %c1_14 = arith.constant 1 : index
    %c0_15 = arith.constant 0 : index
    %10 = vector.load %arg13[%c0_13, %c1_14, %c0_15] : memref<10x18x4xf32, #tpu.memory_space<vmem>>, vector<1x16x4xf32>
    tpu.vector_store %arg13[%c0_13, %c1_14, %c0_15], %9 {strides = array<i32>} : memref<10x18x4xf32, #tpu.memory_space<vmem>>, vector<1x16x4xf32>,
    %c1_i32 = arith.constant 1 : i32
    %11 = arith.cmpi slt, %arg1, %c1_i32 : i32
    %c0_16 = arith.constant 0 : index
    %c0_17 = arith.constant 0 : index
    %c0_18 = arith.constant 0 : index
    %c0_19 = arith.constant 0 : index
    %12 = vector.load %arg4[%c0_16, %c0_17, %c0_18, %c0_19] : memref<1x1x16x4xf32, #tpu.memory_space<vmem>>, vector<1x1x16x4xf32>
    %13 = vector.shape_cast %12 : vector<1x1x16x4xf32> to vector<1x16x4xf32>
    %cst_20 = arith.constant 0.000000e+00 : f32
    %14 = vector.broadcast %cst_20 : f32 to vector<1x16x4xf32>
    %15 = arith.select %11, %13, %14 : vector<1x16x4xf32>
    %c9 = arith.constant 9 : index
    %c1_21 = arith.constant 1 : index
    %c0_22 = arith.constant 0 : index
    %16 = vector.load %arg13[%c9, %c1_21, %c0_22] : memref<10x18x4xf32, #tpu.memory_space<vmem>>, vector<1x16x4xf32>
    tpu.vector_store %arg13[%c9, %c1_21, %c0_22], %15 {strides = array<i32>} : memref<10x18x4xf32, #tpu.memory_space<vmem>>, vector<1x16x4xf32>,
    %cst_23 = arith.constant 0.000000e+00 : f32
    %17 = vector.broadcast %cst_23 : f32 to vector<10x18x4xf32>
    %c0_24 = arith.constant 0 : index
    %c0_25 = arith.constant 0 : index
    %c0_26 = arith.constant 0 : index
    %18 = vector.load %arg14[%c0_24, %c0_25, %c0_26] : memref<10x18x4xf32, #tpu.memory_space<vmem>>, vector<10x18x4xf32>
    tpu.vector_store %arg14[%c0_24, %c0_25, %c0_26], %17 {strides = array<i32>} : memref<10x18x4xf32, #tpu.memory_space<vmem>>, vector<10x18x4xf32>,
    %c0_27 = arith.constant 0 : index
    %c0_28 = arith.constant 0 : index
    %c0_29 = arith.constant 0 : index
    %c0_30 = arith.constant 0 : index
    %19 = vector.load %arg5[%c0_27, %c0_28, %c0_29, %c0_30] : memref<1x8x16x4xf32, #tpu.memory_space<vmem>>, vector<1x8x16x4xf32>
    %20 = vector.shape_cast %19 : vector<1x8x16x4xf32> to vector<8x16x4xf32>
    %c1_31 = arith.constant 1 : index
    %c1_32 = arith.constant 1 : index
    %c0_33 = arith.constant 0 : index
    %21 = vector.load %arg14[%c1_31, %c1_32, %c0_33] : memref<10x18x4xf32, #tpu.memory_space<vmem>>, vector<8x16x4xf32>
    tpu.vector_store %arg14[%c1_31, %c1_32, %c0_33], %20 {strides = array<i32>} : memref<10x18x4xf32, #tpu.memory_space<vmem>>, vector<8x16x4xf32>,
    %c0_i32_34 = arith.constant 0 : i32
    %22 = arith.cmpi sgt, %arg1, %c0_i32_34 : i32
    %c0_35 = arith.constant 0 : index
    %c0_36 = arith.constant 0 : index
    %c0_37 = arith.constant 0 : index
    %c0_38 = arith.constant 0 : index
    %23 = vector.load %arg6[%c0_35, %c0_36, %c0_37, %c0_38] : memref<1x1x16x4xf32, #tpu.memory_space<vmem>>, vector<1x1x16x4xf32>
    %24 = vector.shape_cast %23 : vector<1x1x16x4xf32> to vector<1x16x4xf32>
    %cst_39 = arith.constant 0.000000e+00 : f32
    %25 = vector.broadcast %cst_39 : f32 to vector<1x16x4xf32>
    %26 = arith.select %22, %24, %25 : vector<1x16x4xf32>
    %c0_40 = arith.constant 0 : index
    %c1_41 = arith.constant 1 : index
    %c0_42 = arith.constant 0 : index
    %27 = vector.load %arg14[%c0_40, %c1_41, %c0_42] : memref<10x18x4xf32, #tpu.memory_space<vmem>>, vector<1x16x4xf32>
    tpu.vector_store %arg14[%c0_40, %c1_41, %c0_42], %26 {strides = array<i32>} : memref<10x18x4xf32, #tpu.memory_space<vmem>>, vector<1x16x4xf32>,
    %c1_i32_43 = arith.constant 1 : i32
    %28 = arith.cmpi slt, %arg1, %c1_i32_43 : i32
    %c0_44 = arith.constant 0 : index
    %c0_45 = arith.constant 0 : index
    %c0_46 = arith.constant 0 : index
    %c0_47 = arith.constant 0 : index
    %29 = vector.load %arg7[%c0_44, %c0_45, %c0_46, %c0_47] : memref<1x1x16x4xf32, #tpu.memory_space<vmem>>, vector<1x1x16x4xf32>
    %30 = vector.shape_cast %29 : vector<1x1x16x4xf32> to vector<1x16x4xf32>
    %cst_48 = arith.constant 0.000000e+00 : f32
    %31 = vector.broadcast %cst_48 : f32 to vector<1x16x4xf32>
    %32 = arith.select %28, %30, %31 : vector<1x16x4xf32>
    %c9_49 = arith.constant 9 : index
    %c1_50 = arith.constant 1 : index
    %c0_51 = arith.constant 0 : index
    %33 = vector.load %arg14[%c9_49, %c1_50, %c0_51] : memref<10x18x4xf32, #tpu.memory_space<vmem>>, vector<1x16x4xf32>
    tpu.vector_store %arg14[%c9_49, %c1_50, %c0_51], %32 {strides = array<i32>} : memref<10x18x4xf32, #tpu.memory_space<vmem>>, vector<1x16x4xf32>,
    %c0_52 = arith.constant 0 : index
    %c0_53 = arith.constant 0 : index
    %c0_54 = arith.constant 0 : index
    %34 = vector.load %arg8[%c0_52, %c0_53, %c0_54] : memref<9x4x8xf32, #tpu.memory_space<vmem>>, vector<9x4x8xf32>
    %c0_55 = arith.constant 0 : index
    %c0_56 = arith.constant 0 : index
    %c0_57 = arith.constant 0 : index
    %35 = vector.load %arg9[%c0_55, %c0_56, %c0_57] : memref<9x4x8xf32, #tpu.memory_space<vmem>>, vector<9x4x8xf32>
    %cst_58 = arith.constant 0.000000e+00 : f32
    %36 = vector.broadcast %cst_58 : f32 to vector<128x8xf32>
    %c0_59 = arith.constant 0 : index
    %c0_60 = arith.constant 0 : index
    %c0_61 = arith.constant 0 : index
    %37 = vector.load %arg13[%c0_59, %c0_60, %c0_61] : memref<10x18x4xf32, #tpu.memory_space<vmem>>, vector<8x16x4xf32>
    %38 = vector.shape_cast %37 : vector<8x16x4xf32> to vector<128x4xf32>
    %c0_62 = arith.constant 0 : index
    %c0_63 = arith.constant 0 : index
    %c0_64 = arith.constant 0 : index
    %39 = vector.load %arg14[%c0_62, %c0_63, %c0_64] : memref<10x18x4xf32, #tpu.memory_space<vmem>>, vector<8x16x4xf32>
    %40 = vector.shape_cast %39 : vector<8x16x4xf32> to vector<128x4xf32>
    %41 = vector.extract_strided_slice %34 {offsets = [0, 0, 0], sizes = [1, 4, 8], strides = [1, 1, 1]} : vector<9x4x8xf32> to vector<1x4x8xf32>
    %42 = vector.shape_cast %41 : vector<1x4x8xf32> to vector<4x8xf32>
    %cst_65 = arith.constant dense<0.000000e+00> : vector<128x8xf32>
    %43 = tpu.matmul %38, %42, %cst_65 {dimension_numbers = #tpu.dot_dimension_numbers<[1], [0], [0], [1], [0, 0, 1, 1], [], []>} : vector<128x4xf32>, vector<4x8xf32>, vector<128x8xf32> -> vector<128x8xf32>
    %44 = arith.addf %36, %43 : vector<128x8xf32>
    %45 = vector.extract_strided_slice %35 {offsets = [0, 0, 0], sizes = [1, 4, 8], strides = [1, 1, 1]} : vector<9x4x8xf32> to vector<1x4x8xf32>
    %46 = vector.shape_cast %45 : vector<1x4x8xf32> to vector<4x8xf32>
    %cst_66 = arith.constant dense<0.000000e+00> : vector<128x8xf32>
    %47 = tpu.matmul %40, %46, %cst_66 {dimension_numbers = #tpu.dot_dimension_numbers<[1], [0], [0], [1], [0, 0, 1, 1], [], []>} : vector<128x4xf32>, vector<4x8xf32>, vector<128x8xf32> -> vector<128x8xf32>
    %48 = arith.addf %44, %47 : vector<128x8xf32>
    %c0_67 = arith.constant 0 : index
    %c1_68 = arith.constant 1 : index
    %c0_69 = arith.constant 0 : index
    %49 = vector.load %arg13[%c0_67, %c1_68, %c0_69] : memref<10x18x4xf32, #tpu.memory_space<vmem>>, vector<8x16x4xf32>
    %50 = vector.shape_cast %49 : vector<8x16x4xf32> to vector<128x4xf32>
    %c0_70 = arith.constant 0 : index
    %c1_71 = arith.constant 1 : index
    %c0_72 = arith.constant 0 : index
    %51 = vector.load %arg14[%c0_70, %c1_71, %c0_72] : memref<10x18x4xf32, #tpu.memory_space<vmem>>, vector<8x16x4xf32>
    %52 = vector.shape_cast %51 : vector<8x16x4xf32> to vector<128x4xf32>
    %53 = vector.extract_strided_slice %34 {offsets = [1, 0, 0], sizes = [1, 4, 8], strides = [1, 1, 1]} : vector<9x4x8xf32> to vector<1x4x8xf32>
    %54 = vector.shape_cast %53 : vector<1x4x8xf32> to vector<4x8xf32>
    %cst_73 = arith.constant dense<0.000000e+00> : vector<128x8xf32>
    %55 = tpu.matmul %50, %54, %cst_73 {dimension_numbers = #tpu.dot_dimension_numbers<[1], [0], [0], [1], [0, 0, 1, 1], [], []>} : vector<128x4xf32>, vector<4x8xf32>, vector<128x8xf32> -> vector<128x8xf32>
    %56 = arith.addf %48, %55 : vector<128x8xf32>
    %57 = vector.extract_strided_slice %35 {offsets = [1, 0, 0], sizes = [1, 4, 8], strides = [1, 1, 1]} : vector<9x4x8xf32> to vector<1x4x8xf32>
    %58 = vector.shape_cast %57 : vector<1x4x8xf32> to vector<4x8xf32>
    %cst_74 = arith.constant dense<0.000000e+00> : vector<128x8xf32>
    %59 = tpu.matmul %52, %58, %cst_74 {dimension_numbers = #tpu.dot_dimension_numbers<[1], [0], [0], [1], [0, 0, 1, 1], [], []>} : vector<128x4xf32>, vector<4x8xf32>, vector<128x8xf32> -> vector<128x8xf32>
    %60 = arith.addf %56, %59 : vector<128x8xf32>
    %c0_75 = arith.constant 0 : index
    %c2 = arith.constant 2 : index
    %c0_76 = arith.constant 0 : index
    %61 = vector.load %arg13[%c0_75, %c2, %c0_76] : memref<10x18x4xf32, #tpu.memory_space<vmem>>, vector<8x16x4xf32>
    %62 = vector.shape_cast %61 : vector<8x16x4xf32> to vector<128x4xf32>
    %c0_77 = arith.constant 0 : index
    %c2_78 = arith.constant 2 : index
    %c0_79 = arith.constant 0 : index
    %63 = vector.load %arg14[%c0_77, %c2_78, %c0_79] : memref<10x18x4xf32, #tpu.memory_space<vmem>>, vector<8x16x4xf32>
    %64 = vector.shape_cast %63 : vector<8x16x4xf32> to vector<128x4xf32>
    %65 = vector.extract_strided_slice %34 {offsets = [2, 0, 0], sizes = [1, 4, 8], strides = [1, 1, 1]} : vector<9x4x8xf32> to vector<1x4x8xf32>
    %66 = vector.shape_cast %65 : vector<1x4x8xf32> to vector<4x8xf32>
    %cst_80 = arith.constant dense<0.000000e+00> : vector<128x8xf32>
    %67 = tpu.matmul %62, %66, %cst_80 {dimension_numbers = #tpu.dot_dimension_numbers<[1], [0], [0], [1], [0, 0, 1, 1], [], []>} : vector<128x4xf32>, vector<4x8xf32>, vector<128x8xf32> -> vector<128x8xf32>
    %68 = arith.addf %60, %67 : vector<128x8xf32>
    %69 = vector.extract_strided_slice %35 {offsets = [2, 0, 0], sizes = [1, 4, 8], strides = [1, 1, 1]} : vector<9x4x8xf32> to vector<1x4x8xf32>
    %70 = vector.shape_cast %69 : vector<1x4x8xf32> to vector<4x8xf32>
    %cst_81 = arith.constant dense<0.000000e+00> : vector<128x8xf32>
    %71 = tpu.matmul %64, %70, %cst_81 {dimension_numbers = #tpu.dot_dimension_numbers<[1], [0], [0], [1], [0, 0, 1, 1], [], []>} : vector<128x4xf32>, vector<4x8xf32>, vector<128x8xf32> -> vector<128x8xf32>
    %72 = arith.addf %68, %71 : vector<128x8xf32>
    %c1_82 = arith.constant 1 : index
    %c0_83 = arith.constant 0 : index
    %c0_84 = arith.constant 0 : index
    %73 = vector.load %arg13[%c1_82, %c0_83, %c0_84] : memref<10x18x4xf32, #tpu.memory_space<vmem>>, vector<8x16x4xf32>
    %74 = vector.shape_cast %73 : vector<8x16x4xf32> to vector<128x4xf32>
    %c1_85 = arith.constant 1 : index
    %c0_86 = arith.constant 0 : index
    %c0_87 = arith.constant 0 : index
    %75 = vector.load %arg14[%c1_85, %c0_86, %c0_87] : memref<10x18x4xf32, #tpu.memory_space<vmem>>, vector<8x16x4xf32>
    %76 = vector.shape_cast %75 : vector<8x16x4xf32> to vector<128x4xf32>
    %77 = vector.extract_strided_slice %34 {offsets = [3, 0, 0], sizes = [1, 4, 8], strides = [1, 1, 1]} : vector<9x4x8xf32> to vector<1x4x8xf32>
    %78 = vector.shape_cast %77 : vector<1x4x8xf32> to vector<4x8xf32>
    %cst_88 = arith.constant dense<0.000000e+00> : vector<128x8xf32>
    %79 = tpu.matmul %74, %78, %cst_88 {dimension_numbers = #tpu.dot_dimension_numbers<[1], [0], [0], [1], [0, 0, 1, 1], [], []>} : vector<128x4xf32>, vector<4x8xf32>, vector<128x8xf32> -> vector<128x8xf32>
    %80 = arith.addf %72, %79 : vector<128x8xf32>
    %81 = vector.extract_strided_slice %35 {offsets = [3, 0, 0], sizes = [1, 4, 8], strides = [1, 1, 1]} : vector<9x4x8xf32> to vector<1x4x8xf32>
    %82 = vector.shape_cast %81 : vector<1x4x8xf32> to vector<4x8xf32>
    %cst_89 = arith.constant dense<0.000000e+00> : vector<128x8xf32>
    %83 = tpu.matmul %76, %82, %cst_89 {dimension_numbers = #tpu.dot_dimension_numbers<[1], [0], [0], [1], [0, 0, 1, 1], [], []>} : vector<128x4xf32>, vector<4x8xf32>, vector<128x8xf32> -> vector<128x8xf32>
    %84 = arith.addf %80, %83 : vector<128x8xf32>
    %c1_90 = arith.constant 1 : index
    %c1_91 = arith.constant 1 : index
    %c0_92 = arith.constant 0 : index
    %85 = vector.load %arg13[%c1_90, %c1_91, %c0_92] : memref<10x18x4xf32, #tpu.memory_space<vmem>>, vector<8x16x4xf32>
    %86 = vector.shape_cast %85 : vector<8x16x4xf32> to vector<128x4xf32>
    %c1_93 = arith.constant 1 : index
    %c1_94 = arith.constant 1 : index
    %c0_95 = arith.constant 0 : index
    %87 = vector.load %arg14[%c1_93, %c1_94, %c0_95] : memref<10x18x4xf32, #tpu.memory_space<vmem>>, vector<8x16x4xf32>
    %88 = vector.shape_cast %87 : vector<8x16x4xf32> to vector<128x4xf32>
    %89 = vector.extract_strided_slice %34 {offsets = [4, 0, 0], sizes = [1, 4, 8], strides = [1, 1, 1]} : vector<9x4x8xf32> to vector<1x4x8xf32>
    %90 = vector.shape_cast %89 : vector<1x4x8xf32> to vector<4x8xf32>
    %cst_96 = arith.constant dense<0.000000e+00> : vector<128x8xf32>
    %91 = tpu.matmul %86, %90, %cst_96 {dimension_numbers = #tpu.dot_dimension_numbers<[1], [0], [0], [1], [0, 0, 1, 1], [], []>} : vector<128x4xf32>, vector<4x8xf32>, vector<128x8xf32> -> vector<128x8xf32>
    %92 = arith.addf %84, %91 : vector<128x8xf32>
    %93 = vector.extract_strided_slice %35 {offsets = [4, 0, 0], sizes = [1, 4, 8], strides = [1, 1, 1]} : vector<9x4x8xf32> to vector<1x4x8xf32>
    %94 = vector.shape_cast %93 : vector<1x4x8xf32> to vector<4x8xf32>
    %cst_97 = arith.constant dense<0.000000e+00> : vector<128x8xf32>
    %95 = tpu.matmul %88, %94, %cst_97 {dimension_numbers = #tpu.dot_dimension_numbers<[1], [0], [0], [1], [0, 0, 1, 1], [], []>} : vector<128x4xf32>, vector<4x8xf32>, vector<128x8xf32> -> vector<128x8xf32>
    %96 = arith.addf %92, %95 : vector<128x8xf32>
    %c1_98 = arith.constant 1 : index
    %c2_99 = arith.constant 2 : index
    %c0_100 = arith.constant 0 : index
    %97 = vector.load %arg13[%c1_98, %c2_99, %c0_100] : memref<10x18x4xf32, #tpu.memory_space<vmem>>, vector<8x16x4xf32>
    %98 = vector.shape_cast %97 : vector<8x16x4xf32> to vector<128x4xf32>
    %c1_101 = arith.constant 1 : index
    %c2_102 = arith.constant 2 : index
    %c0_103 = arith.constant 0 : index
    %99 = vector.load %arg14[%c1_101, %c2_102, %c0_103] : memref<10x18x4xf32, #tpu.memory_space<vmem>>, vector<8x16x4xf32>
    %100 = vector.shape_cast %99 : vector<8x16x4xf32> to vector<128x4xf32>
    %101 = vector.extract_strided_slice %34 {offsets = [5, 0, 0], sizes = [1, 4, 8], strides = [1, 1, 1]} : vector<9x4x8xf32> to vector<1x4x8xf32>
    %102 = vector.shape_cast %101 : vector<1x4x8xf32> to vector<4x8xf32>
    %cst_104 = arith.constant dense<0.000000e+00> : vector<128x8xf32>
    %103 = tpu.matmul %98, %102, %cst_104 {dimension_numbers = #tpu.dot_dimension_numbers<[1], [0], [0], [1], [0, 0, 1, 1], [], []>} : vector<128x4xf32>, vector<4x8xf32>, vector<128x8xf32> -> vector<128x8xf32>
    %104 = arith.addf %96, %103 : vector<128x8xf32>
    %105 = vector.extract_strided_slice %35 {offsets = [5, 0, 0], sizes = [1, 4, 8], strides = [1, 1, 1]} : vector<9x4x8xf32> to vector<1x4x8xf32>
    %106 = vector.shape_cast %105 : vector<1x4x8xf32> to vector<4x8xf32>
    %cst_105 = arith.constant dense<0.000000e+00> : vector<128x8xf32>
    %107 = tpu.matmul %100, %106, %cst_105 {dimension_numbers = #tpu.dot_dimension_numbers<[1], [0], [0], [1], [0, 0, 1, 1], [], []>} : vector<128x4xf32>, vector<4x8xf32>, vector<128x8xf32> -> vector<128x8xf32>
    %108 = arith.addf %104, %107 : vector<128x8xf32>
    %c2_106 = arith.constant 2 : index
    %c0_107 = arith.constant 0 : index
    %c0_108 = arith.constant 0 : index
    %109 = vector.load %arg13[%c2_106, %c0_107, %c0_108] : memref<10x18x4xf32, #tpu.memory_space<vmem>>, vector<8x16x4xf32>
    %110 = vector.shape_cast %109 : vector<8x16x4xf32> to vector<128x4xf32>
    %c2_109 = arith.constant 2 : index
    %c0_110 = arith.constant 0 : index
    %c0_111 = arith.constant 0 : index
    %111 = vector.load %arg14[%c2_109, %c0_110, %c0_111] : memref<10x18x4xf32, #tpu.memory_space<vmem>>, vector<8x16x4xf32>
    %112 = vector.shape_cast %111 : vector<8x16x4xf32> to vector<128x4xf32>
    %113 = vector.extract_strided_slice %34 {offsets = [6, 0, 0], sizes = [1, 4, 8], strides = [1, 1, 1]} : vector<9x4x8xf32> to vector<1x4x8xf32>
    %114 = vector.shape_cast %113 : vector<1x4x8xf32> to vector<4x8xf32>
    %cst_112 = arith.constant dense<0.000000e+00> : vector<128x8xf32>
    %115 = tpu.matmul %110, %114, %cst_112 {dimension_numbers = #tpu.dot_dimension_numbers<[1], [0], [0], [1], [0, 0, 1, 1], [], []>} : vector<128x4xf32>, vector<4x8xf32>, vector<128x8xf32> -> vector<128x8xf32>
    %116 = arith.addf %108, %115 : vector<128x8xf32>
    %117 = vector.extract_strided_slice %35 {offsets = [6, 0, 0], sizes = [1, 4, 8], strides = [1, 1, 1]} : vector<9x4x8xf32> to vector<1x4x8xf32>
    %118 = vector.shape_cast %117 : vector<1x4x8xf32> to vector<4x8xf32>
    %cst_113 = arith.constant dense<0.000000e+00> : vector<128x8xf32>
    %119 = tpu.matmul %112, %118, %cst_113 {dimension_numbers = #tpu.dot_dimension_numbers<[1], [0], [0], [1], [0, 0, 1, 1], [], []>} : vector<128x4xf32>, vector<4x8xf32>, vector<128x8xf32> -> vector<128x8xf32>
    %120 = arith.addf %116, %119 : vector<128x8xf32>
    %c2_114 = arith.constant 2 : index
    %c1_115 = arith.constant 1 : index
    %c0_116 = arith.constant 0 : index
    %121 = vector.load %arg13[%c2_114, %c1_115, %c0_116] : memref<10x18x4xf32, #tpu.memory_space<vmem>>, vector<8x16x4xf32>
    %122 = vector.shape_cast %121 : vector<8x16x4xf32> to vector<128x4xf32>
    %c2_117 = arith.constant 2 : index
    %c1_118 = arith.constant 1 : index
    %c0_119 = arith.constant 0 : index
    %123 = vector.load %arg14[%c2_117, %c1_118, %c0_119] : memref<10x18x4xf32, #tpu.memory_space<vmem>>, vector<8x16x4xf32>
    %124 = vector.shape_cast %123 : vector<8x16x4xf32> to vector<128x4xf32>
    %125 = vector.extract_strided_slice %34 {offsets = [7, 0, 0], sizes = [1, 4, 8], strides = [1, 1, 1]} : vector<9x4x8xf32> to vector<1x4x8xf32>
    %126 = vector.shape_cast %125 : vector<1x4x8xf32> to vector<4x8xf32>
    %cst_120 = arith.constant dense<0.000000e+00> : vector<128x8xf32>
    %127 = tpu.matmul %122, %126, %cst_120 {dimension_numbers = #tpu.dot_dimension_numbers<[1], [0], [0], [1], [0, 0, 1, 1], [], []>} : vector<128x4xf32>, vector<4x8xf32>, vector<128x8xf32> -> vector<128x8xf32>
    %128 = arith.addf %120, %127 : vector<128x8xf32>
    %129 = vector.extract_strided_slice %35 {offsets = [7, 0, 0], sizes = [1, 4, 8], strides = [1, 1, 1]} : vector<9x4x8xf32> to vector<1x4x8xf32>
    %130 = vector.shape_cast %129 : vector<1x4x8xf32> to vector<4x8xf32>
    %cst_121 = arith.constant dense<0.000000e+00> : vector<128x8xf32>
    %131 = tpu.matmul %124, %130, %cst_121 {dimension_numbers = #tpu.dot_dimension_numbers<[1], [0], [0], [1], [0, 0, 1, 1], [], []>} : vector<128x4xf32>, vector<4x8xf32>, vector<128x8xf32> -> vector<128x8xf32>
    %132 = arith.addf %128, %131 : vector<128x8xf32>
    %c2_122 = arith.constant 2 : index
    %c2_123 = arith.constant 2 : index
    %c0_124 = arith.constant 0 : index
    %133 = vector.load %arg13[%c2_122, %c2_123, %c0_124] : memref<10x18x4xf32, #tpu.memory_space<vmem>>, vector<8x16x4xf32>
    %134 = vector.shape_cast %133 : vector<8x16x4xf32> to vector<128x4xf32>
    %c2_125 = arith.constant 2 : index
    %c2_126 = arith.constant 2 : index
    %c0_127 = arith.constant 0 : index
    %135 = vector.load %arg14[%c2_125, %c2_126, %c0_127] : memref<10x18x4xf32, #tpu.memory_space<vmem>>, vector<8x16x4xf32>
    %136 = vector.shape_cast %135 : vector<8x16x4xf32> to vector<128x4xf32>
    %137 = vector.extract_strided_slice %34 {offsets = [8, 0, 0], sizes = [1, 4, 8], strides = [1, 1, 1]} : vector<9x4x8xf32> to vector<1x4x8xf32>
    %138 = vector.shape_cast %137 : vector<1x4x8xf32> to vector<4x8xf32>
    %cst_128 = arith.constant dense<0.000000e+00> : vector<128x8xf32>
    %139 = tpu.matmul %134, %138, %cst_128 {dimension_numbers = #tpu.dot_dimension_numbers<[1], [0], [0], [1], [0, 0, 1, 1], [], []>} : vector<128x4xf32>, vector<4x8xf32>, vector<128x8xf32> -> vector<128x8xf32>
    %140 = arith.addf %132, %139 : vector<128x8xf32>
    %141 = vector.extract_strided_slice %35 {offsets = [8, 0, 0], sizes = [1, 4, 8], strides = [1, 1, 1]} : vector<9x4x8xf32> to vector<1x4x8xf32>
    %142 = vector.shape_cast %141 : vector<1x4x8xf32> to vector<4x8xf32>
    %cst_129 = arith.constant dense<0.000000e+00> : vector<128x8xf32>
    %143 = tpu.matmul %136, %142, %cst_129 {dimension_numbers = #tpu.dot_dimension_numbers<[1], [0], [0], [1], [0, 0, 1, 1], [], []>} : vector<128x4xf32>, vector<4x8xf32>, vector<128x8xf32> -> vector<128x8xf32>
    %144 = arith.addf %140, %143 : vector<128x8xf32>
    %c0_130 = arith.constant 0 : index
    %c0_131 = arith.constant 0 : index
    %145 = vector.load %arg10[%c0_130, %c0_131] : memref<1x8xf32, #tpu.memory_space<vmem>>, vector<1x8xf32>
    %146 = vector.broadcast %145 : vector<1x8xf32> to vector<128x8xf32>
    %147 = arith.addf %144, %146 : vector<128x8xf32>
    %cst_132 = arith.constant dense<0.000000e+00> : vector<8xf32>
    %148 = vector.multi_reduction <add>, %147, %cst_132 [0] : vector<128x8xf32> to vector<8xf32>
    %149 = vector.shape_cast %148 : vector<8xf32> to vector<1x8xf32>
    %c0_133 = arith.constant 0 : index
    %c0_134 = arith.constant 0 : index
    %c0_135 = arith.constant 0 : index
    %c0_136 = arith.constant 0 : index
    %150 = vector.load %arg12[%c0_133, %c0_134, %c0_135, %c0_136] : memref<1x1x2x8xf32, #tpu.memory_space<vmem>>, vector<1x1x1x8xf32>
    %151 = vector.shape_cast %150 : vector<1x1x1x8xf32> to vector<1x8xf32>
    %152 = vector.shape_cast %149 : vector<1x8xf32> to vector<1x1x1x8xf32>
    tpu.vector_store %arg12[%c0_133, %c0_134, %c0_135, %c0_136], %152 {strides = array<i32>} : memref<1x1x2x8xf32, #tpu.memory_space<vmem>>, vector<1x1x1x8xf32>,
    %153 = arith.mulf %147, %147 : vector<128x8xf32>
    %cst_137 = arith.constant dense<0.000000e+00> : vector<8xf32>
    %154 = vector.multi_reduction <add>, %153, %cst_137 [0] : vector<128x8xf32> to vector<8xf32>
    %155 = vector.shape_cast %154 : vector<8xf32> to vector<1x8xf32>
    %c0_138 = arith.constant 0 : index
    %c0_139 = arith.constant 0 : index
    %c1_140 = arith.constant 1 : index
    %c0_141 = arith.constant 0 : index
    %156 = vector.load %arg12[%c0_138, %c0_139, %c1_140, %c0_141] : memref<1x1x2x8xf32, #tpu.memory_space<vmem>>, vector<1x1x1x8xf32>
    %157 = vector.shape_cast %156 : vector<1x1x1x8xf32> to vector<1x8xf32>
    %158 = vector.shape_cast %155 : vector<1x8xf32> to vector<1x1x1x8xf32>
    tpu.vector_store %arg12[%c0_138, %c0_139, %c1_140, %c0_141], %158 {strides = array<i32>} : memref<1x1x2x8xf32, #tpu.memory_space<vmem>>, vector<1x1x1x8xf32>,
    %159 = vector.shape_cast %147 : vector<128x8xf32> to vector<8x16x8xf32>
    %c0_142 = arith.constant 0 : index
    %c0_143 = arith.constant 0 : index
    %c0_144 = arith.constant 0 : index
    %c0_145 = arith.constant 0 : index
    %160 = vector.load %arg11[%c0_142, %c0_143, %c0_144, %c0_145] : memref<1x8x16x8xf32, #tpu.memory_space<vmem>>, vector<1x8x16x8xf32>
    %161 = vector.shape_cast %160 : vector<1x8x16x8xf32> to vector<8x16x8xf32>
    %162 = vector.shape_cast %159 : vector<8x16x8xf32> to vector<1x8x16x8xf32>
    tpu.vector_store %arg11[%c0_142, %c0_143, %c0_144, %c0_145], %162 {strides = array<i32>} : memref<1x8x16x8xf32, #tpu.memory_space<vmem>>, vector<1x8x16x8xf32>,
    return
  }
  func.func @transform_0(%arg0: i32, %arg1: i32) -> (i32, i32, i32, i32) {
    %c0_i32 = arith.constant 0 : i32
    %c0_i32_0 = arith.constant 0 : i32
    %c0_i32_1 = arith.constant 0 : i32
    return %arg0, %arg1, %c0_i32, %c0_i32_0 : i32, i32, i32, i32
  }
  func.func @transform_1(%arg0: i32, %arg1: i32) -> (i32, i32, i32, i32) {
    %c8_i32 = arith.constant 8 : i32
    %0 = arith.muli %arg1, %c8_i32 : i32
    %c1_i32 = arith.constant 1 : i32
    %1 = arith.subi %0, %c1_i32 : i32
    %c0_i32 = arith.constant 0 : i32
    %2 = arith.maxsi %1, %c0_i32 : i32
    %c0_i32_0 = arith.constant 0 : i32
    %c0_i32_1 = arith.constant 0 : i32
    %c0_i32_2 = arith.constant 0 : i32
    return %arg0, %2, %c0_i32_0, %c0_i32_1 : i32, i32, i32, i32
  }
  func.func @transform_2(%arg0: i32, %arg1: i32) -> (i32, i32, i32, i32) {
    %c8_i32 = arith.constant 8 : i32
    %0 = arith.muli %arg1, %c8_i32 : i32
    %c8_i32_0 = arith.constant 8 : i32
    %1 = arith.addi %0, %c8_i32_0 : i32
    %c15_i32 = arith.constant 15 : i32
    %2 = arith.minsi %1, %c15_i32 : i32
    %c0_i32 = arith.constant 0 : i32
    %c0_i32_1 = arith.constant 0 : i32
    %c0_i32_2 = arith.constant 0 : i32
    return %arg0, %2, %c0_i32, %c0_i32_1 : i32, i32, i32, i32
  }
  func.func @transform_3(%arg0: i32, %arg1: i32) -> (i32, i32, i32, i32) {
    %c0_i32 = arith.constant 0 : i32
    %c0_i32_0 = arith.constant 0 : i32
    %c0_i32_1 = arith.constant 0 : i32
    return %arg0, %arg1, %c0_i32, %c0_i32_0 : i32, i32, i32, i32
  }
  func.func @transform_4(%arg0: i32, %arg1: i32) -> (i32, i32, i32, i32) {
    %c8_i32 = arith.constant 8 : i32
    %0 = arith.muli %arg1, %c8_i32 : i32
    %c1_i32 = arith.constant 1 : i32
    %1 = arith.subi %0, %c1_i32 : i32
    %c0_i32 = arith.constant 0 : i32
    %2 = arith.maxsi %1, %c0_i32 : i32
    %c0_i32_0 = arith.constant 0 : i32
    %c0_i32_1 = arith.constant 0 : i32
    %c0_i32_2 = arith.constant 0 : i32
    return %arg0, %2, %c0_i32_0, %c0_i32_1 : i32, i32, i32, i32
  }
  func.func @transform_5(%arg0: i32, %arg1: i32) -> (i32, i32, i32, i32) {
    %c8_i32 = arith.constant 8 : i32
    %0 = arith.muli %arg1, %c8_i32 : i32
    %c8_i32_0 = arith.constant 8 : i32
    %1 = arith.addi %0, %c8_i32_0 : i32
    %c15_i32 = arith.constant 15 : i32
    %2 = arith.minsi %1, %c15_i32 : i32
    %c0_i32 = arith.constant 0 : i32
    %c0_i32_1 = arith.constant 0 : i32
    %c0_i32_2 = arith.constant 0 : i32
    return %arg0, %2, %c0_i32, %c0_i32_1 : i32, i32, i32, i32
  }
  func.func @transform_6(%arg0: i32, %arg1: i32) -> (i32, i32, i32) {
    %c0_i32 = arith.constant 0 : i32
    %c0_i32_0 = arith.constant 0 : i32
    %c0_i32_1 = arith.constant 0 : i32
    %c0_i32_2 = arith.constant 0 : i32
    return %c0_i32, %c0_i32_0, %c0_i32_1 : i32, i32, i32
  }
  func.func @transform_7(%arg0: i32, %arg1: i32) -> (i32, i32, i32) {
    %c0_i32 = arith.constant 0 : i32
    %c0_i32_0 = arith.constant 0 : i32
    %c0_i32_1 = arith.constant 0 : i32
    %c0_i32_2 = arith.constant 0 : i32
    return %c0_i32, %c0_i32_0, %c0_i32_1 : i32, i32, i32
  }
  func.func @transform_8(%arg0: i32, %arg1: i32) -> (i32, i32) {
    %c0_i32 = arith.constant 0 : i32
    %c0_i32_0 = arith.constant 0 : i32
    %c0_i32_1 = arith.constant 0 : i32
    return %c0_i32, %c0_i32_0 : i32, i32
  }
  func.func @transform_9(%arg0: i32, %arg1: i32) -> (i32, i32, i32, i32) {
    %c0_i32 = arith.constant 0 : i32
    %c0_i32_0 = arith.constant 0 : i32
    %c0_i32_1 = arith.constant 0 : i32
    return %arg0, %arg1, %c0_i32, %c0_i32_0 : i32, i32, i32, i32
  }
  func.func @transform_10(%arg0: i32, %arg1: i32) -> (i32, i32, i32, i32) {
    %c0_i32 = arith.constant 0 : i32
    %c0_i32_0 = arith.constant 0 : i32
    %c0_i32_1 = arith.constant 0 : i32
    return %arg0, %arg1, %c0_i32, %c0_i32_0 : i32, i32, i32, i32
  }
}

module attributes {stable_mosaic.version = 11 : i64} {
  func.func @kernel(%arg0: i32, %arg1: i32, %arg2: memref<1x8x16x8xf32, #tpu.memory_space<vmem>>, %arg3: memref<1x1x16x8xf32, #tpu.memory_space<vmem>>, %arg4: memref<1x1x16x8xf32, #tpu.memory_space<vmem>>, %arg5: memref<1x8xf32, #tpu.memory_space<vmem>>, %arg6: memref<1x8xf32, #tpu.memory_space<vmem>>, %arg7: memref<9x8x8xf32, #tpu.memory_space<vmem>>, %arg8: memref<1x8xf32, #tpu.memory_space<vmem>>, %arg9: memref<1x8x16x8xf32, #tpu.memory_space<vmem>>, %arg10: memref<1x1x2x8xf32, #tpu.memory_space<vmem>>, %arg11: memref<10x18x8xf32, #tpu.memory_space<vmem>>) attributes {dimension_semantics = [#tpu.dimension_semantics<parallel>, #tpu.dimension_semantics<parallel>], iteration_bounds = array<i64: 2, 2>, scalar_prefetch = 0 : i64, scratch_operands = 1 : i64, tpu.core_type = #tpu.core_type<tc>, window_params = [{transform_indices = @transform_0, window_bounds = array<i64: 1, 8, 16, 8>}, {transform_indices = @transform_1, window_bounds = array<i64: 1, 1, 16, 8>}, {transform_indices = @transform_2, window_bounds = array<i64: 1, 1, 16, 8>}, {pipeline_mode = #tpu.pipeline_mode<synchronous>, transform_indices = @transform_3, window_bounds = array<i64: 1, 8>}, {pipeline_mode = #tpu.pipeline_mode<synchronous>, transform_indices = @transform_4, window_bounds = array<i64: 1, 8>}, {pipeline_mode = #tpu.pipeline_mode<synchronous>, transform_indices = @transform_5, window_bounds = array<i64: 9, 8, 8>}, {pipeline_mode = #tpu.pipeline_mode<synchronous>, transform_indices = @transform_6, window_bounds = array<i64: 1, 8>}, {transform_indices = @transform_7, window_bounds = array<i64: 1, 8, 16, 8>}, {transform_indices = @transform_8, window_bounds = array<i64: 1, 1, 2, 8>}]} {
    %c0 = arith.constant 0 : index
    %c0_0 = arith.constant 0 : index
    %0 = vector.load %arg5[%c0, %c0_0] : memref<1x8xf32, #tpu.memory_space<vmem>>, vector<1x8xf32>
    %c0_1 = arith.constant 0 : index
    %c0_2 = arith.constant 0 : index
    %1 = vector.load %arg6[%c0_1, %c0_2] : memref<1x8xf32, #tpu.memory_space<vmem>>, vector<1x8xf32>
    %cst = arith.constant 0.000000e+00 : f32
    %2 = vector.broadcast %cst : f32 to vector<10x18x8xf32>
    %c0_3 = arith.constant 0 : index
    %c0_4 = arith.constant 0 : index
    %c0_5 = arith.constant 0 : index
    %3 = vector.load %arg11[%c0_3, %c0_4, %c0_5] : memref<10x18x8xf32, #tpu.memory_space<vmem>>, vector<10x18x8xf32>
    tpu.vector_store %arg11[%c0_3, %c0_4, %c0_5], %2 {strides = array<i32>} : memref<10x18x8xf32, #tpu.memory_space<vmem>>, vector<10x18x8xf32>,
    %c0_6 = arith.constant 0 : index
    %c0_7 = arith.constant 0 : index
    %c0_8 = arith.constant 0 : index
    %c0_9 = arith.constant 0 : index
    %4 = vector.load %arg2[%c0_6, %c0_7, %c0_8, %c0_9] : memref<1x8x16x8xf32, #tpu.memory_space<vmem>>, vector<1x8x16x8xf32>
    %5 = vector.shape_cast %4 : vector<1x8x16x8xf32> to vector<8x16x8xf32>
    %6 = vector.shape_cast %0 : vector<1x8xf32> to vector<1x1x8xf32>
    %7 = vector.broadcast %6 : vector<1x1x8xf32> to vector<8x16x8xf32>
    %8 = arith.mulf %5, %7 : vector<8x16x8xf32>
    %9 = vector.shape_cast %1 : vector<1x8xf32> to vector<1x1x8xf32>
    %10 = vector.broadcast %9 : vector<1x1x8xf32> to vector<8x16x8xf32>
    %11 = arith.addf %8, %10 : vector<8x16x8xf32>
    %cst_10 = arith.constant 0.000000e+00 : f32
    %12 = vector.broadcast %cst_10 : f32 to vector<8x16x8xf32>
    %13 = arith.maximumf %11, %12 : vector<8x16x8xf32>
    %c1 = arith.constant 1 : index
    %c1_11 = arith.constant 1 : index
    %c0_12 = arith.constant 0 : index
    %14 = vector.load %arg11[%c1, %c1_11, %c0_12] : memref<10x18x8xf32, #tpu.memory_space<vmem>>, vector<8x16x8xf32>
    tpu.vector_store %arg11[%c1, %c1_11, %c0_12], %13 {strides = array<i32>} : memref<10x18x8xf32, #tpu.memory_space<vmem>>, vector<8x16x8xf32>,
    %c0_i32 = arith.constant 0 : i32
    %15 = arith.cmpi sgt, %arg1, %c0_i32 : i32
    %c0_13 = arith.constant 0 : index
    %c0_14 = arith.constant 0 : index
    %c0_15 = arith.constant 0 : index
    %c0_16 = arith.constant 0 : index
    %16 = vector.load %arg3[%c0_13, %c0_14, %c0_15, %c0_16] : memref<1x1x16x8xf32, #tpu.memory_space<vmem>>, vector<1x1x16x8xf32>
    %17 = vector.shape_cast %16 : vector<1x1x16x8xf32> to vector<1x16x8xf32>
    %18 = vector.shape_cast %0 : vector<1x8xf32> to vector<1x1x8xf32>
    %19 = vector.broadcast %18 : vector<1x1x8xf32> to vector<1x16x8xf32>
    %20 = arith.mulf %17, %19 : vector<1x16x8xf32>
    %21 = vector.shape_cast %1 : vector<1x8xf32> to vector<1x1x8xf32>
    %22 = vector.broadcast %21 : vector<1x1x8xf32> to vector<1x16x8xf32>
    %23 = arith.addf %20, %22 : vector<1x16x8xf32>
    %cst_17 = arith.constant 0.000000e+00 : f32
    %24 = vector.broadcast %cst_17 : f32 to vector<1x16x8xf32>
    %25 = arith.maximumf %23, %24 : vector<1x16x8xf32>
    %cst_18 = arith.constant 0.000000e+00 : f32
    %26 = vector.broadcast %cst_18 : f32 to vector<1x16x8xf32>
    %27 = arith.select %15, %25, %26 : vector<1x16x8xf32>
    %c0_19 = arith.constant 0 : index
    %c1_20 = arith.constant 1 : index
    %c0_21 = arith.constant 0 : index
    %28 = vector.load %arg11[%c0_19, %c1_20, %c0_21] : memref<10x18x8xf32, #tpu.memory_space<vmem>>, vector<1x16x8xf32>
    tpu.vector_store %arg11[%c0_19, %c1_20, %c0_21], %27 {strides = array<i32>} : memref<10x18x8xf32, #tpu.memory_space<vmem>>, vector<1x16x8xf32>,
    %c1_i32 = arith.constant 1 : i32
    %29 = arith.cmpi slt, %arg1, %c1_i32 : i32
    %c0_22 = arith.constant 0 : index
    %c0_23 = arith.constant 0 : index
    %c0_24 = arith.constant 0 : index
    %c0_25 = arith.constant 0 : index
    %30 = vector.load %arg4[%c0_22, %c0_23, %c0_24, %c0_25] : memref<1x1x16x8xf32, #tpu.memory_space<vmem>>, vector<1x1x16x8xf32>
    %31 = vector.shape_cast %30 : vector<1x1x16x8xf32> to vector<1x16x8xf32>
    %32 = vector.shape_cast %0 : vector<1x8xf32> to vector<1x1x8xf32>
    %33 = vector.broadcast %32 : vector<1x1x8xf32> to vector<1x16x8xf32>
    %34 = arith.mulf %31, %33 : vector<1x16x8xf32>
    %35 = vector.shape_cast %1 : vector<1x8xf32> to vector<1x1x8xf32>
    %36 = vector.broadcast %35 : vector<1x1x8xf32> to vector<1x16x8xf32>
    %37 = arith.addf %34, %36 : vector<1x16x8xf32>
    %cst_26 = arith.constant 0.000000e+00 : f32
    %38 = vector.broadcast %cst_26 : f32 to vector<1x16x8xf32>
    %39 = arith.maximumf %37, %38 : vector<1x16x8xf32>
    %cst_27 = arith.constant 0.000000e+00 : f32
    %40 = vector.broadcast %cst_27 : f32 to vector<1x16x8xf32>
    %41 = arith.select %29, %39, %40 : vector<1x16x8xf32>
    %c9 = arith.constant 9 : index
    %c1_28 = arith.constant 1 : index
    %c0_29 = arith.constant 0 : index
    %42 = vector.load %arg11[%c9, %c1_28, %c0_29] : memref<10x18x8xf32, #tpu.memory_space<vmem>>, vector<1x16x8xf32>
    tpu.vector_store %arg11[%c9, %c1_28, %c0_29], %41 {strides = array<i32>} : memref<10x18x8xf32, #tpu.memory_space<vmem>>, vector<1x16x8xf32>,
    %c0_30 = arith.constant 0 : index
    %c0_31 = arith.constant 0 : index
    %c0_32 = arith.constant 0 : index
    %43 = vector.load %arg7[%c0_30, %c0_31, %c0_32] : memref<9x8x8xf32, #tpu.memory_space<vmem>>, vector<9x8x8xf32>
    %cst_33 = arith.constant 0.000000e+00 : f32
    %44 = vector.broadcast %cst_33 : f32 to vector<128x8xf32>
    %c0_34 = arith.constant 0 : index
    %c0_35 = arith.constant 0 : index
    %c0_36 = arith.constant 0 : index
    %45 = vector.load %arg11[%c0_34, %c0_35, %c0_36] : memref<10x18x8xf32, #tpu.memory_space<vmem>>, vector<8x16x8xf32>
    %46 = vector.shape_cast %45 : vector<8x16x8xf32> to vector<128x8xf32>
    %47 = vector.extract_strided_slice %43 {offsets = [0, 0, 0], sizes = [1, 8, 8], strides = [1, 1, 1]} : vector<9x8x8xf32> to vector<1x8x8xf32>
    %48 = vector.shape_cast %47 : vector<1x8x8xf32> to vector<8x8xf32>
    %cst_37 = arith.constant dense<0.000000e+00> : vector<128x8xf32>
    %49 = tpu.matmul %46, %48, %cst_37 {dimension_numbers = #tpu.dot_dimension_numbers<[1], [0], [0], [1], [0, 0, 1, 1], [], []>} : vector<128x8xf32>, vector<8x8xf32>, vector<128x8xf32> -> vector<128x8xf32>
    %50 = arith.addf %44, %49 : vector<128x8xf32>
    %c0_38 = arith.constant 0 : index
    %c1_39 = arith.constant 1 : index
    %c0_40 = arith.constant 0 : index
    %51 = vector.load %arg11[%c0_38, %c1_39, %c0_40] : memref<10x18x8xf32, #tpu.memory_space<vmem>>, vector<8x16x8xf32>
    %52 = vector.shape_cast %51 : vector<8x16x8xf32> to vector<128x8xf32>
    %53 = vector.extract_strided_slice %43 {offsets = [1, 0, 0], sizes = [1, 8, 8], strides = [1, 1, 1]} : vector<9x8x8xf32> to vector<1x8x8xf32>
    %54 = vector.shape_cast %53 : vector<1x8x8xf32> to vector<8x8xf32>
    %cst_41 = arith.constant dense<0.000000e+00> : vector<128x8xf32>
    %55 = tpu.matmul %52, %54, %cst_41 {dimension_numbers = #tpu.dot_dimension_numbers<[1], [0], [0], [1], [0, 0, 1, 1], [], []>} : vector<128x8xf32>, vector<8x8xf32>, vector<128x8xf32> -> vector<128x8xf32>
    %56 = arith.addf %50, %55 : vector<128x8xf32>
    %c0_42 = arith.constant 0 : index
    %c2 = arith.constant 2 : index
    %c0_43 = arith.constant 0 : index
    %57 = vector.load %arg11[%c0_42, %c2, %c0_43] : memref<10x18x8xf32, #tpu.memory_space<vmem>>, vector<8x16x8xf32>
    %58 = vector.shape_cast %57 : vector<8x16x8xf32> to vector<128x8xf32>
    %59 = vector.extract_strided_slice %43 {offsets = [2, 0, 0], sizes = [1, 8, 8], strides = [1, 1, 1]} : vector<9x8x8xf32> to vector<1x8x8xf32>
    %60 = vector.shape_cast %59 : vector<1x8x8xf32> to vector<8x8xf32>
    %cst_44 = arith.constant dense<0.000000e+00> : vector<128x8xf32>
    %61 = tpu.matmul %58, %60, %cst_44 {dimension_numbers = #tpu.dot_dimension_numbers<[1], [0], [0], [1], [0, 0, 1, 1], [], []>} : vector<128x8xf32>, vector<8x8xf32>, vector<128x8xf32> -> vector<128x8xf32>
    %62 = arith.addf %56, %61 : vector<128x8xf32>
    %c1_45 = arith.constant 1 : index
    %c0_46 = arith.constant 0 : index
    %c0_47 = arith.constant 0 : index
    %63 = vector.load %arg11[%c1_45, %c0_46, %c0_47] : memref<10x18x8xf32, #tpu.memory_space<vmem>>, vector<8x16x8xf32>
    %64 = vector.shape_cast %63 : vector<8x16x8xf32> to vector<128x8xf32>
    %65 = vector.extract_strided_slice %43 {offsets = [3, 0, 0], sizes = [1, 8, 8], strides = [1, 1, 1]} : vector<9x8x8xf32> to vector<1x8x8xf32>
    %66 = vector.shape_cast %65 : vector<1x8x8xf32> to vector<8x8xf32>
    %cst_48 = arith.constant dense<0.000000e+00> : vector<128x8xf32>
    %67 = tpu.matmul %64, %66, %cst_48 {dimension_numbers = #tpu.dot_dimension_numbers<[1], [0], [0], [1], [0, 0, 1, 1], [], []>} : vector<128x8xf32>, vector<8x8xf32>, vector<128x8xf32> -> vector<128x8xf32>
    %68 = arith.addf %62, %67 : vector<128x8xf32>
    %c1_49 = arith.constant 1 : index
    %c1_50 = arith.constant 1 : index
    %c0_51 = arith.constant 0 : index
    %69 = vector.load %arg11[%c1_49, %c1_50, %c0_51] : memref<10x18x8xf32, #tpu.memory_space<vmem>>, vector<8x16x8xf32>
    %70 = vector.shape_cast %69 : vector<8x16x8xf32> to vector<128x8xf32>
    %71 = vector.extract_strided_slice %43 {offsets = [4, 0, 0], sizes = [1, 8, 8], strides = [1, 1, 1]} : vector<9x8x8xf32> to vector<1x8x8xf32>
    %72 = vector.shape_cast %71 : vector<1x8x8xf32> to vector<8x8xf32>
    %cst_52 = arith.constant dense<0.000000e+00> : vector<128x8xf32>
    %73 = tpu.matmul %70, %72, %cst_52 {dimension_numbers = #tpu.dot_dimension_numbers<[1], [0], [0], [1], [0, 0, 1, 1], [], []>} : vector<128x8xf32>, vector<8x8xf32>, vector<128x8xf32> -> vector<128x8xf32>
    %74 = arith.addf %68, %73 : vector<128x8xf32>
    %c1_53 = arith.constant 1 : index
    %c2_54 = arith.constant 2 : index
    %c0_55 = arith.constant 0 : index
    %75 = vector.load %arg11[%c1_53, %c2_54, %c0_55] : memref<10x18x8xf32, #tpu.memory_space<vmem>>, vector<8x16x8xf32>
    %76 = vector.shape_cast %75 : vector<8x16x8xf32> to vector<128x8xf32>
    %77 = vector.extract_strided_slice %43 {offsets = [5, 0, 0], sizes = [1, 8, 8], strides = [1, 1, 1]} : vector<9x8x8xf32> to vector<1x8x8xf32>
    %78 = vector.shape_cast %77 : vector<1x8x8xf32> to vector<8x8xf32>
    %cst_56 = arith.constant dense<0.000000e+00> : vector<128x8xf32>
    %79 = tpu.matmul %76, %78, %cst_56 {dimension_numbers = #tpu.dot_dimension_numbers<[1], [0], [0], [1], [0, 0, 1, 1], [], []>} : vector<128x8xf32>, vector<8x8xf32>, vector<128x8xf32> -> vector<128x8xf32>
    %80 = arith.addf %74, %79 : vector<128x8xf32>
    %c2_57 = arith.constant 2 : index
    %c0_58 = arith.constant 0 : index
    %c0_59 = arith.constant 0 : index
    %81 = vector.load %arg11[%c2_57, %c0_58, %c0_59] : memref<10x18x8xf32, #tpu.memory_space<vmem>>, vector<8x16x8xf32>
    %82 = vector.shape_cast %81 : vector<8x16x8xf32> to vector<128x8xf32>
    %83 = vector.extract_strided_slice %43 {offsets = [6, 0, 0], sizes = [1, 8, 8], strides = [1, 1, 1]} : vector<9x8x8xf32> to vector<1x8x8xf32>
    %84 = vector.shape_cast %83 : vector<1x8x8xf32> to vector<8x8xf32>
    %cst_60 = arith.constant dense<0.000000e+00> : vector<128x8xf32>
    %85 = tpu.matmul %82, %84, %cst_60 {dimension_numbers = #tpu.dot_dimension_numbers<[1], [0], [0], [1], [0, 0, 1, 1], [], []>} : vector<128x8xf32>, vector<8x8xf32>, vector<128x8xf32> -> vector<128x8xf32>
    %86 = arith.addf %80, %85 : vector<128x8xf32>
    %c2_61 = arith.constant 2 : index
    %c1_62 = arith.constant 1 : index
    %c0_63 = arith.constant 0 : index
    %87 = vector.load %arg11[%c2_61, %c1_62, %c0_63] : memref<10x18x8xf32, #tpu.memory_space<vmem>>, vector<8x16x8xf32>
    %88 = vector.shape_cast %87 : vector<8x16x8xf32> to vector<128x8xf32>
    %89 = vector.extract_strided_slice %43 {offsets = [7, 0, 0], sizes = [1, 8, 8], strides = [1, 1, 1]} : vector<9x8x8xf32> to vector<1x8x8xf32>
    %90 = vector.shape_cast %89 : vector<1x8x8xf32> to vector<8x8xf32>
    %cst_64 = arith.constant dense<0.000000e+00> : vector<128x8xf32>
    %91 = tpu.matmul %88, %90, %cst_64 {dimension_numbers = #tpu.dot_dimension_numbers<[1], [0], [0], [1], [0, 0, 1, 1], [], []>} : vector<128x8xf32>, vector<8x8xf32>, vector<128x8xf32> -> vector<128x8xf32>
    %92 = arith.addf %86, %91 : vector<128x8xf32>
    %c2_65 = arith.constant 2 : index
    %c2_66 = arith.constant 2 : index
    %c0_67 = arith.constant 0 : index
    %93 = vector.load %arg11[%c2_65, %c2_66, %c0_67] : memref<10x18x8xf32, #tpu.memory_space<vmem>>, vector<8x16x8xf32>
    %94 = vector.shape_cast %93 : vector<8x16x8xf32> to vector<128x8xf32>
    %95 = vector.extract_strided_slice %43 {offsets = [8, 0, 0], sizes = [1, 8, 8], strides = [1, 1, 1]} : vector<9x8x8xf32> to vector<1x8x8xf32>
    %96 = vector.shape_cast %95 : vector<1x8x8xf32> to vector<8x8xf32>
    %cst_68 = arith.constant dense<0.000000e+00> : vector<128x8xf32>
    %97 = tpu.matmul %94, %96, %cst_68 {dimension_numbers = #tpu.dot_dimension_numbers<[1], [0], [0], [1], [0, 0, 1, 1], [], []>} : vector<128x8xf32>, vector<8x8xf32>, vector<128x8xf32> -> vector<128x8xf32>
    %98 = arith.addf %92, %97 : vector<128x8xf32>
    %c0_69 = arith.constant 0 : index
    %c0_70 = arith.constant 0 : index
    %99 = vector.load %arg8[%c0_69, %c0_70] : memref<1x8xf32, #tpu.memory_space<vmem>>, vector<1x8xf32>
    %100 = vector.broadcast %99 : vector<1x8xf32> to vector<128x8xf32>
    %101 = arith.addf %98, %100 : vector<128x8xf32>
    %cst_71 = arith.constant dense<0.000000e+00> : vector<8xf32>
    %102 = vector.multi_reduction <add>, %101, %cst_71 [0] : vector<128x8xf32> to vector<8xf32>
    %103 = vector.shape_cast %102 : vector<8xf32> to vector<1x8xf32>
    %c0_72 = arith.constant 0 : index
    %c0_73 = arith.constant 0 : index
    %c0_74 = arith.constant 0 : index
    %c0_75 = arith.constant 0 : index
    %104 = vector.load %arg10[%c0_72, %c0_73, %c0_74, %c0_75] : memref<1x1x2x8xf32, #tpu.memory_space<vmem>>, vector<1x1x1x8xf32>
    %105 = vector.shape_cast %104 : vector<1x1x1x8xf32> to vector<1x8xf32>
    %106 = vector.shape_cast %103 : vector<1x8xf32> to vector<1x1x1x8xf32>
    tpu.vector_store %arg10[%c0_72, %c0_73, %c0_74, %c0_75], %106 {strides = array<i32>} : memref<1x1x2x8xf32, #tpu.memory_space<vmem>>, vector<1x1x1x8xf32>,
    %107 = arith.mulf %101, %101 : vector<128x8xf32>
    %cst_76 = arith.constant dense<0.000000e+00> : vector<8xf32>
    %108 = vector.multi_reduction <add>, %107, %cst_76 [0] : vector<128x8xf32> to vector<8xf32>
    %109 = vector.shape_cast %108 : vector<8xf32> to vector<1x8xf32>
    %c0_77 = arith.constant 0 : index
    %c0_78 = arith.constant 0 : index
    %c1_79 = arith.constant 1 : index
    %c0_80 = arith.constant 0 : index
    %110 = vector.load %arg10[%c0_77, %c0_78, %c1_79, %c0_80] : memref<1x1x2x8xf32, #tpu.memory_space<vmem>>, vector<1x1x1x8xf32>
    %111 = vector.shape_cast %110 : vector<1x1x1x8xf32> to vector<1x8xf32>
    %112 = vector.shape_cast %109 : vector<1x8xf32> to vector<1x1x1x8xf32>
    tpu.vector_store %arg10[%c0_77, %c0_78, %c1_79, %c0_80], %112 {strides = array<i32>} : memref<1x1x2x8xf32, #tpu.memory_space<vmem>>, vector<1x1x1x8xf32>,
    %113 = vector.shape_cast %101 : vector<128x8xf32> to vector<8x16x8xf32>
    %c0_81 = arith.constant 0 : index
    %c0_82 = arith.constant 0 : index
    %c0_83 = arith.constant 0 : index
    %c0_84 = arith.constant 0 : index
    %114 = vector.load %arg9[%c0_81, %c0_82, %c0_83, %c0_84] : memref<1x8x16x8xf32, #tpu.memory_space<vmem>>, vector<1x8x16x8xf32>
    %115 = vector.shape_cast %114 : vector<1x8x16x8xf32> to vector<8x16x8xf32>
    %116 = vector.shape_cast %113 : vector<8x16x8xf32> to vector<1x8x16x8xf32>
    tpu.vector_store %arg9[%c0_81, %c0_82, %c0_83, %c0_84], %116 {strides = array<i32>} : memref<1x8x16x8xf32, #tpu.memory_space<vmem>>, vector<1x8x16x8xf32>,
    return
  }
  func.func @transform_0(%arg0: i32, %arg1: i32) -> (i32, i32, i32, i32) {
    %c0_i32 = arith.constant 0 : i32
    %c0_i32_0 = arith.constant 0 : i32
    %c0_i32_1 = arith.constant 0 : i32
    return %arg0, %arg1, %c0_i32, %c0_i32_0 : i32, i32, i32, i32
  }
  func.func @transform_1(%arg0: i32, %arg1: i32) -> (i32, i32, i32, i32) {
    %c8_i32 = arith.constant 8 : i32
    %0 = arith.muli %arg1, %c8_i32 : i32
    %c1_i32 = arith.constant 1 : i32
    %1 = arith.subi %0, %c1_i32 : i32
    %c0_i32 = arith.constant 0 : i32
    %2 = arith.maxsi %1, %c0_i32 : i32
    %c0_i32_0 = arith.constant 0 : i32
    %c0_i32_1 = arith.constant 0 : i32
    %c0_i32_2 = arith.constant 0 : i32
    return %arg0, %2, %c0_i32_0, %c0_i32_1 : i32, i32, i32, i32
  }
  func.func @transform_2(%arg0: i32, %arg1: i32) -> (i32, i32, i32, i32) {
    %c8_i32 = arith.constant 8 : i32
    %0 = arith.muli %arg1, %c8_i32 : i32
    %c8_i32_0 = arith.constant 8 : i32
    %1 = arith.addi %0, %c8_i32_0 : i32
    %c15_i32 = arith.constant 15 : i32
    %2 = arith.minsi %1, %c15_i32 : i32
    %c0_i32 = arith.constant 0 : i32
    %c0_i32_1 = arith.constant 0 : i32
    %c0_i32_2 = arith.constant 0 : i32
    return %arg0, %2, %c0_i32, %c0_i32_1 : i32, i32, i32, i32
  }
  func.func @transform_3(%arg0: i32, %arg1: i32) -> (i32, i32) {
    %c0_i32 = arith.constant 0 : i32
    %c0_i32_0 = arith.constant 0 : i32
    %c0_i32_1 = arith.constant 0 : i32
    return %c0_i32, %c0_i32_0 : i32, i32
  }
  func.func @transform_4(%arg0: i32, %arg1: i32) -> (i32, i32) {
    %c0_i32 = arith.constant 0 : i32
    %c0_i32_0 = arith.constant 0 : i32
    %c0_i32_1 = arith.constant 0 : i32
    return %c0_i32, %c0_i32_0 : i32, i32
  }
  func.func @transform_5(%arg0: i32, %arg1: i32) -> (i32, i32, i32) {
    %c0_i32 = arith.constant 0 : i32
    %c0_i32_0 = arith.constant 0 : i32
    %c0_i32_1 = arith.constant 0 : i32
    %c0_i32_2 = arith.constant 0 : i32
    return %c0_i32, %c0_i32_0, %c0_i32_1 : i32, i32, i32
  }
  func.func @transform_6(%arg0: i32, %arg1: i32) -> (i32, i32) {
    %c0_i32 = arith.constant 0 : i32
    %c0_i32_0 = arith.constant 0 : i32
    %c0_i32_1 = arith.constant 0 : i32
    return %c0_i32, %c0_i32_0 : i32, i32
  }
  func.func @transform_7(%arg0: i32, %arg1: i32) -> (i32, i32, i32, i32) {
    %c0_i32 = arith.constant 0 : i32
    %c0_i32_0 = arith.constant 0 : i32
    %c0_i32_1 = arith.constant 0 : i32
    return %arg0, %arg1, %c0_i32, %c0_i32_0 : i32, i32, i32, i32
  }
  func.func @transform_8(%arg0: i32, %arg1: i32) -> (i32, i32, i32, i32) {
    %c0_i32 = arith.constant 0 : i32
    %c0_i32_0 = arith.constant 0 : i32
    %c0_i32_1 = arith.constant 0 : i32
    return %arg0, %arg1, %c0_i32, %c0_i32_0 : i32, i32, i32, i32
  }
}

module attributes {stable_mosaic.version = 11 : i64} {
  func.func @_bn_relu_kernel(%arg0: i32, %arg1: i32, %arg2: memref<1x8x128xf32, #tpu.memory_space<vmem>>, %arg3: memref<1x128xf32, #tpu.memory_space<vmem>>, %arg4: memref<1x128xf32, #tpu.memory_space<vmem>>, %arg5: memref<1x8x128xf32, #tpu.memory_space<vmem>>) attributes {dimension_semantics = [#tpu.dimension_semantics<parallel>, #tpu.dimension_semantics<parallel>], iteration_bounds = array<i64: 2, 2>, scalar_prefetch = 0 : i64, scratch_operands = 0 : i64, tpu.core_type = #tpu.core_type<tc>, window_params = [{transform_indices = @transform_0, window_bounds = array<i64: 1, 8, 128>}, {pipeline_mode = #tpu.pipeline_mode<synchronous>, transform_indices = @transform_1, window_bounds = array<i64: 1, 128>}, {pipeline_mode = #tpu.pipeline_mode<synchronous>, transform_indices = @transform_2, window_bounds = array<i64: 1, 128>}, {transform_indices = @transform_3, window_bounds = array<i64: 1, 8, 128>}]} {
    %c0 = arith.constant 0 : index
    %c0_0 = arith.constant 0 : index
    %c0_1 = arith.constant 0 : index
    %0 = vector.load %arg2[%c0, %c0_0, %c0_1] : memref<1x8x128xf32, #tpu.memory_space<vmem>>, vector<1x8x128xf32>
    %c0_2 = arith.constant 0 : index
    %c0_3 = arith.constant 0 : index
    %1 = vector.load %arg3[%c0_2, %c0_3] : memref<1x128xf32, #tpu.memory_space<vmem>>, vector<1x128xf32>
    %2 = vector.shape_cast %1 : vector<1x128xf32> to vector<1x1x128xf32>
    %3 = vector.broadcast %2 : vector<1x1x128xf32> to vector<1x8x128xf32>
    %4 = arith.mulf %0, %3 : vector<1x8x128xf32>
    %c0_4 = arith.constant 0 : index
    %c0_5 = arith.constant 0 : index
    %5 = vector.load %arg4[%c0_4, %c0_5] : memref<1x128xf32, #tpu.memory_space<vmem>>, vector<1x128xf32>
    %6 = vector.shape_cast %5 : vector<1x128xf32> to vector<1x1x128xf32>
    %7 = vector.broadcast %6 : vector<1x1x128xf32> to vector<1x8x128xf32>
    %8 = arith.addf %4, %7 : vector<1x8x128xf32>
    %cst = arith.constant 0.000000e+00 : f32
    %9 = vector.broadcast %cst : f32 to vector<1x8x128xf32>
    %10 = arith.maximumf %8, %9 : vector<1x8x128xf32>
    %c0_6 = arith.constant 0 : index
    %c0_7 = arith.constant 0 : index
    %c0_8 = arith.constant 0 : index
    %11 = vector.load %arg5[%c0_6, %c0_7, %c0_8] : memref<1x8x128xf32, #tpu.memory_space<vmem>>, vector<1x8x128xf32>
    tpu.vector_store %arg5[%c0_6, %c0_7, %c0_8], %10 {strides = array<i32>} : memref<1x8x128xf32, #tpu.memory_space<vmem>>, vector<1x8x128xf32>,
    return
  }
  func.func @transform_0(%arg0: i32, %arg1: i32) -> (i32, i32, i32) {
    %c0_i32 = arith.constant 0 : i32
    %c0_i32_0 = arith.constant 0 : i32
    return %arg0, %arg1, %c0_i32 : i32, i32, i32
  }
  func.func @transform_1(%arg0: i32, %arg1: i32) -> (i32, i32) {
    %c0_i32 = arith.constant 0 : i32
    %c0_i32_0 = arith.constant 0 : i32
    %c0_i32_1 = arith.constant 0 : i32
    return %c0_i32, %c0_i32_0 : i32, i32
  }
  func.func @transform_2(%arg0: i32, %arg1: i32) -> (i32, i32) {
    %c0_i32 = arith.constant 0 : i32
    %c0_i32_0 = arith.constant 0 : i32
    %c0_i32_1 = arith.constant 0 : i32
    return %c0_i32, %c0_i32_0 : i32, i32
  }
  func.func @transform_3(%arg0: i32, %arg1: i32) -> (i32, i32, i32) {
    %c0_i32 = arith.constant 0 : i32
    %c0_i32_0 = arith.constant 0 : i32
    return %arg0, %arg1, %c0_i32 : i32, i32, i32
  }
}

</mosaic_0001>

<llo_original>
// kernel: up_forward.4
$region0: #{up_forward.4}
  #allocation0 [shape = 'u32[]', space=smem, size = 0x4, offset = 0x4, fixed_abs, tag = 'smem constant byte address 0x4 - core index']
  #allocation1 [shape = 'u32[144,128]{1,0:T(1,128)}', space=vmem, size = 0x12000, scoped, tag = 'internal scratch']
  %s0 = inlined_call_operand.vmem [shape: f32[2,8,32], index: 0, kind: input, shape index: {}]
  %s1 = inlined_call_operand.vmem [shape: f32[16,8], index: 1, kind: input, shape index: {}]
  %s2 = inlined_call_operand.vmem [shape: f32[32,64], index: 2, kind: input, shape index: {}]
  %s3 = inlined_call_operand.vmem [shape: f32[2,16,64], index: 3, kind: output, shape index: {}]
  %s4 = sld [smem:[#allocation0]]
  $region45: #{up_forward.4} parent=0
    _
  %s6 = ssub.s32 1, %s4
  %s7 = scalar_select 0, %s6, %s4
  loop: start=0, step=1, limit=4
  $region2: #{up_forward.4} parent=0 // loop_pre_header
    _
  $region3: #{up_forward.4} parent=0 // loop_header
    %s9 = sphi 0, %s13
    %p10 = scmp.ge.s32.totalorder %s9, 4
    %s19 = sphi 0, %s21
    %s22 = sphi 0, %s19
    %s23 = sphi 0, %s22
    %s39 = sphi 0, %s23
    %s43 = sphi 0, %s43
    %s45 = sphi 0, %s43
    %s46 = sphi 0, %s45
    %s60 = sphi 0, %s46
    %s64 = sphi 0, %s64
    %s66 = sphi 0, %s64
    %s67 = sphi 0, %s66
    %s81 = sphi 0, %s67
    %s87 = sphi 0, %s89
    %s90 = sphi 0, %s87
    %s91 = sphi 0, %s90
    %s107 = sphi 0, %s91
  $region4: #{up_forward.4} parent=0 // loop_header_branch
    %12 = sbr.rel (%p10) target = $region8
  $region5: #{up_forward.4} parent=0 // loop_body
    %s14 = ssub.s32 %s9, 1
    %s15 = ssub.s32 %s9, 2
    %s16 = sadd.s32 %s9, 1
    %s17 = ssub.s32 %s9, %s16
    %p18 = scmp.eq.s32.totalorder %s17, 0
    %s20 = sadd.s32 %s19, 1
    %s21 = scalar_select %p18, %s19, %s20
    %p24 = pneg %p18
    %p25 = scmp.eq.s32.totalorder %s9, 1
    %p26 = por %p24, %p25
    %p27 = scmp.ne.s32.totalorder %s19, %s22
    %p28 = scmp.eq.s32.totalorder %s9, 0
    %p29 = por %p27, %p28
    %p30 = scmp.ne.s32.totalorder %s19, %s22
    %p31 = scmp.eq.s32.totalorder %s14, 1
    %p32 = por %p30, %p31
    %p33 = scmp.ne.s32.totalorder %s22, %s23
    %p34 = scmp.eq.s32.totalorder %s14, 0
    %p35 = por %p33, %p34
    %p36 = scmp.ne.s32.totalorder %s22, %s23
    %p37 = scmp.eq.s32.totalorder %s15, 1
    %p38 = por %p36, %p37
    %p40 = scmp.ne.s32.totalorder %s23, %s39
    %p41 = scmp.eq.s32.totalorder %s15, 0
    %p42 = por %p40, %p41
    %s44 = sadd.s32 %s43, 1
    %p47 = scmp.eq.s32.totalorder %s9, 1
    %p48 = scmp.ne.s32.totalorder %s43, %s45
    %p49 = scmp.eq.s32.totalorder %s9, 0
    %p50 = por %p48, %p49
    %p51 = scmp.ne.s32.totalorder %s43, %s45
    %p52 = scmp.eq.s32.totalorder %s14, 1
    %p53 = por %p51, %p52
    %p54 = scmp.ne.s32.totalorder %s45, %s46
    %p55 = scmp.eq.s32.totalorder %s14, 0
    %p56 = por %p54, %p55
    %p57 = scmp.ne.s32.totalorder %s45, %s46
    %p58 = scmp.eq.s32.totalorder %s15, 1
    %p59 = por %p57, %p58
    %p61 = scmp.ne.s32.totalorder %s46, %s60
    %p62 = scmp.eq.s32.totalorder %s15, 0
    %p63 = por %p61, %p62
    %s65 = sadd.s32 %s64, 1
    %p68 = scmp.eq.s32.totalorder %s9, 1
    %p69 = scmp.ne.s32.totalorder %s64, %s66
    %p70 = scmp.eq.s32.totalorder %s9, 0
    %p71 = por %p69, %p70
    %p72 = scmp.ne.s32.totalorder %s64, %s66
    %p73 = scmp.eq.s32.totalorder %s14, 1
    %p74 = por %p72, %p73
    %p75 = scmp.ne.s32.totalorder %s66, %s67
    %p76 = scmp.eq.s32.totalorder %s14, 0
    %p77 = por %p75, %p76
    %p78 = scmp.ne.s32.totalorder %s66, %s67
    %p79 = scmp.eq.s32.totalorder %s15, 1
    %p80 = por %p78, %p79
    %p82 = scmp.ne.s32.totalorder %s67, %s81
    %p83 = scmp.eq.s32.totalorder %s15, 0
    %p84 = por %p82, %p83
    %s85 = ssub.s32 %s9, %s16
    %p86 = scmp.eq.s32.totalorder %s85, 0
    %s88 = sadd.s32 %s87, 1
    %s89 = scalar_select %p86, %s87, %s88
    %p92 = pneg %p86
    %p93 = scmp.eq.s32.totalorder %s9, 1
    %p94 = por %p92, %p93
    %p95 = scmp.ne.s32.totalorder %s87, %s90
    %p96 = scmp.eq.s32.totalorder %s9, 0
    %p97 = por %p95, %p96
    %p98 = scmp.ne.s32.totalorder %s87, %s90
    %p99 = scmp.eq.s32.totalorder %s14, 1
    %p100 = por %p98, %p99
    %p101 = scmp.ne.s32.totalorder %s90, %s91
    %p102 = scmp.eq.s32.totalorder %s14, 0
    %p103 = por %p101, %p102
    %p104 = scmp.ne.s32.totalorder %s90, %s91
    %p105 = scmp.eq.s32.totalorder %s15, 1
    %p106 = por %p104, %p105
    %p108 = scmp.ne.s32.totalorder %s91, %s107
    %p109 = scmp.eq.s32.totalorder %s15, 0
    %p110 = por %p108, %p109
    %p111 = scmp.le.s32.totalorder 1, %s9
    %p112 = scmp.lt.s32.totalorder %s9, 3
    %p113 = pnand %p111, %p112
    %p114 = pneg %p113
    // Predicated region
    $region9: #{up_forward.4} parent=5 // pred_check
      _
    $region10: #{up_forward.4} parent=5 // pred_check_branch
      %116 = sbr.rel (%p113) target = $region12
    $region11: #{up_forward.4} parent=5 // pred_region
      %s117 = ssub.s32 %s9, 1
      // Predicated region
      $region13: #{up_forward.4} parent=11 // pred_check
        %p118 = pneg %p56
      $region14: #{up_forward.4} parent=11 // pred_check_branch
        %120 = sbr.rel (%p118) target = $region16
      $region15: #{up_forward.4} parent=11 // pred_region
        _
      $region16: #{up_forward.4} parent=11 // pred_fallthru
        _
      // Predicated region
      $region17: #{up_forward.4} parent=11 // pred_check
        %p121 = pneg %p77
      $region18: #{up_forward.4} parent=11 // pred_check_branch
        %123 = sbr.rel (%p121) target = $region20
      $region19: #{up_forward.4} parent=11 // pred_region
        _
      $region20: #{up_forward.4} parent=11 // pred_fallthru
        _
    $region12: #{up_forward.4} parent=5 // pred_fallthru
      _
    %p124 = scmp.lt.s32.totalorder %s9, 2
    // Predicated region
    $region21: #{up_forward.4} parent=5 // pred_check
      %p125 = pneg %p124
    $region22: #{up_forward.4} parent=5 // pred_check_branch
      %127 = sbr.rel (%p125) target = $region24
    $region23: #{up_forward.4} parent=5 // pred_region
      // Predicated region
      $region25: #{up_forward.4} parent=23 // pred_check
        %p128 = pneg %p29
      $region26: #{up_forward.4} parent=23 // pred_check_branch
        %130 = sbr.rel (%p128) target = $region28
      $region27: #{up_forward.4} parent=23 // pred_region
        %p131 = scmp.lt.s32.totalorder %s9, 1
        %s132 = scalar_select %p131, %s9, 1
        %s133 = smul.addr %s132, 8
        %s134 = scalar_lea.vmem %s0, %s133
      $region28: #{up_forward.4} parent=23 // pred_fallthru
        _
    $region24: #{up_forward.4} parent=5 // pred_fallthru
      _
    %p135 = scmp.le.s32.totalorder 1, %s9
    %p136 = scmp.lt.s32.totalorder %s9, 3
    %p137 = pnand %p135, %p136
    %p138 = pneg %p137
    // Predicated region
    $region29: #{up_forward.4} parent=5 // pred_check
      _
    $region30: #{up_forward.4} parent=5 // pred_check_branch
      %140 = sbr.rel (%p137) target = $region32
    $region31: #{up_forward.4} parent=5 // pred_region
      %s141 = ssub.s32 %s9, 1
      %p142 = scmp.lt.s32.totalorder %s14, 1
      %s143 = scalar_select %p142, %s14, 1
      %s144 = smul.addr %s143, 8
      %s145 = scalar_lea.vmem %s0, %s144
      %p146 = pneg %p35
      %p147 = pneg %p32
      %p148 = pneg %p56
      %p149 = pneg %p53
      %p150 = pneg %p77
      %p151 = pneg %p74
      %p152 = pneg %p103
      %p153 = pneg %p100
      %p154 = scmp.lt.s32.totalorder %s14, 1
      %s155 = scalar_select %p154, %s14, 1
      %s156 = smul.addr %s155, 2
      %s157 = smul.addr %s156, 8
      %s158 = scalar_lea.vmem %s3, %s157
      %p159 = scmp.lt.s32.totalorder %s14, 1
      %s160 = scalar_select %p159, %s14, 1
      %s161 = smul.addr %s160, 8
      %s162 = scalar_lea.vmem %s0, %s161
      %p163 = scmp.lt.s32.totalorder %s14, 1
      %s164 = scalar_select %p163, %s14, 1
      %s165 = smul.addr %s164, 2
      %s166 = smul.addr %s165, 8
      %s167 = scalar_lea.vmem %s3, %s166
      %v168 = vld [vmem:[%s1] sm:$0xff]
      %v169 = vld [vmem:[%s1 + $0x8] sm:$0xff]
      %v170 = vld [vmem:[%s162] sm:$0xff]
      %vm171 = vcmask 64512
      %v173 = vsel %vm171, %v168, 0
      %v176 = vsel %vm171, %v169, 0
      %178 = vmatprep.subr.mxu0 0.0
      %179 = vmatpush1.msra.mxu0 %v170
      %180 = vmatprep.subr.mxu0 0.0
      %181 = vmatpush1.msra.mxu0 0.0
      %182 = vmatprep.subr.mxu0 0.0
      %183 = vmatpush1.msra.mxu0 0.0
      %184 = vmatprep.subr.mxu0 0.0
      %185 = vmatpush1.msra.mxu0 0.0
      %186 = vmatprep.subr.mxu0 0.0
      %187 = vmatpush1.msra.mxu0 0.0
      %188 = vmatprep.subr.mxu0 0.0
      %189 = vmatpush1.msra.mxu0 0.0
      %190 = vmatprep.subr.mxu0 0.0
      %191 = vmatpush1.msra.mxu0 0.0
      %192 = vmatprep.subr.mxu0 0.0
      %193 = vmatpush1.msra.mxu0 0.0
      %194 = vmatprep.subr.mxu0 0.0
      %195 = vmatpush1.msra.mxu0 0.0
      %196 = vmatprep.subr.mxu0 0.0
      %197 = vmatpush1.msra.mxu0 0.0
      %198 = vmatprep.subr.mxu0 0.0
      %199 = vmatpush1.msra.mxu0 0.0
      %200 = vmatprep.subr.mxu0 0.0
      %201 = vmatpush1.msra.mxu0 0.0
      %202 = vmatprep.subr.mxu0 0.0
      %203 = vmatpush1.msra.mxu0 0.0
      %204 = vmatprep.subr.mxu0 0.0
      %205 = vmatpush1.msra.mxu0 0.0
      %206 = vmatprep.subr.mxu0 0.0
      %207 = vmatpush1.msra.mxu0 0.0
      %208 = vmatprep.subr.mxu0 0.0
      %209 = vmatpush1.msra.mxu0 0.0
      %210 = vmatprep.subr.mxu0 0.0
      %211 = vmatpush1.msra.mxu0 0.0
      %212 = vmatprep.subr.mxu0 0.0
      %213 = vmatpush1.msra.mxu0 0.0
      %214 = vmatprep.subr.mxu0 0.0
      %215 = vmatpush1.msra.mxu0 0.0
      %216 = vmatprep.subr.mxu0 0.0
      %217 = vmatpush1.msra.mxu0 0.0
      %218 = vmatprep.subr.mxu0 0.0
      %219 = vmatpush1.msra.mxu0 0.0
      %220 = vmatprep.subr.mxu0 0.0
      %221 = vmatpush1.msra.mxu0 0.0
      %222 = vmatprep.subr.mxu0 0.0
      %223 = vmatpush1.msra.mxu0 0.0
      %224 = vmatprep.subr.mxu0 0.0
      %225 = vmatpush1.msra.mxu0 0.0
      %226 = vmatprep.subr.mxu0 0.0
      %227 = vmatpush1.msra.mxu0 0.0
      %228 = vmatprep.subr.mxu0 0.0
      %229 = vmatpush1.msra.mxu0 0.0
      %230 = vmatprep.subr.mxu0 0.0
      %231 = vmatpush1.msra.mxu0 0.0
      %232 = vmatprep.subr.mxu0 0.0
      %233 = vmatpush1.msra.mxu0 0.0
      %234 = vmatprep.subr.mxu0 0.0
      %235 = vmatpush1.msra.mxu0 0.0
      %236 = vmatprep.subr.mxu0 0.0
      %237 = vmatpush1.msra.mxu0 0.0
      %238 = vmatprep.subr.mxu0 0.0
      %239 = vmatpush1.msra.mxu0 0.0
      %240 = vmatprep.subr.mxu0 0.0
      %241 = vmatpush1.msra.mxu0 0.0
      %242 = vmatprep.mubr.f32.mxu0 0.0
      %243 = vmatmul.mubr.f32.gmra.mrb[0].mxu0 %v173
      %v244 = vpop.f32.mrb[0].mxu0
      %v245 = vadd.f32 0.0, %v244
      %v246 = vpop.f32.mrb[0].mxu0
      %247 = vmatprep.mubr.f32.mxu0 0.0
      %248 = vmatmul.mubr.f32.gmra.mrb[0].mxu0 %v176
      %v249 = vpop.f32.mrb[0].mxu0
      %v250 = vadd.f32 0.0, %v249
      %v251 = vpop.f32.mrb[0].mxu0
      %252 = vdwg.mxu0
      %v253 = vld [vmem:[%s2] sm:$0xff]
      %v254 = vld [vmem:[%s2 + $0x8] sm:$0xff]
      %v255 = vld [vmem:[%s2 + $0x10] sm:$0xff]
      %v256 = vld [vmem:[%s2 + $0x18] sm:$0xff]
      %vm257 = vcmask 261120
      %v259 = vsel %vm257, %v245, 0
      %v262 = vsel %vm257, %v250, 0
      %264 = vmatprep.subr.mxu0 0.0
      %265 = vmatpush1.msra.mxu0 %v253
      %266 = vmatprep.subr.mxu0 0.0
      %267 = vmatpush1.msra.mxu0 %v254
      %268 = vmatprep.subr.mxu0 0.0
      %269 = vmatpush1.msra.mxu0 %v255
      %270 = vmatprep.subr.mxu0 0.0
      %271 = vmatpush1.msra.mxu0 %v256
      %272 = vmatprep.subr.mxu0 0.0
      %273 = vmatpush1.msra.mxu0 0.0
      %274 = vmatprep.subr.mxu0 0.0
      %275 = vmatpush1.msra.mxu0 0.0
      %276 = vmatprep.subr.mxu0 0.0
      %277 = vmatpush1.msra.mxu0 0.0
      %278 = vmatprep.subr.mxu0 0.0
      %279 = vmatpush1.msra.mxu0 0.0
      %280 = vmatprep.subr.mxu0 0.0
      %281 = vmatpush1.msra.mxu0 0.0
      %282 = vmatprep.subr.mxu0 0.0
      %283 = vmatpush1.msra.mxu0 0.0
      %284 = vmatprep.subr.mxu0 0.0
      %285 = vmatpush1.msra.mxu0 0.0
      %286 = vmatprep.subr.mxu0 0.0
      %287 = vmatpush1.msra.mxu0 0.0
      %288 = vmatprep.subr.mxu0 0.0
      %289 = vmatpush1.msra.mxu0 0.0
      %290 = vmatprep.subr.mxu0 0.0
      %291 = vmatpush1.msra.mxu0 0.0
      %292 = vmatprep.subr.mxu0 0.0
      %293 = vmatpush1.msra.mxu0 0.0
      %294 = vmatprep.subr.mxu0 0.0
      %295 = vmatpush1.msra.mxu0 0.0
      %296 = vmatprep.subr.mxu0 0.0
      %297 = vmatpush1.msra.mxu0 0.0
      %298 = vmatprep.subr.mxu0 0.0
      %299 = vmatpush1.msra.mxu0 0.0
      %300 = vmatprep.subr.mxu0 0.0
      %301 = vmatpush1.msra.mxu0 0.0
      %302 = vmatprep.subr.mxu0 0.0
      %303 = vmatpush1.msra.mxu0 0.0
      %304 = vmatprep.subr.mxu0 0.0
      %305 = vmatpush1.msra.mxu0 0.0
      %306 = vmatprep.subr.mxu0 0.0
      %307 = vmatpush1.msra.mxu0 0.0
      %308 = vmatprep.subr.mxu0 0.0
      %309 = vmatpush1.msra.mxu0 0.0
      %310 = vmatprep.subr.mxu0 0.0
      %311 = vmatpush1.msra.mxu0 0.0
      %312 = vmatprep.subr.mxu0 0.0
      %313 = vmatpush1.msra.mxu0 0.0
      %314 = vmatprep.subr.mxu0 0.0
      %315 = vmatpush1.msra.mxu0 0.0
      %316 = vmatprep.subr.mxu0 0.0
      %317 = vmatpush1.msra.mxu0 0.0
      %318 = vmatprep.subr.mxu0 0.0
      %319 = vmatpush1.msra.mxu0 0.0
      %320 = vmatprep.subr.mxu0 0.0
      %321 = vmatpush1.msra.mxu0 0.0
      %322 = vmatprep.subr.mxu0 0.0
      %323 = vmatpush1.msra.mxu0 0.0
      %324 = vmatprep.subr.mxu0 0.0
      %325 = vmatpush1.msra.mxu0 0.0
      %326 = vmatprep.subr.mxu0 0.0
      %327 = vmatpush1.msra.mxu0 0.0
      %328 = vmatprep.mubr.f32.mxu0 0.0
      %329 = vmatmul.mubr.f32.gmra.mrb[0].mxu0 %v259
      %v330 = vpop.f32.mrb[0].mxu0
      %v331 = vadd.f32 0.0, %v330
      %v332 = vpop.f32.mrb[0].mxu0
      %333 = vmatprep.mubr.f32.mxu0 0.0
      %334 = vmatmul.mubr.f32.gmra.mrb[0].mxu0 %v262
      %v335 = vpop.f32.mrb[0].mxu0
      %v336 = vadd.f32 0.0, %v335
      %v337 = vpop.f32.mrb[0].mxu0
      %338 = vdwg.mxu0
      %vm339 = vcmask 523264
      %340 = vst.msk [vmem:[%s167] sm:$0xff] %vm339, %v331
      %341 = vst.msk [vmem:[%s167 + $0x8] sm:$0xff] %vm339, %v336
      %p342 = scmp.lt.s32.totalorder %s14, 1
      %s343 = scalar_select %p342, %s14, 1
      %s344 = smul.addr %s343, 2
      %s345 = smul.addr %s344, 8
      %s346 = scalar_lea.vmem %s3, %s345
      // Predicated region
      $region33: #{up_forward.4} parent=31 // pred_check
        %p347 = pneg %p100
      $region34: #{up_forward.4} parent=31 // pred_check_branch
        %349 = sbr.rel (%p347) target = $region36
      $region35: #{up_forward.4} parent=31 // pred_region
        _
      $region36: #{up_forward.4} parent=31 // pred_fallthru
        _
    $region32: #{up_forward.4} parent=5 // pred_fallthru
      _
    %p350 = scmp.le.s32.totalorder 2, %s9
    // Predicated region
    $region37: #{up_forward.4} parent=5 // pred_check
      %p351 = pneg %p350
    $region38: #{up_forward.4} parent=5 // pred_check_branch
      %353 = sbr.rel (%p351) target = $region40
    $region39: #{up_forward.4} parent=5 // pred_region
      %s354 = ssub.s32 %s9, 2
      // Predicated region
      $region41: #{up_forward.4} parent=39 // pred_check
        %p355 = pneg %p106
      $region42: #{up_forward.4} parent=39 // pred_check_branch
        %357 = sbr.rel (%p355) target = $region44
      $region43: #{up_forward.4} parent=39 // pred_region
        %p358 = scmp.lt.s32.totalorder %s15, 1
        %s359 = scalar_select %p358, %s15, 1
        %s360 = smul.addr %s359, 2
        %s361 = smul.addr %s360, 8
        %s362 = scalar_lea.vmem %s3, %s361
      $region44: #{up_forward.4} parent=39 // pred_fallthru
        _
    $region40: #{up_forward.4} parent=5 // pred_fallthru
      _
  $region6: #{up_forward.4} parent=0 // loop_footer
    %s13 = sadd.s32 1, %s9
  $region7: #{up_forward.4} parent=0 // loop_footer_branch
    %8 = sbr.rel target = $region3
  $region8: #{up_forward.4} parent=0 // loop_exit
    _

// kernel: tile.18
$region0: #{tile.18}
  #allocation0 [shape = 's32[1]{0}', space=sflag, size = 0x4, scoped, tag = 'scoped memory for tile.18']
  %s0 = inlined_call_operand.vmem [shape: f32[8], index: 0, kind: input, shape index: {}]
  %s1 = inlined_call_operand.vmem [shape: f32[16,8], index: 1, kind: output, shape index: {}]
  // Predicated region
  $region2: #{tile.18} parent=0 // pred_check
    _
  $region3: #{tile.18} parent=0 // pred_check_branch
    %3 = sbr.rel (0) target = $region5
  $region4: #{tile.18} parent=0 // pred_region
    _
  $region5: #{tile.18} parent=0 // pred_fallthru
    _
  %v4 = vld [vmem:[%s0] ss:$0 sm:$0xff]
  %5 = vst [vmem:[%s1] sm:$0xff] %v4
  %s6 = scalar_lea.vmem %s1, 8
  %7 = vst [vmem:[%s6] sm:$0xff] %v4

// kernel: tile.19
$region0: #{tile.19}
  %s0 = inlined_call_operand.vmem [shape: f32[16,8], index: 0, kind: input, shape index: {}]
  %s1 = inlined_call_operand.vmem [shape: f32[1,128], index: 1, kind: output, shape index: {}]
  $region1: #{tile.19} parent=0
    #allocation0 [shape = 'u8[4096]{0}', space=vmem, size = 0x1000, scoped, tag = 'scoped mem for output reshape']
    %v2 = vld [vmem:[%s0] sm:$0x1]
    %vm3 = vcmask 64512
    %4 = vst.msk [vmem:[#allocation0] sm:$0x1] %vm3, %v2
    %s5 = scalar_lea.vmem %s0, 15
    %v6 = vld [vmem:[%s5] sm:$0x1]
    %7 = vrot.lane.b32.xlu0 %v6, 120
    %v8 = vpop.permute.xlu0 %7
    %vm9 = vcmask 1048512
    %10 = vst.msk [vmem:[#allocation0] sm:$0x1] %vm9, %v8
    %s11 = scalar_lea.vmem %s0, 14
    %v12 = vld [vmem:[%s11] sm:$0x1]
    %13 = vrot.lane.b32.xlu0 %v12, 112
    %v14 = vpop.permute.xlu0 %13
    %vm15 = vcmask 982912
    %16 = vst.msk [vmem:[#allocation0] sm:$0x1] %vm15, %v14
    %s17 = scalar_lea.vmem %s0, 13
    %v18 = vld [vmem:[%s17] sm:$0x1]
    %19 = vrot.lane.b32.xlu0 %v18, 104
    %v20 = vpop.permute.xlu0 %19
    %vm21 = vcmask 917312
    %22 = vst.msk [vmem:[#allocation0] sm:$0x1] %vm21, %v20
    %s23 = scalar_lea.vmem %s0, 12
    %v24 = vld [vmem:[%s23] sm:$0x1]
    %25 = vrot.lane.b32.xlu0 %v24, 96
    %v26 = vpop.permute.xlu0 %25
    %vm27 = vcmask 851712
    %28 = vst.msk [vmem:[#allocation0] sm:$0x1] %vm27, %v26
    %s29 = scalar_lea.vmem %s0, 11
    %v30 = vld [vmem:[%s29] sm:$0x1]
    %31 = vrot.lane.b32.xlu0 %v30, 88
    %v32 = vpop.permute.xlu0 %31
    %vm33 = vcmask 786112
    %34 = vst.msk [vmem:[#allocation0] sm:$0x1] %vm33, %v32
    %s35 = scalar_lea.vmem %s0, 10
    %v36 = vld [vmem:[%s35] sm:$0x1]
    %37 = vrot.lane.b32.xlu0 %v36, 80
    %v38 = vpop.permute.xlu0 %37
    %vm39 = vcmask 720512
    %40 = vst.msk [vmem:[#allocation0] sm:$0x1] %vm39, %v38
    %s41 = scalar_lea.vmem %s0, 9
    %v42 = vld [vmem:[%s41] sm:$0x1]
    %43 = vrot.lane.b32.xlu0 %v42, 72
    %v44 = vpop.permute.xlu0 %43
    %vm45 = vcmask 654912
    %46 = vst.msk [vmem:[#allocation0] sm:$0x1] %vm45, %v44
    %s47 = scalar_lea.vmem %s0, 8
    %v48 = vld [vmem:[%s47] sm:$0x1]
    %49 = vrot.lane.b32.xlu0 %v48, 64
    %v50 = vpop.permute.xlu0 %49
    %vm51 = vcmask 589312
    %52 = vst.msk [vmem:[#allocation0] sm:$0x1] %vm51, %v50
    %s53 = scalar_lea.vmem %s0, 7
    %v54 = vld [vmem:[%s53] sm:$0x1]
    %55 = vrot.lane.b32.xlu0 %v54, 56
    %v56 = vpop.permute.xlu0 %55
    %vm57 = vcmask 523712
    %58 = vst.msk [vmem:[#allocation0] sm:$0x1] %vm57, %v56
    %s59 = scalar_lea.vmem %s0, 6
    %v60 = vld [vmem:[%s59] sm:$0x1]
    %61 = vrot.lane.b32.xlu0 %v60, 48
    %v62 = vpop.permute.xlu0 %61
    %vm63 = vcmask 458112
    %64 = vst.msk [vmem:[#allocation0] sm:$0x1] %vm63, %v62
    %s65 = scalar_lea.vmem %s0, 5
    %v66 = vld [vmem:[%s65] sm:$0x1]
    %67 = vrot.lane.b32.xlu0 %v66, 40
    %v68 = vpop.permute.xlu0 %67
    %vm69 = vcmask 392512
    %70 = vst.msk [vmem:[#allocation0] sm:$0x1] %vm69, %v68
    %s71 = scalar_lea.vmem %s0, 4
    %v72 = vld [vmem:[%s71] sm:$0x1]
    %73 = vrot.lane.b32.xlu0 %v72, 32
    %v74 = vpop.permute.xlu0 %73
    %vm75 = vcmask 326912
    %76 = vst.msk [vmem:[#allocation0] sm:$0x1] %vm75, %v74
    %s77 = scalar_lea.vmem %s0, 3
    %v78 = vld [vmem:[%s77] sm:$0x1]
    %79 = vrot.lane.b32.xlu0 %v78, 24
    %v80 = vpop.permute.xlu0 %79
    %vm81 = vcmask 261312
    %82 = vst.msk [vmem:[#allocation0] sm:$0x1] %vm81, %v80
    %s83 = scalar_lea.vmem %s0, 2
    %v84 = vld [vmem:[%s83] sm:$0x1]
    %85 = vrot.lane.b32.xlu0 %v84, 16
    %v86 = vpop.permute.xlu0 %85
    %vm87 = vcmask 195712
    %88 = vst.msk [vmem:[#allocation0] sm:$0x1] %vm87, %v86
    %s89 = scalar_lea.vmem %s0, 1
    %v90 = vld [vmem:[%s89] sm:$0x1]
    %91 = vrot.lane.b32.xlu0 %v90, 8
    %v92 = vpop.permute.xlu0 %91
    %vm93 = vcmask 130112
    %94 = vst.msk [vmem:[#allocation0] sm:$0x1] %vm93, %v92
    %s96 = sshllo.u32 0, 1
    %v98 = vld [vmem:[#allocation0] sm:%s96]
    %s99 = sshllo.u32 0, 1
    %100 = vst [vmem:[%s1] sm:%s99] %v98

// kernel: up_forward.7
$region0: #{up_forward.7}
  #allocation0 [shape = 'u32[]', space=smem, size = 0x4, offset = 0x4, fixed_abs, tag = 'smem constant byte address 0x4 - core index']
  #allocation1 [shape = 'u32[144,128]{1,0:T(1,128)}', space=vmem, size = 0x12000, scoped, tag = 'internal scratch']
  %s0 = inlined_call_operand.vmem [shape: f32[2,16,128], index: 0, kind: input, shape index: {}]
  %s1 = inlined_call_operand.vmem [shape: f32[1,128], index: 1, kind: input, shape index: {}]
  %s2 = inlined_call_operand.vmem [shape: f32[1,128], index: 2, kind: input, shape index: {}]
  %s3 = inlined_call_operand.vmem [shape: f32[2,16,128], index: 3, kind: output, shape index: {}]
  %s4 = sld [smem:[#allocation0]]
  $region45: #{up_forward.7} parent=0
    _
  %s6 = ssub.s32 1, %s4
  %s7 = scalar_select 0, %s6, %s4
  loop: start=0, step=1, limit=6
  $region2: #{up_forward.7} parent=0 // loop_pre_header
    _
  $region3: #{up_forward.7} parent=0 // loop_header
    %s9 = sphi 0, %s13
    %p10 = scmp.ge.s32.totalorder %s9, 6
    %s16 = sphi 0, %s28
    %s17 = sphi 0, %s24
    %s18 = sphi 0, %s16
    %s19 = sphi 0, %s17
    %s20 = sphi 0, %s18
    %s21 = sphi 0, %s19
    %s33 = sphi 0, %s35
    %s36 = sphi 0, %s33
    %s37 = sphi 0, %s36
    %s53 = sphi 0, %s37
    %s57 = sphi 0, %s57
    %s59 = sphi 0, %s57
    %s60 = sphi 0, %s59
    %s74 = sphi 0, %s60
    %s78 = sphi 0, %s78
    %s80 = sphi 0, %s78
    %s81 = sphi 0, %s80
    %s95 = sphi 0, %s81
    %s103 = sphi 0, %s105
    %s106 = sphi 0, %s103
    %s107 = sphi 0, %s106
    %s123 = sphi 0, %s107
  $region4: #{up_forward.7} parent=0 // loop_header_branch
    %12 = sbr.rel (%p10) target = $region8
  $region5: #{up_forward.7} parent=0 // loop_body
    %s14 = ssub.s32 %s9, 1
    %s15 = ssub.s32 %s9, 2
    %s22 = sadd.s32 1, %s17
    %p23 = scmp.ge.s32.totalorder %s22, 2
    %s24 = scalar_select %p23, 0, %s22
    %s25 = sadd.s32 1, %s16
    %s26 = scalar_select %p23, %s25, %s16
    %p27 = scmp.ge.s32.totalorder %s26, 2
    %s28 = scalar_select %p27, 0, %s26
    %s29 = ssub.s32 %s16, %s28
    %s30 = ssub.s32 %s17, %s24
    %s31 = sor.u32 %s29, %s30
    %p32 = scmp.eq.s32.totalorder %s31, 0
    %s34 = sadd.s32 %s33, 1
    %s35 = scalar_select %p32, %s33, %s34
    %p38 = pneg %p32
    %p39 = scmp.eq.s32.totalorder %s9, 3
    %p40 = por %p38, %p39
    %p41 = scmp.ne.s32.totalorder %s33, %s36
    %p42 = scmp.eq.s32.totalorder %s9, 0
    %p43 = por %p41, %p42
    %p44 = scmp.ne.s32.totalorder %s33, %s36
    %p45 = scmp.eq.s32.totalorder %s14, 3
    %p46 = por %p44, %p45
    %p47 = scmp.ne.s32.totalorder %s36, %s37
    %p48 = scmp.eq.s32.totalorder %s14, 0
    %p49 = por %p47, %p48
    %p50 = scmp.ne.s32.totalorder %s36, %s37
    %p51 = scmp.eq.s32.totalorder %s15, 3
    %p52 = por %p50, %p51
    %p54 = scmp.ne.s32.totalorder %s37, %s53
    %p55 = scmp.eq.s32.totalorder %s15, 0
    %p56 = por %p54, %p55
    %s58 = sadd.s32 %s57, 1
    %p61 = scmp.eq.s32.totalorder %s9, 3
    %p62 = scmp.ne.s32.totalorder %s57, %s59
    %p63 = scmp.eq.s32.totalorder %s9, 0
    %p64 = por %p62, %p63
    %p65 = scmp.ne.s32.totalorder %s57, %s59
    %p66 = scmp.eq.s32.totalorder %s14, 3
    %p67 = por %p65, %p66
    %p68 = scmp.ne.s32.totalorder %s59, %s60
    %p69 = scmp.eq.s32.totalorder %s14, 0
    %p70 = por %p68, %p69
    %p71 = scmp.ne.s32.totalorder %s59, %s60
    %p72 = scmp.eq.s32.totalorder %s15, 3
    %p73 = por %p71, %p72
    %p75 = scmp.ne.s32.totalorder %s60, %s74
    %p76 = scmp.eq.s32.totalorder %s15, 0
    %p77 = por %p75, %p76
    %s79 = sadd.s32 %s78, 1
    %p82 = scmp.eq.s32.totalorder %s9, 3
    %p83 = scmp.ne.s32.totalorder %s78, %s80
    %p84 = scmp.eq.s32.totalorder %s9, 0
    %p85 = por %p83, %p84
    %p86 = scmp.ne.s32.totalorder %s78, %s80
    %p87 = scmp.eq.s32.totalorder %s14, 3
    %p88 = por %p86, %p87
    %p89 = scmp.ne.s32.totalorder %s80, %s81
    %p90 = scmp.eq.s32.totalorder %s14, 0
    %p91 = por %p89, %p90
    %p92 = scmp.ne.s32.totalorder %s80, %s81
    %p93 = scmp.eq.s32.totalorder %s15, 3
    %p94 = por %p92, %p93
    %p96 = scmp.ne.s32.totalorder %s81, %s95
    %p97 = scmp.eq.s32.totalorder %s15, 0
    %p98 = por %p96, %p97
    %s99 = ssub.s32 %s16, %s28
    %s100 = ssub.s32 %s17, %s24
    %s101 = sor.u32 %s99, %s100
    %p102 = scmp.eq.s32.totalorder %s101, 0
    %s104 = sadd.s32 %s103, 1
    %s105 = scalar_select %p102, %s103, %s104
    %p108 = pneg %p102
    %p109 = scmp.eq.s32.totalorder %s9, 3
    %p110 = por %p108, %p109
    %p111 = scmp.ne.s32.totalorder %s103, %s106
    %p112 = scmp.eq.s32.totalorder %s9, 0
    %p113 = por %p111, %p112
    %p114 = scmp.ne.s32.totalorder %s103, %s106
    %p115 = scmp.eq.s32.totalorder %s14, 3
    %p116 = por %p114, %p115
    %p117 = scmp.ne.s32.totalorder %s106, %s107
    %p118 = scmp.eq.s32.totalorder %s14, 0
    %p119 = por %p117, %p118
    %p120 = scmp.ne.s32.totalorder %s106, %s107
    %p121 = scmp.eq.s32.totalorder %s15, 3
    %p122 = por %p120, %p121
    %p124 = scmp.ne.s32.totalorder %s107, %s123
    %p125 = scmp.eq.s32.totalorder %s15, 0
    %p126 = por %p124, %p125
    %p127 = scmp.le.s32.totalorder 1, %s9
    %p128 = scmp.lt.s32.totalorder %s9, 5
    %p129 = pnand %p127, %p128
    %p130 = pneg %p129
    // Predicated region
    $region9: #{up_forward.7} parent=5 // pred_check
      _
    $region10: #{up_forward.7} parent=5 // pred_check_branch
      %132 = sbr.rel (%p129) target = $region12
    $region11: #{up_forward.7} parent=5 // pred_region
      %s133 = ssub.s32 %s9, 1
      // Predicated region
      $region13: #{up_forward.7} parent=11 // pred_check
        %p134 = pneg %p70
      $region14: #{up_forward.7} parent=11 // pred_check_branch
        %136 = sbr.rel (%p134) target = $region16
      $region15: #{up_forward.7} parent=11 // pred_region
        _
      $region16: #{up_forward.7} parent=11 // pred_fallthru
        _
      // Predicated region
      $region17: #{up_forward.7} parent=11 // pred_check
        %p137 = pneg %p91
      $region18: #{up_forward.7} parent=11 // pred_check_branch
        %139 = sbr.rel (%p137) target = $region20
      $region19: #{up_forward.7} parent=11 // pred_region
        _
      $region20: #{up_forward.7} parent=11 // pred_fallthru
        _
    $region12: #{up_forward.7} parent=5 // pred_fallthru
      _
    %p140 = scmp.lt.s32.totalorder %s9, 4
    // Predicated region
    $region21: #{up_forward.7} parent=5 // pred_check
      %p141 = pneg %p140
    $region22: #{up_forward.7} parent=5 // pred_check_branch
      %143 = sbr.rel (%p141) target = $region24
    $region23: #{up_forward.7} parent=5 // pred_region
      // Predicated region
      $region25: #{up_forward.7} parent=23 // pred_check
        %p144 = pneg %p43
      $region26: #{up_forward.7} parent=23 // pred_check_branch
        %146 = sbr.rel (%p144) target = $region28
      $region27: #{up_forward.7} parent=23 // pred_region
        %p147 = scmp.lt.s32.totalorder %s16, 1
        %s148 = scalar_select %p147, %s16, 1
        %p149 = scmp.lt.s32.totalorder %s17, 1
        %s150 = scalar_select %p149, %s17, 1
        %s151 = smul.addr %s148, 2
        %s152 = sadd.s32 %s150, %s151
        %s153 = smul.addr %s152, 8
        %s154 = scalar_lea.vmem %s0, %s153
      $region28: #{up_forward.7} parent=23 // pred_fallthru
        _
    $region24: #{up_forward.7} parent=5 // pred_fallthru
      _
    %p155 = scmp.le.s32.totalorder 1, %s9
    %p156 = scmp.lt.s32.totalorder %s9, 5
    %p157 = pnand %p155, %p156
    %p158 = pneg %p157
    // Predicated region
    $region29: #{up_forward.7} parent=5 // pred_check
      _
    $region30: #{up_forward.7} parent=5 // pred_check_branch
      %160 = sbr.rel (%p157) target = $region32
    $region31: #{up_forward.7} parent=5 // pred_region
      %s161 = ssub.s32 %s9, 1
      %p162 = scmp.lt.s32.totalorder %s18, 1
      %s163 = scalar_select %p162, %s18, 1
      %p164 = scmp.lt.s32.totalorder %s19, 1
      %s165 = scalar_select %p164, %s19, 1
      %s166 = smul.addr %s163, 2
      %s167 = sadd.s32 %s165, %s166
      %s168 = smul.addr %s167, 8
      %s169 = scalar_lea.vmem %s0, %s168
      %p170 = pneg %p49
      %p171 = pneg %p46
      %p172 = pneg %p70
      %p173 = pneg %p67
      %p174 = pneg %p91
      %p175 = pneg %p88
      %p176 = pneg %p119
      %p177 = pneg %p116
      %p178 = scmp.lt.s32.totalorder %s18, 1
      %s179 = scalar_select %p178, %s18, 1
      %p180 = scmp.lt.s32.totalorder %s19, 1
      %s181 = scalar_select %p180, %s19, 1
      %s182 = smul.addr %s179, 2
      %s183 = sadd.s32 %s181, %s182
      %s184 = smul.addr %s183, 8
      %s185 = scalar_lea.vmem %s3, %s184
      %p186 = scmp.lt.s32.totalorder %s18, 1
      %s187 = scalar_select %p186, %s18, 1
      %p188 = scmp.lt.s32.totalorder %s19, 1
      %s189 = scalar_select %p188, %s19, 1
      %s190 = smul.addr %s187, 2
      %s191 = sadd.s32 %s189, %s190
      %s192 = smul.addr %s191, 8
      %s193 = scalar_lea.vmem %s0, %s192
      %p194 = scmp.lt.s32.totalorder %s18, 1
      %s195 = scalar_select %p194, %s18, 1
      %p196 = scmp.lt.s32.totalorder %s19, 1
      %s197 = scalar_select %p196, %s19, 1
      %s198 = smul.addr %s195, 2
      %s199 = sadd.s32 %s197, %s198
      %s200 = smul.addr %s199, 8
      %s201 = scalar_lea.vmem %s3, %s200
      %v202 = vld [vmem:[%s193] sm:$0xff]
      %v203 = vld [vmem:[%s1] sm:$0x1]
      %v205 = vlaneseq
      %v206 = vshrl.u32 %v205, 7
      %v207 = vsub.s32 0, %v206
      %v208 = vrot.slane %v203, %v207
      %v210 = vmul.f32 %v202, %v208
      %v211 = vld [vmem:[%s2] sm:$0x1]
      %v213 = vlaneseq
      %v214 = vshrl.u32 %v213, 7
      %v215 = vsub.s32 0, %v214
      %v216 = vrot.slane %v211, %v215
      %v218 = vadd.f32 %v210, %v216
      %v219 = vmax.f32 %v218, 0.0
      %220 = vst [vmem:[%s201] sm:$0xff] %v219
      %p221 = scmp.lt.s32.totalorder %s18, 1
      %s222 = scalar_select %p221, %s18, 1
      %p223 = scmp.lt.s32.totalorder %s19, 1
      %s224 = scalar_select %p223, %s19, 1
      %s225 = smul.addr %s222, 2
      %s226 = sadd.s32 %s224, %s225
      %s227 = smul.addr %s226, 8
      %s228 = scalar_lea.vmem %s3, %s227
      // Predicated region
      $region33: #{up_forward.7} parent=31 // pred_check
        %p229 = pneg %p116
      $region34: #{up_forward.7} parent=31 // pred_check_branch
        %231 = sbr.rel (%p229) target = $region36
      $region35: #{up_forward.7} parent=31 // pred_region
        _
      $region36: #{up_forward.7} parent=31 // pred_fallthru
        _
    $region32: #{up_forward.7} parent=5 // pred_fallthru
      _
    %p232 = scmp.le.s32.totalorder 2, %s9
    // Predicated region
    $region37: #{up_forward.7} parent=5 // pred_check
      %p233 = pneg %p232
    $region38: #{up_forward.7} parent=5 // pred_check_branch
      %235 = sbr.rel (%p233) target = $region40
    $region39: #{up_forward.7} parent=5 // pred_region
      %s236 = ssub.s32 %s9, 2
      // Predicated region
      $region41: #{up_forward.7} parent=39 // pred_check
        %p237 = pneg %p122
      $region42: #{up_forward.7} parent=39 // pred_check_branch
        %239 = sbr.rel (%p237) target = $region44
      $region43: #{up_forward.7} parent=39 // pred_region
        %p240 = scmp.lt.s32.totalorder %s20, 1
        %s241 = scalar_select %p240, %s20, 1
        %p242 = scmp.lt.s32.totalorder %s21, 1
        %s243 = scalar_select %p242, %s21, 1
        %s244 = smul.addr %s241, 2
        %s245 = sadd.s32 %s243, %s244
        %s246 = smul.addr %s245, 8
        %s247 = scalar_lea.vmem %s3, %s246
      $region44: #{up_forward.7} parent=39 // pred_fallthru
        _
    $region40: #{up_forward.7} parent=5 // pred_fallthru
      _
  $region6: #{up_forward.7} parent=0 // loop_footer
    %s13 = sadd.s32 1, %s9
  $region7: #{up_forward.7} parent=0 // loop_footer_branch
    %8 = sbr.rel target = $region3
  $region8: #{up_forward.7} parent=0 // loop_exit
    _

// kernel: up_forward.6
$region0: #{up_forward.6}
  #allocation0 [shape = 'u32[]', space=smem, size = 0x4, offset = 0x4, fixed_abs, tag = 'smem constant byte address 0x4 - core index']
  #allocation1 [shape = 'u32[144,128]{1,0:T(1,128)}', space=vmem, size = 0x12000, scoped, tag = 'internal scratch']
  #allocation2 [shape = 'f32[10,18,8]{2,1,0:T(8,128)}', space=vmem, size = 0x1e000, scoped, tag = 'scratch operand']
  %s0 = inlined_call_operand.vmem [shape: f32[2,16,16,8], index: 0, kind: input, shape index: {}, may-alias: {0,1,2}]
  %s1 = inlined_call_operand.vmem [shape: f32[2,16,16,8], index: 1, kind: input, shape index: {}, may-alias: {0,1,2}]
  %s2 = inlined_call_operand.vmem [shape: f32[2,16,16,8], index: 2, kind: input, shape index: {}, may-alias: {0,1,2}]
  %s3 = inlined_call_operand.vmem [shape: f32[1,8], index: 3, kind: input, shape index: {}]
  %s4 = inlined_call_operand.vmem [shape: f32[1,8], index: 4, kind: input, shape index: {}]
  %s5 = inlined_call_operand.vmem [shape: f32[9,8,8], index: 5, kind: input, shape index: {}]
  %s6 = inlined_call_operand.vmem [shape: f32[1,8], index: 6, kind: input, shape index: {}]
  %s7 = inlined_call_operand.vmem [shape: f32[2,16,16,8], index: 7, kind: output, shape index: {0}]
  %s8 = inlined_call_operand.vmem [shape: f32[2,2,2,8], index: 8, kind: output, shape index: {1}]
  %9 = xla_tuple %s7, %s8
  %s10 = sld [smem:[#allocation0]]
  $region69: #{up_forward.6} parent=0
    _
  %s12 = ssub.s32 1, %s10
  %s13 = scalar_select 0, %s12, %s10
  loop: start=0, step=1, limit=6
  $region2: #{up_forward.6} parent=0 // loop_pre_header
    _
  $region3: #{up_forward.6} parent=0 // loop_header
    %s15 = sphi 0, %s19
    %p16 = scmp.ge.s32.totalorder %s15, 6
    %s22 = sphi 0, %s34
    %s23 = sphi 0, %s30
    %s24 = sphi 0, %s22
    %s25 = sphi 0, %s23
    %s26 = sphi 0, %s24
    %s27 = sphi 0, %s25
    %s39 = sphi 0, %s41
    %s42 = sphi 0, %s39
    %s43 = sphi 0, %s42
    %s59 = sphi 0, %s43
    %s75 = sphi 0, %s77
    %s78 = sphi 0, %s75
    %s79 = sphi 0, %s78
    %s95 = sphi 0, %s79
    %s111 = sphi 0, %s113
    %s114 = sphi 0, %s111
    %s115 = sphi 0, %s114
    %s131 = sphi 0, %s115
    %s135 = sphi 0, %s135
    %s137 = sphi 0, %s135
    %s138 = sphi 0, %s137
    %s152 = sphi 0, %s138
    %s156 = sphi 0, %s156
    %s158 = sphi 0, %s156
    %s159 = sphi 0, %s158
    %s173 = sphi 0, %s159
    %s177 = sphi 0, %s177
    %s179 = sphi 0, %s177
    %s180 = sphi 0, %s179
    %s194 = sphi 0, %s180
    %s198 = sphi 0, %s198
    %s200 = sphi 0, %s198
    %s201 = sphi 0, %s200
    %s215 = sphi 0, %s201
    %s223 = sphi 0, %s225
    %s226 = sphi 0, %s223
    %s227 = sphi 0, %s226
    %s243 = sphi 0, %s227
    %s251 = sphi 0, %s253
    %s254 = sphi 0, %s251
    %s255 = sphi 0, %s254
    %s271 = sphi 0, %s255
  $region4: #{up_forward.6} parent=0 // loop_header_branch
    %18 = sbr.rel (%p16) target = $region8
  $region5: #{up_forward.6} parent=0 // loop_body
    %s20 = ssub.s32 %s15, 1
    %s21 = ssub.s32 %s15, 2
    %s28 = sadd.s32 1, %s23
    %p29 = scmp.ge.s32.totalorder %s28, 2
    %s30 = scalar_select %p29, 0, %s28
    %s31 = sadd.s32 1, %s22
    %s32 = scalar_select %p29, %s31, %s22
    %p33 = scmp.ge.s32.totalorder %s32, 2
    %s34 = scalar_select %p33, 0, %s32
    %s35 = ssub.s32 %s22, %s34
    %s36 = ssub.s32 %s23, %s30
    %s37 = sor.u32 %s35, %s36
    %p38 = scmp.eq.s32.totalorder %s37, 0
    %s40 = sadd.s32 %s39, 1
    %s41 = scalar_select %p38, %s39, %s40
    %p44 = pneg %p38
    %p45 = scmp.eq.s32.totalorder %s15, 3
    %p46 = por %p44, %p45
    %p47 = scmp.ne.s32.totalorder %s39, %s42
    %p48 = scmp.eq.s32.totalorder %s15, 0
    %p49 = por %p47, %p48
    %p50 = scmp.ne.s32.totalorder %s39, %s42
    %p51 = scmp.eq.s32.totalorder %s20, 3
    %p52 = por %p50, %p51
    %p53 = scmp.ne.s32.totalorder %s42, %s43
    %p54 = scmp.eq.s32.totalorder %s20, 0
    %p55 = por %p53, %p54
    %p56 = scmp.ne.s32.totalorder %s42, %s43
    %p57 = scmp.eq.s32.totalorder %s21, 3
    %p58 = por %p56, %p57
    %p60 = scmp.ne.s32.totalorder %s43, %s59
    %p61 = scmp.eq.s32.totalorder %s21, 0
    %p62 = por %p60, %p61
    %s63 = smul.u32 %s23, 8
    %s64 = ssub.s32 %s63, 1
    %p65 = scmp.gt.s32.totalorder %s64, 0
    %s66 = scalar_select %p65, %s64, 0
    %s67 = smul.u32 %s30, 8
    %s68 = ssub.s32 %s67, 1
    %p69 = scmp.gt.s32.totalorder %s68, 0
    %s70 = scalar_select %p69, %s68, 0
    %s71 = ssub.s32 %s22, %s34
    %s72 = ssub.s32 %s66, %s70
    %s73 = sor.u32 %s71, %s72
    %p74 = scmp.eq.s32.totalorder %s73, 0
    %s76 = sadd.s32 %s75, 1
    %s77 = scalar_select %p74, %s75, %s76
    %p80 = pneg %p74
    %p81 = scmp.eq.s32.totalorder %s15, 3
    %p82 = por %p80, %p81
    %p83 = scmp.ne.s32.totalorder %s75, %s78
    %p84 = scmp.eq.s32.totalorder %s15, 0
    %p85 = por %p83, %p84
    %p86 = scmp.ne.s32.totalorder %s75, %s78
    %p87 = scmp.eq.s32.totalorder %s20, 3
    %p88 = por %p86, %p87
    %p89 = scmp.ne.s32.totalorder %s78, %s79
    %p90 = scmp.eq.s32.totalorder %s20, 0
    %p91 = por %p89, %p90
    %p92 = scmp.ne.s32.totalorder %s78, %s79
    %p93 = scmp.eq.s32.totalorder %s21, 3
    %p94 = por %p92, %p93
    %p96 = scmp.ne.s32.totalorder %s79, %s95
    %p97 = scmp.eq.s32.totalorder %s21, 0
    %p98 = por %p96, %p97
    %s99 = smul.u32 %s23, 8
    %s100 = sadd.s32 %s99, 8
    %p101 = scmp.lt.s32.totalorder %s100, 15
    %s102 = scalar_select %p101, %s100, 15
    %s103 = smul.u32 %s30, 8
    %s104 = sadd.s32 %s103, 8
    %p105 = scmp.lt.s32.totalorder %s104, 15
    %s106 = scalar_select %p105, %s104, 15
    %s107 = ssub.s32 %s22, %s34
    %s108 = ssub.s32 %s102, %s106
    %s109 = sor.u32 %s107, %s108
    %p110 = scmp.eq.s32.totalorder %s109, 0
    %s112 = sadd.s32 %s111, 1
    %s113 = scalar_select %p110, %s111, %s112
    %p116 = pneg %p110
    %p117 = scmp.eq.s32.totalorder %s15, 3
    %p118 = por %p116, %p117
    %p119 = scmp.ne.s32.totalorder %s111, %s114
    %p120 = scmp.eq.s32.totalorder %s15, 0
    %p121 = por %p119, %p120
    %p122 = scmp.ne.s32.totalorder %s111, %s114
    %p123 = scmp.eq.s32.totalorder %s20, 3
    %p124 = por %p122, %p123
    %p125 = scmp.ne.s32.totalorder %s114, %s115
    %p126 = scmp.eq.s32.totalorder %s20, 0
    %p127 = por %p125, %p126
    %p128 = scmp.ne.s32.totalorder %s114, %s115
    %p129 = scmp.eq.s32.totalorder %s21, 3
    %p130 = por %p128, %p129
    %p132 = scmp.ne.s32.totalorder %s115, %s131
    %p133 = scmp.eq.s32.totalorder %s21, 0
    %p134 = por %p132, %p133
    %s136 = sadd.s32 %s135, 1
    %p139 = scmp.eq.s32.totalorder %s15, 3
    %p140 = scmp.ne.s32.totalorder %s135, %s137
    %p141 = scmp.eq.s32.totalorder %s15, 0
    %p142 = por %p140, %p141
    %p143 = scmp.ne.s32.totalorder %s135, %s137
    %p144 = scmp.eq.s32.totalorder %s20, 3
    %p145 = por %p143, %p144
    %p146 = scmp.ne.s32.totalorder %s137, %s138
    %p147 = scmp.eq.s32.totalorder %s20, 0
    %p148 = por %p146, %p147
    %p149 = scmp.ne.s32.totalorder %s137, %s138
    %p150 = scmp.eq.s32.totalorder %s21, 3
    %p151 = por %p149, %p150
    %p153 = scmp.ne.s32.totalorder %s138, %s152
    %p154 = scmp.eq.s32.totalorder %s21, 0
    %p155 = por %p153, %p154
    %s157 = sadd.s32 %s156, 1
    %p160 = scmp.eq.s32.totalorder %s15, 3
    %p161 = scmp.ne.s32.totalorder %s156, %s158
    %p162 = scmp.eq.s32.totalorder %s15, 0
    %p163 = por %p161, %p162
    %p164 = scmp.ne.s32.totalorder %s156, %s158
    %p165 = scmp.eq.s32.totalorder %s20, 3
    %p166 = por %p164, %p165
    %p167 = scmp.ne.s32.totalorder %s158, %s159
    %p168 = scmp.eq.s32.totalorder %s20, 0
    %p169 = por %p167, %p168
    %p170 = scmp.ne.s32.totalorder %s158, %s159
    %p171 = scmp.eq.s32.totalorder %s21, 3
    %p172 = por %p170, %p171
    %p174 = scmp.ne.s32.totalorder %s159, %s173
    %p175 = scmp.eq.s32.totalorder %s21, 0
    %p176 = por %p174, %p175
    %s178 = sadd.s32 %s177, 1
    %p181 = scmp.eq.s32.totalorder %s15, 3
    %p182 = scmp.ne.s32.totalorder %s177, %s179
    %p183 = scmp.eq.s32.totalorder %s15, 0
    %p184 = por %p182, %p183
    %p185 = scmp.ne.s32.totalorder %s177, %s179
    %p186 = scmp.eq.s32.totalorder %s20, 3
    %p187 = por %p185, %p186
    %p188 = scmp.ne.s32.totalorder %s179, %s180
    %p189 = scmp.eq.s32.totalorder %s20, 0
    %p190 = por %p188, %p189
    %p191 = scmp.ne.s32.totalorder %s179, %s180
    %p192 = scmp.eq.s32.totalorder %s21, 3
    %p193 = por %p191, %p192
    %p195 = scmp.ne.s32.totalorder %s180, %s194
    %p196 = scmp.eq.s32.totalorder %s21, 0
    %p197 = por %p195, %p196
    %s199 = sadd.s32 %s198, 1
    %p202 = scmp.eq.s32.totalorder %s15, 3
    %p203 = scmp.ne.s32.totalorder %s198, %s200
    %p204 = scmp.eq.s32.totalorder %s15, 0
    %p205 = por %p203, %p204
    %p206 = scmp.ne.s32.totalorder %s198, %s200
    %p207 = scmp.eq.s32.totalorder %s20, 3
    %p208 = por %p206, %p207
    %p209 = scmp.ne.s32.totalorder %s200, %s201
    %p210 = scmp.eq.s32.totalorder %s20, 0
    %p211 = por %p209, %p210
    %p212 = scmp.ne.s32.totalorder %s200, %s201
    %p213 = scmp.eq.s32.totalorder %s21, 3
    %p214 = por %p212, %p213
    %p216 = scmp.ne.s32.totalorder %s201, %s215
    %p217 = scmp.eq.s32.totalorder %s21, 0
    %p218 = por %p216, %p217
    %s219 = ssub.s32 %s22, %s34
    %s220 = ssub.s32 %s23, %s30
    %s221 = sor.u32 %s219, %s220
    %p222 = scmp.eq.s32.totalorder %s221, 0
    %s224 = sadd.s32 %s223, 1
    %s225 = scalar_select %p222, %s223, %s224
    %p228 = pneg %p222
    %p229 = scmp.eq.s32.totalorder %s15, 3
    %p230 = por %p228, %p229
    %p231 = scmp.ne.s32.totalorder %s223, %s226
    %p232 = scmp.eq.s32.totalorder %s15, 0
    %p233 = por %p231, %p232
    %p234 = scmp.ne.s32.totalorder %s223, %s226
    %p235 = scmp.eq.s32.totalorder %s20, 3
    %p236 = por %p234, %p235
    %p237 = scmp.ne.s32.totalorder %s226, %s227
    %p238 = scmp.eq.s32.totalorder %s20, 0
    %p239 = por %p237, %p238
    %p240 = scmp.ne.s32.totalorder %s226, %s227
    %p241 = scmp.eq.s32.totalorder %s21, 3
    %p242 = por %p240, %p241
    %p244 = scmp.ne.s32.totalorder %s227, %s243
    %p245 = scmp.eq.s32.totalorder %s21, 0
    %p246 = por %p244, %p245
    %s247 = ssub.s32 %s22, %s34
    %s248 = ssub.s32 %s23, %s30
    %s249 = sor.u32 %s247, %s248
    %p250 = scmp.eq.s32.totalorder %s249, 0
    %s252 = sadd.s32 %s251, 1
    %s253 = scalar_select %p250, %s251, %s252
    %p256 = pneg %p250
    %p257 = scmp.eq.s32.totalorder %s15, 3
    %p258 = por %p256, %p257
    %p259 = scmp.ne.s32.totalorder %s251, %s254
    %p260 = scmp.eq.s32.totalorder %s15, 0
    %p261 = por %p259, %p260
    %p262 = scmp.ne.s32.totalorder %s251, %s254
    %p263 = scmp.eq.s32.totalorder %s20, 3
    %p264 = por %p262, %p263
    %p265 = scmp.ne.s32.totalorder %s254, %s255
    %p266 = scmp.eq.s32.totalorder %s20, 0
    %p267 = por %p265, %p266
    %p268 = scmp.ne.s32.totalorder %s254, %s255
    %p269 = scmp.eq.s32.totalorder %s21, 3
    %p270 = por %p268, %p269
    %p272 = scmp.ne.s32.totalorder %s255, %s271
    %p273 = scmp.eq.s32.totalorder %s21, 0
    %p274 = por %p272, %p273
    %p275 = scmp.le.s32.totalorder 1, %s15
    %p276 = scmp.lt.s32.totalorder %s15, 5
    %p277 = pnand %p275, %p276
    %p278 = pneg %p277
    // Predicated region
    $region9: #{up_forward.6} parent=5 // pred_check
      _
    $region10: #{up_forward.6} parent=5 // pred_check_branch
      %280 = sbr.rel (%p277) target = $region12
    $region11: #{up_forward.6} parent=5 // pred_region
      %s281 = ssub.s32 %s15, 1
      // Predicated region
      $region13: #{up_forward.6} parent=11 // pred_check
        %p282 = pneg %p148
      $region14: #{up_forward.6} parent=11 // pred_check_branch
        %284 = sbr.rel (%p282) target = $region16
      $region15: #{up_forward.6} parent=11 // pred_region
        _
      $region16: #{up_forward.6} parent=11 // pred_fallthru
        _
      // Predicated region
      $region17: #{up_forward.6} parent=11 // pred_check
        %p285 = pneg %p169
      $region18: #{up_forward.6} parent=11 // pred_check_branch
        %287 = sbr.rel (%p285) target = $region20
      $region19: #{up_forward.6} parent=11 // pred_region
        _
      $region20: #{up_forward.6} parent=11 // pred_fallthru
        _
      // Predicated region
      $region21: #{up_forward.6} parent=11 // pred_check
        %p288 = pneg %p190
      $region22: #{up_forward.6} parent=11 // pred_check_branch
        %290 = sbr.rel (%p288) target = $region24
      $region23: #{up_forward.6} parent=11 // pred_region
        _
      $region24: #{up_forward.6} parent=11 // pred_fallthru
        _
      // Predicated region
      $region25: #{up_forward.6} parent=11 // pred_check
        %p291 = pneg %p211
      $region26: #{up_forward.6} parent=11 // pred_check_branch
        %293 = sbr.rel (%p291) target = $region28
      $region27: #{up_forward.6} parent=11 // pred_region
        _
      $region28: #{up_forward.6} parent=11 // pred_fallthru
        _
    $region12: #{up_forward.6} parent=5 // pred_fallthru
      _
    %p294 = scmp.lt.s32.totalorder %s15, 4
    // Predicated region
    $region29: #{up_forward.6} parent=5 // pred_check
      %p295 = pneg %p294
    $region30: #{up_forward.6} parent=5 // pred_check_branch
      %297 = sbr.rel (%p295) target = $region32
    $region31: #{up_forward.6} parent=5 // pred_region
      // Predicated region
      $region33: #{up_forward.6} parent=31 // pred_check
        %p298 = pneg %p49
      $region34: #{up_forward.6} parent=31 // pred_check_branch
        %300 = sbr.rel (%p298) target = $region36
      $region35: #{up_forward.6} parent=31 // pred_region
        %s301 = smul.u32 8, %s23
        %p302 = scmp.lt.s32.totalorder %s22, 1
        %s303 = scalar_select %p302, %s22, 1
        %p304 = scmp.lt.s32.totalorder %s301, 15
        %s305 = scalar_select %p304, %s301, 15
        %s306 = smul.addr %s305, 2
        %s307 = smul.addr %s303, 32
        %s308 = sadd.s32 %s306, %s307
        %s309 = smul.addr %s308, 8
        %s310 = scalar_lea.vmem %s0, %s309
        %s311 = smul.u32 8, %s23
      $region36: #{up_forward.6} parent=31 // pred_fallthru
        _
      // Predicated region
      $region37: #{up_forward.6} parent=31 // pred_check
        %p312 = pneg %p85
      $region38: #{up_forward.6} parent=31 // pred_check_branch
        %314 = sbr.rel (%p312) target = $region40
      $region39: #{up_forward.6} parent=31 // pred_region
        %s315 = smul.u32 %s23, 8
        %s316 = ssub.s32 %s315, 1
        %p317 = scmp.gt.s32.totalorder %s316, 0
        %s318 = scalar_select %p317, %s316, 0
        %p319 = scmp.lt.s32.totalorder %s22, 1
        %s320 = scalar_select %p319, %s22, 1
        %p321 = scmp.lt.s32.totalorder %s318, 15
        %s322 = scalar_select %p321, %s318, 15
        %s323 = smul.addr %s322, 2
        %s324 = smul.addr %s320, 32
        %s325 = sadd.s32 %s323, %s324
        %s326 = smul.addr %s325, 8
        %s327 = scalar_lea.vmem %s1, %s326
        %s328 = smul.u32 %s23, 8
        %s329 = ssub.s32 %s328, 1
        %p330 = scmp.gt.s32.totalorder %s329, 0
        %s331 = scalar_select %p330, %s329, 0
      $region40: #{up_forward.6} parent=31 // pred_fallthru
        _
      // Predicated region
      $region41: #{up_forward.6} parent=31 // pred_check
        %p332 = pneg %p121
      $region42: #{up_forward.6} parent=31 // pred_check_branch
        %334 = sbr.rel (%p332) target = $region44
      $region43: #{up_forward.6} parent=31 // pred_region
        %s335 = smul.u32 %s23, 8
        %s336 = sadd.s32 %s335, 8
        %p337 = scmp.lt.s32.totalorder %s336, 15
        %s338 = scalar_select %p337, %s336, 15
        %p339 = scmp.lt.s32.totalorder %s22, 1
        %s340 = scalar_select %p339, %s22, 1
        %p341 = scmp.lt.s32.totalorder %s338, 15
        %s342 = scalar_select %p341, %s338, 15
        %s343 = smul.addr %s342, 2
        %s344 = smul.addr %s340, 32
        %s345 = sadd.s32 %s343, %s344
        %s346 = smul.addr %s345, 8
        %s347 = scalar_lea.vmem %s2, %s346
        %s348 = smul.u32 %s23, 8
        %s349 = sadd.s32 %s348, 8
        %p350 = scmp.lt.s32.totalorder %s349, 15
        %s351 = scalar_select %p350, %s349, 15
      $region44: #{up_forward.6} parent=31 // pred_fallthru
        _
    $region32: #{up_forward.6} parent=5 // pred_fallthru
      _
    %p352 = scmp.le.s32.totalorder 1, %s15
    %p353 = scmp.lt.s32.totalorder %s15, 5
    %p354 = pnand %p352, %p353
    %p355 = pneg %p354
    // Predicated region
    $region45: #{up_forward.6} parent=5 // pred_check
      _
    $region46: #{up_forward.6} parent=5 // pred_check_branch
      %357 = sbr.rel (%p354) target = $region48
    $region47: #{up_forward.6} parent=5 // pred_region
      %s358 = ssub.s32 %s15, 1
      %s359 = smul.u32 8, %s25
      %p360 = scmp.lt.s32.totalorder %s24, 1
      %s361 = scalar_select %p360, %s24, 1
      %p362 = scmp.lt.s32.totalorder %s359, 15
      %s363 = scalar_select %p362, %s359, 15
      %s364 = smul.addr %s363, 2
      %s365 = smul.addr %s361, 32
      %s366 = sadd.s32 %s364, %s365
      %s367 = smul.addr %s366, 8
      %s368 = scalar_lea.vmem %s0, %s367
      %p369 = pneg %p55
      %p370 = pneg %p52
      %s371 = smul.u32 %s25, 8
      %s372 = ssub.s32 %s371, 1
      %p373 = scmp.gt.s32.totalorder %s372, 0
      %s374 = scalar_select %p373, %s372, 0
      %p375 = scmp.lt.s32.totalorder %s24, 1
      %s376 = scalar_select %p375, %s24, 1
      %p377 = scmp.lt.s32.totalorder %s374, 15
      %s378 = scalar_select %p377, %s374, 15
      %s379 = smul.addr %s378, 2
      %s380 = smul.addr %s376, 32
      %s381 = sadd.s32 %s379, %s380
      %s382 = smul.addr %s381, 8
      %s383 = scalar_lea.vmem %s1, %s382
      %p384 = pneg %p91
      %p385 = pneg %p88
      %s386 = smul.u32 %s25, 8
      %s387 = sadd.s32 %s386, 8
      %p388 = scmp.lt.s32.totalorder %s387, 15
      %s389 = scalar_select %p388, %s387, 15
      %p390 = scmp.lt.s32.totalorder %s24, 1
      %s391 = scalar_select %p390, %s24, 1
      %p392 = scmp.lt.s32.totalorder %s389, 15
      %s393 = scalar_select %p392, %s389, 15
      %s394 = smul.addr %s393, 2
      %s395 = smul.addr %s391, 32
      %s396 = sadd.s32 %s394, %s395
      %s397 = smul.addr %s396, 8
      %s398 = scalar_lea.vmem %s2, %s397
      %p399 = pneg %p127
      %p400 = pneg %p124
      %p401 = pneg %p148
      %p402 = pneg %p145
      %p403 = pneg %p169
      %p404 = pneg %p166
      %p405 = pneg %p190
      %p406 = pneg %p187
      %p407 = pneg %p211
      %p408 = pneg %p208
      %p409 = pneg %p239
      %p410 = pneg %p236
      %s411 = smul.u32 8, %s25
      %p412 = scmp.lt.s32.totalorder %s24, 1
      %s413 = scalar_select %p412, %s24, 1
      %p414 = scmp.lt.s32.totalorder %s411, 15
      %s415 = scalar_select %p414, %s411, 15
      %s416 = smul.addr %s415, 2
      %s417 = smul.addr %s413, 32
      %s418 = sadd.s32 %s416, %s417
      %s419 = smul.addr %s418, 8
      %s420 = scalar_lea.vmem %s7, %s419
      %p421 = pneg %p267
      %p422 = pneg %p264
      %p423 = scmp.lt.s32.totalorder %s24, 1
      %s424 = scalar_select %p423, %s24, 1
      %p425 = scmp.lt.s32.totalorder %s25, 1
      %s426 = scalar_select %p425, %s25, 1
      %s427 = smul.addr %s424, 2
      %s428 = sadd.s32 %s426, %s427
      %s429 = smul.addr %s428, 2
      %s430 = scalar_lea.vmem %s8, %s429
      %s431 = smul.u32 8, %s25
      %p432 = scmp.lt.s32.totalorder %s24, 1
      %s433 = scalar_select %p432, %s24, 1
      %p434 = scmp.lt.s32.totalorder %s431, 15
      %s435 = scalar_select %p434, %s431, 15
      %s436 = smul.addr %s435, 2
      %s437 = smul.addr %s433, 32
      %s438 = sadd.s32 %s436, %s437
      %s439 = smul.addr %s438, 8
      %s440 = scalar_lea.vmem %s0, %s439
      %s441 = smul.u32 8, %s25
      %s442 = smul.u32 %s25, 8
      %s443 = ssub.s32 %s442, 1
      %p444 = scmp.gt.s32.totalorder %s443, 0
      %s445 = scalar_select %p444, %s443, 0
      %p446 = scmp.lt.s32.totalorder %s24, 1
      %s447 = scalar_select %p446, %s24, 1
      %p448 = scmp.lt.s32.totalorder %s445, 15
      %s449 = scalar_select %p448, %s445, 15
      %s450 = smul.addr %s449, 2
      %s451 = smul.addr %s447, 32
      %s452 = sadd.s32 %s450, %s451
      %s453 = smul.addr %s452, 8
      %s454 = scalar_lea.vmem %s1, %s453
      %s455 = smul.u32 %s25, 8
      %s456 = ssub.s32 %s455, 1
      %p457 = scmp.gt.s32.totalorder %s456, 0
      %s458 = scalar_select %p457, %s456, 0
      %s459 = smul.u32 %s25, 8
      %s460 = sadd.s32 %s459, 8
      %p461 = scmp.lt.s32.totalorder %s460, 15
      %s462 = scalar_select %p461, %s460, 15
      %p463 = scmp.lt.s32.totalorder %s24, 1
      %s464 = scalar_select %p463, %s24, 1
      %p465 = scmp.lt.s32.totalorder %s462, 15
      %s466 = scalar_select %p465, %s462, 15
      %s467 = smul.addr %s466, 2
      %s468 = smul.addr %s464, 32
      %s469 = sadd.s32 %s467, %s468
      %s470 = smul.addr %s469, 8
      %s471 = scalar_lea.vmem %s2, %s470
      %s472 = smul.u32 %s25, 8
      %s473 = sadd.s32 %s472, 8
      %p474 = scmp.lt.s32.totalorder %s473, 15
      %s475 = scalar_select %p474, %s473, 15
      %s476 = smul.u32 8, %s25
      %p477 = scmp.lt.s32.totalorder %s24, 1
      %s478 = scalar_select %p477, %s24, 1
      %p479 = scmp.lt.s32.totalorder %s476, 15
      %s480 = scalar_select %p479, %s476, 15
      %s481 = smul.addr %s480, 2
      %s482 = smul.addr %s478, 32
      %s483 = sadd.s32 %s481, %s482
      %s484 = smul.addr %s483, 8
      %s485 = scalar_lea.vmem %s7, %s484
      %s486 = smul.u32 8, %s25
      %p487 = scmp.lt.s32.totalorder %s24, 1
      %s488 = scalar_select %p487, %s24, 1
      %p489 = scmp.lt.s32.totalorder %s25, 1
      %s490 = scalar_select %p489, %s25, 1
      %s491 = smul.addr %s488, 2
      %s492 = sadd.s32 %s490, %s491
      %s493 = smul.addr %s492, 2
      %s494 = scalar_lea.vmem %s8, %s493
      %v495 = vld [vmem:[%s3] sm:$0x1]
      %v496 = vld [vmem:[%s4] sm:$0x1]
      %vm497 = vcmask 64512
      %498 = vst.msk [vmem:[#allocation2] sm:$0xff] %vm497, 0.0
      %499 = vst.msk [vmem:[#allocation2 + $0x8] sm:$0xff] %vm497, 0.0
      %vm500 = vcmask 58368
      %501 = vst.msk [vmem:[#allocation2 + $0x10] sm:$0x3] %vm500, 0.0
      %502 = vst.msk [vmem:[#allocation2 + $0x18] sm:$0xff] %vm497, 0.0
      %503 = vst.msk [vmem:[#allocation2 + $0x20] sm:$0xff] %vm497, 0.0
      %504 = vst.msk [vmem:[#allocation2 + $0x28] sm:$0x3] %vm500, 0.0
      %505 = vst.msk [vmem:[#allocation2 + $0x30] sm:$0xff] %vm497, 0.0
      %506 = vst.msk [vmem:[#allocation2 + $0x38] sm:$0xff] %vm497, 0.0
      %507 = vst.msk [vmem:[#allocation2 + $0x40] sm:$0x3] %vm500, 0.0
      %508 = vst.msk [vmem:[#allocation2 + $0x48] sm:$0xff] %vm497, 0.0
      %509 = vst.msk [vmem:[#allocation2 + $0x50] sm:$0xff] %vm497, 0.0
      %510 = vst.msk [vmem:[#allocation2 + $0x58] sm:$0x3] %vm500, 0.0
      %511 = vst.msk [vmem:[#allocation2 + $0x60] sm:$0xff] %vm497, 0.0
      %512 = vst.msk [vmem:[#allocation2 + $0x68] sm:$0xff] %vm497, 0.0
      %513 = vst.msk [vmem:[#allocation2 + $0x70] sm:$0x3] %vm500, 0.0
      %514 = vst.msk [vmem:[#allocation2 + $0x78] sm:$0xff] %vm497, 0.0
      %515 = vst.msk [vmem:[#allocation2 + $0x80] sm:$0xff] %vm497, 0.0
      %516 = vst.msk [vmem:[#allocation2 + $0x88] sm:$0x3] %vm500, 0.0
      %517 = vst.msk [vmem:[#allocation2 + $0x90] sm:$0xff] %vm497, 0.0
      %518 = vst.msk [vmem:[#allocation2 + $0x98] sm:$0xff] %vm497, 0.0
      %519 = vst.msk [vmem:[#allocation2 + $0xa0] sm:$0x3] %vm500, 0.0
      %520 = vst.msk [vmem:[#allocation2 + $0xa8] sm:$0xff] %vm497, 0.0
      %521 = vst.msk [vmem:[#allocation2 + $0xb0] sm:$0xff] %vm497, 0.0
      %522 = vst.msk [vmem:[#allocation2 + $0xb8] sm:$0x3] %vm500, 0.0
      %523 = vst.msk [vmem:[#allocation2 + $0xc0] sm:$0xff] %vm497, 0.0
      %524 = vst.msk [vmem:[#allocation2 + $0xc8] sm:$0xff] %vm497, 0.0
      %525 = vst.msk [vmem:[#allocation2 + $0xd0] sm:$0x3] %vm500, 0.0
      %526 = vst.msk [vmem:[#allocation2 + $0xd8] sm:$0xff] %vm497, 0.0
      %527 = vst.msk [vmem:[#allocation2 + $0xe0] sm:$0xff] %vm497, 0.0
      %528 = vst.msk [vmem:[#allocation2 + $0xe8] sm:$0x3] %vm500, 0.0
      %v529 = vld [vmem:[%s440] sm:$0xff]
      %v530 = vld [vmem:[%s440 + $0x8] sm:$0xff]
      %v531 = vld [vmem:[%s440 + $0x10] sm:$0xff]
      %v532 = vld [vmem:[%s440 + $0x18] sm:$0xff]
      %v533 = vld [vmem:[%s440 + $0x20] sm:$0xff]
      %v534 = vld [vmem:[%s440 + $0x28] sm:$0xff]
      %v535 = vld [vmem:[%s440 + $0x30] sm:$0xff]
      %v536 = vld [vmem:[%s440 + $0x38] sm:$0xff]
      %v537 = vld [vmem:[%s440 + $0x40] sm:$0xff]
      %v538 = vld [vmem:[%s440 + $0x48] sm:$0xff]
      %v539 = vld [vmem:[%s440 + $0x50] sm:$0xff]
      %v540 = vld [vmem:[%s440 + $0x58] sm:$0xff]
      %v541 = vld [vmem:[%s440 + $0x60] sm:$0xff]
      %v542 = vld [vmem:[%s440 + $0x68] sm:$0xff]
      %v543 = vld [vmem:[%s440 + $0x70] sm:$0xff]
      %v544 = vld [vmem:[%s440 + $0x78] sm:$0xff]
      %v546 = vlaneseq
      %v547 = vshrl.u32 %v546, 7
      %v548 = vsub.s32 0, %v547
      %v549 = vrot.slane %v495, %v548
      %v551 = vmul.f32 %v529, %v549
      %v552 = vmul.f32 %v530, %v549
      %v553 = vmul.f32 %v531, %v549
      %v554 = vmul.f32 %v532, %v549
      %v555 = vmul.f32 %v533, %v549
      %v556 = vmul.f32 %v534, %v549
      %v557 = vmul.f32 %v535, %v549
      %v558 = vmul.f32 %v536, %v549
      %v559 = vmul.f32 %v537, %v549
      %v560 = vmul.f32 %v538, %v549
      %v561 = vmul.f32 %v539, %v549
      %v562 = vmul.f32 %v540, %v549
      %v563 = vmul.f32 %v541, %v549
      %v564 = vmul.f32 %v542, %v549
      %v565 = vmul.f32 %v543, %v549
      %v566 = vmul.f32 %v544, %v549
      %v568 = vlaneseq
      %v569 = vshrl.u32 %v568, 7
      %v570 = vsub.s32 0, %v569
      %v571 = vrot.slane %v496, %v570
      %v573 = vadd.f32 %v551, %v571
      %v574 = vadd.f32 %v552, %v571
      %v575 = vadd.f32 %v553, %v571
      %v576 = vadd.f32 %v554, %v571
      %v577 = vadd.f32 %v555, %v571
      %v578 = vadd.f32 %v556, %v571
      %v579 = vadd.f32 %v557, %v571
      %v580 = vadd.f32 %v558, %v571
      %v581 = vadd.f32 %v559, %v571
      %v582 = vadd.f32 %v560, %v571
      %v583 = vadd.f32 %v561, %v571
      %v584 = vadd.f32 %v562, %v571
      %v585 = vadd.f32 %v563, %v571
      %v586 = vadd.f32 %v564, %v571
      %v587 = vadd.f32 %v565, %v571
      %v588 = vadd.f32 %v566, %v571
      %v589 = vmax.f32 %v573, 0.0
      %v590 = vmax.f32 %v574, 0.0
      %v591 = vmax.f32 %v575, 0.0
      %v592 = vmax.f32 %v576, 0.0
      %v593 = vmax.f32 %v577, 0.0
      %v594 = vmax.f32 %v578, 0.0
      %v595 = vmax.f32 %v579, 0.0
      %v596 = vmax.f32 %v580, 0.0
      %v597 = vmax.f32 %v581, 0.0
      %v598 = vmax.f32 %v582, 0.0
      %v599 = vmax.f32 %v583, 0.0
      %v600 = vmax.f32 %v584, 0.0
      %v601 = vmax.f32 %v585, 0.0
      %v602 = vmax.f32 %v586, 0.0
      %v603 = vmax.f32 %v587, 0.0
      %v604 = vmax.f32 %v588, 0.0
      %s605 = scalar_lea.vmem [#allocation2], 24
      %606 = vst.msk [vmem:[%s605 + $0x1] sm:$0xff] %vm497, %v589
      %607 = vst.msk [vmem:[%s605 + $0x9] sm:$0xff] %vm497, %v590
      %608 = vst.msk [vmem:[%s605 + $0x19] sm:$0xff] %vm497, %v591
      %609 = vst.msk [vmem:[%s605 + $0x21] sm:$0xff] %vm497, %v592
      %610 = vst.msk [vmem:[%s605 + $0x31] sm:$0xff] %vm497, %v593
      %611 = vst.msk [vmem:[%s605 + $0x39] sm:$0xff] %vm497, %v594
      %612 = vst.msk [vmem:[%s605 + $0x49] sm:$0xff] %vm497, %v595
      %613 = vst.msk [vmem:[%s605 + $0x51] sm:$0xff] %vm497, %v596
      %614 = vst.msk [vmem:[%s605 + $0x61] sm:$0xff] %vm497, %v597
      %615 = vst.msk [vmem:[%s605 + $0x69] sm:$0xff] %vm497, %v598
      %616 = vst.msk [vmem:[%s605 + $0x79] sm:$0xff] %vm497, %v599
      %617 = vst.msk [vmem:[%s605 + $0x81] sm:$0xff] %vm497, %v600
      %618 = vst.msk [vmem:[%s605 + $0x91] sm:$0xff] %vm497, %v601
      %619 = vst.msk [vmem:[%s605 + $0x99] sm:$0xff] %vm497, %v602
      %620 = vst.msk [vmem:[%s605 + $0xa9] sm:$0xff] %vm497, %v603
      %621 = vst.msk [vmem:[%s605 + $0xb1] sm:$0xff] %vm497, %v604
      %p622 = scmp.gt.s32.totalorder %s25, 0
      %v623 = vld [vmem:[%s454] sm:$0xff]
      %v624 = vld [vmem:[%s454 + $0x8] sm:$0xff]
      %v625 = vmul.f32 %v623, %v549
      %v626 = vmul.f32 %v624, %v549
      %v627 = vadd.f32 %v625, %v571
      %v628 = vadd.f32 %v626, %v571
      %v629 = vmax.f32 %v627, 0.0
      %v630 = vmax.f32 %v628, 0.0
      %s631 = scalar_select %p622, 1, 0
      %v632 = vstv %s631
      %vm633 = vcmp.eq.s32.totalorder %v632, 1
      %v634 = vsel %vm633, %v629, 0.0
      %v635 = vsel %vm633, %v630, 0.0
      %636 = vst.msk [vmem:[#allocation2 + $0x1] sm:$0xff] %vm497, %v634
      %637 = vst.msk [vmem:[#allocation2 + $0x9] sm:$0xff] %vm497, %v635
      %p638 = scmp.lt.s32.totalorder %s25, 1
      %v639 = vld [vmem:[%s471] sm:$0xff]
      %v640 = vld [vmem:[%s471 + $0x8] sm:$0xff]
      %v641 = vmul.f32 %v639, %v549
      %v642 = vmul.f32 %v640, %v549
      %v643 = vadd.f32 %v641, %v571
      %v644 = vadd.f32 %v642, %v571
      %v645 = vmax.f32 %v643, 0.0
      %v646 = vmax.f32 %v644, 0.0
      %s647 = scalar_select %p638, 1, 0
      %v648 = vstv %s647
      %vm649 = vcmp.eq.s32.totalorder %v648, 1
      %v650 = vsel %vm649, %v645, 0.0
      %v651 = vsel %vm649, %v646, 0.0
      %s652 = scalar_lea.vmem [#allocation2], 216
      %653 = vst.msk [vmem:[%s652 + $0x1] sm:$0xff] %vm497, %v650
      %654 = vst.msk [vmem:[%s652 + $0x9] sm:$0xff] %vm497, %v651
      %v655 = vld [vmem:[%s5] sm:$0xff]
      %v656 = vld [vmem:[%s5 + $0x8] sm:$0xff]
      %v657 = vld [vmem:[%s5 + $0x10] sm:$0xff]
      %v658 = vld [vmem:[%s5 + $0x18] sm:$0xff]
      %v659 = vld [vmem:[%s5 + $0x20] sm:$0xff]
      %v660 = vld [vmem:[%s5 + $0x28] sm:$0xff]
      %v661 = vld [vmem:[%s5 + $0x30] sm:$0xff]
      %v662 = vld [vmem:[%s5 + $0x38] sm:$0xff]
      %v663 = vld [vmem:[%s5 + $0x40] sm:$0xff]
      %v664 = vld [vmem:[#allocation2] sm:$0xff]
      %v665 = vld [vmem:[#allocation2 + $0x8] sm:$0xff]
      %v666 = vld [vmem:[#allocation2 + $0x18] sm:$0xff]
      %v667 = vld [vmem:[#allocation2 + $0x20] sm:$0xff]
      %v668 = vld [vmem:[#allocation2 + $0x30] sm:$0xff]
      %v669 = vld [vmem:[#allocation2 + $0x38] sm:$0xff]
      %v670 = vld [vmem:[#allocation2 + $0x48] sm:$0xff]
      %v671 = vld [vmem:[#allocation2 + $0x50] sm:$0xff]
      %v672 = vld [vmem:[#allocation2 + $0x60] sm:$0xff]
      %v673 = vld [vmem:[#allocation2 + $0x68] sm:$0xff]
      %v674 = vld [vmem:[#allocation2 + $0x78] sm:$0xff]
      %v675 = vld [vmem:[#allocation2 + $0x80] sm:$0xff]
      %v676 = vld [vmem:[#allocation2 + $0x90] sm:$0xff]
      %v677 = vld [vmem:[#allocation2 + $0x98] sm:$0xff]
      %v678 = vld [vmem:[#allocation2 + $0xa8] sm:$0xff]
      %v679 = vld [vmem:[#allocation2 + $0xb0] sm:$0xff]
      %v680 = vld [vmem:[#allocation2 + $0x1] sm:$0xff]
      %v681 = vld [vmem:[#allocation2 + $0x9] sm:$0xff]
      %v682 = vld [vmem:[#allocation2 + $0x19] sm:$0xff]
      %v683 = vld [vmem:[#allocation2 + $0x21] sm:$0xff]
      %v684 = vld [vmem:[#allocation2 + $0x31] sm:$0xff]
      %v685 = vld [vmem:[#allocation2 + $0x39] sm:$0xff]
      %v686 = vld [vmem:[#allocation2 + $0x49] sm:$0xff]
      %v687 = vld [vmem:[#allocation2 + $0x51] sm:$0xff]
      %v688 = vld [vmem:[#allocation2 + $0x61] sm:$0xff]
      %v689 = vld [vmem:[#allocation2 + $0x69] sm:$0xff]
      %v690 = vld [vmem:[#allocation2 + $0x79] sm:$0xff]
      %v691 = vld [vmem:[#allocation2 + $0x81] sm:$0xff]
      %v692 = vld [vmem:[#allocation2 + $0x91] sm:$0xff]
      %v693 = vld [vmem:[#allocation2 + $0x99] sm:$0xff]
      %v694 = vld [vmem:[#allocation2 + $0xa9] sm:$0xff]
      %v695 = vld [vmem:[#allocation2 + $0xb1] sm:$0xff]
      %v697 = vsel %vm497, %v680, 0
      %v700 = vsel %vm497, %v681, 0
      %v703 = vsel %vm497, %v682, 0
      %v706 = vsel %vm497, %v683, 0
      %v709 = vsel %vm497, %v684, 0
      %v712 = vsel %vm497, %v685, 0
      %v715 = vsel %vm497, %v686, 0
      %v718 = vsel %vm497, %v687, 0
      %v721 = vsel %vm497, %v688, 0
      %v724 = vsel %vm497, %v689, 0
      %v727 = vsel %vm497, %v690, 0
      %v730 = vsel %vm497, %v691, 0
      %v733 = vsel %vm497, %v692, 0
      %v736 = vsel %vm497, %v693, 0
      %v739 = vsel %vm497, %v694, 0
      %v742 = vsel %vm497, %v695, 0
      %744 = vmatprep.subr.mxu0 0.0
      %745 = vmatpush1.msra.mxu0 %v656
      %746 = vmatprep.subr.mxu0 0.0
      %747 = vmatpush1.msra.mxu0 0.0
      %748 = vmatprep.subr.mxu0 0.0
      %749 = vmatpush1.msra.mxu0 0.0
      %750 = vmatprep.subr.mxu0 0.0
      %751 = vmatpush1.msra.mxu0 0.0
      %752 = vmatprep.subr.mxu0 0.0
      %753 = vmatpush1.msra.mxu0 0.0
      %754 = vmatprep.subr.mxu0 0.0
      %755 = vmatpush1.msra.mxu0 0.0
      %756 = vmatprep.subr.mxu0 0.0
      %757 = vmatpush1.msra.mxu0 0.0
      %758 = vmatprep.subr.mxu0 0.0
      %759 = vmatpush1.msra.mxu0 0.0
      %760 = vmatprep.subr.mxu0 0.0
      %761 = vmatpush1.msra.mxu0 0.0
      %762 = vmatprep.subr.mxu0 0.0
      %763 = vmatpush1.msra.mxu0 0.0
      %764 = vmatprep.subr.mxu0 0.0
      %765 = vmatpush1.msra.mxu0 0.0
      %766 = vmatprep.subr.mxu0 0.0
      %767 = vmatpush1.msra.mxu0 0.0
      %768 = vmatprep.subr.mxu0 0.0
      %769 = vmatpush1.msra.mxu0 0.0
      %770 = vmatprep.subr.mxu0 0.0
      %771 = vmatpush1.msra.mxu0 0.0
      %772 = vmatprep.subr.mxu0 0.0
      %773 = vmatpush1.msra.mxu0 0.0
      %774 = vmatprep.subr.mxu0 0.0
      %775 = vmatpush1.msra.mxu0 0.0
      %776 = vmatprep.subr.mxu0 0.0
      %777 = vmatpush1.msra.mxu0 0.0
      %778 = vmatprep.subr.mxu0 0.0
      %779 = vmatpush1.msra.mxu0 0.0
      %780 = vmatprep.subr.mxu0 0.0
      %781 = vmatpush1.msra.mxu0 0.0
      %782 = vmatprep.subr.mxu0 0.0
      %783 = vmatpush1.msra.mxu0 0.0
      %784 = vmatprep.subr.mxu0 0.0
      %785 = vmatpush1.msra.mxu0 0.0
      %786 = vmatprep.subr.mxu0 0.0
      %787 = vmatpush1.msra.mxu0 0.0
      %788 = vmatprep.subr.mxu0 0.0
      %789 = vmatpush1.msra.mxu0 0.0
      %790 = vmatprep.subr.mxu0 0.0
      %791 = vmatpush1.msra.mxu0 0.0
      %792 = vmatprep.subr.mxu0 0.0
      %793 = vmatpush1.msra.mxu0 0.0
      %794 = vmatprep.subr.mxu0 0.0
      %795 = vmatpush1.msra.mxu0 0.0
      %796 = vmatprep.subr.mxu0 0.0
      %797 = vmatpush1.msra.mxu0 0.0
      %798 = vmatprep.subr.mxu0 0.0
      %799 = vmatpush1.msra.mxu0 0.0
      %800 = vmatprep.subr.mxu0 0.0
      %801 = vmatpush1.msra.mxu0 0.0
      %802 = vmatprep.subr.mxu0 0.0
      %803 = vmatpush1.msra.mxu0 0.0
      %804 = vmatprep.subr.mxu0 0.0
      %805 = vmatpush1.msra.mxu0 0.0
      %806 = vmatprep.subr.mxu0 0.0
      %807 = vmatpush1.msra.mxu0 0.0
      %808 = vmatprep.mubr.f32.mxu0 0.0
      %809 = vmatmul.mubr.f32.gmra.mrb[0].mxu0 %v697
      %v810 = vpop.f32.mrb[0].mxu0
      %v811 = vadd.f32 0.0, %v810
      %v812 = vpop.f32.mrb[0].mxu0
      %813 = vmatprep.mubr.f32.mxu0 0.0
      %814 = vmatmul.mubr.f32.gmra.mrb[0].mxu0 %v700
      %v815 = vpop.f32.mrb[0].mxu0
      %v816 = vadd.f32 0.0, %v815
      %v817 = vpop.f32.mrb[0].mxu0
      %818 = vmatprep.mubr.f32.mxu0 0.0
      %819 = vmatmul.mubr.f32.gmra.mrb[0].mxu0 %v703
      %v820 = vpop.f32.mrb[0].mxu0
      %v821 = vadd.f32 0.0, %v820
      %v822 = vpop.f32.mrb[0].mxu0
      %823 = vmatprep.mubr.f32.mxu0 0.0
      %824 = vmatmul.mubr.f32.gmra.mrb[0].mxu0 %v706
      %v825 = vpop.f32.mrb[0].mxu0
      %v826 = vadd.f32 0.0, %v825
      %v827 = vpop.f32.mrb[0].mxu0
      %828 = vmatprep.mubr.f32.mxu0 0.0
      %829 = vmatmul.mubr.f32.gmra.mrb[0].mxu0 %v709
      %v830 = vpop.f32.mrb[0].mxu0
      %v831 = vadd.f32 0.0, %v830
      %v832 = vpop.f32.mrb[0].mxu0
      %833 = vmatprep.mubr.f32.mxu0 0.0
      %834 = vmatmul.mubr.f32.gmra.mrb[0].mxu0 %v712
      %v835 = vpop.f32.mrb[0].mxu0
      %v836 = vadd.f32 0.0, %v835
      %v837 = vpop.f32.mrb[0].mxu0
      %838 = vmatprep.mubr.f32.mxu0 0.0
      %839 = vmatmul.mubr.f32.gmra.mrb[0].mxu0 %v715
      %v840 = vpop.f32.mrb[0].mxu0
      %v841 = vadd.f32 0.0, %v840
      %v842 = vpop.f32.mrb[0].mxu0
      %843 = vmatprep.mubr.f32.mxu0 0.0
      %844 = vmatmul.mubr.f32.gmra.mrb[0].mxu0 %v718
      %v845 = vpop.f32.mrb[0].mxu0
      %v846 = vadd.f32 0.0, %v845
      %v847 = vpop.f32.mrb[0].mxu0
      %848 = vmatprep.mubr.f32.mxu0 0.0
      %849 = vmatmul.mubr.f32.gmra.mrb[0].mxu0 %v721
      %v850 = vpop.f32.mrb[0].mxu0
      %v851 = vadd.f32 0.0, %v850
      %v852 = vpop.f32.mrb[0].mxu0
      %853 = vmatprep.mubr.f32.mxu0 0.0
      %854 = vmatmul.mubr.f32.gmra.mrb[0].mxu0 %v724
      %v855 = vpop.f32.mrb[0].mxu0
      %v856 = vadd.f32 0.0, %v855
      %v857 = vpop.f32.mrb[0].mxu0
      %858 = vmatprep.mubr.f32.mxu0 0.0
      %859 = vmatmul.mubr.f32.gmra.mrb[0].mxu0 %v727
      %v860 = vpop.f32.mrb[0].mxu0
      %v861 = vadd.f32 0.0, %v860
      %v862 = vpop.f32.mrb[0].mxu0
      %863 = vmatprep.mubr.f32.mxu0 0.0
      %864 = vmatmul.mubr.f32.gmra.mrb[0].mxu0 %v730
      %v865 = vpop.f32.mrb[0].mxu0
      %v866 = vadd.f32 0.0, %v865
      %v867 = vpop.f32.mrb[0].mxu0
      %868 = vmatprep.mubr.f32.mxu0 0.0
      %869 = vmatmul.mubr.f32.gmra.mrb[0].mxu0 %v733
      %v870 = vpop.f32.mrb[0].mxu0
      %v871 = vadd.f32 0.0, %v870
      %v872 = vpop.f32.mrb[0].mxu0
      %873 = vmatprep.mubr.f32.mxu0 0.0
      %874 = vmatmul.mubr.f32.gmra.mrb[0].mxu0 %v736
      %v875 = vpop.f32.mrb[0].mxu0
      %v876 = vadd.f32 0.0, %v875
      %v877 = vpop.f32.mrb[0].mxu0
      %878 = vmatprep.mubr.f32.mxu0 0.0
      %879 = vmatmul.mubr.f32.gmra.mrb[0].mxu0 %v739
      %v880 = vpop.f32.mrb[0].mxu0
      %v881 = vadd.f32 0.0, %v880
      %v882 = vpop.f32.mrb[0].mxu0
      %883 = vmatprep.mubr.f32.mxu0 0.0
      %884 = vmatmul.mubr.f32.gmra.mrb[0].mxu0 %v742
      %v885 = vpop.f32.mrb[0].mxu0
      %v886 = vadd.f32 0.0, %v885
      %v887 = vpop.f32.mrb[0].mxu0
      %888 = vdwg.mxu0
      %v890 = vsel %vm497, %v664, 0
      %v893 = vsel %vm497, %v665, 0
      %v896 = vsel %vm497, %v666, 0
      %v899 = vsel %vm497, %v667, 0
      %v902 = vsel %vm497, %v668, 0
      %v905 = vsel %vm497, %v669, 0
      %v908 = vsel %vm497, %v670, 0
      %v911 = vsel %vm497, %v671, 0
      %v914 = vsel %vm497, %v672, 0
      %v917 = vsel %vm497, %v673, 0
      %v920 = vsel %vm497, %v674, 0
      %v923 = vsel %vm497, %v675, 0
      %v926 = vsel %vm497, %v676, 0
      %v929 = vsel %vm497, %v677, 0
      %v932 = vsel %vm497, %v678, 0
      %v935 = vsel %vm497, %v679, 0
      %937 = vmatprep.subr.mxu0 0.0
      %938 = vmatpush1.msra.mxu0 %v655
      %939 = vmatprep.subr.mxu0 0.0
      %940 = vmatpush1.msra.mxu0 0.0
      %941 = vmatprep.subr.mxu0 0.0
      %942 = vmatpush1.msra.mxu0 0.0
      %943 = vmatprep.subr.mxu0 0.0
      %944 = vmatpush1.msra.mxu0 0.0
      %945 = vmatprep.subr.mxu0 0.0
      %946 = vmatpush1.msra.mxu0 0.0
      %947 = vmatprep.subr.mxu0 0.0
      %948 = vmatpush1.msra.mxu0 0.0
      %949 = vmatprep.subr.mxu0 0.0
      %950 = vmatpush1.msra.mxu0 0.0
      %951 = vmatprep.subr.mxu0 0.0
      %952 = vmatpush1.msra.mxu0 0.0
      %953 = vmatprep.subr.mxu0 0.0
      %954 = vmatpush1.msra.mxu0 0.0
      %955 = vmatprep.subr.mxu0 0.0
      %956 = vmatpush1.msra.mxu0 0.0
      %957 = vmatprep.subr.mxu0 0.0
      %958 = vmatpush1.msra.mxu0 0.0
      %959 = vmatprep.subr.mxu0 0.0
      %960 = vmatpush1.msra.mxu0 0.0
      %961 = vmatprep.subr.mxu0 0.0
      %962 = vmatpush1.msra.mxu0 0.0
      %963 = vmatprep.subr.mxu0 0.0
      %964 = vmatpush1.msra.mxu0 0.0
      %965 = vmatprep.subr.mxu0 0.0
      %966 = vmatpush1.msra.mxu0 0.0
      %967 = vmatprep.subr.mxu0 0.0
      %968 = vmatpush1.msra.mxu0 0.0
      %969 = vmatprep.subr.mxu0 0.0
      %970 = vmatpush1.msra.mxu0 0.0
      %971 = vmatprep.subr.mxu0 0.0
      %972 = vmatpush1.msra.mxu0 0.0
      %973 = vmatprep.subr.mxu0 0.0
      %974 = vmatpush1.msra.mxu0 0.0
      %975 = vmatprep.subr.mxu0 0.0
      %976 = vmatpush1.msra.mxu0 0.0
      %977 = vmatprep.subr.mxu0 0.0
      %978 = vmatpush1.msra.mxu0 0.0
      %979 = vmatprep.subr.mxu0 0.0
      %980 = vmatpush1.msra.mxu0 0.0
      %981 = vmatprep.subr.mxu0 0.0
      %982 = vmatpush1.msra.mxu0 0.0
      %983 = vmatprep.subr.mxu0 0.0
      %984 = vmatpush1.msra.mxu0 0.0
      %985 = vmatprep.subr.mxu0 0.0
      %986 = vmatpush1.msra.mxu0 0.0
      %987 = vmatprep.subr.mxu0 0.0
      %988 = vmatpush1.msra.mxu0 0.0
      %989 = vmatprep.subr.mxu0 0.0
      %990 = vmatpush1.msra.mxu0 0.0
      %991 = vmatprep.subr.mxu0 0.0
      %992 = vmatpush1.msra.mxu0 0.0
      %993 = vmatprep.subr.mxu0 0.0
      %994 = vmatpush1.msra.mxu0 0.0
      %995 = vmatprep.subr.mxu0 0.0
      %996 = vmatpush1.msra.mxu0 0.0
      %997 = vmatprep.subr.mxu0 0.0
      %998 = vmatpush1.msra.mxu0 0.0
      %999 = vmatprep.subr.mxu0 0.0
      %1000 = vmatpush1.msra.mxu0 0.0
      %1001 = vmatprep.mubr.f32.mxu0 0.0
      %1002 = vmatmul.mubr.f32.gmra.mrb[0].mxu0 %v890
      %v1003 = vpop.f32.mrb[0].mxu0
      %v1004 = vadd.f32 %v811, %v1003
      %v1005 = vpop.f32.mrb[0].mxu0
      %1006 = vmatprep.mubr.f32.mxu0 0.0
      %1007 = vmatmul.mubr.f32.gmra.mrb[0].mxu0 %v893
      %v1008 = vpop.f32.mrb[0].mxu0
      %v1009 = vadd.f32 %v816, %v1008
      %v1010 = vpop.f32.mrb[0].mxu0
      %1011 = vmatprep.mubr.f32.mxu0 0.0
      %1012 = vmatmul.mubr.f32.gmra.mrb[0].mxu0 %v896
      %v1013 = vpop.f32.mrb[0].mxu0
      %v1014 = vadd.f32 %v821, %v1013
      %v1015 = vpop.f32.mrb[0].mxu0
      %1016 = vmatprep.mubr.f32.mxu0 0.0
      %1017 = vmatmul.mubr.f32.gmra.mrb[0].mxu0 %v899
      %v1018 = vpop.f32.mrb[0].mxu0
      %v1019 = vadd.f32 %v826, %v1018
      %v1020 = vpop.f32.mrb[0].mxu0
      %1021 = vmatprep.mubr.f32.mxu0 0.0
      %1022 = vmatmul.mubr.f32.gmra.mrb[0].mxu0 %v902
      %v1023 = vpop.f32.mrb[0].mxu0
      %v1024 = vadd.f32 %v831, %v1023
      %v1025 = vpop.f32.mrb[0].mxu0
      %1026 = vmatprep.mubr.f32.mxu0 0.0
      %1027 = vmatmul.mubr.f32.gmra.mrb[0].mxu0 %v905
      %v1028 = vpop.f32.mrb[0].mxu0
      %v1029 = vadd.f32 %v836, %v1028
      %v1030 = vpop.f32.mrb[0].mxu0
      %1031 = vmatprep.mubr.f32.mxu0 0.0
      %1032 = vmatmul.mubr.f32.gmra.mrb[0].mxu0 %v908
      %v1033 = vpop.f32.mrb[0].mxu0
      %v1034 = vadd.f32 %v841, %v1033
      %v1035 = vpop.f32.mrb[0].mxu0
      %1036 = vmatprep.mubr.f32.mxu0 0.0
      %1037 = vmatmul.mubr.f32.gmra.mrb[0].mxu0 %v911
      %v1038 = vpop.f32.mrb[0].mxu0
      %v1039 = vadd.f32 %v846, %v1038
      %v1040 = vpop.f32.mrb[0].mxu0
      %1041 = vmatprep.mubr.f32.mxu0 0.0
      %1042 = vmatmul.mubr.f32.gmra.mrb[0].mxu0 %v914
      %v1043 = vpop.f32.mrb[0].mxu0
      %v1044 = vadd.f32 %v851, %v1043
      %v1045 = vpop.f32.mrb[0].mxu0
      %1046 = vmatprep.mubr.f32.mxu0 0.0
      %1047 = vmatmul.mubr.f32.gmra.mrb[0].mxu0 %v917
      %v1048 = vpop.f32.mrb[0].mxu0
      %v1049 = vadd.f32 %v856, %v1048
      %v1050 = vpop.f32.mrb[0].mxu0
      %1051 = vmatprep.mubr.f32.mxu0 0.0
      %1052 = vmatmul.mubr.f32.gmra.mrb[0].mxu0 %v920
      %v1053 = vpop.f32.mrb[0].mxu0
      %v1054 = vadd.f32 %v861, %v1053
      %v1055 = vpop.f32.mrb[0].mxu0
      %1056 = vmatprep.mubr.f32.mxu0 0.0
      %1057 = vmatmul.mubr.f32.gmra.mrb[0].mxu0 %v923
      %v1058 = vpop.f32.mrb[0].mxu0
      %v1059 = vadd.f32 %v866, %v1058
      %v1060 = vpop.f32.mrb[0].mxu0
      %1061 = vmatprep.mubr.f32.mxu0 0.0
      %1062 = vmatmul.mubr.f32.gmra.mrb[0].mxu0 %v926
      %v1063 = vpop.f32.mrb[0].mxu0
      %v1064 = vadd.f32 %v871, %v1063
      %v1065 = vpop.f32.mrb[0].mxu0
      %1066 = vmatprep.mubr.f32.mxu0 0.0
      %1067 = vmatmul.mubr.f32.gmra.mrb[0].mxu0 %v929
      %v1068 = vpop.f32.mrb[0].mxu0
      %v1069 = vadd.f32 %v876, %v1068
      %v1070 = vpop.f32.mrb[0].mxu0
      %1071 = vmatprep.mubr.f32.mxu0 0.0
      %1072 = vmatmul.mubr.f32.gmra.mrb[0].mxu0 %v932
      %v1073 = vpop.f32.mrb[0].mxu0
      %v1074 = vadd.f32 %v881, %v1073
      %v1075 = vpop.f32.mrb[0].mxu0
      %1076 = vmatprep.mubr.f32.mxu0 0.0
      %1077 = vmatmul.mubr.f32.gmra.mrb[0].mxu0 %v935
      %v1078 = vpop.f32.mrb[0].mxu0
      %v1079 = vadd.f32 %v886, %v1078
      %v1080 = vpop.f32.mrb[0].mxu0
      %1081 = vdwg.mxu0
      %v1082 = vld [vmem:[#allocation2 + $0x2] sm:$0xff]
      %v1083 = vld [vmem:[#allocation2 + $0xa] sm:$0xff]
      %v1084 = vld [vmem:[#allocation2 + $0x1a] sm:$0xff]
      %v1085 = vld [vmem:[#allocation2 + $0x22] sm:$0xff]
      %v1086 = vld [vmem:[#allocation2 + $0x32] sm:$0xff]
      %v1087 = vld [vmem:[#allocation2 + $0x3a] sm:$0xff]
      %v1088 = vld [vmem:[#allocation2 + $0x4a] sm:$0xff]
      %v1089 = vld [vmem:[#allocation2 + $0x52] sm:$0xff]
      %v1090 = vld [vmem:[#allocation2 + $0x62] sm:$0xff]
      %v1091 = vld [vmem:[#allocation2 + $0x6a] sm:$0xff]
      %v1092 = vld [vmem:[#allocation2 + $0x7a] sm:$0xff]
      %v1093 = vld [vmem:[#allocation2 + $0x82] sm:$0xff]
      %v1094 = vld [vmem:[#allocation2 + $0x92] sm:$0xff]
      %v1095 = vld [vmem:[#allocation2 + $0x9a] sm:$0xff]
      %v1096 = vld [vmem:[#allocation2 + $0xaa] sm:$0xff]
      %v1097 = vld [vmem:[#allocation2 + $0xb2] sm:$0xff]
      %v1099 = vsel %vm497, %v1082, 0
      %v1102 = vsel %vm497, %v1083, 0
      %v1105 = vsel %vm497, %v1084, 0
      %v1108 = vsel %vm497, %v1085, 0
      %v1111 = vsel %vm497, %v1086, 0
      %v1114 = vsel %vm497, %v1087, 0
      %v1117 = vsel %vm497, %v1088, 0
      %v1120 = vsel %vm497, %v1089, 0
      %v1123 = vsel %vm497, %v1090, 0
      %v1126 = vsel %vm497, %v1091, 0
      %v1129 = vsel %vm497, %v1092, 0
      %v1132 = vsel %vm497, %v1093, 0
      %v1135 = vsel %vm497, %v1094, 0
      %v1138 = vsel %vm497, %v1095, 0
      %v1141 = vsel %vm497, %v1096, 0
      %v1144 = vsel %vm497, %v1097, 0
      %1146 = vmatprep.subr.mxu0 0.0
      %1147 = vmatpush1.msra.mxu0 %v657
      %1148 = vmatprep.subr.mxu0 0.0
      %1149 = vmatpush1.msra.mxu0 0.0
      %1150 = vmatprep.subr.mxu0 0.0
      %1151 = vmatpush1.msra.mxu0 0.0
      %1152 = vmatprep.subr.mxu0 0.0
      %1153 = vmatpush1.msra.mxu0 0.0
      %1154 = vmatprep.subr.mxu0 0.0
      %1155 = vmatpush1.msra.mxu0 0.0
      %1156 = vmatprep.subr.mxu0 0.0
      %1157 = vmatpush1.msra.mxu0 0.0
      %1158 = vmatprep.subr.mxu0 0.0
      %1159 = vmatpush1.msra.mxu0 0.0
      %1160 = vmatprep.subr.mxu0 0.0
      %1161 = vmatpush1.msra.mxu0 0.0
      %1162 = vmatprep.subr.mxu0 0.0
      %1163 = vmatpush1.msra.mxu0 0.0
      %1164 = vmatprep.subr.mxu0 0.0
      %1165 = vmatpush1.msra.mxu0 0.0
      %1166 = vmatprep.subr.mxu0 0.0
      %1167 = vmatpush1.msra.mxu0 0.0
      %1168 = vmatprep.subr.mxu0 0.0
      %1169 = vmatpush1.msra.mxu0 0.0
      %1170 = vmatprep.subr.mxu0 0.0
      %1171 = vmatpush1.msra.mxu0 0.0
      %1172 = vmatprep.subr.mxu0 0.0
      %1173 = vmatpush1.msra.mxu0 0.0
      %1174 = vmatprep.subr.mxu0 0.0
      %1175 = vmatpush1.msra.mxu0 0.0
      %1176 = vmatprep.subr.mxu0 0.0
      %1177 = vmatpush1.msra.mxu0 0.0
      %1178 = vmatprep.subr.mxu0 0.0
      %1179 = vmatpush1.msra.mxu0 0.0
      %1180 = vmatprep.subr.mxu0 0.0
      %1181 = vmatpush1.msra.mxu0 0.0
      %1182 = vmatprep.subr.mxu0 0.0
      %1183 = vmatpush1.msra.mxu0 0.0
      %1184 = vmatprep.subr.mxu0 0.0
      %1185 = vmatpush1.msra.mxu0 0.0
      %1186 = vmatprep.subr.mxu0 0.0
      %1187 = vmatpush1.msra.mxu0 0.0
      %1188 = vmatprep.subr.mxu0 0.0
      %1189 = vmatpush1.msra.mxu0 0.0
      %1190 = vmatprep.subr.mxu0 0.0
      %1191 = vmatpush1.msra.mxu0 0.0
      %1192 = vmatprep.subr.mxu0 0.0
      %1193 = vmatpush1.msra.mxu0 0.0
      %1194 = vmatprep.subr.mxu0 0.0
      %1195 = vmatpush1.msra.mxu0 0.0
      %1196 = vmatprep.subr.mxu0 0.0
      %1197 = vmatpush1.msra.mxu0 0.0
      %1198 = vmatprep.subr.mxu0 0.0
      %1199 = vmatpush1.msra.mxu0 0.0
      %1200 = vmatprep.subr.mxu0 0.0
      %1201 = vmatpush1.msra.mxu0 0.0
      %1202 = vmatprep.subr.mxu0 0.0
      %1203 = vmatpush1.msra.mxu0 0.0
      %1204 = vmatprep.subr.mxu0 0.0
      %1205 = vmatpush1.msra.mxu0 0.0
      %1206 = vmatprep.subr.mxu0 0.0
      %1207 = vmatpush1.msra.mxu0 0.0
      %1208 = vmatprep.subr.mxu0 0.0
      %1209 = vmatpush1.msra.mxu0 0.0
      %1210 = vmatprep.mubr.f32.mxu0 0.0
      %1211 = vmatmul.mubr.f32.gmra.mrb[0].mxu0 %v1099
      %v1212 = vpop.f32.mrb[0].mxu0
      %v1213 = vadd.f32 0.0, %v1212
      %v1214 = vpop.f32.mrb[0].mxu0
      %1215 = vmatprep.mubr.f32.mxu0 0.0
      %1216 = vmatmul.mubr.f32.gmra.mrb[0].mxu0 %v1102
      %v1217 = vpop.f32.mrb[0].mxu0
      %v1218 = vadd.f32 0.0, %v1217
      %v1219 = vpop.f32.mrb[0].mxu0
      %1220 = vmatprep.mubr.f32.mxu0 0.0
      %1221 = vmatmul.mubr.f32.gmra.mrb[0].mxu0 %v1105
      %v1222 = vpop.f32.mrb[0].mxu0
      %v1223 = vadd.f32 0.0, %v1222
      %v1224 = vpop.f32.mrb[0].mxu0
      %1225 = vmatprep.mubr.f32.mxu0 0.0
      %1226 = vmatmul.mubr.f32.gmra.mrb[0].mxu0 %v1108
      %v1227 = vpop.f32.mrb[0].mxu0
      %v1228 = vadd.f32 0.0, %v1227
      %v1229 = vpop.f32.mrb[0].mxu0
      %1230 = vmatprep.mubr.f32.mxu0 0.0
      %1231 = vmatmul.mubr.f32.gmra.mrb[0].mxu0 %v1111
      %v1232 = vpop.f32.mrb[0].mxu0
      %v1233 = vadd.f32 0.0, %v1232
      %v1234 = vpop.f32.mrb[0].mxu0
      %1235 = vmatprep.mubr.f32.mxu0 0.0
      %1236 = vmatmul.mubr.f32.gmra.mrb[0].mxu0 %v1114
      %v1237 = vpop.f32.mrb[0].mxu0
      %v1238 = vadd.f32 0.0, %v1237
      %v1239 = vpop.f32.mrb[0].mxu0
      %1240 = vmatprep.mubr.f32.mxu0 0.0
      %1241 = vmatmul.mubr.f32.gmra.mrb[0].mxu0 %v1117
      %v1242 = vpop.f32.mrb[0].mxu0
      %v1243 = vadd.f32 0.0, %v1242
      %v1244 = vpop.f32.mrb[0].mxu0
      %1245 = vmatprep.mubr.f32.mxu0 0.0
      %1246 = vmatmul.mubr.f32.gmra.mrb[0].mxu0 %v1120
      %v1247 = vpop.f32.mrb[0].mxu0
      %v1248 = vadd.f32 0.0, %v1247
      %v1249 = vpop.f32.mrb[0].mxu0
      %1250 = vmatprep.mubr.f32.mxu0 0.0
      %1251 = vmatmul.mubr.f32.gmra.mrb[0].mxu0 %v1123
      %v1252 = vpop.f32.mrb[0].mxu0
      %v1253 = vadd.f32 0.0, %v1252
      %v1254 = vpop.f32.mrb[0].mxu0
      %1255 = vmatprep.mubr.f32.mxu0 0.0
      %1256 = vmatmul.mubr.f32.gmra.mrb[0].mxu0 %v1126
      %v1257 = vpop.f32.mrb[0].mxu0
      %v1258 = vadd.f32 0.0, %v1257
      %v1259 = vpop.f32.mrb[0].mxu0
      %1260 = vmatprep.mubr.f32.mxu0 0.0
      %1261 = vmatmul.mubr.f32.gmra.mrb[0].mxu0 %v1129
      %v1262 = vpop.f32.mrb[0].mxu0
      %v1263 = vadd.f32 0.0, %v1262
      %v1264 = vpop.f32.mrb[0].mxu0
      %1265 = vmatprep.mubr.f32.mxu0 0.0
      %1266 = vmatmul.mubr.f32.gmra.mrb[0].mxu0 %v1132
      %v1267 = vpop.f32.mrb[0].mxu0
      %v1268 = vadd.f32 0.0, %v1267
      %v1269 = vpop.f32.mrb[0].mxu0
      %1270 = vmatprep.mubr.f32.mxu0 0.0
      %1271 = vmatmul.mubr.f32.gmra.mrb[0].mxu0 %v1135
      %v1272 = vpop.f32.mrb[0].mxu0
      %v1273 = vadd.f32 0.0, %v1272
      %v1274 = vpop.f32.mrb[0].mxu0
      %1275 = vmatprep.mubr.f32.mxu0 0.0
      %1276 = vmatmul.mubr.f32.gmra.mrb[0].mxu0 %v1138
      %v1277 = vpop.f32.mrb[0].mxu0
      %v1278 = vadd.f32 0.0, %v1277
      %v1279 = vpop.f32.mrb[0].mxu0
      %1280 = vmatprep.mubr.f32.mxu0 0.0
      %1281 = vmatmul.mubr.f32.gmra.mrb[0].mxu0 %v1141
      %v1282 = vpop.f32.mrb[0].mxu0
      %v1283 = vadd.f32 0.0, %v1282
      %v1284 = vpop.f32.mrb[0].mxu0
      %1285 = vmatprep.mubr.f32.mxu0 0.0
      %1286 = vmatmul.mubr.f32.gmra.mrb[0].mxu0 %v1144
      %v1287 = vpop.f32.mrb[0].mxu0
      %v1288 = vadd.f32 0.0, %v1287
      %v1289 = vpop.f32.mrb[0].mxu0
      %1290 = vdwg.mxu0
      %v1291 = vadd.f32 %v1004, %v1213
      %v1292 = vadd.f32 %v1009, %v1218
      %v1293 = vadd.f32 %v1014, %v1223
      %v1294 = vadd.f32 %v1019, %v1228
      %v1295 = vadd.f32 %v1024, %v1233
      %v1296 = vadd.f32 %v1029, %v1238
      %v1297 = vadd.f32 %v1034, %v1243
      %v1298 = vadd.f32 %v1039, %v1248
      %v1299 = vadd.f32 %v1044, %v1253
      %v1300 = vadd.f32 %v1049, %v1258
      %v1301 = vadd.f32 %v1054, %v1263
      %v1302 = vadd.f32 %v1059, %v1268
      %v1303 = vadd.f32 %v1064, %v1273
      %v1304 = vadd.f32 %v1069, %v1278
      %v1305 = vadd.f32 %v1074, %v1283
      %v1306 = vadd.f32 %v1079, %v1288
      %v1307 = vld [vmem:[%s605] sm:$0xff]
      %v1308 = vld [vmem:[%s605 + $0x8] sm:$0xff]
      %v1309 = vld [vmem:[%s605 + $0x18] sm:$0xff]
      %v1310 = vld [vmem:[%s605 + $0x20] sm:$0xff]
      %v1311 = vld [vmem:[%s605 + $0x30] sm:$0xff]
      %v1312 = vld [vmem:[%s605 + $0x38] sm:$0xff]
      %v1313 = vld [vmem:[%s605 + $0x48] sm:$0xff]
      %v1314 = vld [vmem:[%s605 + $0x50] sm:$0xff]
      %v1315 = vld [vmem:[%s605 + $0x60] sm:$0xff]
      %v1316 = vld [vmem:[%s605 + $0x68] sm:$0xff]
      %v1317 = vld [vmem:[%s605 + $0x78] sm:$0xff]
      %v1318 = vld [vmem:[%s605 + $0x80] sm:$0xff]
      %v1319 = vld [vmem:[%s605 + $0x90] sm:$0xff]
      %v1320 = vld [vmem:[%s605 + $0x98] sm:$0xff]
      %v1321 = vld [vmem:[%s605 + $0xa8] sm:$0xff]
      %v1322 = vld [vmem:[%s605 + $0xb0] sm:$0xff]
      %v1324 = vsel %vm497, %v1307, 0
      %v1327 = vsel %vm497, %v1308, 0
      %v1330 = vsel %vm497, %v1309, 0
      %v1333 = vsel %vm497, %v1310, 0
      %v1336 = vsel %vm497, %v1311, 0
      %v1339 = vsel %vm497, %v1312, 0
      %v1342 = vsel %vm497, %v1313, 0
      %v1345 = vsel %vm497, %v1314, 0
      %v1348 = vsel %vm497, %v1315, 0
      %v1351 = vsel %vm497, %v1316, 0
      %v1354 = vsel %vm497, %v1317, 0
      %v1357 = vsel %vm497, %v1318, 0
      %v1360 = vsel %vm497, %v1319, 0
      %v1363 = vsel %vm497, %v1320, 0
      %v1366 = vsel %vm497, %v1321, 0
      %v1369 = vsel %vm497, %v1322, 0
      %1371 = vmatprep.subr.mxu0 0.0
      %1372 = vmatpush1.msra.mxu0 %v658
      %1373 = vmatprep.subr.mxu0 0.0
      %1374 = vmatpush1.msra.mxu0 0.0
      %1375 = vmatprep.subr.mxu0 0.0
      %1376 = vmatpush1.msra.mxu0 0.0
      %1377 = vmatprep.subr.mxu0 0.0
      %1378 = vmatpush1.msra.mxu0 0.0
      %1379 = vmatprep.subr.mxu0 0.0
      %1380 = vmatpush1.msra.mxu0 0.0
      %1381 = vmatprep.subr.mxu0 0.0
      %1382 = vmatpush1.msra.mxu0 0.0
      %1383 = vmatprep.subr.mxu0 0.0
      %1384 = vmatpush1.msra.mxu0 0.0
      %1385 = vmatprep.subr.mxu0 0.0
      %1386 = vmatpush1.msra.mxu0 0.0
      %1387 = vmatprep.subr.mxu0 0.0
      %1388 = vmatpush1.msra.mxu0 0.0
      %1389 = vmatprep.subr.mxu0 0.0
      %1390 = vmatpush1.msra.mxu0 0.0
      %1391 = vmatprep.subr.mxu0 0.0
      %1392 = vmatpush1.msra.mxu0 0.0
      %1393 = vmatprep.subr.mxu0 0.0
      %1394 = vmatpush1.msra.mxu0 0.0
      %1395 = vmatprep.subr.mxu0 0.0
      %1396 = vmatpush1.msra.mxu0 0.0
      %1397 = vmatprep.subr.mxu0 0.0
      %1398 = vmatpush1.msra.mxu0 0.0
      %1399 = vmatprep.subr.mxu0 0.0
      %1400 = vmatpush1.msra.mxu0 0.0
      %1401 = vmatprep.subr.mxu0 0.0
      %1402 = vmatpush1.msra.mxu0 0.0
      %1403 = vmatprep.subr.mxu0 0.0
      %1404 = vmatpush1.msra.mxu0 0.0
      %1405 = vmatprep.subr.mxu0 0.0
      %1406 = vmatpush1.msra.mxu0 0.0
      %1407 = vmatprep.subr.mxu0 0.0
      %1408 = vmatpush1.msra.mxu0 0.0
      %1409 = vmatprep.subr.mxu0 0.0
      %1410 = vmatpush1.msra.mxu0 0.0
      %1411 = vmatprep.subr.mxu0 0.0
      %1412 = vmatpush1.msra.mxu0 0.0
      %1413 = vmatprep.subr.mxu0 0.0
      %1414 = vmatpush1.msra.mxu0 0.0
      %1415 = vmatprep.subr.mxu0 0.0
      %1416 = vmatpush1.msra.mxu0 0.0
      %1417 = vmatprep.subr.mxu0 0.0
      %1418 = vmatpush1.msra.mxu0 0.0
      %1419 = vmatprep.subr.mxu0 0.0
      %1420 = vmatpush1.msra.mxu0 0.0
      %1421 = vmatprep.subr.mxu0 0.0
      %1422 = vmatpush1.msra.mxu0 0.0
      %1423 = vmatprep.subr.mxu0 0.0
      %1424 = vmatpush1.msra.mxu0 0.0
      %1425 = vmatprep.subr.mxu0 0.0
      %1426 = vmatpush1.msra.mxu0 0.0
      %1427 = vmatprep.subr.mxu0 0.0
      %1428 = vmatpush1.msra.mxu0 0.0
      %1429 = vmatprep.subr.mxu0 0.0
      %1430 = vmatpush1.msra.mxu0 0.0
      %1431 = vmatprep.subr.mxu0 0.0
      %1432 = vmatpush1.msra.mxu0 0.0
      %1433 = vmatprep.subr.mxu0 0.0
      %1434 = vmatpush1.msra.mxu0 0.0
      %1435 = vmatprep.mubr.f32.mxu0 0.0
      %1436 = vmatmul.mubr.f32.gmra.mrb[0].mxu0 %v1324
      %v1437 = vpop.f32.mrb[0].mxu0
      %v1438 = vadd.f32 0.0, %v1437
      %v1439 = vpop.f32.mrb[0].mxu0
      %1440 = vmatprep.mubr.f32.mxu0 0.0
      %1441 = vmatmul.mubr.f32.gmra.mrb[0].mxu0 %v1327
      %v1442 = vpop.f32.mrb[0].mxu0
      %v1443 = vadd.f32 0.0, %v1442
      %v1444 = vpop.f32.mrb[0].mxu0
      %1445 = vmatprep.mubr.f32.mxu0 0.0
      %1446 = vmatmul.mubr.f32.gmra.mrb[0].mxu0 %v1330
      %v1447 = vpop.f32.mrb[0].mxu0
      %v1448 = vadd.f32 0.0, %v1447
      %v1449 = vpop.f32.mrb[0].mxu0
      %1450 = vmatprep.mubr.f32.mxu0 0.0
      %1451 = vmatmul.mubr.f32.gmra.mrb[0].mxu0 %v1333
      %v1452 = vpop.f32.mrb[0].mxu0
      %v1453 = vadd.f32 0.0, %v1452
      %v1454 = vpop.f32.mrb[0].mxu0
      %1455 = vmatprep.mubr.f32.mxu0 0.0
      %1456 = vmatmul.mubr.f32.gmra.mrb[0].mxu0 %v1336
      %v1457 = vpop.f32.mrb[0].mxu0
      %v1458 = vadd.f32 0.0, %v1457
      %v1459 = vpop.f32.mrb[0].mxu0
      %1460 = vmatprep.mubr.f32.mxu0 0.0
      %1461 = vmatmul.mubr.f32.gmra.mrb[0].mxu0 %v1339
      %v1462 = vpop.f32.mrb[0].mxu0
      %v1463 = vadd.f32 0.0, %v1462
      %v1464 = vpop.f32.mrb[0].mxu0
      %1465 = vmatprep.mubr.f32.mxu0 0.0
      %1466 = vmatmul.mubr.f32.gmra.mrb[0].mxu0 %v1342
      %v1467 = vpop.f32.mrb[0].mxu0
      %v1468 = vadd.f32 0.0, %v1467
      %v1469 = vpop.f32.mrb[0].mxu0
      %1470 = vmatprep.mubr.f32.mxu0 0.0
      %1471 = vmatmul.mubr.f32.gmra.mrb[0].mxu0 %v1345
      %v1472 = vpop.f32.mrb[0].mxu0
      %v1473 = vadd.f32 0.0, %v1472
      %v1474 = vpop.f32.mrb[0].mxu0
      %1475 = vmatprep.mubr.f32.mxu0 0.0
      %1476 = vmatmul.mubr.f32.gmra.mrb[0].mxu0 %v1348
      %v1477 = vpop.f32.mrb[0].mxu0
      %v1478 = vadd.f32 0.0, %v1477
      %v1479 = vpop.f32.mrb[0].mxu0
      %1480 = vmatprep.mubr.f32.mxu0 0.0
      %1481 = vmatmul.mubr.f32.gmra.mrb[0].mxu0 %v1351
      %v1482 = vpop.f32.mrb[0].mxu0
      %v1483 = vadd.f32 0.0, %v1482
      %v1484 = vpop.f32.mrb[0].mxu0
      %1485 = vmatprep.mubr.f32.mxu0 0.0
      %1486 = vmatmul.mubr.f32.gmra.mrb[0].mxu0 %v1354
      %v1487 = vpop.f32.mrb[0].mxu0
      %v1488 = vadd.f32 0.0, %v1487
      %v1489 = vpop.f32.mrb[0].mxu0
      %1490 = vmatprep.mubr.f32.mxu0 0.0
      %1491 = vmatmul.mubr.f32.gmra.mrb[0].mxu0 %v1357
      %v1492 = vpop.f32.mrb[0].mxu0
      %v1493 = vadd.f32 0.0, %v1492
      %v1494 = vpop.f32.mrb[0].mxu0
      %1495 = vmatprep.mubr.f32.mxu0 0.0
      %1496 = vmatmul.mubr.f32.gmra.mrb[0].mxu0 %v1360
      %v1497 = vpop.f32.mrb[0].mxu0
      %v1498 = vadd.f32 0.0, %v1497
      %v1499 = vpop.f32.mrb[0].mxu0
      %1500 = vmatprep.mubr.f32.mxu0 0.0
      %1501 = vmatmul.mubr.f32.gmra.mrb[0].mxu0 %v1363
      %v1502 = vpop.f32.mrb[0].mxu0
      %v1503 = vadd.f32 0.0, %v1502
      %v1504 = vpop.f32.mrb[0].mxu0
      %1505 = vmatprep.mubr.f32.mxu0 0.0
      %1506 = vmatmul.mubr.f32.gmra.mrb[0].mxu0 %v1366
      %v1507 = vpop.f32.mrb[0].mxu0
      %v1508 = vadd.f32 0.0, %v1507
      %v1509 = vpop.f32.mrb[0].mxu0
      %1510 = vmatprep.mubr.f32.mxu0 0.0
      %1511 = vmatmul.mubr.f32.gmra.mrb[0].mxu0 %v1369
      %v1512 = vpop.f32.mrb[0].mxu0
      %v1513 = vadd.f32 0.0, %v1512
      %v1514 = vpop.f32.mrb[0].mxu0
      %1515 = vdwg.mxu0
      %v1516 = vadd.f32 %v1291, %v1438
      %v1517 = vadd.f32 %v1292, %v1443
      %v1518 = vadd.f32 %v1293, %v1448
      %v1519 = vadd.f32 %v1294, %v1453
      %v1520 = vadd.f32 %v1295, %v1458
      %v1521 = vadd.f32 %v1296, %v1463
      %v1522 = vadd.f32 %v1297, %v1468
      %v1523 = vadd.f32 %v1298, %v1473
      %v1524 = vadd.f32 %v1299, %v1478
      %v1525 = vadd.f32 %v1300, %v1483
      %v1526 = vadd.f32 %v1301, %v1488
      %v1527 = vadd.f32 %v1302, %v1493
      %v1528 = vadd.f32 %v1303, %v1498
      %v1529 = vadd.f32 %v1304, %v1503
      %v1530 = vadd.f32 %v1305, %v1508
      %v1531 = vadd.f32 %v1306, %v1513
      %v1532 = vld [vmem:[%s605 + $0x1] sm:$0xff]
      %v1533 = vld [vmem:[%s605 + $0x9] sm:$0xff]
      %v1534 = vld [vmem:[%s605 + $0x19] sm:$0xff]
      %v1535 = vld [vmem:[%s605 + $0x21] sm:$0xff]
      %v1536 = vld [vmem:[%s605 + $0x31] sm:$0xff]
      %v1537 = vld [vmem:[%s605 + $0x39] sm:$0xff]
      %v1538 = vld [vmem:[%s605 + $0x49] sm:$0xff]
      %v1539 = vld [vmem:[%s605 + $0x51] sm:$0xff]
      %v1540 = vld [vmem:[%s605 + $0x61] sm:$0xff]
      %v1541 = vld [vmem:[%s605 + $0x69] sm:$0xff]
      %v1542 = vld [vmem:[%s605 + $0x79] sm:$0xff]
      %v1543 = vld [vmem:[%s605 + $0x81] sm:$0xff]
      %v1544 = vld [vmem:[%s605 + $0x91] sm:$0xff]
      %v1545 = vld [vmem:[%s605 + $0x99] sm:$0xff]
      %v1546 = vld [vmem:[%s605 + $0xa9] sm:$0xff]
      %v1547 = vld [vmem:[%s605 + $0xb1] sm:$0xff]
      %v1549 = vsel %vm497, %v1532, 0
      %v1552 = vsel %vm497, %v1533, 0
      %v1555 = vsel %vm497, %v1534, 0
      %v1558 = vsel %vm497, %v1535, 0
      %v1561 = vsel %vm497, %v1536, 0
      %v1564 = vsel %vm497, %v1537, 0
      %v1567 = vsel %vm497, %v1538, 0
      %v1570 = vsel %vm497, %v1539, 0
      %v1573 = vsel %vm497, %v1540, 0
      %v1576 = vsel %vm497, %v1541, 0
      %v1579 = vsel %vm497, %v1542, 0
      %v1582 = vsel %vm497, %v1543, 0
      %v1585 = vsel %vm497, %v1544, 0
      %v1588 = vsel %vm497, %v1545, 0
      %v1591 = vsel %vm497, %v1546, 0
      %v1594 = vsel %vm497, %v1547, 0
      %1596 = vmatprep.subr.mxu0 0.0
      %1597 = vmatpush1.msra.mxu0 %v659
      %1598 = vmatprep.subr.mxu0 0.0
      %1599 = vmatpush1.msra.mxu0 0.0
      %1600 = vmatprep.subr.mxu0 0.0
      %1601 = vmatpush1.msra.mxu0 0.0
      %1602 = vmatprep.subr.mxu0 0.0
      %1603 = vmatpush1.msra.mxu0 0.0
      %1604 = vmatprep.subr.mxu0 0.0
      %1605 = vmatpush1.msra.mxu0 0.0
      %1606 = vmatprep.subr.mxu0 0.0
      %1607 = vmatpush1.msra.mxu0 0.0
      %1608 = vmatprep.subr.mxu0 0.0
      %1609 = vmatpush1.msra.mxu0 0.0
      %1610 = vmatprep.subr.mxu0 0.0
      %1611 = vmatpush1.msra.mxu0 0.0
      %1612 = vmatprep.subr.mxu0 0.0
      %1613 = vmatpush1.msra.mxu0 0.0
      %1614 = vmatprep.subr.mxu0 0.0
      %1615 = vmatpush1.msra.mxu0 0.0
      %1616 = vmatprep.subr.mxu0 0.0
      %1617 = vmatpush1.msra.mxu0 0.0
      %1618 = vmatprep.subr.mxu0 0.0
      %1619 = vmatpush1.msra.mxu0 0.0
      %1620 = vmatprep.subr.mxu0 0.0
      %1621 = vmatpush1.msra.mxu0 0.0
      %1622 = vmatprep.subr.mxu0 0.0
      %1623 = vmatpush1.msra.mxu0 0.0
      %1624 = vmatprep.subr.mxu0 0.0
      %1625 = vmatpush1.msra.mxu0 0.0
      %1626 = vmatprep.subr.mxu0 0.0
      %1627 = vmatpush1.msra.mxu0 0.0
      %1628 = vmatprep.subr.mxu0 0.0
      %1629 = vmatpush1.msra.mxu0 0.0
      %1630 = vmatprep.subr.mxu0 0.0
      %1631 = vmatpush1.msra.mxu0 0.0
      %1632 = vmatprep.subr.mxu0 0.0
      %1633 = vmatpush1.msra.mxu0 0.0
      %1634 = vmatprep.subr.mxu0 0.0
      %1635 = vmatpush1.msra.mxu0 0.0
      %1636 = vmatprep.subr.mxu0 0.0
      %1637 = vmatpush1.msra.mxu0 0.0
      %1638 = vmatprep.subr.mxu0 0.0
      %1639 = vmatpush1.msra.mxu0 0.0
      %1640 = vmatprep.subr.mxu0 0.0
      %1641 = vmatpush1.msra.mxu0 0.0
      %1642 = vmatprep.subr.mxu0 0.0
      %1643 = vmatpush1.msra.mxu0 0.0
      %1644 = vmatprep.subr.mxu0 0.0
      %1645 = vmatpush1.msra.mxu0 0.0
      %1646 = vmatprep.subr.mxu0 0.0
      %1647 = vmatpush1.msra.mxu0 0.0
      %1648 = vmatprep.subr.mxu0 0.0
      %1649 = vmatpush1.msra.mxu0 0.0
      %1650 = vmatprep.subr.mxu0 0.0
      %1651 = vmatpush1.msra.mxu0 0.0
      %1652 = vmatprep.subr.mxu0 0.0
      %1653 = vmatpush1.msra.mxu0 0.0
      %1654 = vmatprep.subr.mxu0 0.0
      %1655 = vmatpush1.msra.mxu0 0.0
      %1656 = vmatprep.subr.mxu0 0.0
      %1657 = vmatpush1.msra.mxu0 0.0
      %1658 = vmatprep.subr.mxu0 0.0
      %1659 = vmatpush1.msra.mxu0 0.0
      %1660 = vmatprep.mubr.f32.mxu0 0.0
      %1661 = vmatmul.mubr.f32.gmra.mrb[0].mxu0 %v1549
      %v1662 = vpop.f32.mrb[0].mxu0
      %v1663 = vadd.f32 0.0, %v1662
      %v1664 = vpop.f32.mrb[0].mxu0
      %1665 = vmatprep.mubr.f32.mxu0 0.0
      %1666 = vmatmul.mubr.f32.gmra.mrb[0].mxu0 %v1552
      %v1667 = vpop.f32.mrb[0].mxu0
      %v1668 = vadd.f32 0.0, %v1667
      %v1669 = vpop.f32.mrb[0].mxu0
      %1670 = vmatprep.mubr.f32.mxu0 0.0
      %1671 = vmatmul.mubr.f32.gmra.mrb[0].mxu0 %v1555
      %v1672 = vpop.f32.mrb[0].mxu0
      %v1673 = vadd.f32 0.0, %v1672
      %v1674 = vpop.f32.mrb[0].mxu0
      %1675 = vmatprep.mubr.f32.mxu0 0.0
      %1676 = vmatmul.mubr.f32.gmra.mrb[0].mxu0 %v1558
      %v1677 = vpop.f32.mrb[0].mxu0
      %v1678 = vadd.f32 0.0, %v1677
      %v1679 = vpop.f32.mrb[0].mxu0
      %1680 = vmatprep.mubr.f32.mxu0 0.0
      %1681 = vmatmul.mubr.f32.gmra.mrb[0].mxu0 %v1561
      %v1682 = vpop.f32.mrb[0].mxu0
      %v1683 = vadd.f32 0.0, %v1682
      %v1684 = vpop.f32.mrb[0].mxu0
      %1685 = vmatprep.mubr.f32.mxu0 0.0
      %1686 = vmatmul.mubr.f32.gmra.mrb[0].mxu0 %v1564
      %v1687 = vpop.f32.mrb[0].mxu0
      %v1688 = vadd.f32 0.0, %v1687
      %v1689 = vpop.f32.mrb[0].mxu0
      %1690 = vmatprep.mubr.f32.mxu0 0.0
      %1691 = vmatmul.mubr.f32.gmra.mrb[0].mxu0 %v1567
      %v1692 = vpop.f32.mrb[0].mxu0
      %v1693 = vadd.f32 0.0, %v1692
      %v1694 = vpop.f32.mrb[0].mxu0
      %1695 = vmatprep.mubr.f32.mxu0 0.0
      %1696 = vmatmul.mubr.f32.gmra.mrb[0].mxu0 %v1570
      %v1697 = vpop.f32.mrb[0].mxu0
      %v1698 = vadd.f32 0.0, %v1697
      %v1699 = vpop.f32.mrb[0].mxu0
      %1700 = vmatprep.mubr.f32.mxu0 0.0
      %1701 = vmatmul.mubr.f32.gmra.mrb[0].mxu0 %v1573
      %v1702 = vpop.f32.mrb[0].mxu0
      %v1703 = vadd.f32 0.0, %v1702
      %v1704 = vpop.f32.mrb[0].mxu0
      %1705 = vmatprep.mubr.f32.mxu0 0.0
      %1706 = vmatmul.mubr.f32.gmra.mrb[0].mxu0 %v1576
      %v1707 = vpop.f32.mrb[0].mxu0
      %v1708 = vadd.f32 0.0, %v1707
      %v1709 = vpop.f32.mrb[0].mxu0
      %1710 = vmatprep.mubr.f32.mxu0 0.0
      %1711 = vmatmul.mubr.f32.gmra.mrb[0].mxu0 %v1579
      %v1712 = vpop.f32.mrb[0].mxu0
      %v1713 = vadd.f32 0.0, %v1712
      %v1714 = vpop.f32.mrb[0].mxu0
      %1715 = vmatprep.mubr.f32.mxu0 0.0
      %1716 = vmatmul.mubr.f32.gmra.mrb[0].mxu0 %v1582
      %v1717 = vpop.f32.mrb[0].mxu0
      %v1718 = vadd.f32 0.0, %v1717
      %v1719 = vpop.f32.mrb[0].mxu0
      %1720 = vmatprep.mubr.f32.mxu0 0.0
      %1721 = vmatmul.mubr.f32.gmra.mrb[0].mxu0 %v1585
      %v1722 = vpop.f32.mrb[0].mxu0
      %v1723 = vadd.f32 0.0, %v1722
      %v1724 = vpop.f32.mrb[0].mxu0
      %1725 = vmatprep.mubr.f32.mxu0 0.0
      %1726 = vmatmul.mubr.f32.gmra.mrb[0].mxu0 %v1588
      %v1727 = vpop.f32.mrb[0].mxu0
      %v1728 = vadd.f32 0.0, %v1727
      %v1729 = vpop.f32.mrb[0].mxu0
      %1730 = vmatprep.mubr.f32.mxu0 0.0
      %1731 = vmatmul.mubr.f32.gmra.mrb[0].mxu0 %v1591
      %v1732 = vpop.f32.mrb[0].mxu0
      %v1733 = vadd.f32 0.0, %v1732
      %v1734 = vpop.f32.mrb[0].mxu0
      %1735 = vmatprep.mubr.f32.mxu0 0.0
      %1736 = vmatmul.mubr.f32.gmra.mrb[0].mxu0 %v1594
      %v1737 = vpop.f32.mrb[0].mxu0
      %v1738 = vadd.f32 0.0, %v1737
      %v1739 = vpop.f32.mrb[0].mxu0
      %1740 = vdwg.mxu0
      %v1741 = vadd.f32 %v1516, %v1663
      %v1742 = vadd.f32 %v1517, %v1668
      %v1743 = vadd.f32 %v1518, %v1673
      %v1744 = vadd.f32 %v1519, %v1678
      %v1745 = vadd.f32 %v1520, %v1683
      %v1746 = vadd.f32 %v1521, %v1688
      %v1747 = vadd.f32 %v1522, %v1693
      %v1748 = vadd.f32 %v1523, %v1698
      %v1749 = vadd.f32 %v1524, %v1703
      %v1750 = vadd.f32 %v1525, %v1708
      %v1751 = vadd.f32 %v1526, %v1713
      %v1752 = vadd.f32 %v1527, %v1718
      %v1753 = vadd.f32 %v1528, %v1723
      %v1754 = vadd.f32 %v1529, %v1728
      %v1755 = vadd.f32 %v1530, %v1733
      %v1756 = vadd.f32 %v1531, %v1738
      %v1757 = vld [vmem:[%s605 + $0x2] sm:$0xff]
      %v1758 = vld [vmem:[%s605 + $0xa] sm:$0xff]
      %v1759 = vld [vmem:[%s605 + $0x1a] sm:$0xff]
      %v1760 = vld [vmem:[%s605 + $0x22] sm:$0xff]
      %v1761 = vld [vmem:[%s605 + $0x32] sm:$0xff]
      %v1762 = vld [vmem:[%s605 + $0x3a] sm:$0xff]
      %v1763 = vld [vmem:[%s605 + $0x4a] sm:$0xff]
      %v1764 = vld [vmem:[%s605 + $0x52] sm:$0xff]
      %v1765 = vld [vmem:[%s605 + $0x62] sm:$0xff]
      %v1766 = vld [vmem:[%s605 + $0x6a] sm:$0xff]
      %v1767 = vld [vmem:[%s605 + $0x7a] sm:$0xff]
      %v1768 = vld [vmem:[%s605 + $0x82] sm:$0xff]
      %v1769 = vld [vmem:[%s605 + $0x92] sm:$0xff]
      %v1770 = vld [vmem:[%s605 + $0x9a] sm:$0xff]
      %v1771 = vld [vmem:[%s605 + $0xaa] sm:$0xff]
      %v1772 = vld [vmem:[%s605 + $0xb2] sm:$0xff]
      %v1774 = vsel %vm497, %v1757, 0
      %v1777 = vsel %vm497, %v1758, 0
      %v1780 = vsel %vm497, %v1759, 0
      %v1783 = vsel %vm497, %v1760, 0
      %v1786 = vsel %vm497, %v1761, 0
      %v1789 = vsel %vm497, %v1762, 0
      %v1792 = vsel %vm497, %v1763, 0
      %v1795 = vsel %vm497, %v1764, 0
      %v1798 = vsel %vm497, %v1765, 0
      %v1801 = vsel %vm497, %v1766, 0
      %v1804 = vsel %vm497, %v1767, 0
      %v1807 = vsel %vm497, %v1768, 0
      %v1810 = vsel %vm497, %v1769, 0
      %v1813 = vsel %vm497, %v1770, 0
      %v1816 = vsel %vm497, %v1771, 0
      %v1819 = vsel %vm497, %v1772, 0
      %1821 = vmatprep.subr.mxu0 0.0
      %1822 = vmatpush1.msra.mxu0 %v660
      %1823 = vmatprep.subr.mxu0 0.0
      %1824 = vmatpush1.msra.mxu0 0.0
      %1825 = vmatprep.subr.mxu0 0.0
      %1826 = vmatpush1.msra.mxu0 0.0
      %1827 = vmatprep.subr.mxu0 0.0
      %1828 = vmatpush1.msra.mxu0 0.0
      %1829 = vmatprep.subr.mxu0 0.0
      %1830 = vmatpush1.msra.mxu0 0.0
      %1831 = vmatprep.subr.mxu0 0.0
      %1832 = vmatpush1.msra.mxu0 0.0
      %1833 = vmatprep.subr.mxu0 0.0
      %1834 = vmatpush1.msra.mxu0 0.0
      %1835 = vmatprep.subr.mxu0 0.0
      %1836 = vmatpush1.msra.mxu0 0.0
      %1837 = vmatprep.subr.mxu0 0.0
      %1838 = vmatpush1.msra.mxu0 0.0
      %1839 = vmatprep.subr.mxu0 0.0
      %1840 = vmatpush1.msra.mxu0 0.0
      %1841 = vmatprep.subr.mxu0 0.0
      %1842 = vmatpush1.msra.mxu0 0.0
      %1843 = vmatprep.subr.mxu0 0.0
      %1844 = vmatpush1.msra.mxu0 0.0
      %1845 = vmatprep.subr.mxu0 0.0
      %1846 = vmatpush1.msra.mxu0 0.0
      %1847 = vmatprep.subr.mxu0 0.0
      %1848 = vmatpush1.msra.mxu0 0.0
      %1849 = vmatprep.subr.mxu0 0.0
      %1850 = vmatpush1.msra.mxu0 0.0
      %1851 = vmatprep.subr.mxu0 0.0
      %1852 = vmatpush1.msra.mxu0 0.0
      %1853 = vmatprep.subr.mxu0 0.0
      %1854 = vmatpush1.msra.mxu0 0.0
      %1855 = vmatprep.subr.mxu0 0.0
      %1856 = vmatpush1.msra.mxu0 0.0
      %1857 = vmatprep.subr.mxu0 0.0
      %1858 = vmatpush1.msra.mxu0 0.0
      %1859 = vmatprep.subr.mxu0 0.0
      %1860 = vmatpush1.msra.mxu0 0.0
      %1861 = vmatprep.subr.mxu0 0.0
      %1862 = vmatpush1.msra.mxu0 0.0
      %1863 = vmatprep.subr.mxu0 0.0
      %1864 = vmatpush1.msra.mxu0 0.0
      %1865 = vmatprep.subr.mxu0 0.0
      %1866 = vmatpush1.msra.mxu0 0.0
      %1867 = vmatprep.subr.mxu0 0.0
      %1868 = vmatpush1.msra.mxu0 0.0
      %1869 = vmatprep.subr.mxu0 0.0
      %1870 = vmatpush1.msra.mxu0 0.0
      %1871 = vmatprep.subr.mxu0 0.0
      %1872 = vmatpush1.msra.mxu0 0.0
      %1873 = vmatprep.subr.mxu0 0.0
      %1874 = vmatpush1.msra.mxu0 0.0
      %1875 = vmatprep.subr.mxu0 0.0
      %1876 = vmatpush1.msra.mxu0 0.0
      %1877 = vmatprep.subr.mxu0 0.0
      %1878 = vmatpush1.msra.mxu0 0.0
      %1879 = vmatprep.subr.mxu0 0.0
      %1880 = vmatpush1.msra.mxu0 0.0
      %1881 = vmatprep.subr.mxu0 0.0
      %1882 = vmatpush1.msra.mxu0 0.0
      %1883 = vmatprep.subr.mxu0 0.0
      %1884 = vmatpush1.msra.mxu0 0.0
      %1885 = vmatprep.mubr.f32.mxu0 0.0
      %1886 = vmatmul.mubr.f32.gmra.mrb[0].mxu0 %v1774
      %v1887 = vpop.f32.mrb[0].mxu0
      %v1888 = vadd.f32 0.0, %v1887
      %v1889 = vpop.f32.mrb[0].mxu0
      %1890 = vmatprep.mubr.f32.mxu0 0.0
      %1891 = vmatmul.mubr.f32.gmra.mrb[0].mxu0 %v1777
      %v1892 = vpop.f32.mrb[0].mxu0
      %v1893 = vadd.f32 0.0, %v1892
      %v1894 = vpop.f32.mrb[0].mxu0
      %1895 = vmatprep.mubr.f32.mxu0 0.0
      %1896 = vmatmul.mubr.f32.gmra.mrb[0].mxu0 %v1780
      %v1897 = vpop.f32.mrb[0].mxu0
      %v1898 = vadd.f32 0.0, %v1897
      %v1899 = vpop.f32.mrb[0].mxu0
      %1900 = vmatprep.mubr.f32.mxu0 0.0
      %1901 = vmatmul.mubr.f32.gmra.mrb[0].mxu0 %v1783
      %v1902 = vpop.f32.mrb[0].mxu0
      %v1903 = vadd.f32 0.0, %v1902
      %v1904 = vpop.f32.mrb[0].mxu0
      %1905 = vmatprep.mubr.f32.mxu0 0.0
      %1906 = vmatmul.mubr.f32.gmra.mrb[0].mxu0 %v1786
      %v1907 = vpop.f32.mrb[0].mxu0
      %v1908 = vadd.f32 0.0, %v1907
      %v1909 = vpop.f32.mrb[0].mxu0
      %1910 = vmatprep.mubr.f32.mxu0 0.0
      %1911 = vmatmul.mubr.f32.gmra.mrb[0].mxu0 %v1789
      %v1912 = vpop.f32.mrb[0].mxu0
      %v1913 = vadd.f32 0.0, %v1912
      %v1914 = vpop.f32.mrb[0].mxu0
      %1915 = vmatprep.mubr.f32.mxu0 0.0
      %1916 = vmatmul.mubr.f32.gmra.mrb[0].mxu0 %v1792
      %v1917 = vpop.f32.mrb[0].mxu0
      %v1918 = vadd.f32 0.0, %v1917
      %v1919 = vpop.f32.mrb[0].mxu0
      %1920 = vmatprep.mubr.f32.mxu0 0.0
      %1921 = vmatmul.mubr.f32.gmra.mrb[0].mxu0 %v1795
      %v1922 = vpop.f32.mrb[0].mxu0
      %v1923 = vadd.f32 0.0, %v1922
      %v1924 = vpop.f32.mrb[0].mxu0
      %1925 = vmatprep.mubr.f32.mxu0 0.0
      %1926 = vmatmul.mubr.f32.gmra.mrb[0].mxu0 %v1798
      %v1927 = vpop.f32.mrb[0].mxu0
      %v1928 = vadd.f32 0.0, %v1927
      %v1929 = vpop.f32.mrb[0].mxu0
      %1930 = vmatprep.mubr.f32.mxu0 0.0
      %1931 = vmatmul.mubr.f32.gmra.mrb[0].mxu0 %v1801
      %v1932 = vpop.f32.mrb[0].mxu0
      %v1933 = vadd.f32 0.0, %v1932
      %v1934 = vpop.f32.mrb[0].mxu0
      %1935 = vmatprep.mubr.f32.mxu0 0.0
      %1936 = vmatmul.mubr.f32.gmra.mrb[0].mxu0 %v1804
      %v1937 = vpop.f32.mrb[0].mxu0
      %v1938 = vadd.f32 0.0, %v1937
      %v1939 = vpop.f32.mrb[0].mxu0
      %1940 = vmatprep.mubr.f32.mxu0 0.0
      %1941 = vmatmul.mubr.f32.gmra.mrb[0].mxu0 %v1807
      %v1942 = vpop.f32.mrb[0].mxu0
      %v1943 = vadd.f32 0.0, %v1942
      %v1944 = vpop.f32.mrb[0].mxu0
      %1945 = vmatprep.mubr.f32.mxu0 0.0
      %1946 = vmatmul.mubr.f32.gmra.mrb[0].mxu0 %v1810
      %v1947 = vpop.f32.mrb[0].mxu0
      %v1948 = vadd.f32 0.0, %v1947
      %v1949 = vpop.f32.mrb[0].mxu0
      %1950 = vmatprep.mubr.f32.mxu0 0.0
      %1951 = vmatmul.mubr.f32.gmra.mrb[0].mxu0 %v1813
      %v1952 = vpop.f32.mrb[0].mxu0
      %v1953 = vadd.f32 0.0, %v1952
      %v1954 = vpop.f32.mrb[0].mxu0
      %1955 = vmatprep.mubr.f32.mxu0 0.0
      %1956 = vmatmul.mubr.f32.gmra.mrb[0].mxu0 %v1816
      %v1957 = vpop.f32.mrb[0].mxu0
      %v1958 = vadd.f32 0.0, %v1957
      %v1959 = vpop.f32.mrb[0].mxu0
      %1960 = vmatprep.mubr.f32.mxu0 0.0
      %1961 = vmatmul.mubr.f32.gmra.mrb[0].mxu0 %v1819
      %v1962 = vpop.f32.mrb[0].mxu0
      %v1963 = vadd.f32 0.0, %v1962
      %v1964 = vpop.f32.mrb[0].mxu0
      %1965 = vdwg.mxu0
      %v1966 = vadd.f32 %v1741, %v1888
      %v1967 = vadd.f32 %v1742, %v1893
      %v1968 = vadd.f32 %v1743, %v1898
      %v1969 = vadd.f32 %v1744, %v1903
      %v1970 = vadd.f32 %v1745, %v1908
      %v1971 = vadd.f32 %v1746, %v1913
      %v1972 = vadd.f32 %v1747, %v1918
      %v1973 = vadd.f32 %v1748, %v1923
      %v1974 = vadd.f32 %v1749, %v1928
      %v1975 = vadd.f32 %v1750, %v1933
      %v1976 = vadd.f32 %v1751, %v1938
      %v1977 = vadd.f32 %v1752, %v1943
      %v1978 = vadd.f32 %v1753, %v1948
      %v1979 = vadd.f32 %v1754, %v1953
      %v1980 = vadd.f32 %v1755, %v1958
      %v1981 = vadd.f32 %v1756, %v1963
      %s1982 = scalar_lea.vmem [#allocation2], 48
      %v1983 = vld [vmem:[%s1982] sm:$0xff]
      %v1984 = vld [vmem:[%s1982 + $0x8] sm:$0xff]
      %v1985 = vld [vmem:[%s1982 + $0x18] sm:$0xff]
      %v1986 = vld [vmem:[%s1982 + $0x20] sm:$0xff]
      %v1987 = vld [vmem:[%s1982 + $0x30] sm:$0xff]
      %v1988 = vld [vmem:[%s1982 + $0x38] sm:$0xff]
      %v1989 = vld [vmem:[%s1982 + $0x48] sm:$0xff]
      %v1990 = vld [vmem:[%s1982 + $0x50] sm:$0xff]
      %v1991 = vld [vmem:[%s1982 + $0x60] sm:$0xff]
      %v1992 = vld [vmem:[%s1982 + $0x68] sm:$0xff]
      %v1993 = vld [vmem:[%s1982 + $0x78] sm:$0xff]
      %v1994 = vld [vmem:[%s1982 + $0x80] sm:$0xff]
      %v1995 = vld [vmem:[%s1982 + $0x90] sm:$0xff]
      %v1996 = vld [vmem:[%s1982 + $0x98] sm:$0xff]
      %v1997 = vld [vmem:[%s1982 + $0xa8] sm:$0xff]
      %v1998 = vld [vmem:[%s1982 + $0xb0] sm:$0xff]
      %v2000 = vsel %vm497, %v1983, 0
      %v2003 = vsel %vm497, %v1984, 0
      %v2006 = vsel %vm497, %v1985, 0
      %v2009 = vsel %vm497, %v1986, 0
      %v2012 = vsel %vm497, %v1987, 0
      %v2015 = vsel %vm497, %v1988, 0
      %v2018 = vsel %vm497, %v1989, 0
      %v2021 = vsel %vm497, %v1990, 0
      %v2024 = vsel %vm497, %v1991, 0
      %v2027 = vsel %vm497, %v1992, 0
      %v2030 = vsel %vm497, %v1993, 0
      %v2033 = vsel %vm497, %v1994, 0
      %v2036 = vsel %vm497, %v1995, 0
      %v2039 = vsel %vm497, %v1996, 0
      %v2042 = vsel %vm497, %v1997, 0
      %v2045 = vsel %vm497, %v1998, 0
      %2047 = vmatprep.subr.mxu0 0.0
      %2048 = vmatpush1.msra.mxu0 %v661
      %2049 = vmatprep.subr.mxu0 0.0
      %2050 = vmatpush1.msra.mxu0 0.0
      %2051 = vmatprep.subr.mxu0 0.0
      %2052 = vmatpush1.msra.mxu0 0.0
      %2053 = vmatprep.subr.mxu0 0.0
      %2054 = vmatpush1.msra.mxu0 0.0
      %2055 = vmatprep.subr.mxu0 0.0
      %2056 = vmatpush1.msra.mxu0 0.0
      %2057 = vmatprep.subr.mxu0 0.0
      %2058 = vmatpush1.msra.mxu0 0.0
      %2059 = vmatprep.subr.mxu0 0.0
      %2060 = vmatpush1.msra.mxu0 0.0
      %2061 = vmatprep.subr.mxu0 0.0
      %2062 = vmatpush1.msra.mxu0 0.0
      %2063 = vmatprep.subr.mxu0 0.0
      %2064 = vmatpush1.msra.mxu0 0.0
      %2065 = vmatprep.subr.mxu0 0.0
      %2066 = vmatpush1.msra.mxu0 0.0
      %2067 = vmatprep.subr.mxu0 0.0
      %2068 = vmatpush1.msra.mxu0 0.0
      %2069 = vmatprep.subr.mxu0 0.0
      %2070 = vmatpush1.msra.mxu0 0.0
      %2071 = vmatprep.subr.mxu0 0.0
      %2072 = vmatpush1.msra.mxu0 0.0
      %2073 = vmatprep.subr.mxu0 0.0
      %2074 = vmatpush1.msra.mxu0 0.0
      %2075 = vmatprep.subr.mxu0 0.0
      %2076 = vmatpush1.msra.mxu0 0.0
      %2077 = vmatprep.subr.mxu0 0.0
      %2078 = vmatpush1.msra.mxu0 0.0
      %2079 = vmatprep.subr.mxu0 0.0
      %2080 = vmatpush1.msra.mxu0 0.0
      %2081 = vmatprep.subr.mxu0 0.0
      %2082 = vmatpush1.msra.mxu0 0.0
      %2083 = vmatprep.subr.mxu0 0.0
      %2084 = vmatpush1.msra.mxu0 0.0
      %2085 = vmatprep.subr.mxu0 0.0
      %2086 = vmatpush1.msra.mxu0 0.0
      %2087 = vmatprep.subr.mxu0 0.0
      %2088 = vmatpush1.msra.mxu0 0.0
      %2089 = vmatprep.subr.mxu0 0.0
      %2090 = vmatpush1.msra.mxu0 0.0
      %2091 = vmatprep.subr.mxu0 0.0
      %2092 = vmatpush1.msra.mxu0 0.0
      %2093 = vmatprep.subr.mxu0 0.0
      %2094 = vmatpush1.msra.mxu0 0.0
      %2095 = vmatprep.subr.mxu0 0.0
      %2096 = vmatpush1.msra.mxu0 0.0
      %2097 = vmatprep.subr.mxu0 0.0
      %2098 = vmatpush1.msra.mxu0 0.0
      %2099 = vmatprep.subr.mxu0 0.0
      %2100 = vmatpush1.msra.mxu0 0.0
      %2101 = vmatprep.subr.mxu0 0.0
      %2102 = vmatpush1.msra.mxu0 0.0
      %2103 = vmatprep.subr.mxu0 0.0
      %2104 = vmatpush1.msra.mxu0 0.0
      %2105 = vmatprep.subr.mxu0 0.0
      %2106 = vmatpush1.msra.mxu0 0.0
      %2107 = vmatprep.subr.mxu0 0.0
      %2108 = vmatpush1.msra.mxu0 0.0
      %2109 = vmatprep.subr.mxu0 0.0
      %2110 = vmatpush1.msra.mxu0 0.0
      %2111 = vmatprep.mubr.f32.mxu0 0.0
      %2112 = vmatmul.mubr.f32.gmra.mrb[0].mxu0 %v2000
      %v2113 = vpop.f32.mrb[0].mxu0
      %v2114 = vadd.f32 0.0, %v2113
      %v2115 = vpop.f32.mrb[0].mxu0
      %2116 = vmatprep.mubr.f32.mxu0 0.0
      %2117 = vmatmul.mubr.f32.gmra.mrb[0].mxu0 %v2003
      %v2118 = vpop.f32.mrb[0].mxu0
      %v2119 = vadd.f32 0.0, %v2118
      %v2120 = vpop.f32.mrb[0].mxu0
      %2121 = vmatprep.mubr.f32.mxu0 0.0
      %2122 = vmatmul.mubr.f32.gmra.mrb[0].mxu0 %v2006
      %v2123 = vpop.f32.mrb[0].mxu0
      %v2124 = vadd.f32 0.0, %v2123
      %v2125 = vpop.f32.mrb[0].mxu0
      %2126 = vmatprep.mubr.f32.mxu0 0.0
      %2127 = vmatmul.mubr.f32.gmra.mrb[0].mxu0 %v2009
      %v2128 = vpop.f32.mrb[0].mxu0
      %v2129 = vadd.f32 0.0, %v2128
      %v2130 = vpop.f32.mrb[0].mxu0
      %2131 = vmatprep.mubr.f32.mxu0 0.0
      %2132 = vmatmul.mubr.f32.gmra.mrb[0].mxu0 %v2012
      %v2133 = vpop.f32.mrb[0].mxu0
      %v2134 = vadd.f32 0.0, %v2133
      %v2135 = vpop.f32.mrb[0].mxu0
      %2136 = vmatprep.mubr.f32.mxu0 0.0
      %2137 = vmatmul.mubr.f32.gmra.mrb[0].mxu0 %v2015
      %v2138 = vpop.f32.mrb[0].mxu0
      %v2139 = vadd.f32 0.0, %v2138
      %v2140 = vpop.f32.mrb[0].mxu0
      %2141 = vmatprep.mubr.f32.mxu0 0.0
      %2142 = vmatmul.mubr.f32.gmra.mrb[0].mxu0 %v2018
      %v2143 = vpop.f32.mrb[0].mxu0
      %v2144 = vadd.f32 0.0, %v2143
      %v2145 = vpop.f32.mrb[0].mxu0
      %2146 = vmatprep.mubr.f32.mxu0 0.0
      %2147 = vmatmul.mubr.f32.gmra.mrb[0].mxu0 %v2021
      %v2148 = vpop.f32.mrb[0].mxu0
      %v2149 = vadd.f32 0.0, %v2148
      %v2150 = vpop.f32.mrb[0].mxu0
      %2151 = vmatprep.mubr.f32.mxu0 0.0
      %2152 = vmatmul.mubr.f32.gmra.mrb[0].mxu0 %v2024
      %v2153 = vpop.f32.mrb[0].mxu0
      %v2154 = vadd.f32 0.0, %v2153
      %v2155 = vpop.f32.mrb[0].mxu0
      %2156 = vmatprep.mubr.f32.mxu0 0.0
      %2157 = vmatmul.mubr.f32.gmra.mrb[0].mxu0 %v2027
      %v2158 = vpop.f32.mrb[0].mxu0
      %v2159 = vadd.f32 0.0, %v2158
      %v2160 = vpop.f32.mrb[0].mxu0
      %2161 = vmatprep.mubr.f32.mxu0 0.0
      %2162 = vmatmul.mubr.f32.gmra.mrb[0].mxu0 %v2030
      %v2163 = vpop.f32.mrb[0].mxu0
      %v2164 = vadd.f32 0.0, %v2163
      %v2165 = vpop.f32.mrb[0].mxu0
      %2166 = vmatprep.mubr.f32.mxu0 0.0
      %2167 = vmatmul.mubr.f32.gmra.mrb[0].mxu0 %v2033
      %v2168 = vpop.f32.mrb[0].mxu0
      %v2169 = vadd.f32 0.0, %v2168
      %v2170 = vpop.f32.mrb[0].mxu0
      %2171 = vmatprep.mubr.f32.mxu0 0.0
      %2172 = vmatmul.mubr.f32.gmra.mrb[0].mxu0 %v2036
      %v2173 = vpop.f32.mrb[0].mxu0
      %v2174 = vadd.f32 0.0, %v2173
      %v2175 = vpop.f32.mrb[0].mxu0
      %2176 = vmatprep.mubr.f32.mxu0 0.0
      %2177 = vmatmul.mubr.f32.gmra.mrb[0].mxu0 %v2039
      %v2178 = vpop.f32.mrb[0].mxu0
      %v2179 = vadd.f32 0.0, %v2178
      %v2180 = vpop.f32.mrb[0].mxu0
      %2181 = vmatprep.mubr.f32.mxu0 0.0
      %2182 = vmatmul.mubr.f32.gmra.mrb[0].mxu0 %v2042
      %v2183 = vpop.f32.mrb[0].mxu0
      %v2184 = vadd.f32 0.0, %v2183
      %v2185 = vpop.f32.mrb[0].mxu0
      %2186 = vmatprep.mubr.f32.mxu0 0.0
      %2187 = vmatmul.mubr.f32.gmra.mrb[0].mxu0 %v2045
      %v2188 = vpop.f32.mrb[0].mxu0
      %v2189 = vadd.f32 0.0, %v2188
      %v2190 = vpop.f32.mrb[0].mxu0
      %2191 = vdwg.mxu0
      %v2192 = vadd.f32 %v1966, %v2114
      %v2193 = vadd.f32 %v1967, %v2119
      %v2194 = vadd.f32 %v1968, %v2124
      %v2195 = vadd.f32 %v1969, %v2129
      %v2196 = vadd.f32 %v1970, %v2134
      %v2197 = vadd.f32 %v1971, %v2139
      %v2198 = vadd.f32 %v1972, %v2144
      %v2199 = vadd.f32 %v1973, %v2149
      %v2200 = vadd.f32 %v1974, %v2154
      %v2201 = vadd.f32 %v1975, %v2159
      %v2202 = vadd.f32 %v1976, %v2164
      %v2203 = vadd.f32 %v1977, %v2169
      %v2204 = vadd.f32 %v1978, %v2174
      %v2205 = vadd.f32 %v1979, %v2179
      %v2206 = vadd.f32 %v1980, %v2184
      %v2207 = vadd.f32 %v1981, %v2189
      %v2208 = vld [vmem:[%s1982 + $0x1] sm:$0xff]
      %v2209 = vld [vmem:[%s1982 + $0x9] sm:$0xff]
      %v2210 = vld [vmem:[%s1982 + $0x19] sm:$0xff]
      %v2211 = vld [vmem:[%s1982 + $0x21] sm:$0xff]
      %v2212 = vld [vmem:[%s1982 + $0x31] sm:$0xff]
      %v2213 = vld [vmem:[%s1982 + $0x39] sm:$0xff]
      %v2214 = vld [vmem:[%s1982 + $0x49] sm:$0xff]
      %v2215 = vld [vmem:[%s1982 + $0x51] sm:$0xff]
      %v2216 = vld [vmem:[%s1982 + $0x61] sm:$0xff]
      %v2217 = vld [vmem:[%s1982 + $0x69] sm:$0xff]
      %v2218 = vld [vmem:[%s1982 + $0x79] sm:$0xff]
      %v2219 = vld [vmem:[%s1982 + $0x81] sm:$0xff]
      %v2220 = vld [vmem:[%s1982 + $0x91] sm:$0xff]
      %v2221 = vld [vmem:[%s1982 + $0x99] sm:$0xff]
      %v2222 = vld [vmem:[%s1982 + $0xa9] sm:$0xff]
      %v2223 = vld [vmem:[%s1982 + $0xb1] sm:$0xff]
      %v2225 = vsel %vm497, %v2208, 0
      %v2228 = vsel %vm497, %v2209, 0
      %v2231 = vsel %vm497, %v2210, 0
      %v2234 = vsel %vm497, %v2211, 0
      %v2237 = vsel %vm497, %v2212, 0
      %v2240 = vsel %vm497, %v2213, 0
      %v2243 = vsel %vm497, %v2214, 0
      %v2246 = vsel %vm497, %v2215, 0
      %v2249 = vsel %vm497, %v2216, 0
      %v2252 = vsel %vm497, %v2217, 0
      %v2255 = vsel %vm497, %v2218, 0
      %v2258 = vsel %vm497, %v2219, 0
      %v2261 = vsel %vm497, %v2220, 0
      %v2264 = vsel %vm497, %v2221, 0
      %v2267 = vsel %vm497, %v2222, 0
      %v2270 = vsel %vm497, %v2223, 0
      %2272 = vmatprep.subr.mxu0 0.0
      %2273 = vmatpush1.msra.mxu0 %v662
      %2274 = vmatprep.subr.mxu0 0.0
      %2275 = vmatpush1.msra.mxu0 0.0
      %2276 = vmatprep.subr.mxu0 0.0
      %2277 = vmatpush1.msra.mxu0 0.0
      %2278 = vmatprep.subr.mxu0 0.0
      %2279 = vmatpush1.msra.mxu0 0.0
      %2280 = vmatprep.subr.mxu0 0.0
      %2281 = vmatpush1.msra.mxu0 0.0
      %2282 = vmatprep.subr.mxu0 0.0
      %2283 = vmatpush1.msra.mxu0 0.0
      %2284 = vmatprep.subr.mxu0 0.0
      %2285 = vmatpush1.msra.mxu0 0.0
      %2286 = vmatprep.subr.mxu0 0.0
      %2287 = vmatpush1.msra.mxu0 0.0
      %2288 = vmatprep.subr.mxu0 0.0
      %2289 = vmatpush1.msra.mxu0 0.0
      %2290 = vmatprep.subr.mxu0 0.0
      %2291 = vmatpush1.msra.mxu0 0.0
      %2292 = vmatprep.subr.mxu0 0.0
      %2293 = vmatpush1.msra.mxu0 0.0
      %2294 = vmatprep.subr.mxu0 0.0
      %2295 = vmatpush1.msra.mxu0 0.0
      %2296 = vmatprep.subr.mxu0 0.0
      %2297 = vmatpush1.msra.mxu0 0.0
      %2298 = vmatprep.subr.mxu0 0.0
      %2299 = vmatpush1.msra.mxu0 0.0
      %2300 = vmatprep.subr.mxu0 0.0
      %2301 = vmatpush1.msra.mxu0 0.0
      %2302 = vmatprep.subr.mxu0 0.0
      %2303 = vmatpush1.msra.mxu0 0.0
      %2304 = vmatprep.subr.mxu0 0.0
      %2305 = vmatpush1.msra.mxu0 0.0
      %2306 = vmatprep.subr.mxu0 0.0
      %2307 = vmatpush1.msra.mxu0 0.0
      %2308 = vmatprep.subr.mxu0 0.0
      %2309 = vmatpush1.msra.mxu0 0.0
      %2310 = vmatprep.subr.mxu0 0.0
      %2311 = vmatpush1.msra.mxu0 0.0
      %2312 = vmatprep.subr.mxu0 0.0
      %2313 = vmatpush1.msra.mxu0 0.0
      %2314 = vmatprep.subr.mxu0 0.0
      %2315 = vmatpush1.msra.mxu0 0.0
      %2316 = vmatprep.subr.mxu0 0.0
      %2317 = vmatpush1.msra.mxu0 0.0
      %2318 = vmatprep.subr.mxu0 0.0
      %2319 = vmatpush1.msra.mxu0 0.0
      %2320 = vmatprep.subr.mxu0 0.0
      %2321 = vmatpush1.msra.mxu0 0.0
      %2322 = vmatprep.subr.mxu0 0.0
      %2323 = vmatpush1.msra.mxu0 0.0
      %2324 = vmatprep.subr.mxu0 0.0
      %2325 = vmatpush1.msra.mxu0 0.0
      %2326 = vmatprep.subr.mxu0 0.0
      %2327 = vmatpush1.msra.mxu0 0.0
      %2328 = vmatprep.subr.mxu0 0.0
      %2329 = vmatpush1.msra.mxu0 0.0
      %2330 = vmatprep.subr.mxu0 0.0
      %2331 = vmatpush1.msra.mxu0 0.0
      %2332 = vmatprep.subr.mxu0 0.0
      %2333 = vmatpush1.msra.mxu0 0.0
      %2334 = vmatprep.subr.mxu0 0.0
      %2335 = vmatpush1.msra.mxu0 0.0
      %2336 = vmatprep.mubr.f32.mxu0 0.0
      %2337 = vmatmul.mubr.f32.gmra.mrb[0].mxu0 %v2225
      %v2338 = vpop.f32.mrb[0].mxu0
      %v2339 = vadd.f32 0.0, %v2338
      %v2340 = vpop.f32.mrb[0].mxu0
      %2341 = vmatprep.mubr.f32.mxu0 0.0
      %2342 = vmatmul.mubr.f32.gmra.mrb[0].mxu0 %v2228
      %v2343 = vpop.f32.mrb[0].mxu0
      %v2344 = vadd.f32 0.0, %v2343
      %v2345 = vpop.f32.mrb[0].mxu0
      %2346 = vmatprep.mubr.f32.mxu0 0.0
      %2347 = vmatmul.mubr.f32.gmra.mrb[0].mxu0 %v2231
      %v2348 = vpop.f32.mrb[0].mxu0
      %v2349 = vadd.f32 0.0, %v2348
      %v2350 = vpop.f32.mrb[0].mxu0
      %2351 = vmatprep.mubr.f32.mxu0 0.0
      %2352 = vmatmul.mubr.f32.gmra.mrb[0].mxu0 %v2234
      %v2353 = vpop.f32.mrb[0].mxu0
      %v2354 = vadd.f32 0.0, %v2353
      %v2355 = vpop.f32.mrb[0].mxu0
      %2356 = vmatprep.mubr.f32.mxu0 0.0
      %2357 = vmatmul.mubr.f32.gmra.mrb[0].mxu0 %v2237
      %v2358 = vpop.f32.mrb[0].mxu0
      %v2359 = vadd.f32 0.0, %v2358
      %v2360 = vpop.f32.mrb[0].mxu0
      %2361 = vmatprep.mubr.f32.mxu0 0.0
      %2362 = vmatmul.mubr.f32.gmra.mrb[0].mxu0 %v2240
      %v2363 = vpop.f32.mrb[0].mxu0
      %v2364 = vadd.f32 0.0, %v2363
      %v2365 = vpop.f32.mrb[0].mxu0
      %2366 = vmatprep.mubr.f32.mxu0 0.0
      %2367 = vmatmul.mubr.f32.gmra.mrb[0].mxu0 %v2243
      %v2368 = vpop.f32.mrb[0].mxu0
      %v2369 = vadd.f32 0.0, %v2368
      %v2370 = vpop.f32.mrb[0].mxu0
      %2371 = vmatprep.mubr.f32.mxu0 0.0
      %2372 = vmatmul.mubr.f32.gmra.mrb[0].mxu0 %v2246
      %v2373 = vpop.f32.mrb[0].mxu0
      %v2374 = vadd.f32 0.0, %v2373
      %v2375 = vpop.f32.mrb[0].mxu0
      %2376 = vmatprep.mubr.f32.mxu0 0.0
      %2377 = vmatmul.mubr.f32.gmra.mrb[0].mxu0 %v2249
      %v2378 = vpop.f32.mrb[0].mxu0
      %v2379 = vadd.f32 0.0, %v2378
      %v2380 = vpop.f32.mrb[0].mxu0
      %2381 = vmatprep.mubr.f32.mxu0 0.0
      %2382 = vmatmul.mubr.f32.gmra.mrb[0].mxu0 %v2252
      %v2383 = vpop.f32.mrb[0].mxu0
      %v2384 = vadd.f32 0.0, %v2383
      %v2385 = vpop.f32.mrb[0].mxu0
      %2386 = vmatprep.mubr.f32.mxu0 0.0
      %2387 = vmatmul.mubr.f32.gmra.mrb[0].mxu0 %v2255
      %v2388 = vpop.f32.mrb[0].mxu0
      %v2389 = vadd.f32 0.0, %v2388
      %v2390 = vpop.f32.mrb[0].mxu0
      %2391 = vmatprep.mubr.f32.mxu0 0.0
      %2392 = vmatmul.mubr.f32.gmra.mrb[0].mxu0 %v2258
      %v2393 = vpop.f32.mrb[0].mxu0
      %v2394 = vadd.f32 0.0, %v2393
      %v2395 = vpop.f32.mrb[0].mxu0
      %2396 = vmatprep.mubr.f32.mxu0 0.0
      %2397 = vmatmul.mubr.f32.gmra.mrb[0].mxu0 %v2261
      %v2398 = vpop.f32.mrb[0].mxu0
      %v2399 = vadd.f32 0.0, %v2398
      %v2400 = vpop.f32.mrb[0].mxu0
      %2401 = vmatprep.mubr.f32.mxu0 0.0
      %2402 = vmatmul.mubr.f32.gmra.mrb[0].mxu0 %v2264
      %v2403 = vpop.f32.mrb[0].mxu0
      %v2404 = vadd.f32 0.0, %v2403
      %v2405 = vpop.f32.mrb[0].mxu0
      %2406 = vmatprep.mubr.f32.mxu0 0.0
      %2407 = vmatmul.mubr.f32.gmra.mrb[0].mxu0 %v2267
      %v2408 = vpop.f32.mrb[0].mxu0
      %v2409 = vadd.f32 0.0, %v2408
      %v2410 = vpop.f32.mrb[0].mxu0
      %2411 = vmatprep.mubr.f32.mxu0 0.0
      %2412 = vmatmul.mubr.f32.gmra.mrb[0].mxu0 %v2270
      %v2413 = vpop.f32.mrb[0].mxu0
      %v2414 = vadd.f32 0.0, %v2413
      %v2415 = vpop.f32.mrb[0].mxu0
      %2416 = vdwg.mxu0
      %v2417 = vadd.f32 %v2192, %v2339
      %v2418 = vadd.f32 %v2193, %v2344
      %v2419 = vadd.f32 %v2194, %v2349
      %v2420 = vadd.f32 %v2195, %v2354
      %v2421 = vadd.f32 %v2196, %v2359
      %v2422 = vadd.f32 %v2197, %v2364
      %v2423 = vadd.f32 %v2198, %v2369
      %v2424 = vadd.f32 %v2199, %v2374
      %v2425 = vadd.f32 %v2200, %v2379
      %v2426 = vadd.f32 %v2201, %v2384
      %v2427 = vadd.f32 %v2202, %v2389
      %v2428 = vadd.f32 %v2203, %v2394
      %v2429 = vadd.f32 %v2204, %v2399
      %v2430 = vadd.f32 %v2205, %v2404
      %v2431 = vadd.f32 %v2206, %v2409
      %v2432 = vadd.f32 %v2207, %v2414
      %v2433 = vld [vmem:[%s1982 + $0x2] sm:$0xff]
      %v2434 = vld [vmem:[%s1982 + $0xa] sm:$0xff]
      %v2435 = vld [vmem:[%s1982 + $0x1a] sm:$0xff]
      %v2436 = vld [vmem:[%s1982 + $0x22] sm:$0xff]
      %v2437 = vld [vmem:[%s1982 + $0x32] sm:$0xff]
      %v2438 = vld [vmem:[%s1982 + $0x3a] sm:$0xff]
      %v2439 = vld [vmem:[%s1982 + $0x4a] sm:$0xff]
      %v2440 = vld [vmem:[%s1982 + $0x52] sm:$0xff]
      %v2441 = vld [vmem:[%s1982 + $0x62] sm:$0xff]
      %v2442 = vld [vmem:[%s1982 + $0x6a] sm:$0xff]
      %v2443 = vld [vmem:[%s1982 + $0x7a] sm:$0xff]
      %v2444 = vld [vmem:[%s1982 + $0x82] sm:$0xff]
      %v2445 = vld [vmem:[%s1982 + $0x92] sm:$0xff]
      %v2446 = vld [vmem:[%s1982 + $0x9a] sm:$0xff]
      %v2447 = vld [vmem:[%s1982 + $0xaa] sm:$0xff]
      %v2448 = vld [vmem:[%s1982 + $0xb2] sm:$0xff]
      %v2450 = vsel %vm497, %v2433, 0
      %v2453 = vsel %vm497, %v2434, 0
      %v2456 = vsel %vm497, %v2435, 0
      %v2459 = vsel %vm497, %v2436, 0
      %v2462 = vsel %vm497, %v2437, 0
      %v2465 = vsel %vm497, %v2438, 0
      %v2468 = vsel %vm497, %v2439, 0
      %v2471 = vsel %vm497, %v2440, 0
      %v2474 = vsel %vm497, %v2441, 0
      %v2477 = vsel %vm497, %v2442, 0
      %v2480 = vsel %vm497, %v2443, 0
      %v2483 = vsel %vm497, %v2444, 0
      %v2486 = vsel %vm497, %v2445, 0
      %v2489 = vsel %vm497, %v2446, 0
      %v2492 = vsel %vm497, %v2447, 0
      %v2495 = vsel %vm497, %v2448, 0
      %2497 = vmatprep.subr.mxu0 0.0
      %2498 = vmatpush1.msra.mxu0 %v663
      %2499 = vmatprep.subr.mxu0 0.0
      %2500 = vmatpush1.msra.mxu0 0.0
      %2501 = vmatprep.subr.mxu0 0.0
      %2502 = vmatpush1.msra.mxu0 0.0
      %2503 = vmatprep.subr.mxu0 0.0
      %2504 = vmatpush1.msra.mxu0 0.0
      %2505 = vmatprep.subr.mxu0 0.0
      %2506 = vmatpush1.msra.mxu0 0.0
      %2507 = vmatprep.subr.mxu0 0.0
      %2508 = vmatpush1.msra.mxu0 0.0
      %2509 = vmatprep.subr.mxu0 0.0
      %2510 = vmatpush1.msra.mxu0 0.0
      %2511 = vmatprep.subr.mxu0 0.0
      %2512 = vmatpush1.msra.mxu0 0.0
      %2513 = vmatprep.subr.mxu0 0.0
      %2514 = vmatpush1.msra.mxu0 0.0
      %2515 = vmatprep.subr.mxu0 0.0
      %2516 = vmatpush1.msra.mxu0 0.0
      %2517 = vmatprep.subr.mxu0 0.0
      %2518 = vmatpush1.msra.mxu0 0.0
      %2519 = vmatprep.subr.mxu0 0.0
      %2520 = vmatpush1.msra.mxu0 0.0
      %2521 = vmatprep.subr.mxu0 0.0
      %2522 = vmatpush1.msra.mxu0 0.0
      %2523 = vmatprep.subr.mxu0 0.0
      %2524 = vmatpush1.msra.mxu0 0.0
      %2525 = vmatprep.subr.mxu0 0.0
      %2526 = vmatpush1.msra.mxu0 0.0
      %2527 = vmatprep.subr.mxu0 0.0
      %2528 = vmatpush1.msra.mxu0 0.0
      %2529 = vmatprep.subr.mxu0 0.0
      %2530 = vmatpush1.msra.mxu0 0.0
      %2531 = vmatprep.subr.mxu0 0.0
      %2532 = vmatpush1.msra.mxu0 0.0
      %2533 = vmatprep.subr.mxu0 0.0
      %2534 = vmatpush1.msra.mxu0 0.0
      %2535 = vmatprep.subr.mxu0 0.0
      %2536 = vmatpush1.msra.mxu0 0.0
      %2537 = vmatprep.subr.mxu0 0.0
      %2538 = vmatpush1.msra.mxu0 0.0
      %2539 = vmatprep.subr.mxu0 0.0
      %2540 = vmatpush1.msra.mxu0 0.0
      %2541 = vmatprep.subr.mxu0 0.0
      %2542 = vmatpush1.msra.mxu0 0.0
      %2543 = vmatprep.subr.mxu0 0.0
      %2544 = vmatpush1.msra.mxu0 0.0
      %2545 = vmatprep.subr.mxu0 0.0
      %2546 = vmatpush1.msra.mxu0 0.0
      %2547 = vmatprep.subr.mxu0 0.0
      %2548 = vmatpush1.msra.mxu0 0.0
      %2549 = vmatprep.subr.mxu0 0.0
      %2550 = vmatpush1.msra.mxu0 0.0
      %2551 = vmatprep.subr.mxu0 0.0
      %2552 = vmatpush1.msra.mxu0 0.0
      %2553 = vmatprep.subr.mxu0 0.0
      %2554 = vmatpush1.msra.mxu0 0.0
      %2555 = vmatprep.subr.mxu0 0.0
      %2556 = vmatpush1.msra.mxu0 0.0
      %2557 = vmatprep.subr.mxu0 0.0
      %2558 = vmatpush1.msra.mxu0 0.0
      %2559 = vmatprep.subr.mxu0 0.0
      %2560 = vmatpush1.msra.mxu0 0.0
      %2561 = vmatprep.mubr.f32.mxu0 0.0
      %2562 = vmatmul.mubr.f32.gmra.mrb[0].mxu0 %v2450
      %v2563 = vpop.f32.mrb[0].mxu0
      %v2564 = vadd.f32 0.0, %v2563
      %v2565 = vpop.f32.mrb[0].mxu0
      %2566 = vmatprep.mubr.f32.mxu0 0.0
      %2567 = vmatmul.mubr.f32.gmra.mrb[0].mxu0 %v2453
      %v2568 = vpop.f32.mrb[0].mxu0
      %v2569 = vadd.f32 0.0, %v2568
      %v2570 = vpop.f32.mrb[0].mxu0
      %2571 = vmatprep.mubr.f32.mxu0 0.0
      %2572 = vmatmul.mubr.f32.gmra.mrb[0].mxu0 %v2456
      %v2573 = vpop.f32.mrb[0].mxu0
      %v2574 = vadd.f32 0.0, %v2573
      %v2575 = vpop.f32.mrb[0].mxu0
      %2576 = vmatprep.mubr.f32.mxu0 0.0
      %2577 = vmatmul.mubr.f32.gmra.mrb[0].mxu0 %v2459
      %v2578 = vpop.f32.mrb[0].mxu0
      %v2579 = vadd.f32 0.0, %v2578
      %v2580 = vpop.f32.mrb[0].mxu0
      %2581 = vmatprep.mubr.f32.mxu0 0.0
      %2582 = vmatmul.mubr.f32.gmra.mrb[0].mxu0 %v2462
      %v2583 = vpop.f32.mrb[0].mxu0
      %v2584 = vadd.f32 0.0, %v2583
      %v2585 = vpop.f32.mrb[0].mxu0
      %2586 = vmatprep.mubr.f32.mxu0 0.0
      %2587 = vmatmul.mubr.f32.gmra.mrb[0].mxu0 %v2465
      %v2588 = vpop.f32.mrb[0].mxu0
      %v2589 = vadd.f32 0.0, %v2588
      %v2590 = vpop.f32.mrb[0].mxu0
      %2591 = vmatprep.mubr.f32.mxu0 0.0
      %2592 = vmatmul.mubr.f32.gmra.mrb[0].mxu0 %v2468
      %v2593 = vpop.f32.mrb[0].mxu0
      %v2594 = vadd.f32 0.0, %v2593
      %v2595 = vpop.f32.mrb[0].mxu0
      %2596 = vmatprep.mubr.f32.mxu0 0.0
      %2597 = vmatmul.mubr.f32.gmra.mrb[0].mxu0 %v2471
      %v2598 = vpop.f32.mrb[0].mxu0
      %v2599 = vadd.f32 0.0, %v2598
      %v2600 = vpop.f32.mrb[0].mxu0
      %2601 = vmatprep.mubr.f32.mxu0 0.0
      %2602 = vmatmul.mubr.f32.gmra.mrb[0].mxu0 %v2474
      %v2603 = vpop.f32.mrb[0].mxu0
      %v2604 = vadd.f32 0.0, %v2603
      %v2605 = vpop.f32.mrb[0].mxu0
      %2606 = vmatprep.mubr.f32.mxu0 0.0
      %2607 = vmatmul.mubr.f32.gmra.mrb[0].mxu0 %v2477
      %v2608 = vpop.f32.mrb[0].mxu0
      %v2609 = vadd.f32 0.0, %v2608
      %v2610 = vpop.f32.mrb[0].mxu0
      %2611 = vmatprep.mubr.f32.mxu0 0.0
      %2612 = vmatmul.mubr.f32.gmra.mrb[0].mxu0 %v2480
      %v2613 = vpop.f32.mrb[0].mxu0
      %v2614 = vadd.f32 0.0, %v2613
      %v2615 = vpop.f32.mrb[0].mxu0
      %2616 = vmatprep.mubr.f32.mxu0 0.0
      %2617 = vmatmul.mubr.f32.gmra.mrb[0].mxu0 %v2483
      %v2618 = vpop.f32.mrb[0].mxu0
      %v2619 = vadd.f32 0.0, %v2618
      %v2620 = vpop.f32.mrb[0].mxu0
      %2621 = vmatprep.mubr.f32.mxu0 0.0
      %2622 = vmatmul.mubr.f32.gmra.mrb[0].mxu0 %v2486
      %v2623 = vpop.f32.mrb[0].mxu0
      %v2624 = vadd.f32 0.0, %v2623
      %v2625 = vpop.f32.mrb[0].mxu0
      %2626 = vmatprep.mubr.f32.mxu0 0.0
      %2627 = vmatmul.mubr.f32.gmra.mrb[0].mxu0 %v2489
      %v2628 = vpop.f32.mrb[0].mxu0
      %v2629 = vadd.f32 0.0, %v2628
      %v2630 = vpop.f32.mrb[0].mxu0
      %2631 = vmatprep.mubr.f32.mxu0 0.0
      %2632 = vmatmul.mubr.f32.gmra.mrb[0].mxu0 %v2492
      %v2633 = vpop.f32.mrb[0].mxu0
      %v2634 = vadd.f32 0.0, %v2633
      %v2635 = vpop.f32.mrb[0].mxu0
      %2636 = vmatprep.mubr.f32.mxu0 0.0
      %2637 = vmatmul.mubr.f32.gmra.mrb[0].mxu0 %v2495
      %v2638 = vpop.f32.mrb[0].mxu0
      %v2639 = vadd.f32 0.0, %v2638
      %v2640 = vpop.f32.mrb[0].mxu0
      %2641 = vdwg.mxu0
      %v2642 = vadd.f32 %v2417, %v2564
      %v2643 = vadd.f32 %v2418, %v2569
      %v2644 = vadd.f32 %v2419, %v2574
      %v2645 = vadd.f32 %v2420, %v2579
      %v2646 = vadd.f32 %v2421, %v2584
      %v2647 = vadd.f32 %v2422, %v2589
      %v2648 = vadd.f32 %v2423, %v2594
      %v2649 = vadd.f32 %v2424, %v2599
      %v2650 = vadd.f32 %v2425, %v2604
      %v2651 = vadd.f32 %v2426, %v2609
      %v2652 = vadd.f32 %v2427, %v2614
      %v2653 = vadd.f32 %v2428, %v2619
      %v2654 = vadd.f32 %v2429, %v2624
      %v2655 = vadd.f32 %v2430, %v2629
      %v2656 = vadd.f32 %v2431, %v2634
      %v2657 = vadd.f32 %v2432, %v2639
      %v2658 = vld [vmem:[%s6] sm:$0x1]
      %v2660 = vlaneseq
      %v2661 = vshrl.u32 %v2660, 7
      %v2662 = vsub.s32 0, %v2661
      %v2663 = vrot.slane %v2658, %v2662
      %v2665 = vadd.f32 %v2642, %v2663
      %v2666 = vadd.f32 %v2643, %v2663
      %v2667 = vadd.f32 %v2644, %v2663
      %v2668 = vadd.f32 %v2645, %v2663
      %v2669 = vadd.f32 %v2646, %v2663
      %v2670 = vadd.f32 %v2647, %v2663
      %v2671 = vadd.f32 %v2648, %v2663
      %v2672 = vadd.f32 %v2649, %v2663
      %v2673 = vadd.f32 %v2650, %v2663
      %v2674 = vadd.f32 %v2651, %v2663
      %v2675 = vadd.f32 %v2652, %v2663
      %v2676 = vadd.f32 %v2653, %v2663
      %v2677 = vadd.f32 %v2654, %v2663
      %v2678 = vadd.f32 %v2655, %v2663
      %v2679 = vadd.f32 %v2656, %v2663
      %v2680 = vadd.f32 %v2657, %v2663
      %v2681 = vsel %vm497, %v2665, 0.0
      %v2682 = vsel %vm497, %v2666, 0.0
      %v2683 = vadd.f32 %v2681, %v2682
      %v2684 = vsel %vm497, %v2667, 0.0
      %v2685 = vadd.f32 %v2683, %v2684
      %v2686 = vsel %vm497, %v2668, 0.0
      %v2687 = vadd.f32 %v2685, %v2686
      %v2688 = vsel %vm497, %v2669, 0.0
      %v2689 = vadd.f32 %v2687, %v2688
      %v2690 = vsel %vm497, %v2670, 0.0
      %v2691 = vadd.f32 %v2689, %v2690
      %v2692 = vsel %vm497, %v2671, 0.0
      %v2693 = vadd.f32 %v2691, %v2692
      %v2694 = vsel %vm497, %v2672, 0.0
      %v2695 = vadd.f32 %v2693, %v2694
      %v2696 = vsel %vm497, %v2673, 0.0
      %v2697 = vadd.f32 %v2695, %v2696
      %v2698 = vsel %vm497, %v2674, 0.0
      %v2699 = vadd.f32 %v2697, %v2698
      %v2700 = vsel %vm497, %v2675, 0.0
      %v2701 = vadd.f32 %v2699, %v2700
      %v2702 = vsel %vm497, %v2676, 0.0
      %v2703 = vadd.f32 %v2701, %v2702
      %v2704 = vsel %vm497, %v2677, 0.0
      %v2705 = vadd.f32 %v2703, %v2704
      %v2706 = vsel %vm497, %v2678, 0.0
      %v2707 = vadd.f32 %v2705, %v2706
      %v2708 = vsel %vm497, %v2679, 0.0
      %v2709 = vadd.f32 %v2707, %v2708
      %v2710 = vsel %vm497, %v2680, 0.0
      %v2711 = vadd.f32 %v2709, %v2710
      %v2712 = vrot.slane %v2711, 4
      %v2713 = vadd.f32 %v2711, %v2712
      %v2714 = vrot.slane %v2713, 2
      %v2715 = vadd.f32 %v2713, %v2714
      %v2716 = vrot.slane %v2715, 1
      %v2717 = vadd.f32 %v2715, %v2716
      %vm2718 = vcmask 57344
      %2719 = vst.msk [vmem:[%s494] sm:$0x1] %vm2718, %v2717
      %v2720 = vmul.f32 %v2665, %v2665
      %v2721 = vmul.f32 %v2666, %v2666
      %v2722 = vmul.f32 %v2667, %v2667
      %v2723 = vmul.f32 %v2668, %v2668
      %v2724 = vmul.f32 %v2669, %v2669
      %v2725 = vmul.f32 %v2670, %v2670
      %v2726 = vmul.f32 %v2671, %v2671
      %v2727 = vmul.f32 %v2672, %v2672
      %v2728 = vmul.f32 %v2673, %v2673
      %v2729 = vmul.f32 %v2674, %v2674
      %v2730 = vmul.f32 %v2675, %v2675
      %v2731 = vmul.f32 %v2676, %v2676
      %v2732 = vmul.f32 %v2677, %v2677
      %v2733 = vmul.f32 %v2678, %v2678
      %v2734 = vmul.f32 %v2679, %v2679
      %v2735 = vmul.f32 %v2680, %v2680
      %v2736 = vsel %vm497, %v2720, 0.0
      %v2737 = vsel %vm497, %v2721, 0.0
      %v2738 = vadd.f32 %v2736, %v2737
      %v2739 = vsel %vm497, %v2722, 0.0
      %v2740 = vadd.f32 %v2738, %v2739
      %v2741 = vsel %vm497, %v2723, 0.0
      %v2742 = vadd.f32 %v2740, %v2741
      %v2743 = vsel %vm497, %v2724, 0.0
      %v2744 = vadd.f32 %v2742, %v2743
      %v2745 = vsel %vm497, %v2725, 0.0
      %v2746 = vadd.f32 %v2744, %v2745
      %v2747 = vsel %vm497, %v2726, 0.0
      %v2748 = vadd.f32 %v2746, %v2747
      %v2749 = vsel %vm497, %v2727, 0.0
      %v2750 = vadd.f32 %v2748, %v2749
      %v2751 = vsel %vm497, %v2728, 0.0
      %v2752 = vadd.f32 %v2750, %v2751
      %v2753 = vsel %vm497, %v2729, 0.0
      %v2754 = vadd.f32 %v2752, %v2753
      %v2755 = vsel %vm497, %v2730, 0.0
      %v2756 = vadd.f32 %v2754, %v2755
      %v2757 = vsel %vm497, %v2731, 0.0
      %v2758 = vadd.f32 %v2756, %v2757
      %v2759 = vsel %vm497, %v2732, 0.0
      %v2760 = vadd.f32 %v2758, %v2759
      %v2761 = vsel %vm497, %v2733, 0.0
      %v2762 = vadd.f32 %v2760, %v2761
      %v2763 = vsel %vm497, %v2734, 0.0
      %v2764 = vadd.f32 %v2762, %v2763
      %v2765 = vsel %vm497, %v2735, 0.0
      %v2766 = vadd.f32 %v2764, %v2765
      %v2767 = vrot.slane %v2766, 4
      %v2768 = vadd.f32 %v2766, %v2767
      %v2769 = vrot.slane %v2768, 2
      %v2770 = vadd.f32 %v2768, %v2769
      %v2771 = vrot.slane %v2770, 1
      %v2772 = vadd.f32 %v2770, %v2771
      %2773 = vst.msk [vmem:[%s494 + $0x1] sm:$0x1] %vm2718, %v2772
      %2774 = vst.msk [vmem:[%s485] sm:$0xff] %vm497, %v2665
      %2775 = vst.msk [vmem:[%s485 + $0x8] sm:$0xff] %vm497, %v2666
      %2776 = vst.msk [vmem:[%s485 + $0x10] sm:$0xff] %vm497, %v2667
      %2777 = vst.msk [vmem:[%s485 + $0x18] sm:$0xff] %vm497, %v2668
      %2778 = vst.msk [vmem:[%s485 + $0x20] sm:$0xff] %vm497, %v2669
      %2779 = vst.msk [vmem:[%s485 + $0x28] sm:$0xff] %vm497, %v2670
      %2780 = vst.msk [vmem:[%s485 + $0x30] sm:$0xff] %vm497, %v2671
      %2781 = vst.msk [vmem:[%s485 + $0x38] sm:$0xff] %vm497, %v2672
      %2782 = vst.msk [vmem:[%s485 + $0x40] sm:$0xff] %vm497, %v2673
      %2783 = vst.msk [vmem:[%s485 + $0x48] sm:$0xff] %vm497, %v2674
      %2784 = vst.msk [vmem:[%s485 + $0x50] sm:$0xff] %vm497, %v2675
      %2785 = vst.msk [vmem:[%s485 + $0x58] sm:$0xff] %vm497, %v2676
      %2786 = vst.msk [vmem:[%s485 + $0x60] sm:$0xff] %vm497, %v2677
      %2787 = vst.msk [vmem:[%s485 + $0x68] sm:$0xff] %vm497, %v2678
      %2788 = vst.msk [vmem:[%s485 + $0x70] sm:$0xff] %vm497, %v2679
      %2789 = vst.msk [vmem:[%s485 + $0x78] sm:$0xff] %vm497, %v2680
      %s2790 = smul.u32 8, %s25
      %p2791 = scmp.lt.s32.totalorder %s24, 1
      %s2792 = scalar_select %p2791, %s24, 1
      %p2793 = scmp.lt.s32.totalorder %s2790, 15
      %s2794 = scalar_select %p2793, %s2790, 15
      %s2795 = smul.addr %s2794, 2
      %s2796 = smul.addr %s2792, 32
      %s2797 = sadd.s32 %s2795, %s2796
      %s2798 = smul.addr %s2797, 8
      %s2799 = scalar_lea.vmem %s7, %s2798
      %p2800 = scmp.lt.s32.totalorder %s24, 1
      %s2801 = scalar_select %p2800, %s24, 1
      %p2802 = scmp.lt.s32.totalorder %s25, 1
      %s2803 = scalar_select %p2802, %s25, 1
      %s2804 = smul.addr %s2801, 2
      %s2805 = sadd.s32 %s2803, %s2804
      %s2806 = smul.addr %s2805, 2
      %s2807 = scalar_lea.vmem %s8, %s2806
      // Predicated region
      $region49: #{up_forward.6} parent=47 // pred_check
        %p2808 = pneg %p236
      $region50: #{up_forward.6} parent=47 // pred_check_branch
        %2810 = sbr.rel (%p2808) target = $region52
      $region51: #{up_forward.6} parent=47 // pred_region
        %s2811 = smul.u32 8, %s25
      $region52: #{up_forward.6} parent=47 // pred_fallthru
        _
      // Predicated region
      $region53: #{up_forward.6} parent=47 // pred_check
        %p2812 = pneg %p264
      $region54: #{up_forward.6} parent=47 // pred_check_branch
        %2814 = sbr.rel (%p2812) target = $region56
      $region55: #{up_forward.6} parent=47 // pred_region
        _
      $region56: #{up_forward.6} parent=47 // pred_fallthru
        _
    $region48: #{up_forward.6} parent=5 // pred_fallthru
      _
    %p2815 = scmp.le.s32.totalorder 2, %s15
    // Predicated region
    $region57: #{up_forward.6} parent=5 // pred_check
      %p2816 = pneg %p2815
    $region58: #{up_forward.6} parent=5 // pred_check_branch
      %2818 = sbr.rel (%p2816) target = $region60
    $region59: #{up_forward.6} parent=5 // pred_region
      %s2819 = ssub.s32 %s15, 2
      // Predicated region
      $region61: #{up_forward.6} parent=59 // pred_check
        %p2820 = pneg %p242
      $region62: #{up_forward.6} parent=59 // pred_check_branch
        %2822 = sbr.rel (%p2820) target = $region64
      $region63: #{up_forward.6} parent=59 // pred_region
        %s2823 = smul.u32 8, %s27
        %p2824 = scmp.lt.s32.totalorder %s26, 1
        %s2825 = scalar_select %p2824, %s26, 1
        %p2826 = scmp.lt.s32.totalorder %s2823, 15
        %s2827 = scalar_select %p2826, %s2823, 15
        %s2828 = smul.addr %s2827, 2
        %s2829 = smul.addr %s2825, 32
        %s2830 = sadd.s32 %s2828, %s2829
        %s2831 = smul.addr %s2830, 8
        %s2832 = scalar_lea.vmem %s7, %s2831
      $region64: #{up_forward.6} parent=59 // pred_fallthru
        _
      // Predicated region
      $region65: #{up_forward.6} parent=59 // pred_check
        %p2833 = pneg %p270
      $region66: #{up_forward.6} parent=59 // pred_check_branch
        %2835 = sbr.rel (%p2833) target = $region68
      $region67: #{up_forward.6} parent=59 // pred_region
        %p2836 = scmp.lt.s32.totalorder %s26, 1
        %s2837 = scalar_select %p2836, %s26, 1
        %p2838 = scmp.lt.s32.totalorder %s27, 1
        %s2839 = scalar_select %p2838, %s27, 1
        %s2840 = smul.addr %s2837, 2
        %s2841 = sadd.s32 %s2839, %s2840
        %s2842 = smul.addr %s2841, 2
        %s2843 = scalar_lea.vmem %s8, %s2842
      $region68: #{up_forward.6} parent=59 // pred_fallthru
        _
    $region60: #{up_forward.6} parent=5 // pred_fallthru
      _
  $region6: #{up_forward.6} parent=0 // loop_footer
    %s19 = sadd.s32 1, %s15
  $region7: #{up_forward.6} parent=0 // loop_footer_branch
    %14 = sbr.rel target = $region3
  $region8: #{up_forward.6} parent=0 // loop_exit
    _

// kernel: up_forward.5
$region0: #{up_forward.5}
  #allocation0 [shape = 'u32[]', space=smem, size = 0x4, offset = 0x4, fixed_abs, tag = 'smem constant byte address 0x4 - core index']
  #allocation1 [shape = 'u32[144,128]{1,0:T(1,128)}', space=vmem, size = 0x12000, scoped, tag = 'internal scratch']
  #allocation2 [shape = 'f32[10,18,4]{2,1,0:T(8,128)}', space=vmem, size = 0x1e000, scoped, tag = 'scratch operand']
  #allocation3 [shape = 'f32[10,18,4]{2,1,0:T(8,128)}', space=vmem, size = 0x1e000, scoped, tag = 'scratch operand']
  %s0 = inlined_call_operand.vmem [shape: f32[2,16,16,4], index: 0, kind: input, shape index: {}, may-alias: {0,1,2}]
  %s1 = inlined_call_operand.vmem [shape: f32[2,16,16,4], index: 1, kind: input, shape index: {}, may-alias: {0,1,2}]
  %s2 = inlined_call_operand.vmem [shape: f32[2,16,16,4], index: 2, kind: input, shape index: {}, may-alias: {0,1,2}]
  %s3 = inlined_call_operand.vmem [shape: f32[2,16,16,4], index: 3, kind: input, shape index: {}, may-alias: {3,4,5}]
  %s4 = inlined_call_operand.vmem [shape: f32[2,16,16,4], index: 4, kind: input, shape index: {}, may-alias: {3,4,5}]
  %s5 = inlined_call_operand.vmem [shape: f32[2,16,16,4], index: 5, kind: input, shape index: {}, may-alias: {3,4,5}]
  %s6 = inlined_call_operand.vmem [shape: f32[9,4,8], index: 6, kind: input, shape index: {}]
  %s7 = inlined_call_operand.vmem [shape: f32[9,4,8], index: 7, kind: input, shape index: {}]
  %s8 = inlined_call_operand.vmem [shape: f32[1,8], index: 8, kind: input, shape index: {}]
  %s9 = inlined_call_operand.vmem [shape: f32[2,16,16,8], index: 9, kind: output, shape index: {0}]
  %s10 = inlined_call_operand.vmem [shape: f32[2,2,2,8], index: 10, kind: output, shape index: {1}]
  %11 = xla_tuple %s9, %s10
  %s12 = sld [smem:[#allocation0]]
  $region77: #{up_forward.5} parent=0
    _
  %s14 = ssub.s32 1, %s12
  %s15 = scalar_select 0, %s14, %s12
  loop: start=0, step=1, limit=6
  $region2: #{up_forward.5} parent=0 // loop_pre_header
    _
  $region3: #{up_forward.5} parent=0 // loop_header
    %s17 = sphi 0, %s21
    %p18 = scmp.ge.s32.totalorder %s17, 6
    %s24 = sphi 0, %s36
    %s25 = sphi 0, %s32
    %s26 = sphi 0, %s24
    %s27 = sphi 0, %s25
    %s28 = sphi 0, %s26
    %s29 = sphi 0, %s27
    %s41 = sphi 0, %s43
    %s44 = sphi 0, %s41
    %s45 = sphi 0, %s44
    %s61 = sphi 0, %s45
    %s77 = sphi 0, %s79
    %s80 = sphi 0, %s77
    %s81 = sphi 0, %s80
    %s97 = sphi 0, %s81
    %s113 = sphi 0, %s115
    %s116 = sphi 0, %s113
    %s117 = sphi 0, %s116
    %s133 = sphi 0, %s117
    %s141 = sphi 0, %s143
    %s144 = sphi 0, %s141
    %s145 = sphi 0, %s144
    %s161 = sphi 0, %s145
    %s177 = sphi 0, %s179
    %s180 = sphi 0, %s177
    %s181 = sphi 0, %s180
    %s197 = sphi 0, %s181
    %s213 = sphi 0, %s215
    %s216 = sphi 0, %s213
    %s217 = sphi 0, %s216
    %s233 = sphi 0, %s217
    %s237 = sphi 0, %s237
    %s239 = sphi 0, %s237
    %s240 = sphi 0, %s239
    %s254 = sphi 0, %s240
    %s258 = sphi 0, %s258
    %s260 = sphi 0, %s258
    %s261 = sphi 0, %s260
    %s275 = sphi 0, %s261
    %s279 = sphi 0, %s279
    %s281 = sphi 0, %s279
    %s282 = sphi 0, %s281
    %s296 = sphi 0, %s282
    %s304 = sphi 0, %s306
    %s307 = sphi 0, %s304
    %s308 = sphi 0, %s307
    %s324 = sphi 0, %s308
    %s332 = sphi 0, %s334
    %s335 = sphi 0, %s332
    %s336 = sphi 0, %s335
    %s352 = sphi 0, %s336
  $region4: #{up_forward.5} parent=0 // loop_header_branch
    %20 = sbr.rel (%p18) target = $region8
  $region5: #{up_forward.5} parent=0 // loop_body
    %s22 = ssub.s32 %s17, 1
    %s23 = ssub.s32 %s17, 2
    %s30 = sadd.s32 1, %s25
    %p31 = scmp.ge.s32.totalorder %s30, 2
    %s32 = scalar_select %p31, 0, %s30
    %s33 = sadd.s32 1, %s24
    %s34 = scalar_select %p31, %s33, %s24
    %p35 = scmp.ge.s32.totalorder %s34, 2
    %s36 = scalar_select %p35, 0, %s34
    %s37 = ssub.s32 %s24, %s36
    %s38 = ssub.s32 %s25, %s32
    %s39 = sor.u32 %s37, %s38
    %p40 = scmp.eq.s32.totalorder %s39, 0
    %s42 = sadd.s32 %s41, 1
    %s43 = scalar_select %p40, %s41, %s42
    %p46 = pneg %p40
    %p47 = scmp.eq.s32.totalorder %s17, 3
    %p48 = por %p46, %p47
    %p49 = scmp.ne.s32.totalorder %s41, %s44
    %p50 = scmp.eq.s32.totalorder %s17, 0
    %p51 = por %p49, %p50
    %p52 = scmp.ne.s32.totalorder %s41, %s44
    %p53 = scmp.eq.s32.totalorder %s22, 3
    %p54 = por %p52, %p53
    %p55 = scmp.ne.s32.totalorder %s44, %s45
    %p56 = scmp.eq.s32.totalorder %s22, 0
    %p57 = por %p55, %p56
    %p58 = scmp.ne.s32.totalorder %s44, %s45
    %p59 = scmp.eq.s32.totalorder %s23, 3
    %p60 = por %p58, %p59
    %p62 = scmp.ne.s32.totalorder %s45, %s61
    %p63 = scmp.eq.s32.totalorder %s23, 0
    %p64 = por %p62, %p63
    %s65 = smul.u32 %s25, 8
    %s66 = ssub.s32 %s65, 1
    %p67 = scmp.gt.s32.totalorder %s66, 0
    %s68 = scalar_select %p67, %s66, 0
    %s69 = smul.u32 %s32, 8
    %s70 = ssub.s32 %s69, 1
    %p71 = scmp.gt.s32.totalorder %s70, 0
    %s72 = scalar_select %p71, %s70, 0
    %s73 = ssub.s32 %s24, %s36
    %s74 = ssub.s32 %s68, %s72
    %s75 = sor.u32 %s73, %s74
    %p76 = scmp.eq.s32.totalorder %s75, 0
    %s78 = sadd.s32 %s77, 1
    %s79 = scalar_select %p76, %s77, %s78
    %p82 = pneg %p76
    %p83 = scmp.eq.s32.totalorder %s17, 3
    %p84 = por %p82, %p83
    %p85 = scmp.ne.s32.totalorder %s77, %s80
    %p86 = scmp.eq.s32.totalorder %s17, 0
    %p87 = por %p85, %p86
    %p88 = scmp.ne.s32.totalorder %s77, %s80
    %p89 = scmp.eq.s32.totalorder %s22, 3
    %p90 = por %p88, %p89
    %p91 = scmp.ne.s32.totalorder %s80, %s81
    %p92 = scmp.eq.s32.totalorder %s22, 0
    %p93 = por %p91, %p92
    %p94 = scmp.ne.s32.totalorder %s80, %s81
    %p95 = scmp.eq.s32.totalorder %s23, 3
    %p96 = por %p94, %p95
    %p98 = scmp.ne.s32.totalorder %s81, %s97
    %p99 = scmp.eq.s32.totalorder %s23, 0
    %p100 = por %p98, %p99
    %s101 = smul.u32 %s25, 8
    %s102 = sadd.s32 %s101, 8
    %p103 = scmp.lt.s32.totalorder %s102, 15
    %s104 = scalar_select %p103, %s102, 15
    %s105 = smul.u32 %s32, 8
    %s106 = sadd.s32 %s105, 8
    %p107 = scmp.lt.s32.totalorder %s106, 15
    %s108 = scalar_select %p107, %s106, 15
    %s109 = ssub.s32 %s24, %s36
    %s110 = ssub.s32 %s104, %s108
    %s111 = sor.u32 %s109, %s110
    %p112 = scmp.eq.s32.totalorder %s111, 0
    %s114 = sadd.s32 %s113, 1
    %s115 = scalar_select %p112, %s113, %s114
    %p118 = pneg %p112
    %p119 = scmp.eq.s32.totalorder %s17, 3
    %p120 = por %p118, %p119
    %p121 = scmp.ne.s32.totalorder %s113, %s116
    %p122 = scmp.eq.s32.totalorder %s17, 0
    %p123 = por %p121, %p122
    %p124 = scmp.ne.s32.totalorder %s113, %s116
    %p125 = scmp.eq.s32.totalorder %s22, 3
    %p126 = por %p124, %p125
    %p127 = scmp.ne.s32.totalorder %s116, %s117
    %p128 = scmp.eq.s32.totalorder %s22, 0
    %p129 = por %p127, %p128
    %p130 = scmp.ne.s32.totalorder %s116, %s117
    %p131 = scmp.eq.s32.totalorder %s23, 3
    %p132 = por %p130, %p131
    %p134 = scmp.ne.s32.totalorder %s117, %s133
    %p135 = scmp.eq.s32.totalorder %s23, 0
    %p136 = por %p134, %p135
    %s137 = ssub.s32 %s24, %s36
    %s138 = ssub.s32 %s25, %s32
    %s139 = sor.u32 %s137, %s138
    %p140 = scmp.eq.s32.totalorder %s139, 0
    %s142 = sadd.s32 %s141, 1
    %s143 = scalar_select %p140, %s141, %s142
    %p146 = pneg %p140
    %p147 = scmp.eq.s32.totalorder %s17, 3
    %p148 = por %p146, %p147
    %p149 = scmp.ne.s32.totalorder %s141, %s144
    %p150 = scmp.eq.s32.totalorder %s17, 0
    %p151 = por %p149, %p150
    %p152 = scmp.ne.s32.totalorder %s141, %s144
    %p153 = scmp.eq.s32.totalorder %s22, 3
    %p154 = por %p152, %p153
    %p155 = scmp.ne.s32.totalorder %s144, %s145
    %p156 = scmp.eq.s32.totalorder %s22, 0
    %p157 = por %p155, %p156
    %p158 = scmp.ne.s32.totalorder %s144, %s145
    %p159 = scmp.eq.s32.totalorder %s23, 3
    %p160 = por %p158, %p159
    %p162 = scmp.ne.s32.totalorder %s145, %s161
    %p163 = scmp.eq.s32.totalorder %s23, 0
    %p164 = por %p162, %p163
    %s165 = smul.u32 %s25, 8
    %s166 = ssub.s32 %s165, 1
    %p167 = scmp.gt.s32.totalorder %s166, 0
    %s168 = scalar_select %p167, %s166, 0
    %s169 = smul.u32 %s32, 8
    %s170 = ssub.s32 %s169, 1
    %p171 = scmp.gt.s32.totalorder %s170, 0
    %s172 = scalar_select %p171, %s170, 0
    %s173 = ssub.s32 %s24, %s36
    %s174 = ssub.s32 %s168, %s172
    %s175 = sor.u32 %s173, %s174
    %p176 = scmp.eq.s32.totalorder %s175, 0
    %s178 = sadd.s32 %s177, 1
    %s179 = scalar_select %p176, %s177, %s178
    %p182 = pneg %p176
    %p183 = scmp.eq.s32.totalorder %s17, 3
    %p184 = por %p182, %p183
    %p185 = scmp.ne.s32.totalorder %s177, %s180
    %p186 = scmp.eq.s32.totalorder %s17, 0
    %p187 = por %p185, %p186
    %p188 = scmp.ne.s32.totalorder %s177, %s180
    %p189 = scmp.eq.s32.totalorder %s22, 3
    %p190 = por %p188, %p189
    %p191 = scmp.ne.s32.totalorder %s180, %s181
    %p192 = scmp.eq.s32.totalorder %s22, 0
    %p193 = por %p191, %p192
    %p194 = scmp.ne.s32.totalorder %s180, %s181
    %p195 = scmp.eq.s32.totalorder %s23, 3
    %p196 = por %p194, %p195
    %p198 = scmp.ne.s32.totalorder %s181, %s197
    %p199 = scmp.eq.s32.totalorder %s23, 0
    %p200 = por %p198, %p199
    %s201 = smul.u32 %s25, 8
    %s202 = sadd.s32 %s201, 8
    %p203 = scmp.lt.s32.totalorder %s202, 15
    %s204 = scalar_select %p203, %s202, 15
    %s205 = smul.u32 %s32, 8
    %s206 = sadd.s32 %s205, 8
    %p207 = scmp.lt.s32.totalorder %s206, 15
    %s208 = scalar_select %p207, %s206, 15
    %s209 = ssub.s32 %s24, %s36
    %s210 = ssub.s32 %s204, %s208
    %s211 = sor.u32 %s209, %s210
    %p212 = scmp.eq.s32.totalorder %s211, 0
    %s214 = sadd.s32 %s213, 1
    %s215 = scalar_select %p212, %s213, %s214
    %p218 = pneg %p212
    %p219 = scmp.eq.s32.totalorder %s17, 3
    %p220 = por %p218, %p219
    %p221 = scmp.ne.s32.totalorder %s213, %s216
    %p222 = scmp.eq.s32.totalorder %s17, 0
    %p223 = por %p221, %p222
    %p224 = scmp.ne.s32.totalorder %s213, %s216
    %p225 = scmp.eq.s32.totalorder %s22, 3
    %p226 = por %p224, %p225
    %p227 = scmp.ne.s32.totalorder %s216, %s217
    %p228 = scmp.eq.s32.totalorder %s22, 0
    %p229 = por %p227, %p228
    %p230 = scmp.ne.s32.totalorder %s216, %s217
    %p231 = scmp.eq.s32.totalorder %s23, 3
    %p232 = por %p230, %p231
    %p234 = scmp.ne.s32.totalorder %s217, %s233
    %p235 = scmp.eq.s32.totalorder %s23, 0
    %p236 = por %p234, %p235
    %s238 = sadd.s32 %s237, 1
    %p241 = scmp.eq.s32.totalorder %s17, 3
    %p242 = scmp.ne.s32.totalorder %s237, %s239
    %p243 = scmp.eq.s32.totalorder %s17, 0
    %p244 = por %p242, %p243
    %p245 = scmp.ne.s32.totalorder %s237, %s239
    %p246 = scmp.eq.s32.totalorder %s22, 3
    %p247 = por %p245, %p246
    %p248 = scmp.ne.s32.totalorder %s239, %s240
    %p249 = scmp.eq.s32.totalorder %s22, 0
    %p250 = por %p248, %p249
    %p251 = scmp.ne.s32.totalorder %s239, %s240
    %p252 = scmp.eq.s32.totalorder %s23, 3
    %p253 = por %p251, %p252
    %p255 = scmp.ne.s32.totalorder %s240, %s254
    %p256 = scmp.eq.s32.totalorder %s23, 0
    %p257 = por %p255, %p256
    %s259 = sadd.s32 %s258, 1
    %p262 = scmp.eq.s32.totalorder %s17, 3
    %p263 = scmp.ne.s32.totalorder %s258, %s260
    %p264 = scmp.eq.s32.totalorder %s17, 0
    %p265 = por %p263, %p264
    %p266 = scmp.ne.s32.totalorder %s258, %s260
    %p267 = scmp.eq.s32.totalorder %s22, 3
    %p268 = por %p266, %p267
    %p269 = scmp.ne.s32.totalorder %s260, %s261
    %p270 = scmp.eq.s32.totalorder %s22, 0
    %p271 = por %p269, %p270
    %p272 = scmp.ne.s32.totalorder %s260, %s261
    %p273 = scmp.eq.s32.totalorder %s23, 3
    %p274 = por %p272, %p273
    %p276 = scmp.ne.s32.totalorder %s261, %s275
    %p277 = scmp.eq.s32.totalorder %s23, 0
    %p278 = por %p276, %p277
    %s280 = sadd.s32 %s279, 1
    %p283 = scmp.eq.s32.totalorder %s17, 3
    %p284 = scmp.ne.s32.totalorder %s279, %s281
    %p285 = scmp.eq.s32.totalorder %s17, 0
    %p286 = por %p284, %p285
    %p287 = scmp.ne.s32.totalorder %s279, %s281
    %p288 = scmp.eq.s32.totalorder %s22, 3
    %p289 = por %p287, %p288
    %p290 = scmp.ne.s32.totalorder %s281, %s282
    %p291 = scmp.eq.s32.totalorder %s22, 0
    %p292 = por %p290, %p291
    %p293 = scmp.ne.s32.totalorder %s281, %s282
    %p294 = scmp.eq.s32.totalorder %s23, 3
    %p295 = por %p293, %p294
    %p297 = scmp.ne.s32.totalorder %s282, %s296
    %p298 = scmp.eq.s32.totalorder %s23, 0
    %p299 = por %p297, %p298
    %s300 = ssub.s32 %s24, %s36
    %s301 = ssub.s32 %s25, %s32
    %s302 = sor.u32 %s300, %s301
    %p303 = scmp.eq.s32.totalorder %s302, 0
    %s305 = sadd.s32 %s304, 1
    %s306 = scalar_select %p303, %s304, %s305
    %p309 = pneg %p303
    %p310 = scmp.eq.s32.totalorder %s17, 3
    %p311 = por %p309, %p310
    %p312 = scmp.ne.s32.totalorder %s304, %s307
    %p313 = scmp.eq.s32.totalorder %s17, 0
    %p314 = por %p312, %p313
    %p315 = scmp.ne.s32.totalorder %s304, %s307
    %p316 = scmp.eq.s32.totalorder %s22, 3
    %p317 = por %p315, %p316
    %p318 = scmp.ne.s32.totalorder %s307, %s308
    %p319 = scmp.eq.s32.totalorder %s22, 0
    %p320 = por %p318, %p319
    %p321 = scmp.ne.s32.totalorder %s307, %s308
    %p322 = scmp.eq.s32.totalorder %s23, 3
    %p323 = por %p321, %p322
    %p325 = scmp.ne.s32.totalorder %s308, %s324
    %p326 = scmp.eq.s32.totalorder %s23, 0
    %p327 = por %p325, %p326
    %s328 = ssub.s32 %s24, %s36
    %s329 = ssub.s32 %s25, %s32
    %s330 = sor.u32 %s328, %s329
    %p331 = scmp.eq.s32.totalorder %s330, 0
    %s333 = sadd.s32 %s332, 1
    %s334 = scalar_select %p331, %s332, %s333
    %p337 = pneg %p331
    %p338 = scmp.eq.s32.totalorder %s17, 3
    %p339 = por %p337, %p338
    %p340 = scmp.ne.s32.totalorder %s332, %s335
    %p341 = scmp.eq.s32.totalorder %s17, 0
    %p342 = por %p340, %p341
    %p343 = scmp.ne.s32.totalorder %s332, %s335
    %p344 = scmp.eq.s32.totalorder %s22, 3
    %p345 = por %p343, %p344
    %p346 = scmp.ne.s32.totalorder %s335, %s336
    %p347 = scmp.eq.s32.totalorder %s22, 0
    %p348 = por %p346, %p347
    %p349 = scmp.ne.s32.totalorder %s335, %s336
    %p350 = scmp.eq.s32.totalorder %s23, 3
    %p351 = por %p349, %p350
    %p353 = scmp.ne.s32.totalorder %s336, %s352
    %p354 = scmp.eq.s32.totalorder %s23, 0
    %p355 = por %p353, %p354
    %p356 = scmp.le.s32.totalorder 1, %s17
    %p357 = scmp.lt.s32.totalorder %s17, 5
    %p358 = pnand %p356, %p357
    %p359 = pneg %p358
    // Predicated region
    $region9: #{up_forward.5} parent=5 // pred_check
      _
    $region10: #{up_forward.5} parent=5 // pred_check_branch
      %361 = sbr.rel (%p358) target = $region12
    $region11: #{up_forward.5} parent=5 // pred_region
      %s362 = ssub.s32 %s17, 1
      // Predicated region
      $region13: #{up_forward.5} parent=11 // pred_check
        %p363 = pneg %p250
      $region14: #{up_forward.5} parent=11 // pred_check_branch
        %365 = sbr.rel (%p363) target = $region16
      $region15: #{up_forward.5} parent=11 // pred_region
        _
      $region16: #{up_forward.5} parent=11 // pred_fallthru
        _
      // Predicated region
      $region17: #{up_forward.5} parent=11 // pred_check
        %p366 = pneg %p271
      $region18: #{up_forward.5} parent=11 // pred_check_branch
        %368 = sbr.rel (%p366) target = $region20
      $region19: #{up_forward.5} parent=11 // pred_region
        _
      $region20: #{up_forward.5} parent=11 // pred_fallthru
        _
      // Predicated region
      $region21: #{up_forward.5} parent=11 // pred_check
        %p369 = pneg %p292
      $region22: #{up_forward.5} parent=11 // pred_check_branch
        %371 = sbr.rel (%p369) target = $region24
      $region23: #{up_forward.5} parent=11 // pred_region
        _
      $region24: #{up_forward.5} parent=11 // pred_fallthru
        _
    $region12: #{up_forward.5} parent=5 // pred_fallthru
      _
    %p372 = scmp.lt.s32.totalorder %s17, 4
    // Predicated region
    $region25: #{up_forward.5} parent=5 // pred_check
      %p373 = pneg %p372
    $region26: #{up_forward.5} parent=5 // pred_check_branch
      %375 = sbr.rel (%p373) target = $region28
    $region27: #{up_forward.5} parent=5 // pred_region
      // Predicated region
      $region29: #{up_forward.5} parent=27 // pred_check
        %p376 = pneg %p51
      $region30: #{up_forward.5} parent=27 // pred_check_branch
        %378 = sbr.rel (%p376) target = $region32
      $region31: #{up_forward.5} parent=27 // pred_region
        %s379 = smul.u32 8, %s25
        %p380 = scmp.lt.s32.totalorder %s24, 1
        %s381 = scalar_select %p380, %s24, 1
        %p382 = scmp.lt.s32.totalorder %s379, 15
        %s383 = scalar_select %p382, %s379, 15
        %s384 = smul.addr %s383, 2
        %s385 = smul.addr %s381, 32
        %s386 = sadd.s32 %s384, %s385
        %s387 = smul.addr %s386, 8
        %s388 = scalar_lea.vmem %s0, %s387
        %s389 = smul.u32 8, %s25
      $region32: #{up_forward.5} parent=27 // pred_fallthru
        _
      // Predicated region
      $region33: #{up_forward.5} parent=27 // pred_check
        %p390 = pneg %p87
      $region34: #{up_forward.5} parent=27 // pred_check_branch
        %392 = sbr.rel (%p390) target = $region36
      $region35: #{up_forward.5} parent=27 // pred_region
        %s393 = smul.u32 %s25, 8
        %s394 = ssub.s32 %s393, 1
        %p395 = scmp.gt.s32.totalorder %s394, 0
        %s396 = scalar_select %p395, %s394, 0
        %p397 = scmp.lt.s32.totalorder %s24, 1
        %s398 = scalar_select %p397, %s24, 1
        %p399 = scmp.lt.s32.totalorder %s396, 15
        %s400 = scalar_select %p399, %s396, 15
        %s401 = smul.addr %s400, 2
        %s402 = smul.addr %s398, 32
        %s403 = sadd.s32 %s401, %s402
        %s404 = smul.addr %s403, 8
        %s405 = scalar_lea.vmem %s1, %s404
        %s406 = smul.u32 %s25, 8
        %s407 = ssub.s32 %s406, 1
        %p408 = scmp.gt.s32.totalorder %s407, 0
        %s409 = scalar_select %p408, %s407, 0
      $region36: #{up_forward.5} parent=27 // pred_fallthru
        _
      // Predicated region
      $region37: #{up_forward.5} parent=27 // pred_check
        %p410 = pneg %p123
      $region38: #{up_forward.5} parent=27 // pred_check_branch
        %412 = sbr.rel (%p410) target = $region40
      $region39: #{up_forward.5} parent=27 // pred_region
        %s413 = smul.u32 %s25, 8
        %s414 = sadd.s32 %s413, 8
        %p415 = scmp.lt.s32.totalorder %s414, 15
        %s416 = scalar_select %p415, %s414, 15
        %p417 = scmp.lt.s32.totalorder %s24, 1
        %s418 = scalar_select %p417, %s24, 1
        %p419 = scmp.lt.s32.totalorder %s416, 15
        %s420 = scalar_select %p419, %s416, 15
        %s421 = smul.addr %s420, 2
        %s422 = smul.addr %s418, 32
        %s423 = sadd.s32 %s421, %s422
        %s424 = smul.addr %s423, 8
        %s425 = scalar_lea.vmem %s2, %s424
        %s426 = smul.u32 %s25, 8
        %s427 = sadd.s32 %s426, 8
        %p428 = scmp.lt.s32.totalorder %s427, 15
        %s429 = scalar_select %p428, %s427, 15
      $region40: #{up_forward.5} parent=27 // pred_fallthru
        _
      // Predicated region
      $region41: #{up_forward.5} parent=27 // pred_check
        %p430 = pneg %p151
      $region42: #{up_forward.5} parent=27 // pred_check_branch
        %432 = sbr.rel (%p430) target = $region44
      $region43: #{up_forward.5} parent=27 // pred_region
        %s433 = smul.u32 8, %s25
        %p434 = scmp.lt.s32.totalorder %s24, 1
        %s435 = scalar_select %p434, %s24, 1
        %p436 = scmp.lt.s32.totalorder %s433, 15
        %s437 = scalar_select %p436, %s433, 15
        %s438 = smul.addr %s437, 2
        %s439 = smul.addr %s435, 32
        %s440 = sadd.s32 %s438, %s439
        %s441 = smul.addr %s440, 8
        %s442 = scalar_lea.vmem %s3, %s441
        %s443 = smul.u32 8, %s25
      $region44: #{up_forward.5} parent=27 // pred_fallthru
        _
      // Predicated region
      $region45: #{up_forward.5} parent=27 // pred_check
        %p444 = pneg %p187
      $region46: #{up_forward.5} parent=27 // pred_check_branch
        %446 = sbr.rel (%p444) target = $region48
      $region47: #{up_forward.5} parent=27 // pred_region
        %s447 = smul.u32 %s25, 8
        %s448 = ssub.s32 %s447, 1
        %p449 = scmp.gt.s32.totalorder %s448, 0
        %s450 = scalar_select %p449, %s448, 0
        %p451 = scmp.lt.s32.totalorder %s24, 1
        %s452 = scalar_select %p451, %s24, 1
        %p453 = scmp.lt.s32.totalorder %s450, 15
        %s454 = scalar_select %p453, %s450, 15
        %s455 = smul.addr %s454, 2
        %s456 = smul.addr %s452, 32
        %s457 = sadd.s32 %s455, %s456
        %s458 = smul.addr %s457, 8
        %s459 = scalar_lea.vmem %s4, %s458
        %s460 = smul.u32 %s25, 8
        %s461 = ssub.s32 %s460, 1
        %p462 = scmp.gt.s32.totalorder %s461, 0
        %s463 = scalar_select %p462, %s461, 0
      $region48: #{up_forward.5} parent=27 // pred_fallthru
        _
      // Predicated region
      $region49: #{up_forward.5} parent=27 // pred_check
        %p464 = pneg %p223
      $region50: #{up_forward.5} parent=27 // pred_check_branch
        %466 = sbr.rel (%p464) target = $region52
      $region51: #{up_forward.5} parent=27 // pred_region
        %s467 = smul.u32 %s25, 8
        %s468 = sadd.s32 %s467, 8
        %p469 = scmp.lt.s32.totalorder %s468, 15
        %s470 = scalar_select %p469, %s468, 15
        %p471 = scmp.lt.s32.totalorder %s24, 1
        %s472 = scalar_select %p471, %s24, 1
        %p473 = scmp.lt.s32.totalorder %s470, 15
        %s474 = scalar_select %p473, %s470, 15
        %s475 = smul.addr %s474, 2
        %s476 = smul.addr %s472, 32
        %s477 = sadd.s32 %s475, %s476
        %s478 = smul.addr %s477, 8
        %s479 = scalar_lea.vmem %s5, %s478
        %s480 = smul.u32 %s25, 8
        %s481 = sadd.s32 %s480, 8
        %p482 = scmp.lt.s32.totalorder %s481, 15
        %s483 = scalar_select %p482, %s481, 15
      $region52: #{up_forward.5} parent=27 // pred_fallthru
        _
    $region28: #{up_forward.5} parent=5 // pred_fallthru
      _
    %p484 = scmp.le.s32.totalorder 1, %s17
    %p485 = scmp.lt.s32.totalorder %s17, 5
    %p486 = pnand %p484, %p485
    %p487 = pneg %p486
    // Predicated region
    $region53: #{up_forward.5} parent=5 // pred_check
      _
    $region54: #{up_forward.5} parent=5 // pred_check_branch
      %489 = sbr.rel (%p486) target = $region56
    $region55: #{up_forward.5} parent=5 // pred_region
      %s490 = ssub.s32 %s17, 1
      %s491 = smul.u32 8, %s27
      %p492 = scmp.lt.s32.totalorder %s26, 1
      %s493 = scalar_select %p492, %s26, 1
      %p494 = scmp.lt.s32.totalorder %s491, 15
      %s495 = scalar_select %p494, %s491, 15
      %s496 = smul.addr %s495, 2
      %s497 = smul.addr %s493, 32
      %s498 = sadd.s32 %s496, %s497
      %s499 = smul.addr %s498, 8
      %s500 = scalar_lea.vmem %s0, %s499
      %p501 = pneg %p57
      %p502 = pneg %p54
      %s503 = smul.u32 %s27, 8
      %s504 = ssub.s32 %s503, 1
      %p505 = scmp.gt.s32.totalorder %s504, 0
      %s506 = scalar_select %p505, %s504, 0
      %p507 = scmp.lt.s32.totalorder %s26, 1
      %s508 = scalar_select %p507, %s26, 1
      %p509 = scmp.lt.s32.totalorder %s506, 15
      %s510 = scalar_select %p509, %s506, 15
      %s511 = smul.addr %s510, 2
      %s512 = smul.addr %s508, 32
      %s513 = sadd.s32 %s511, %s512
      %s514 = smul.addr %s513, 8
      %s515 = scalar_lea.vmem %s1, %s514
      %p516 = pneg %p93
      %p517 = pneg %p90
      %s518 = smul.u32 %s27, 8
      %s519 = sadd.s32 %s518, 8
      %p520 = scmp.lt.s32.totalorder %s519, 15
      %s521 = scalar_select %p520, %s519, 15
      %p522 = scmp.lt.s32.totalorder %s26, 1
      %s523 = scalar_select %p522, %s26, 1
      %p524 = scmp.lt.s32.totalorder %s521, 15
      %s525 = scalar_select %p524, %s521, 15
      %s526 = smul.addr %s525, 2
      %s527 = smul.addr %s523, 32
      %s528 = sadd.s32 %s526, %s527
      %s529 = smul.addr %s528, 8
      %s530 = scalar_lea.vmem %s2, %s529
      %p531 = pneg %p129
      %p532 = pneg %p126
      %s533 = smul.u32 8, %s27
      %p534 = scmp.lt.s32.totalorder %s26, 1
      %s535 = scalar_select %p534, %s26, 1
      %p536 = scmp.lt.s32.totalorder %s533, 15
      %s537 = scalar_select %p536, %s533, 15
      %s538 = smul.addr %s537, 2
      %s539 = smul.addr %s535, 32
      %s540 = sadd.s32 %s538, %s539
      %s541 = smul.addr %s540, 8
      %s542 = scalar_lea.vmem %s3, %s541
      %p543 = pneg %p157
      %p544 = pneg %p154
      %s545 = smul.u32 %s27, 8
      %s546 = ssub.s32 %s545, 1
      %p547 = scmp.gt.s32.totalorder %s546, 0
      %s548 = scalar_select %p547, %s546, 0
      %p549 = scmp.lt.s32.totalorder %s26, 1
      %s550 = scalar_select %p549, %s26, 1
      %p551 = scmp.lt.s32.totalorder %s548, 15
      %s552 = scalar_select %p551, %s548, 15
      %s553 = smul.addr %s552, 2
      %s554 = smul.addr %s550, 32
      %s555 = sadd.s32 %s553, %s554
      %s556 = smul.addr %s555, 8
      %s557 = scalar_lea.vmem %s4, %s556
      %p558 = pneg %p193
      %p559 = pneg %p190
      %s560 = smul.u32 %s27, 8
      %s561 = sadd.s32 %s560, 8
      %p562 = scmp.lt.s32.totalorder %s561, 15
      %s563 = scalar_select %p562, %s561, 15
      %p564 = scmp.lt.s32.totalorder %s26, 1
      %s565 = scalar_select %p564, %s26, 1
      %p566 = scmp.lt.s32.totalorder %s563, 15
      %s567 = scalar_select %p566, %s563, 15
      %s568 = smul.addr %s567, 2
      %s569 = smul.addr %s565, 32
      %s570 = sadd.s32 %s568, %s569
      %s571 = smul.addr %s570, 8
      %s572 = scalar_lea.vmem %s5, %s571
      %p573 = pneg %p229
      %p574 = pneg %p226
      %p575 = pneg %p250
      %p576 = pneg %p247
      %p577 = pneg %p271
      %p578 = pneg %p268
      %p579 = pneg %p292
      %p580 = pneg %p289
      %p581 = pneg %p320
      %p582 = pneg %p317
      %s583 = smul.u32 8, %s27
      %p584 = scmp.lt.s32.totalorder %s26, 1
      %s585 = scalar_select %p584, %s26, 1
      %p586 = scmp.lt.s32.totalorder %s583, 15
      %s587 = scalar_select %p586, %s583, 15
      %s588 = smul.addr %s587, 2
      %s589 = smul.addr %s585, 32
      %s590 = sadd.s32 %s588, %s589
      %s591 = smul.addr %s590, 8
      %s592 = scalar_lea.vmem %s9, %s591
      %p593 = pneg %p348
      %p594 = pneg %p345
      %p595 = scmp.lt.s32.totalorder %s26, 1
      %s596 = scalar_select %p595, %s26, 1
      %p597 = scmp.lt.s32.totalorder %s27, 1
      %s598 = scalar_select %p597, %s27, 1
      %s599 = smul.addr %s596, 2
      %s600 = sadd.s32 %s598, %s599
      %s601 = smul.addr %s600, 2
      %s602 = scalar_lea.vmem %s10, %s601
      %s603 = smul.u32 8, %s27
      %p604 = scmp.lt.s32.totalorder %s26, 1
      %s605 = scalar_select %p604, %s26, 1
      %p606 = scmp.lt.s32.totalorder %s603, 15
      %s607 = scalar_select %p606, %s603, 15
      %s608 = smul.addr %s607, 2
      %s609 = smul.addr %s605, 32
      %s610 = sadd.s32 %s608, %s609
      %s611 = smul.addr %s610, 8
      %s612 = scalar_lea.vmem %s0, %s611
      %s613 = smul.u32 8, %s27
      %s614 = smul.u32 %s27, 8
      %s615 = ssub.s32 %s614, 1
      %p616 = scmp.gt.s32.totalorder %s615, 0
      %s617 = scalar_select %p616, %s615, 0
      %p618 = scmp.lt.s32.totalorder %s26, 1
      %s619 = scalar_select %p618, %s26, 1
      %p620 = scmp.lt.s32.totalorder %s617, 15
      %s621 = scalar_select %p620, %s617, 15
      %s622 = smul.addr %s621, 2
      %s623 = smul.addr %s619, 32
      %s624 = sadd.s32 %s622, %s623
      %s625 = smul.addr %s624, 8
      %s626 = scalar_lea.vmem %s1, %s625
      %s627 = smul.u32 %s27, 8
      %s628 = ssub.s32 %s627, 1
      %p629 = scmp.gt.s32.totalorder %s628, 0
      %s630 = scalar_select %p629, %s628, 0
      %s631 = smul.u32 %s27, 8
      %s632 = sadd.s32 %s631, 8
      %p633 = scmp.lt.s32.totalorder %s632, 15
      %s634 = scalar_select %p633, %s632, 15
      %p635 = scmp.lt.s32.totalorder %s26, 1
      %s636 = scalar_select %p635, %s26, 1
      %p637 = scmp.lt.s32.totalorder %s634, 15
      %s638 = scalar_select %p637, %s634, 15
      %s639 = smul.addr %s638, 2
      %s640 = smul.addr %s636, 32
      %s641 = sadd.s32 %s639, %s640
      %s642 = smul.addr %s641, 8
      %s643 = scalar_lea.vmem %s2, %s642
      %s644 = smul.u32 %s27, 8
      %s645 = sadd.s32 %s644, 8
      %p646 = scmp.lt.s32.totalorder %s645, 15
      %s647 = scalar_select %p646, %s645, 15
      %s648 = smul.u32 8, %s27
      %p649 = scmp.lt.s32.totalorder %s26, 1
      %s650 = scalar_select %p649, %s26, 1
      %p651 = scmp.lt.s32.totalorder %s648, 15
      %s652 = scalar_select %p651, %s648, 15
      %s653 = smul.addr %s652, 2
      %s654 = smul.addr %s650, 32
      %s655 = sadd.s32 %s653, %s654
      %s656 = smul.addr %s655, 8
      %s657 = scalar_lea.vmem %s3, %s656
      %s658 = smul.u32 8, %s27
      %s659 = smul.u32 %s27, 8
      %s660 = ssub.s32 %s659, 1
      %p661 = scmp.gt.s32.totalorder %s660, 0
      %s662 = scalar_select %p661, %s660, 0
      %p663 = scmp.lt.s32.totalorder %s26, 1
      %s664 = scalar_select %p663, %s26, 1
      %p665 = scmp.lt.s32.totalorder %s662, 15
      %s666 = scalar_select %p665, %s662, 15
      %s667 = smul.addr %s666, 2
      %s668 = smul.addr %s664, 32
      %s669 = sadd.s32 %s667, %s668
      %s670 = smul.addr %s669, 8
      %s671 = scalar_lea.vmem %s4, %s670
      %s672 = smul.u32 %s27, 8
      %s673 = ssub.s32 %s672, 1
      %p674 = scmp.gt.s32.totalorder %s673, 0
      %s675 = scalar_select %p674, %s673, 0
      %s676 = smul.u32 %s27, 8
      %s677 = sadd.s32 %s676, 8
      %p678 = scmp.lt.s32.totalorder %s677, 15
      %s679 = scalar_select %p678, %s677, 15
      %p680 = scmp.lt.s32.totalorder %s26, 1
      %s681 = scalar_select %p680, %s26, 1
      %p682 = scmp.lt.s32.totalorder %s679, 15
      %s683 = scalar_select %p682, %s679, 15
      %s684 = smul.addr %s683, 2
      %s685 = smul.addr %s681, 32
      %s686 = sadd.s32 %s684, %s685
      %s687 = smul.addr %s686, 8
      %s688 = scalar_lea.vmem %s5, %s687
      %s689 = smul.u32 %s27, 8
      %s690 = sadd.s32 %s689, 8
      %p691 = scmp.lt.s32.totalorder %s690, 15
      %s692 = scalar_select %p691, %s690, 15
      %s693 = smul.u32 8, %s27
      %p694 = scmp.lt.s32.totalorder %s26, 1
      %s695 = scalar_select %p694, %s26, 1
      %p696 = scmp.lt.s32.totalorder %s693, 15
      %s697 = scalar_select %p696, %s693, 15
      %s698 = smul.addr %s697, 2
      %s699 = smul.addr %s695, 32
      %s700 = sadd.s32 %s698, %s699
      %s701 = smul.addr %s700, 8
      %s702 = scalar_lea.vmem %s9, %s701
      %s703 = smul.u32 8, %s27
      %p704 = scmp.lt.s32.totalorder %s26, 1
      %s705 = scalar_select %p704, %s26, 1
      %p706 = scmp.lt.s32.totalorder %s27, 1
      %s707 = scalar_select %p706, %s27, 1
      %s708 = smul.addr %s705, 2
      %s709 = sadd.s32 %s707, %s708
      %s710 = smul.addr %s709, 2
      %s711 = scalar_lea.vmem %s10, %s710
      %vm712 = vcmask 31744
      %713 = vst.msk [vmem:[#allocation2] sm:$0xff] %vm712, 0.0
      %714 = vst.msk [vmem:[#allocation2 + $0x8] sm:$0xff] %vm712, 0.0
      %vm715 = vcmask 25600
      %716 = vst.msk [vmem:[#allocation2 + $0x10] sm:$0x3] %vm715, 0.0
      %717 = vst.msk [vmem:[#allocation2 + $0x18] sm:$0xff] %vm712, 0.0
      %718 = vst.msk [vmem:[#allocation2 + $0x20] sm:$0xff] %vm712, 0.0
      %719 = vst.msk [vmem:[#allocation2 + $0x28] sm:$0x3] %vm715, 0.0
      %720 = vst.msk [vmem:[#allocation2 + $0x30] sm:$0xff] %vm712, 0.0
      %721 = vst.msk [vmem:[#allocation2 + $0x38] sm:$0xff] %vm712, 0.0
      %722 = vst.msk [vmem:[#allocation2 + $0x40] sm:$0x3] %vm715, 0.0
      %723 = vst.msk [vmem:[#allocation2 + $0x48] sm:$0xff] %vm712, 0.0
      %724 = vst.msk [vmem:[#allocation2 + $0x50] sm:$0xff] %vm712, 0.0
      %725 = vst.msk [vmem:[#allocation2 + $0x58] sm:$0x3] %vm715, 0.0
      %726 = vst.msk [vmem:[#allocation2 + $0x60] sm:$0xff] %vm712, 0.0
      %727 = vst.msk [vmem:[#allocation2 + $0x68] sm:$0xff] %vm712, 0.0
      %728 = vst.msk [vmem:[#allocation2 + $0x70] sm:$0x3] %vm715, 0.0
      %729 = vst.msk [vmem:[#allocation2 + $0x78] sm:$0xff] %vm712, 0.0
      %730 = vst.msk [vmem:[#allocation2 + $0x80] sm:$0xff] %vm712, 0.0
      %731 = vst.msk [vmem:[#allocation2 + $0x88] sm:$0x3] %vm715, 0.0
      %732 = vst.msk [vmem:[#allocation2 + $0x90] sm:$0xff] %vm712, 0.0
      %733 = vst.msk [vmem:[#allocation2 + $0x98] sm:$0xff] %vm712, 0.0
      %734 = vst.msk [vmem:[#allocation2 + $0xa0] sm:$0x3] %vm715, 0.0
      %735 = vst.msk [vmem:[#allocation2 + $0xa8] sm:$0xff] %vm712, 0.0
      %736 = vst.msk [vmem:[#allocation2 + $0xb0] sm:$0xff] %vm712, 0.0
      %737 = vst.msk [vmem:[#allocation2 + $0xb8] sm:$0x3] %vm715, 0.0
      %738 = vst.msk [vmem:[#allocation2 + $0xc0] sm:$0xff] %vm712, 0.0
      %739 = vst.msk [vmem:[#allocation2 + $0xc8] sm:$0xff] %vm712, 0.0
      %740 = vst.msk [vmem:[#allocation2 + $0xd0] sm:$0x3] %vm715, 0.0
      %741 = vst.msk [vmem:[#allocation2 + $0xd8] sm:$0xff] %vm712, 0.0
      %742 = vst.msk [vmem:[#allocation2 + $0xe0] sm:$0xff] %vm712, 0.0
      %743 = vst.msk [vmem:[#allocation2 + $0xe8] sm:$0x3] %vm715, 0.0
      %v744 = vld [vmem:[%s612] sm:$0xff]
      %v745 = vld [vmem:[%s612 + $0x8] sm:$0xff]
      %v746 = vld [vmem:[%s612 + $0x10] sm:$0xff]
      %v747 = vld [vmem:[%s612 + $0x18] sm:$0xff]
      %v748 = vld [vmem:[%s612 + $0x20] sm:$0xff]
      %v749 = vld [vmem:[%s612 + $0x28] sm:$0xff]
      %v750 = vld [vmem:[%s612 + $0x30] sm:$0xff]
      %v751 = vld [vmem:[%s612 + $0x38] sm:$0xff]
      %v752 = vld [vmem:[%s612 + $0x40] sm:$0xff]
      %v753 = vld [vmem:[%s612 + $0x48] sm:$0xff]
      %v754 = vld [vmem:[%s612 + $0x50] sm:$0xff]
      %v755 = vld [vmem:[%s612 + $0x58] sm:$0xff]
      %v756 = vld [vmem:[%s612 + $0x60] sm:$0xff]
      %v757 = vld [vmem:[%s612 + $0x68] sm:$0xff]
      %v758 = vld [vmem:[%s612 + $0x70] sm:$0xff]
      %v759 = vld [vmem:[%s612 + $0x78] sm:$0xff]
      %s760 = scalar_lea.vmem [#allocation2], 24
      %761 = vst.msk [vmem:[%s760 + $0x1] sm:$0xff] %vm712, %v744
      %762 = vst.msk [vmem:[%s760 + $0x9] sm:$0xff] %vm712, %v745
      %763 = vst.msk [vmem:[%s760 + $0x19] sm:$0xff] %vm712, %v746
      %764 = vst.msk [vmem:[%s760 + $0x21] sm:$0xff] %vm712, %v747
      %765 = vst.msk [vmem:[%s760 + $0x31] sm:$0xff] %vm712, %v748
      %766 = vst.msk [vmem:[%s760 + $0x39] sm:$0xff] %vm712, %v749
      %767 = vst.msk [vmem:[%s760 + $0x49] sm:$0xff] %vm712, %v750
      %768 = vst.msk [vmem:[%s760 + $0x51] sm:$0xff] %vm712, %v751
      %769 = vst.msk [vmem:[%s760 + $0x61] sm:$0xff] %vm712, %v752
      %770 = vst.msk [vmem:[%s760 + $0x69] sm:$0xff] %vm712, %v753
      %771 = vst.msk [vmem:[%s760 + $0x79] sm:$0xff] %vm712, %v754
      %772 = vst.msk [vmem:[%s760 + $0x81] sm:$0xff] %vm712, %v755
      %773 = vst.msk [vmem:[%s760 + $0x91] sm:$0xff] %vm712, %v756
      %774 = vst.msk [vmem:[%s760 + $0x99] sm:$0xff] %vm712, %v757
      %775 = vst.msk [vmem:[%s760 + $0xa9] sm:$0xff] %vm712, %v758
      %776 = vst.msk [vmem:[%s760 + $0xb1] sm:$0xff] %vm712, %v759
      %p777 = scmp.gt.s32.totalorder %s27, 0
      %v778 = vld [vmem:[%s626] sm:$0xff]
      %v779 = vld [vmem:[%s626 + $0x8] sm:$0xff]
      %s780 = scalar_select %p777, 1, 0
      %v781 = vstv %s780
      %vm782 = vcmp.eq.s32.totalorder %v781, 1
      %v783 = vsel %vm782, %v778, 0.0
      %v784 = vsel %vm782, %v779, 0.0
      %785 = vst.msk [vmem:[#allocation2 + $0x1] sm:$0xff] %vm712, %v783
      %786 = vst.msk [vmem:[#allocation2 + $0x9] sm:$0xff] %vm712, %v784
      %p787 = scmp.lt.s32.totalorder %s27, 1
      %v788 = vld [vmem:[%s643] sm:$0xff]
      %v789 = vld [vmem:[%s643 + $0x8] sm:$0xff]
      %s790 = scalar_select %p787, 1, 0
      %v791 = vstv %s790
      %vm792 = vcmp.eq.s32.totalorder %v791, 1
      %v793 = vsel %vm792, %v788, 0.0
      %v794 = vsel %vm792, %v789, 0.0
      %s795 = scalar_lea.vmem [#allocation2], 216
      %796 = vst.msk [vmem:[%s795 + $0x1] sm:$0xff] %vm712, %v793
      %797 = vst.msk [vmem:[%s795 + $0x9] sm:$0xff] %vm712, %v794
      %798 = vst.msk [vmem:[#allocation3] sm:$0xff] %vm712, 0.0
      %799 = vst.msk [vmem:[#allocation3 + $0x8] sm:$0xff] %vm712, 0.0
      %800 = vst.msk [vmem:[#allocation3 + $0x10] sm:$0x3] %vm715, 0.0
      %801 = vst.msk [vmem:[#allocation3 + $0x18] sm:$0xff] %vm712, 0.0
      %802 = vst.msk [vmem:[#allocation3 + $0x20] sm:$0xff] %vm712, 0.0
      %803 = vst.msk [vmem:[#allocation3 + $0x28] sm:$0x3] %vm715, 0.0
      %804 = vst.msk [vmem:[#allocation3 + $0x30] sm:$0xff] %vm712, 0.0
      %805 = vst.msk [vmem:[#allocation3 + $0x38] sm:$0xff] %vm712, 0.0
      %806 = vst.msk [vmem:[#allocation3 + $0x40] sm:$0x3] %vm715, 0.0
      %807 = vst.msk [vmem:[#allocation3 + $0x48] sm:$0xff] %vm712, 0.0
      %808 = vst.msk [vmem:[#allocation3 + $0x50] sm:$0xff] %vm712, 0.0
      %809 = vst.msk [vmem:[#allocation3 + $0x58] sm:$0x3] %vm715, 0.0
      %810 = vst.msk [vmem:[#allocation3 + $0x60] sm:$0xff] %vm712, 0.0
      %811 = vst.msk [vmem:[#allocation3 + $0x68] sm:$0xff] %vm712, 0.0
      %812 = vst.msk [vmem:[#allocation3 + $0x70] sm:$0x3] %vm715, 0.0
      %813 = vst.msk [vmem:[#allocation3 + $0x78] sm:$0xff] %vm712, 0.0
      %814 = vst.msk [vmem:[#allocation3 + $0x80] sm:$0xff] %vm712, 0.0
      %815 = vst.msk [vmem:[#allocation3 + $0x88] sm:$0x3] %vm715, 0.0
      %816 = vst.msk [vmem:[#allocation3 + $0x90] sm:$0xff] %vm712, 0.0
      %817 = vst.msk [vmem:[#allocation3 + $0x98] sm:$0xff] %vm712, 0.0
      %818 = vst.msk [vmem:[#allocation3 + $0xa0] sm:$0x3] %vm715, 0.0
      %819 = vst.msk [vmem:[#allocation3 + $0xa8] sm:$0xff] %vm712, 0.0
      %820 = vst.msk [vmem:[#allocation3 + $0xb0] sm:$0xff] %vm712, 0.0
      %821 = vst.msk [vmem:[#allocation3 + $0xb8] sm:$0x3] %vm715, 0.0
      %822 = vst.msk [vmem:[#allocation3 + $0xc0] sm:$0xff] %vm712, 0.0
      %823 = vst.msk [vmem:[#allocation3 + $0xc8] sm:$0xff] %vm712, 0.0
      %824 = vst.msk [vmem:[#allocation3 + $0xd0] sm:$0x3] %vm715, 0.0
      %825 = vst.msk [vmem:[#allocation3 + $0xd8] sm:$0xff] %vm712, 0.0
      %826 = vst.msk [vmem:[#allocation3 + $0xe0] sm:$0xff] %vm712, 0.0
      %827 = vst.msk [vmem:[#allocation3 + $0xe8] sm:$0x3] %vm715, 0.0
      %v828 = vld [vmem:[%s657] sm:$0xff]
      %v829 = vld [vmem:[%s657 + $0x8] sm:$0xff]
      %v830 = vld [vmem:[%s657 + $0x10] sm:$0xff]
      %v831 = vld [vmem:[%s657 + $0x18] sm:$0xff]
      %v832 = vld [vmem:[%s657 + $0x20] sm:$0xff]
      %v833 = vld [vmem:[%s657 + $0x28] sm:$0xff]
      %v834 = vld [vmem:[%s657 + $0x30] sm:$0xff]
      %v835 = vld [vmem:[%s657 + $0x38] sm:$0xff]
      %v836 = vld [vmem:[%s657 + $0x40] sm:$0xff]
      %v837 = vld [vmem:[%s657 + $0x48] sm:$0xff]
      %v838 = vld [vmem:[%s657 + $0x50] sm:$0xff]
      %v839 = vld [vmem:[%s657 + $0x58] sm:$0xff]
      %v840 = vld [vmem:[%s657 + $0x60] sm:$0xff]
      %v841 = vld [vmem:[%s657 + $0x68] sm:$0xff]
      %v842 = vld [vmem:[%s657 + $0x70] sm:$0xff]
      %v843 = vld [vmem:[%s657 + $0x78] sm:$0xff]
      %s844 = scalar_lea.vmem [#allocation3], 24
      %845 = vst.msk [vmem:[%s844 + $0x1] sm:$0xff] %vm712, %v828
      %846 = vst.msk [vmem:[%s844 + $0x9] sm:$0xff] %vm712, %v829
      %847 = vst.msk [vmem:[%s844 + $0x19] sm:$0xff] %vm712, %v830
      %848 = vst.msk [vmem:[%s844 + $0x21] sm:$0xff] %vm712, %v831
      %849 = vst.msk [vmem:[%s844 + $0x31] sm:$0xff] %vm712, %v832
      %850 = vst.msk [vmem:[%s844 + $0x39] sm:$0xff] %vm712, %v833
      %851 = vst.msk [vmem:[%s844 + $0x49] sm:$0xff] %vm712, %v834
      %852 = vst.msk [vmem:[%s844 + $0x51] sm:$0xff] %vm712, %v835
      %853 = vst.msk [vmem:[%s844 + $0x61] sm:$0xff] %vm712, %v836
      %854 = vst.msk [vmem:[%s844 + $0x69] sm:$0xff] %vm712, %v837
      %855 = vst.msk [vmem:[%s844 + $0x79] sm:$0xff] %vm712, %v838
      %856 = vst.msk [vmem:[%s844 + $0x81] sm:$0xff] %vm712, %v839
      %857 = vst.msk [vmem:[%s844 + $0x91] sm:$0xff] %vm712, %v840
      %858 = vst.msk [vmem:[%s844 + $0x99] sm:$0xff] %vm712, %v841
      %859 = vst.msk [vmem:[%s844 + $0xa9] sm:$0xff] %vm712, %v842
      %860 = vst.msk [vmem:[%s844 + $0xb1] sm:$0xff] %vm712, %v843
      %v861 = vld [vmem:[%s671] sm:$0xff]
      %v862 = vld [vmem:[%s671 + $0x8] sm:$0xff]
      %v863 = vsel %vm782, %v861, 0.0
      %v864 = vsel %vm782, %v862, 0.0
      %865 = vst.msk [vmem:[#allocation3 + $0x1] sm:$0xff] %vm712, %v863
      %866 = vst.msk [vmem:[#allocation3 + $0x9] sm:$0xff] %vm712, %v864
      %v867 = vld [vmem:[%s688] sm:$0xff]
      %v868 = vld [vmem:[%s688 + $0x8] sm:$0xff]
      %v869 = vsel %vm792, %v867, 0.0
      %v870 = vsel %vm792, %v868, 0.0
      %s871 = scalar_lea.vmem [#allocation3], 216
      %872 = vst.msk [vmem:[%s871 + $0x1] sm:$0xff] %vm712, %v869
      %873 = vst.msk [vmem:[%s871 + $0x9] sm:$0xff] %vm712, %v870
      %v874 = vld [vmem:[%s6] sm:$0xf]
      %v875 = vld [vmem:[%s6 + $0x4] sm:$0xf]
      %v876 = vld [vmem:[%s6 + $0x8] sm:$0xf]
      %v877 = vld [vmem:[%s6 + $0xc] sm:$0xf]
      %v878 = vld [vmem:[%s6 + $0x10] sm:$0xf]
      %v879 = vld [vmem:[%s6 + $0x14] sm:$0xf]
      %v880 = vld [vmem:[%s6 + $0x18] sm:$0xf]
      %v881 = vld [vmem:[%s6 + $0x1c] sm:$0xf]
      %v882 = vld [vmem:[%s6 + $0x20] sm:$0xf]
      %v883 = vld [vmem:[%s7] sm:$0xf]
      %v884 = vld [vmem:[%s7 + $0x4] sm:$0xf]
      %v885 = vld [vmem:[%s7 + $0x8] sm:$0xf]
      %v886 = vld [vmem:[%s7 + $0xc] sm:$0xf]
      %v887 = vld [vmem:[%s7 + $0x10] sm:$0xf]
      %v888 = vld [vmem:[%s7 + $0x14] sm:$0xf]
      %v889 = vld [vmem:[%s7 + $0x18] sm:$0xf]
      %v890 = vld [vmem:[%s7 + $0x1c] sm:$0xf]
      %v891 = vld [vmem:[%s7 + $0x20] sm:$0xf]
      %v892 = vld [vmem:[#allocation2] sm:$0xff]
      %v893 = vld [vmem:[#allocation2 + $0x8] sm:$0xff]
      %v894 = vld [vmem:[#allocation2 + $0x18] sm:$0xff]
      %v895 = vld [vmem:[#allocation2 + $0x20] sm:$0xff]
      %v896 = vld [vmem:[#allocation2 + $0x30] sm:$0xff]
      %v897 = vld [vmem:[#allocation2 + $0x38] sm:$0xff]
      %v898 = vld [vmem:[#allocation2 + $0x48] sm:$0xff]
      %v899 = vld [vmem:[#allocation2 + $0x50] sm:$0xff]
      %v900 = vld [vmem:[#allocation2 + $0x60] sm:$0xff]
      %v901 = vld [vmem:[#allocation2 + $0x68] sm:$0xff]
      %v902 = vld [vmem:[#allocation2 + $0x78] sm:$0xff]
      %v903 = vld [vmem:[#allocation2 + $0x80] sm:$0xff]
      %v904 = vld [vmem:[#allocation2 + $0x90] sm:$0xff]
      %v905 = vld [vmem:[#allocation2 + $0x98] sm:$0xff]
      %v906 = vld [vmem:[#allocation2 + $0xa8] sm:$0xff]
      %v907 = vld [vmem:[#allocation2 + $0xb0] sm:$0xff]
      %v908 = vld [vmem:[#allocation3] sm:$0xff]
      %v909 = vld [vmem:[#allocation3 + $0x8] sm:$0xff]
      %v910 = vld [vmem:[#allocation3 + $0x18] sm:$0xff]
      %v911 = vld [vmem:[#allocation3 + $0x20] sm:$0xff]
      %v912 = vld [vmem:[#allocation3 + $0x30] sm:$0xff]
      %v913 = vld [vmem:[#allocation3 + $0x38] sm:$0xff]
      %v914 = vld [vmem:[#allocation3 + $0x48] sm:$0xff]
      %v915 = vld [vmem:[#allocation3 + $0x50] sm:$0xff]
      %v916 = vld [vmem:[#allocation3 + $0x60] sm:$0xff]
      %v917 = vld [vmem:[#allocation3 + $0x68] sm:$0xff]
      %v918 = vld [vmem:[#allocation3 + $0x78] sm:$0xff]
      %v919 = vld [vmem:[#allocation3 + $0x80] sm:$0xff]
      %v920 = vld [vmem:[#allocation3 + $0x90] sm:$0xff]
      %v921 = vld [vmem:[#allocation3 + $0x98] sm:$0xff]
      %v922 = vld [vmem:[#allocation3 + $0xa8] sm:$0xff]
      %v923 = vld [vmem:[#allocation3 + $0xb0] sm:$0xff]
      %v925 = vsel %vm712, %v908, 0
      %v928 = vsel %vm712, %v909, 0
      %v931 = vsel %vm712, %v910, 0
      %v934 = vsel %vm712, %v911, 0
      %v937 = vsel %vm712, %v912, 0
      %v940 = vsel %vm712, %v913, 0
      %v943 = vsel %vm712, %v914, 0
      %v946 = vsel %vm712, %v915, 0
      %v949 = vsel %vm712, %v916, 0
      %v952 = vsel %vm712, %v917, 0
      %v955 = vsel %vm712, %v918, 0
      %v958 = vsel %vm712, %v919, 0
      %v961 = vsel %vm712, %v920, 0
      %v964 = vsel %vm712, %v921, 0
      %v967 = vsel %vm712, %v922, 0
      %v970 = vsel %vm712, %v923, 0
      %vm972 = vcmask 1043456
      %v974 = vsel %vm972, %v883, 0
      %976 = vmatprep.subr.mxu0 0.0
      %977 = vmatpush1.msra.mxu0 %v974
      %978 = vmatprep.subr.mxu0 0.0
      %979 = vmatpush1.msra.mxu0 0.0
      %980 = vmatprep.subr.mxu0 0.0
      %981 = vmatpush1.msra.mxu0 0.0
      %982 = vmatprep.subr.mxu0 0.0
      %983 = vmatpush1.msra.mxu0 0.0
      %984 = vmatprep.subr.mxu0 0.0
      %985 = vmatpush1.msra.mxu0 0.0
      %986 = vmatprep.subr.mxu0 0.0
      %987 = vmatpush1.msra.mxu0 0.0
      %988 = vmatprep.subr.mxu0 0.0
      %989 = vmatpush1.msra.mxu0 0.0
      %990 = vmatprep.subr.mxu0 0.0
      %991 = vmatpush1.msra.mxu0 0.0
      %992 = vmatprep.subr.mxu0 0.0
      %993 = vmatpush1.msra.mxu0 0.0
      %994 = vmatprep.subr.mxu0 0.0
      %995 = vmatpush1.msra.mxu0 0.0
      %996 = vmatprep.subr.mxu0 0.0
      %997 = vmatpush1.msra.mxu0 0.0
      %998 = vmatprep.subr.mxu0 0.0
      %999 = vmatpush1.msra.mxu0 0.0
      %1000 = vmatprep.subr.mxu0 0.0
      %1001 = vmatpush1.msra.mxu0 0.0
      %1002 = vmatprep.subr.mxu0 0.0
      %1003 = vmatpush1.msra.mxu0 0.0
      %1004 = vmatprep.subr.mxu0 0.0
      %1005 = vmatpush1.msra.mxu0 0.0
      %1006 = vmatprep.subr.mxu0 0.0
      %1007 = vmatpush1.msra.mxu0 0.0
      %1008 = vmatprep.subr.mxu0 0.0
      %1009 = vmatpush1.msra.mxu0 0.0
      %1010 = vmatprep.subr.mxu0 0.0
      %1011 = vmatpush1.msra.mxu0 0.0
      %1012 = vmatprep.subr.mxu0 0.0
      %1013 = vmatpush1.msra.mxu0 0.0
      %1014 = vmatprep.subr.mxu0 0.0
      %1015 = vmatpush1.msra.mxu0 0.0
      %1016 = vmatprep.subr.mxu0 0.0
      %1017 = vmatpush1.msra.mxu0 0.0
      %1018 = vmatprep.subr.mxu0 0.0
      %1019 = vmatpush1.msra.mxu0 0.0
      %1020 = vmatprep.subr.mxu0 0.0
      %1021 = vmatpush1.msra.mxu0 0.0
      %1022 = vmatprep.subr.mxu0 0.0
      %1023 = vmatpush1.msra.mxu0 0.0
      %1024 = vmatprep.subr.mxu0 0.0
      %1025 = vmatpush1.msra.mxu0 0.0
      %1026 = vmatprep.subr.mxu0 0.0
      %1027 = vmatpush1.msra.mxu0 0.0
      %1028 = vmatprep.subr.mxu0 0.0
      %1029 = vmatpush1.msra.mxu0 0.0
      %1030 = vmatprep.subr.mxu0 0.0
      %1031 = vmatpush1.msra.mxu0 0.0
      %1032 = vmatprep.subr.mxu0 0.0
      %1033 = vmatpush1.msra.mxu0 0.0
      %1034 = vmatprep.subr.mxu0 0.0
      %1035 = vmatpush1.msra.mxu0 0.0
      %1036 = vmatprep.subr.mxu0 0.0
      %1037 = vmatpush1.msra.mxu0 0.0
      %1038 = vmatprep.subr.mxu0 0.0
      %1039 = vmatpush1.msra.mxu0 0.0
      %1040 = vmatprep.mubr.f32.mxu0 0.0
      %1041 = vmatmul.mubr.f32.gmra.mrb[0].mxu0 %v925
      %v1042 = vpop.f32.mrb[0].mxu0
      %v1043 = vadd.f32 0.0, %v1042
      %v1044 = vpop.f32.mrb[0].mxu0
      %1045 = vmatprep.mubr.f32.mxu0 0.0
      %1046 = vmatmul.mubr.f32.gmra.mrb[0].mxu0 %v928
      %v1047 = vpop.f32.mrb[0].mxu0
      %v1048 = vadd.f32 0.0, %v1047
      %v1049 = vpop.f32.mrb[0].mxu0
      %1050 = vmatprep.mubr.f32.mxu0 0.0
      %1051 = vmatmul.mubr.f32.gmra.mrb[0].mxu0 %v931
      %v1052 = vpop.f32.mrb[0].mxu0
      %v1053 = vadd.f32 0.0, %v1052
      %v1054 = vpop.f32.mrb[0].mxu0
      %1055 = vmatprep.mubr.f32.mxu0 0.0
      %1056 = vmatmul.mubr.f32.gmra.mrb[0].mxu0 %v934
      %v1057 = vpop.f32.mrb[0].mxu0
      %v1058 = vadd.f32 0.0, %v1057
      %v1059 = vpop.f32.mrb[0].mxu0
      %1060 = vmatprep.mubr.f32.mxu0 0.0
      %1061 = vmatmul.mubr.f32.gmra.mrb[0].mxu0 %v937
      %v1062 = vpop.f32.mrb[0].mxu0
      %v1063 = vadd.f32 0.0, %v1062
      %v1064 = vpop.f32.mrb[0].mxu0
      %1065 = vmatprep.mubr.f32.mxu0 0.0
      %1066 = vmatmul.mubr.f32.gmra.mrb[0].mxu0 %v940
      %v1067 = vpop.f32.mrb[0].mxu0
      %v1068 = vadd.f32 0.0, %v1067
      %v1069 = vpop.f32.mrb[0].mxu0
      %1070 = vmatprep.mubr.f32.mxu0 0.0
      %1071 = vmatmul.mubr.f32.gmra.mrb[0].mxu0 %v943
      %v1072 = vpop.f32.mrb[0].mxu0
      %v1073 = vadd.f32 0.0, %v1072
      %v1074 = vpop.f32.mrb[0].mxu0
      %1075 = vmatprep.mubr.f32.mxu0 0.0
      %1076 = vmatmul.mubr.f32.gmra.mrb[0].mxu0 %v946
      %v1077 = vpop.f32.mrb[0].mxu0
      %v1078 = vadd.f32 0.0, %v1077
      %v1079 = vpop.f32.mrb[0].mxu0
      %1080 = vmatprep.mubr.f32.mxu0 0.0
      %1081 = vmatmul.mubr.f32.gmra.mrb[0].mxu0 %v949
      %v1082 = vpop.f32.mrb[0].mxu0
      %v1083 = vadd.f32 0.0, %v1082
      %v1084 = vpop.f32.mrb[0].mxu0
      %1085 = vmatprep.mubr.f32.mxu0 0.0
      %1086 = vmatmul.mubr.f32.gmra.mrb[0].mxu0 %v952
      %v1087 = vpop.f32.mrb[0].mxu0
      %v1088 = vadd.f32 0.0, %v1087
      %v1089 = vpop.f32.mrb[0].mxu0
      %1090 = vmatprep.mubr.f32.mxu0 0.0
      %1091 = vmatmul.mubr.f32.gmra.mrb[0].mxu0 %v955
      %v1092 = vpop.f32.mrb[0].mxu0
      %v1093 = vadd.f32 0.0, %v1092
      %v1094 = vpop.f32.mrb[0].mxu0
      %1095 = vmatprep.mubr.f32.mxu0 0.0
      %1096 = vmatmul.mubr.f32.gmra.mrb[0].mxu0 %v958
      %v1097 = vpop.f32.mrb[0].mxu0
      %v1098 = vadd.f32 0.0, %v1097
      %v1099 = vpop.f32.mrb[0].mxu0
      %1100 = vmatprep.mubr.f32.mxu0 0.0
      %1101 = vmatmul.mubr.f32.gmra.mrb[0].mxu0 %v961
      %v1102 = vpop.f32.mrb[0].mxu0
      %v1103 = vadd.f32 0.0, %v1102
      %v1104 = vpop.f32.mrb[0].mxu0
      %1105 = vmatprep.mubr.f32.mxu0 0.0
      %1106 = vmatmul.mubr.f32.gmra.mrb[0].mxu0 %v964
      %v1107 = vpop.f32.mrb[0].mxu0
      %v1108 = vadd.f32 0.0, %v1107
      %v1109 = vpop.f32.mrb[0].mxu0
      %1110 = vmatprep.mubr.f32.mxu0 0.0
      %1111 = vmatmul.mubr.f32.gmra.mrb[0].mxu0 %v967
      %v1112 = vpop.f32.mrb[0].mxu0
      %v1113 = vadd.f32 0.0, %v1112
      %v1114 = vpop.f32.mrb[0].mxu0
      %1115 = vmatprep.mubr.f32.mxu0 0.0
      %1116 = vmatmul.mubr.f32.gmra.mrb[0].mxu0 %v970
      %v1117 = vpop.f32.mrb[0].mxu0
      %v1118 = vadd.f32 0.0, %v1117
      %v1119 = vpop.f32.mrb[0].mxu0
      %1120 = vdwg.mxu0
      %v1122 = vsel %vm712, %v892, 0
      %v1125 = vsel %vm712, %v893, 0
      %v1128 = vsel %vm712, %v894, 0
      %v1131 = vsel %vm712, %v895, 0
      %v1134 = vsel %vm712, %v896, 0
      %v1137 = vsel %vm712, %v897, 0
      %v1140 = vsel %vm712, %v898, 0
      %v1143 = vsel %vm712, %v899, 0
      %v1146 = vsel %vm712, %v900, 0
      %v1149 = vsel %vm712, %v901, 0
      %v1152 = vsel %vm712, %v902, 0
      %v1155 = vsel %vm712, %v903, 0
      %v1158 = vsel %vm712, %v904, 0
      %v1161 = vsel %vm712, %v905, 0
      %v1164 = vsel %vm712, %v906, 0
      %v1167 = vsel %vm712, %v907, 0
      %v1170 = vsel %vm972, %v874, 0
      %1172 = vmatprep.subr.mxu0 0.0
      %1173 = vmatpush1.msra.mxu0 %v1170
      %1174 = vmatprep.subr.mxu0 0.0
      %1175 = vmatpush1.msra.mxu0 0.0
      %1176 = vmatprep.subr.mxu0 0.0
      %1177 = vmatpush1.msra.mxu0 0.0
      %1178 = vmatprep.subr.mxu0 0.0
      %1179 = vmatpush1.msra.mxu0 0.0
      %1180 = vmatprep.subr.mxu0 0.0
      %1181 = vmatpush1.msra.mxu0 0.0
      %1182 = vmatprep.subr.mxu0 0.0
      %1183 = vmatpush1.msra.mxu0 0.0
      %1184 = vmatprep.subr.mxu0 0.0
      %1185 = vmatpush1.msra.mxu0 0.0
      %1186 = vmatprep.subr.mxu0 0.0
      %1187 = vmatpush1.msra.mxu0 0.0
      %1188 = vmatprep.subr.mxu0 0.0
      %1189 = vmatpush1.msra.mxu0 0.0
      %1190 = vmatprep.subr.mxu0 0.0
      %1191 = vmatpush1.msra.mxu0 0.0
      %1192 = vmatprep.subr.mxu0 0.0
      %1193 = vmatpush1.msra.mxu0 0.0
      %1194 = vmatprep.subr.mxu0 0.0
      %1195 = vmatpush1.msra.mxu0 0.0
      %1196 = vmatprep.subr.mxu0 0.0
      %1197 = vmatpush1.msra.mxu0 0.0
      %1198 = vmatprep.subr.mxu0 0.0
      %1199 = vmatpush1.msra.mxu0 0.0
      %1200 = vmatprep.subr.mxu0 0.0
      %1201 = vmatpush1.msra.mxu0 0.0
      %1202 = vmatprep.subr.mxu0 0.0
      %1203 = vmatpush1.msra.mxu0 0.0
      %1204 = vmatprep.subr.mxu0 0.0
      %1205 = vmatpush1.msra.mxu0 0.0
      %1206 = vmatprep.subr.mxu0 0.0
      %1207 = vmatpush1.msra.mxu0 0.0
      %1208 = vmatprep.subr.mxu0 0.0
      %1209 = vmatpush1.msra.mxu0 0.0
      %1210 = vmatprep.subr.mxu0 0.0
      %1211 = vmatpush1.msra.mxu0 0.0
      %1212 = vmatprep.subr.mxu0 0.0
      %1213 = vmatpush1.msra.mxu0 0.0
      %1214 = vmatprep.subr.mxu0 0.0
      %1215 = vmatpush1.msra.mxu0 0.0
      %1216 = vmatprep.subr.mxu0 0.0
      %1217 = vmatpush1.msra.mxu0 0.0
      %1218 = vmatprep.subr.mxu0 0.0
      %1219 = vmatpush1.msra.mxu0 0.0
      %1220 = vmatprep.subr.mxu0 0.0
      %1221 = vmatpush1.msra.mxu0 0.0
      %1222 = vmatprep.subr.mxu0 0.0
      %1223 = vmatpush1.msra.mxu0 0.0
      %1224 = vmatprep.subr.mxu0 0.0
      %1225 = vmatpush1.msra.mxu0 0.0
      %1226 = vmatprep.subr.mxu0 0.0
      %1227 = vmatpush1.msra.mxu0 0.0
      %1228 = vmatprep.subr.mxu0 0.0
      %1229 = vmatpush1.msra.mxu0 0.0
      %1230 = vmatprep.subr.mxu0 0.0
      %1231 = vmatpush1.msra.mxu0 0.0
      %1232 = vmatprep.subr.mxu0 0.0
      %1233 = vmatpush1.msra.mxu0 0.0
      %1234 = vmatprep.subr.mxu0 0.0
      %1235 = vmatpush1.msra.mxu0 0.0
      %1236 = vmatprep.mubr.f32.mxu0 0.0
      %1237 = vmatmul.mubr.f32.gmra.mrb[0].mxu0 %v1122
      %v1238 = vpop.f32.mrb[0].mxu0
      %v1239 = vadd.f32 %v1043, %v1238
      %v1240 = vpop.f32.mrb[0].mxu0
      %1241 = vmatprep.mubr.f32.mxu0 0.0
      %1242 = vmatmul.mubr.f32.gmra.mrb[0].mxu0 %v1125
      %v1243 = vpop.f32.mrb[0].mxu0
      %v1244 = vadd.f32 %v1048, %v1243
      %v1245 = vpop.f32.mrb[0].mxu0
      %1246 = vmatprep.mubr.f32.mxu0 0.0
      %1247 = vmatmul.mubr.f32.gmra.mrb[0].mxu0 %v1128
      %v1248 = vpop.f32.mrb[0].mxu0
      %v1249 = vadd.f32 %v1053, %v1248
      %v1250 = vpop.f32.mrb[0].mxu0
      %1251 = vmatprep.mubr.f32.mxu0 0.0
      %1252 = vmatmul.mubr.f32.gmra.mrb[0].mxu0 %v1131
      %v1253 = vpop.f32.mrb[0].mxu0
      %v1254 = vadd.f32 %v1058, %v1253
      %v1255 = vpop.f32.mrb[0].mxu0
      %1256 = vmatprep.mubr.f32.mxu0 0.0
      %1257 = vmatmul.mubr.f32.gmra.mrb[0].mxu0 %v1134
      %v1258 = vpop.f32.mrb[0].mxu0
      %v1259 = vadd.f32 %v1063, %v1258
      %v1260 = vpop.f32.mrb[0].mxu0
      %1261 = vmatprep.mubr.f32.mxu0 0.0
      %1262 = vmatmul.mubr.f32.gmra.mrb[0].mxu0 %v1137
      %v1263 = vpop.f32.mrb[0].mxu0
      %v1264 = vadd.f32 %v1068, %v1263
      %v1265 = vpop.f32.mrb[0].mxu0
      %1266 = vmatprep.mubr.f32.mxu0 0.0
      %1267 = vmatmul.mubr.f32.gmra.mrb[0].mxu0 %v1140
      %v1268 = vpop.f32.mrb[0].mxu0
      %v1269 = vadd.f32 %v1073, %v1268
      %v1270 = vpop.f32.mrb[0].mxu0
      %1271 = vmatprep.mubr.f32.mxu0 0.0
      %1272 = vmatmul.mubr.f32.gmra.mrb[0].mxu0 %v1143
      %v1273 = vpop.f32.mrb[0].mxu0
      %v1274 = vadd.f32 %v1078, %v1273
      %v1275 = vpop.f32.mrb[0].mxu0
      %1276 = vmatprep.mubr.f32.mxu0 0.0
      %1277 = vmatmul.mubr.f32.gmra.mrb[0].mxu0 %v1146
      %v1278 = vpop.f32.mrb[0].mxu0
      %v1279 = vadd.f32 %v1083, %v1278
      %v1280 = vpop.f32.mrb[0].mxu0
      %1281 = vmatprep.mubr.f32.mxu0 0.0
      %1282 = vmatmul.mubr.f32.gmra.mrb[0].mxu0 %v1149
      %v1283 = vpop.f32.mrb[0].mxu0
      %v1284 = vadd.f32 %v1088, %v1283
      %v1285 = vpop.f32.mrb[0].mxu0
      %1286 = vmatprep.mubr.f32.mxu0 0.0
      %1287 = vmatmul.mubr.f32.gmra.mrb[0].mxu0 %v1152
      %v1288 = vpop.f32.mrb[0].mxu0
      %v1289 = vadd.f32 %v1093, %v1288
      %v1290 = vpop.f32.mrb[0].mxu0
      %1291 = vmatprep.mubr.f32.mxu0 0.0
      %1292 = vmatmul.mubr.f32.gmra.mrb[0].mxu0 %v1155
      %v1293 = vpop.f32.mrb[0].mxu0
      %v1294 = vadd.f32 %v1098, %v1293
      %v1295 = vpop.f32.mrb[0].mxu0
      %1296 = vmatprep.mubr.f32.mxu0 0.0
      %1297 = vmatmul.mubr.f32.gmra.mrb[0].mxu0 %v1158
      %v1298 = vpop.f32.mrb[0].mxu0
      %v1299 = vadd.f32 %v1103, %v1298
      %v1300 = vpop.f32.mrb[0].mxu0
      %1301 = vmatprep.mubr.f32.mxu0 0.0
      %1302 = vmatmul.mubr.f32.gmra.mrb[0].mxu0 %v1161
      %v1303 = vpop.f32.mrb[0].mxu0
      %v1304 = vadd.f32 %v1108, %v1303
      %v1305 = vpop.f32.mrb[0].mxu0
      %1306 = vmatprep.mubr.f32.mxu0 0.0
      %1307 = vmatmul.mubr.f32.gmra.mrb[0].mxu0 %v1164
      %v1308 = vpop.f32.mrb[0].mxu0
      %v1309 = vadd.f32 %v1113, %v1308
      %v1310 = vpop.f32.mrb[0].mxu0
      %1311 = vmatprep.mubr.f32.mxu0 0.0
      %1312 = vmatmul.mubr.f32.gmra.mrb[0].mxu0 %v1167
      %v1313 = vpop.f32.mrb[0].mxu0
      %v1314 = vadd.f32 %v1118, %v1313
      %v1315 = vpop.f32.mrb[0].mxu0
      %1316 = vdwg.mxu0
      %v1317 = vld [vmem:[#allocation2 + $0x1] sm:$0xff]
      %v1318 = vld [vmem:[#allocation2 + $0x9] sm:$0xff]
      %v1319 = vld [vmem:[#allocation2 + $0x19] sm:$0xff]
      %v1320 = vld [vmem:[#allocation2 + $0x21] sm:$0xff]
      %v1321 = vld [vmem:[#allocation2 + $0x31] sm:$0xff]
      %v1322 = vld [vmem:[#allocation2 + $0x39] sm:$0xff]
      %v1323 = vld [vmem:[#allocation2 + $0x49] sm:$0xff]
      %v1324 = vld [vmem:[#allocation2 + $0x51] sm:$0xff]
      %v1325 = vld [vmem:[#allocation2 + $0x61] sm:$0xff]
      %v1326 = vld [vmem:[#allocation2 + $0x69] sm:$0xff]
      %v1327 = vld [vmem:[#allocation2 + $0x79] sm:$0xff]
      %v1328 = vld [vmem:[#allocation2 + $0x81] sm:$0xff]
      %v1329 = vld [vmem:[#allocation2 + $0x91] sm:$0xff]
      %v1330 = vld [vmem:[#allocation2 + $0x99] sm:$0xff]
      %v1331 = vld [vmem:[#allocation2 + $0xa9] sm:$0xff]
      %v1332 = vld [vmem:[#allocation2 + $0xb1] sm:$0xff]
      %v1333 = vld [vmem:[#allocation3 + $0x1] sm:$0xff]
      %v1334 = vld [vmem:[#allocation3 + $0x9] sm:$0xff]
      %v1335 = vld [vmem:[#allocation3 + $0x19] sm:$0xff]
      %v1336 = vld [vmem:[#allocation3 + $0x21] sm:$0xff]
      %v1337 = vld [vmem:[#allocation3 + $0x31] sm:$0xff]
      %v1338 = vld [vmem:[#allocation3 + $0x39] sm:$0xff]
      %v1339 = vld [vmem:[#allocation3 + $0x49] sm:$0xff]
      %v1340 = vld [vmem:[#allocation3 + $0x51] sm:$0xff]
      %v1341 = vld [vmem:[#allocation3 + $0x61] sm:$0xff]
      %v1342 = vld [vmem:[#allocation3 + $0x69] sm:$0xff]
      %v1343 = vld [vmem:[#allocation3 + $0x79] sm:$0xff]
      %v1344 = vld [vmem:[#allocation3 + $0x81] sm:$0xff]
      %v1345 = vld [vmem:[#allocation3 + $0x91] sm:$0xff]
      %v1346 = vld [vmem:[#allocation3 + $0x99] sm:$0xff]
      %v1347 = vld [vmem:[#allocation3 + $0xa9] sm:$0xff]
      %v1348 = vld [vmem:[#allocation3 + $0xb1] sm:$0xff]
      %v1350 = vsel %vm712, %v1317, 0
      %v1353 = vsel %vm712, %v1318, 0
      %v1356 = vsel %vm712, %v1319, 0
      %v1359 = vsel %vm712, %v1320, 0
      %v1362 = vsel %vm712, %v1321, 0
      %v1365 = vsel %vm712, %v1322, 0
      %v1368 = vsel %vm712, %v1323, 0
      %v1371 = vsel %vm712, %v1324, 0
      %v1374 = vsel %vm712, %v1325, 0
      %v1377 = vsel %vm712, %v1326, 0
      %v1380 = vsel %vm712, %v1327, 0
      %v1383 = vsel %vm712, %v1328, 0
      %v1386 = vsel %vm712, %v1329, 0
      %v1389 = vsel %vm712, %v1330, 0
      %v1392 = vsel %vm712, %v1331, 0
      %v1395 = vsel %vm712, %v1332, 0
      %v1398 = vsel %vm972, %v875, 0
      %1400 = vmatprep.subr.mxu0 0.0
      %1401 = vmatpush1.msra.mxu0 %v1398
      %1402 = vmatprep.subr.mxu0 0.0
      %1403 = vmatpush1.msra.mxu0 0.0
      %1404 = vmatprep.subr.mxu0 0.0
      %1405 = vmatpush1.msra.mxu0 0.0
      %1406 = vmatprep.subr.mxu0 0.0
      %1407 = vmatpush1.msra.mxu0 0.0
      %1408 = vmatprep.subr.mxu0 0.0
      %1409 = vmatpush1.msra.mxu0 0.0
      %1410 = vmatprep.subr.mxu0 0.0
      %1411 = vmatpush1.msra.mxu0 0.0
      %1412 = vmatprep.subr.mxu0 0.0
      %1413 = vmatpush1.msra.mxu0 0.0
      %1414 = vmatprep.subr.mxu0 0.0
      %1415 = vmatpush1.msra.mxu0 0.0
      %1416 = vmatprep.subr.mxu0 0.0
      %1417 = vmatpush1.msra.mxu0 0.0
      %1418 = vmatprep.subr.mxu0 0.0
      %1419 = vmatpush1.msra.mxu0 0.0
      %1420 = vmatprep.subr.mxu0 0.0
      %1421 = vmatpush1.msra.mxu0 0.0
      %1422 = vmatprep.subr.mxu0 0.0
      %1423 = vmatpush1.msra.mxu0 0.0
      %1424 = vmatprep.subr.mxu0 0.0
      %1425 = vmatpush1.msra.mxu0 0.0
      %1426 = vmatprep.subr.mxu0 0.0
      %1427 = vmatpush1.msra.mxu0 0.0
      %1428 = vmatprep.subr.mxu0 0.0
      %1429 = vmatpush1.msra.mxu0 0.0
      %1430 = vmatprep.subr.mxu0 0.0
      %1431 = vmatpush1.msra.mxu0 0.0
      %1432 = vmatprep.subr.mxu0 0.0
      %1433 = vmatpush1.msra.mxu0 0.0
      %1434 = vmatprep.subr.mxu0 0.0
      %1435 = vmatpush1.msra.mxu0 0.0
      %1436 = vmatprep.subr.mxu0 0.0
      %1437 = vmatpush1.msra.mxu0 0.0
      %1438 = vmatprep.subr.mxu0 0.0
      %1439 = vmatpush1.msra.mxu0 0.0
      %1440 = vmatprep.subr.mxu0 0.0
      %1441 = vmatpush1.msra.mxu0 0.0
      %1442 = vmatprep.subr.mxu0 0.0
      %1443 = vmatpush1.msra.mxu0 0.0
      %1444 = vmatprep.subr.mxu0 0.0
      %1445 = vmatpush1.msra.mxu0 0.0
      %1446 = vmatprep.subr.mxu0 0.0
      %1447 = vmatpush1.msra.mxu0 0.0
      %1448 = vmatprep.subr.mxu0 0.0
      %1449 = vmatpush1.msra.mxu0 0.0
      %1450 = vmatprep.subr.mxu0 0.0
      %1451 = vmatpush1.msra.mxu0 0.0
      %1452 = vmatprep.subr.mxu0 0.0
      %1453 = vmatpush1.msra.mxu0 0.0
      %1454 = vmatprep.subr.mxu0 0.0
      %1455 = vmatpush1.msra.mxu0 0.0
      %1456 = vmatprep.subr.mxu0 0.0
      %1457 = vmatpush1.msra.mxu0 0.0
      %1458 = vmatprep.subr.mxu0 0.0
      %1459 = vmatpush1.msra.mxu0 0.0
      %1460 = vmatprep.subr.mxu0 0.0
      %1461 = vmatpush1.msra.mxu0 0.0
      %1462 = vmatprep.subr.mxu0 0.0
      %1463 = vmatpush1.msra.mxu0 0.0
      %1464 = vmatprep.mubr.f32.mxu0 0.0
      %1465 = vmatmul.mubr.f32.gmra.mrb[0].mxu0 %v1350
      %v1466 = vpop.f32.mrb[0].mxu0
      %v1467 = vadd.f32 0.0, %v1466
      %v1468 = vpop.f32.mrb[0].mxu0
      %1469 = vmatprep.mubr.f32.mxu0 0.0
      %1470 = vmatmul.mubr.f32.gmra.mrb[0].mxu0 %v1353
      %v1471 = vpop.f32.mrb[0].mxu0
      %v1472 = vadd.f32 0.0, %v1471
      %v1473 = vpop.f32.mrb[0].mxu0
      %1474 = vmatprep.mubr.f32.mxu0 0.0
      %1475 = vmatmul.mubr.f32.gmra.mrb[0].mxu0 %v1356
      %v1476 = vpop.f32.mrb[0].mxu0
      %v1477 = vadd.f32 0.0, %v1476
      %v1478 = vpop.f32.mrb[0].mxu0
      %1479 = vmatprep.mubr.f32.mxu0 0.0
      %1480 = vmatmul.mubr.f32.gmra.mrb[0].mxu0 %v1359
      %v1481 = vpop.f32.mrb[0].mxu0
      %v1482 = vadd.f32 0.0, %v1481
      %v1483 = vpop.f32.mrb[0].mxu0
      %1484 = vmatprep.mubr.f32.mxu0 0.0
      %1485 = vmatmul.mubr.f32.gmra.mrb[0].mxu0 %v1362
      %v1486 = vpop.f32.mrb[0].mxu0
      %v1487 = vadd.f32 0.0, %v1486
      %v1488 = vpop.f32.mrb[0].mxu0
      %1489 = vmatprep.mubr.f32.mxu0 0.0
      %1490 = vmatmul.mubr.f32.gmra.mrb[0].mxu0 %v1365
      %v1491 = vpop.f32.mrb[0].mxu0
      %v1492 = vadd.f32 0.0, %v1491
      %v1493 = vpop.f32.mrb[0].mxu0
      %1494 = vmatprep.mubr.f32.mxu0 0.0
      %1495 = vmatmul.mubr.f32.gmra.mrb[0].mxu0 %v1368
      %v1496 = vpop.f32.mrb[0].mxu0
      %v1497 = vadd.f32 0.0, %v1496
      %v1498 = vpop.f32.mrb[0].mxu0
      %1499 = vmatprep.mubr.f32.mxu0 0.0
      %1500 = vmatmul.mubr.f32.gmra.mrb[0].mxu0 %v1371
      %v1501 = vpop.f32.mrb[0].mxu0
      %v1502 = vadd.f32 0.0, %v1501
      %v1503 = vpop.f32.mrb[0].mxu0
      %1504 = vmatprep.mubr.f32.mxu0 0.0
      %1505 = vmatmul.mubr.f32.gmra.mrb[0].mxu0 %v1374
      %v1506 = vpop.f32.mrb[0].mxu0
      %v1507 = vadd.f32 0.0, %v1506
      %v1508 = vpop.f32.mrb[0].mxu0
      %1509 = vmatprep.mubr.f32.mxu0 0.0
      %1510 = vmatmul.mubr.f32.gmra.mrb[0].mxu0 %v1377
      %v1511 = vpop.f32.mrb[0].mxu0
      %v1512 = vadd.f32 0.0, %v1511
      %v1513 = vpop.f32.mrb[0].mxu0
      %1514 = vmatprep.mubr.f32.mxu0 0.0
      %1515 = vmatmul.mubr.f32.gmra.mrb[0].mxu0 %v1380
      %v1516 = vpop.f32.mrb[0].mxu0
      %v1517 = vadd.f32 0.0, %v1516
      %v1518 = vpop.f32.mrb[0].mxu0
      %1519 = vmatprep.mubr.f32.mxu0 0.0
      %1520 = vmatmul.mubr.f32.gmra.mrb[0].mxu0 %v1383
      %v1521 = vpop.f32.mrb[0].mxu0
      %v1522 = vadd.f32 0.0, %v1521
      %v1523 = vpop.f32.mrb[0].mxu0
      %1524 = vmatprep.mubr.f32.mxu0 0.0
      %1525 = vmatmul.mubr.f32.gmra.mrb[0].mxu0 %v1386
      %v1526 = vpop.f32.mrb[0].mxu0
      %v1527 = vadd.f32 0.0, %v1526
      %v1528 = vpop.f32.mrb[0].mxu0
      %1529 = vmatprep.mubr.f32.mxu0 0.0
      %1530 = vmatmul.mubr.f32.gmra.mrb[0].mxu0 %v1389
      %v1531 = vpop.f32.mrb[0].mxu0
      %v1532 = vadd.f32 0.0, %v1531
      %v1533 = vpop.f32.mrb[0].mxu0
      %1534 = vmatprep.mubr.f32.mxu0 0.0
      %1535 = vmatmul.mubr.f32.gmra.mrb[0].mxu0 %v1392
      %v1536 = vpop.f32.mrb[0].mxu0
      %v1537 = vadd.f32 0.0, %v1536
      %v1538 = vpop.f32.mrb[0].mxu0
      %1539 = vmatprep.mubr.f32.mxu0 0.0
      %1540 = vmatmul.mubr.f32.gmra.mrb[0].mxu0 %v1395
      %v1541 = vpop.f32.mrb[0].mxu0
      %v1542 = vadd.f32 0.0, %v1541
      %v1543 = vpop.f32.mrb[0].mxu0
      %1544 = vdwg.mxu0
      %v1545 = vadd.f32 %v1239, %v1467
      %v1546 = vadd.f32 %v1244, %v1472
      %v1547 = vadd.f32 %v1249, %v1477
      %v1548 = vadd.f32 %v1254, %v1482
      %v1549 = vadd.f32 %v1259, %v1487
      %v1550 = vadd.f32 %v1264, %v1492
      %v1551 = vadd.f32 %v1269, %v1497
      %v1552 = vadd.f32 %v1274, %v1502
      %v1553 = vadd.f32 %v1279, %v1507
      %v1554 = vadd.f32 %v1284, %v1512
      %v1555 = vadd.f32 %v1289, %v1517
      %v1556 = vadd.f32 %v1294, %v1522
      %v1557 = vadd.f32 %v1299, %v1527
      %v1558 = vadd.f32 %v1304, %v1532
      %v1559 = vadd.f32 %v1309, %v1537
      %v1560 = vadd.f32 %v1314, %v1542
      %v1562 = vsel %vm712, %v1333, 0
      %v1565 = vsel %vm712, %v1334, 0
      %v1568 = vsel %vm712, %v1335, 0
      %v1571 = vsel %vm712, %v1336, 0
      %v1574 = vsel %vm712, %v1337, 0
      %v1577 = vsel %vm712, %v1338, 0
      %v1580 = vsel %vm712, %v1339, 0
      %v1583 = vsel %vm712, %v1340, 0
      %v1586 = vsel %vm712, %v1341, 0
      %v1589 = vsel %vm712, %v1342, 0
      %v1592 = vsel %vm712, %v1343, 0
      %v1595 = vsel %vm712, %v1344, 0
      %v1598 = vsel %vm712, %v1345, 0
      %v1601 = vsel %vm712, %v1346, 0
      %v1604 = vsel %vm712, %v1347, 0
      %v1607 = vsel %vm712, %v1348, 0
      %v1610 = vsel %vm972, %v884, 0
      %1612 = vmatprep.subr.mxu0 0.0
      %1613 = vmatpush1.msra.mxu0 %v1610
      %1614 = vmatprep.subr.mxu0 0.0
      %1615 = vmatpush1.msra.mxu0 0.0
      %1616 = vmatprep.subr.mxu0 0.0
      %1617 = vmatpush1.msra.mxu0 0.0
      %1618 = vmatprep.subr.mxu0 0.0
      %1619 = vmatpush1.msra.mxu0 0.0
      %1620 = vmatprep.subr.mxu0 0.0
      %1621 = vmatpush1.msra.mxu0 0.0
      %1622 = vmatprep.subr.mxu0 0.0
      %1623 = vmatpush1.msra.mxu0 0.0
      %1624 = vmatprep.subr.mxu0 0.0
      %1625 = vmatpush1.msra.mxu0 0.0
      %1626 = vmatprep.subr.mxu0 0.0
      %1627 = vmatpush1.msra.mxu0 0.0
      %1628 = vmatprep.subr.mxu0 0.0
      %1629 = vmatpush1.msra.mxu0 0.0
      %1630 = vmatprep.subr.mxu0 0.0
      %1631 = vmatpush1.msra.mxu0 0.0
      %1632 = vmatprep.subr.mxu0 0.0
      %1633 = vmatpush1.msra.mxu0 0.0
      %1634 = vmatprep.subr.mxu0 0.0
      %1635 = vmatpush1.msra.mxu0 0.0
      %1636 = vmatprep.subr.mxu0 0.0
      %1637 = vmatpush1.msra.mxu0 0.0
      %1638 = vmatprep.subr.mxu0 0.0
      %1639 = vmatpush1.msra.mxu0 0.0
      %1640 = vmatprep.subr.mxu0 0.0
      %1641 = vmatpush1.msra.mxu0 0.0
      %1642 = vmatprep.subr.mxu0 0.0
      %1643 = vmatpush1.msra.mxu0 0.0
      %1644 = vmatprep.subr.mxu0 0.0
      %1645 = vmatpush1.msra.mxu0 0.0
      %1646 = vmatprep.subr.mxu0 0.0
      %1647 = vmatpush1.msra.mxu0 0.0
      %1648 = vmatprep.subr.mxu0 0.0
      %1649 = vmatpush1.msra.mxu0 0.0
      %1650 = vmatprep.subr.mxu0 0.0
      %1651 = vmatpush1.msra.mxu0 0.0
      %1652 = vmatprep.subr.mxu0 0.0
      %1653 = vmatpush1.msra.mxu0 0.0
      %1654 = vmatprep.subr.mxu0 0.0
      %1655 = vmatpush1.msra.mxu0 0.0
      %1656 = vmatprep.subr.mxu0 0.0
      %1657 = vmatpush1.msra.mxu0 0.0
      %1658 = vmatprep.subr.mxu0 0.0
      %1659 = vmatpush1.msra.mxu0 0.0
      %1660 = vmatprep.subr.mxu0 0.0
      %1661 = vmatpush1.msra.mxu0 0.0
      %1662 = vmatprep.subr.mxu0 0.0
      %1663 = vmatpush1.msra.mxu0 0.0
      %1664 = vmatprep.subr.mxu0 0.0
      %1665 = vmatpush1.msra.mxu0 0.0
      %1666 = vmatprep.subr.mxu0 0.0
      %1667 = vmatpush1.msra.mxu0 0.0
      %1668 = vmatprep.subr.mxu0 0.0
      %1669 = vmatpush1.msra.mxu0 0.0
      %1670 = vmatprep.subr.mxu0 0.0
      %1671 = vmatpush1.msra.mxu0 0.0
      %1672 = vmatprep.subr.mxu0 0.0
      %1673 = vmatpush1.msra.mxu0 0.0
      %1674 = vmatprep.subr.mxu0 0.0
      %1675 = vmatpush1.msra.mxu0 0.0
      %1676 = vmatprep.mubr.f32.mxu0 0.0
      %1677 = vmatmul.mubr.f32.gmra.mrb[0].mxu0 %v1562
      %v1678 = vpop.f32.mrb[0].mxu0
      %v1679 = vadd.f32 0.0, %v1678
      %v1680 = vpop.f32.mrb[0].mxu0
      %1681 = vmatprep.mubr.f32.mxu0 0.0
      %1682 = vmatmul.mubr.f32.gmra.mrb[0].mxu0 %v1565
      %v1683 = vpop.f32.mrb[0].mxu0
      %v1684 = vadd.f32 0.0, %v1683
      %v1685 = vpop.f32.mrb[0].mxu0
      %1686 = vmatprep.mubr.f32.mxu0 0.0
      %1687 = vmatmul.mubr.f32.gmra.mrb[0].mxu0 %v1568
      %v1688 = vpop.f32.mrb[0].mxu0
      %v1689 = vadd.f32 0.0, %v1688
      %v1690 = vpop.f32.mrb[0].mxu0
      %1691 = vmatprep.mubr.f32.mxu0 0.0
      %1692 = vmatmul.mubr.f32.gmra.mrb[0].mxu0 %v1571
      %v1693 = vpop.f32.mrb[0].mxu0
      %v1694 = vadd.f32 0.0, %v1693
      %v1695 = vpop.f32.mrb[0].mxu0
      %1696 = vmatprep.mubr.f32.mxu0 0.0
      %1697 = vmatmul.mubr.f32.gmra.mrb[0].mxu0 %v1574
      %v1698 = vpop.f32.mrb[0].mxu0
      %v1699 = vadd.f32 0.0, %v1698
      %v1700 = vpop.f32.mrb[0].mxu0
      %1701 = vmatprep.mubr.f32.mxu0 0.0
      %1702 = vmatmul.mubr.f32.gmra.mrb[0].mxu0 %v1577
      %v1703 = vpop.f32.mrb[0].mxu0
      %v1704 = vadd.f32 0.0, %v1703
      %v1705 = vpop.f32.mrb[0].mxu0
      %1706 = vmatprep.mubr.f32.mxu0 0.0
      %1707 = vmatmul.mubr.f32.gmra.mrb[0].mxu0 %v1580
      %v1708 = vpop.f32.mrb[0].mxu0
      %v1709 = vadd.f32 0.0, %v1708
      %v1710 = vpop.f32.mrb[0].mxu0
      %1711 = vmatprep.mubr.f32.mxu0 0.0
      %1712 = vmatmul.mubr.f32.gmra.mrb[0].mxu0 %v1583
      %v1713 = vpop.f32.mrb[0].mxu0
      %v1714 = vadd.f32 0.0, %v1713
      %v1715 = vpop.f32.mrb[0].mxu0
      %1716 = vmatprep.mubr.f32.mxu0 0.0
      %1717 = vmatmul.mubr.f32.gmra.mrb[0].mxu0 %v1586
      %v1718 = vpop.f32.mrb[0].mxu0
      %v1719 = vadd.f32 0.0, %v1718
      %v1720 = vpop.f32.mrb[0].mxu0
      %1721 = vmatprep.mubr.f32.mxu0 0.0
      %1722 = vmatmul.mubr.f32.gmra.mrb[0].mxu0 %v1589
      %v1723 = vpop.f32.mrb[0].mxu0
      %v1724 = vadd.f32 0.0, %v1723
      %v1725 = vpop.f32.mrb[0].mxu0
      %1726 = vmatprep.mubr.f32.mxu0 0.0
      %1727 = vmatmul.mubr.f32.gmra.mrb[0].mxu0 %v1592
      %v1728 = vpop.f32.mrb[0].mxu0
      %v1729 = vadd.f32 0.0, %v1728
      %v1730 = vpop.f32.mrb[0].mxu0
      %1731 = vmatprep.mubr.f32.mxu0 0.0
      %1732 = vmatmul.mubr.f32.gmra.mrb[0].mxu0 %v1595
      %v1733 = vpop.f32.mrb[0].mxu0
      %v1734 = vadd.f32 0.0, %v1733
      %v1735 = vpop.f32.mrb[0].mxu0
      %1736 = vmatprep.mubr.f32.mxu0 0.0
      %1737 = vmatmul.mubr.f32.gmra.mrb[0].mxu0 %v1598
      %v1738 = vpop.f32.mrb[0].mxu0
      %v1739 = vadd.f32 0.0, %v1738
      %v1740 = vpop.f32.mrb[0].mxu0
      %1741 = vmatprep.mubr.f32.mxu0 0.0
      %1742 = vmatmul.mubr.f32.gmra.mrb[0].mxu0 %v1601
      %v1743 = vpop.f32.mrb[0].mxu0
      %v1744 = vadd.f32 0.0, %v1743
      %v1745 = vpop.f32.mrb[0].mxu0
      %1746 = vmatprep.mubr.f32.mxu0 0.0
      %1747 = vmatmul.mubr.f32.gmra.mrb[0].mxu0 %v1604
      %v1748 = vpop.f32.mrb[0].mxu0
      %v1749 = vadd.f32 0.0, %v1748
      %v1750 = vpop.f32.mrb[0].mxu0
      %1751 = vmatprep.mubr.f32.mxu0 0.0
      %1752 = vmatmul.mubr.f32.gmra.mrb[0].mxu0 %v1607
      %v1753 = vpop.f32.mrb[0].mxu0
      %v1754 = vadd.f32 0.0, %v1753
      %v1755 = vpop.f32.mrb[0].mxu0
      %1756 = vdwg.mxu0
      %v1757 = vadd.f32 %v1545, %v1679
      %v1758 = vadd.f32 %v1546, %v1684
      %v1759 = vadd.f32 %v1547, %v1689
      %v1760 = vadd.f32 %v1548, %v1694
      %v1761 = vadd.f32 %v1549, %v1699
      %v1762 = vadd.f32 %v1550, %v1704
      %v1763 = vadd.f32 %v1551, %v1709
      %v1764 = vadd.f32 %v1552, %v1714
      %v1765 = vadd.f32 %v1553, %v1719
      %v1766 = vadd.f32 %v1554, %v1724
      %v1767 = vadd.f32 %v1555, %v1729
      %v1768 = vadd.f32 %v1556, %v1734
      %v1769 = vadd.f32 %v1557, %v1739
      %v1770 = vadd.f32 %v1558, %v1744
      %v1771 = vadd.f32 %v1559, %v1749
      %v1772 = vadd.f32 %v1560, %v1754
      %v1773 = vld [vmem:[#allocation2 + $0x2] sm:$0xff]
      %v1774 = vld [vmem:[#allocation2 + $0xa] sm:$0xff]
      %v1775 = vld [vmem:[#allocation2 + $0x1a] sm:$0xff]
      %v1776 = vld [vmem:[#allocation2 + $0x22] sm:$0xff]
      %v1777 = vld [vmem:[#allocation2 + $0x32] sm:$0xff]
      %v1778 = vld [vmem:[#allocation2 + $0x3a] sm:$0xff]
      %v1779 = vld [vmem:[#allocation2 + $0x4a] sm:$0xff]
      %v1780 = vld [vmem:[#allocation2 + $0x52] sm:$0xff]
      %v1781 = vld [vmem:[#allocation2 + $0x62] sm:$0xff]
      %v1782 = vld [vmem:[#allocation2 + $0x6a] sm:$0xff]
      %v1783 = vld [vmem:[#allocation2 + $0x7a] sm:$0xff]
      %v1784 = vld [vmem:[#allocation2 + $0x82] sm:$0xff]
      %v1785 = vld [vmem:[#allocation2 + $0x92] sm:$0xff]
      %v1786 = vld [vmem:[#allocation2 + $0x9a] sm:$0xff]
      %v1787 = vld [vmem:[#allocation2 + $0xaa] sm:$0xff]
      %v1788 = vld [vmem:[#allocation2 + $0xb2] sm:$0xff]
      %v1789 = vld [vmem:[#allocation3 + $0x2] sm:$0xff]
      %v1790 = vld [vmem:[#allocation3 + $0xa] sm:$0xff]
      %v1791 = vld [vmem:[#allocation3 + $0x1a] sm:$0xff]
      %v1792 = vld [vmem:[#allocation3 + $0x22] sm:$0xff]
      %v1793 = vld [vmem:[#allocation3 + $0x32] sm:$0xff]
      %v1794 = vld [vmem:[#allocation3 + $0x3a] sm:$0xff]
      %v1795 = vld [vmem:[#allocation3 + $0x4a] sm:$0xff]
      %v1796 = vld [vmem:[#allocation3 + $0x52] sm:$0xff]
      %v1797 = vld [vmem:[#allocation3 + $0x62] sm:$0xff]
      %v1798 = vld [vmem:[#allocation3 + $0x6a] sm:$0xff]
      %v1799 = vld [vmem:[#allocation3 + $0x7a] sm:$0xff]
      %v1800 = vld [vmem:[#allocation3 + $0x82] sm:$0xff]
      %v1801 = vld [vmem:[#allocation3 + $0x92] sm:$0xff]
      %v1802 = vld [vmem:[#allocation3 + $0x9a] sm:$0xff]
      %v1803 = vld [vmem:[#allocation3 + $0xaa] sm:$0xff]
      %v1804 = vld [vmem:[#allocation3 + $0xb2] sm:$0xff]
      %v1806 = vsel %vm712, %v1773, 0
      %v1809 = vsel %vm712, %v1774, 0
      %v1812 = vsel %vm712, %v1775, 0
      %v1815 = vsel %vm712, %v1776, 0
      %v1818 = vsel %vm712, %v1777, 0
      %v1821 = vsel %vm712, %v1778, 0
      %v1824 = vsel %vm712, %v1779, 0
      %v1827 = vsel %vm712, %v1780, 0
      %v1830 = vsel %vm712, %v1781, 0
      %v1833 = vsel %vm712, %v1782, 0
      %v1836 = vsel %vm712, %v1783, 0
      %v1839 = vsel %vm712, %v1784, 0
      %v1842 = vsel %vm712, %v1785, 0
      %v1845 = vsel %vm712, %v1786, 0
      %v1848 = vsel %vm712, %v1787, 0
      %v1851 = vsel %vm712, %v1788, 0
      %v1854 = vsel %vm972, %v876, 0
      %1856 = vmatprep.subr.mxu0 0.0
      %1857 = vmatpush1.msra.mxu0 %v1854
      %1858 = vmatprep.subr.mxu0 0.0
      %1859 = vmatpush1.msra.mxu0 0.0
      %1860 = vmatprep.subr.mxu0 0.0
      %1861 = vmatpush1.msra.mxu0 0.0
      %1862 = vmatprep.subr.mxu0 0.0
      %1863 = vmatpush1.msra.mxu0 0.0
      %1864 = vmatprep.subr.mxu0 0.0
      %1865 = vmatpush1.msra.mxu0 0.0
      %1866 = vmatprep.subr.mxu0 0.0
      %1867 = vmatpush1.msra.mxu0 0.0
      %1868 = vmatprep.subr.mxu0 0.0
      %1869 = vmatpush1.msra.mxu0 0.0
      %1870 = vmatprep.subr.mxu0 0.0
      %1871 = vmatpush1.msra.mxu0 0.0
      %1872 = vmatprep.subr.mxu0 0.0
      %1873 = vmatpush1.msra.mxu0 0.0
      %1874 = vmatprep.subr.mxu0 0.0
      %1875 = vmatpush1.msra.mxu0 0.0
      %1876 = vmatprep.subr.mxu0 0.0
      %1877 = vmatpush1.msra.mxu0 0.0
      %1878 = vmatprep.subr.mxu0 0.0
      %1879 = vmatpush1.msra.mxu0 0.0
      %1880 = vmatprep.subr.mxu0 0.0
      %1881 = vmatpush1.msra.mxu0 0.0
      %1882 = vmatprep.subr.mxu0 0.0
      %1883 = vmatpush1.msra.mxu0 0.0
      %1884 = vmatprep.subr.mxu0 0.0
      %1885 = vmatpush1.msra.mxu0 0.0
      %1886 = vmatprep.subr.mxu0 0.0
      %1887 = vmatpush1.msra.mxu0 0.0
      %1888 = vmatprep.subr.mxu0 0.0
      %1889 = vmatpush1.msra.mxu0 0.0
      %1890 = vmatprep.subr.mxu0 0.0
      %1891 = vmatpush1.msra.mxu0 0.0
      %1892 = vmatprep.subr.mxu0 0.0
      %1893 = vmatpush1.msra.mxu0 0.0
      %1894 = vmatprep.subr.mxu0 0.0
      %1895 = vmatpush1.msra.mxu0 0.0
      %1896 = vmatprep.subr.mxu0 0.0
      %1897 = vmatpush1.msra.mxu0 0.0
      %1898 = vmatprep.subr.mxu0 0.0
      %1899 = vmatpush1.msra.mxu0 0.0
      %1900 = vmatprep.subr.mxu0 0.0
      %1901 = vmatpush1.msra.mxu0 0.0
      %1902 = vmatprep.subr.mxu0 0.0
      %1903 = vmatpush1.msra.mxu0 0.0
      %1904 = vmatprep.subr.mxu0 0.0
      %1905 = vmatpush1.msra.mxu0 0.0
      %1906 = vmatprep.subr.mxu0 0.0
      %1907 = vmatpush1.msra.mxu0 0.0
      %1908 = vmatprep.subr.mxu0 0.0
      %1909 = vmatpush1.msra.mxu0 0.0
      %1910 = vmatprep.subr.mxu0 0.0
      %1911 = vmatpush1.msra.mxu0 0.0
      %1912 = vmatprep.subr.mxu0 0.0
      %1913 = vmatpush1.msra.mxu0 0.0
      %1914 = vmatprep.subr.mxu0 0.0
      %1915 = vmatpush1.msra.mxu0 0.0
      %1916 = vmatprep.subr.mxu0 0.0
      %1917 = vmatpush1.msra.mxu0 0.0
      %1918 = vmatprep.subr.mxu0 0.0
      %1919 = vmatpush1.msra.mxu0 0.0
      %1920 = vmatprep.mubr.f32.mxu0 0.0
      %1921 = vmatmul.mubr.f32.gmra.mrb[0].mxu0 %v1806
      %v1922 = vpop.f32.mrb[0].mxu0
      %v1923 = vadd.f32 0.0, %v1922
      %v1924 = vpop.f32.mrb[0].mxu0
      %1925 = vmatprep.mubr.f32.mxu0 0.0
      %1926 = vmatmul.mubr.f32.gmra.mrb[0].mxu0 %v1809
      %v1927 = vpop.f32.mrb[0].mxu0
      %v1928 = vadd.f32 0.0, %v1927
      %v1929 = vpop.f32.mrb[0].mxu0
      %1930 = vmatprep.mubr.f32.mxu0 0.0
      %1931 = vmatmul.mubr.f32.gmra.mrb[0].mxu0 %v1812
      %v1932 = vpop.f32.mrb[0].mxu0
      %v1933 = vadd.f32 0.0, %v1932
      %v1934 = vpop.f32.mrb[0].mxu0
      %1935 = vmatprep.mubr.f32.mxu0 0.0
      %1936 = vmatmul.mubr.f32.gmra.mrb[0].mxu0 %v1815
      %v1937 = vpop.f32.mrb[0].mxu0
      %v1938 = vadd.f32 0.0, %v1937
      %v1939 = vpop.f32.mrb[0].mxu0
      %1940 = vmatprep.mubr.f32.mxu0 0.0
      %1941 = vmatmul.mubr.f32.gmra.mrb[0].mxu0 %v1818
      %v1942 = vpop.f32.mrb[0].mxu0
      %v1943 = vadd.f32 0.0, %v1942
      %v1944 = vpop.f32.mrb[0].mxu0
      %1945 = vmatprep.mubr.f32.mxu0 0.0
      %1946 = vmatmul.mubr.f32.gmra.mrb[0].mxu0 %v1821
      %v1947 = vpop.f32.mrb[0].mxu0
      %v1948 = vadd.f32 0.0, %v1947
      %v1949 = vpop.f32.mrb[0].mxu0
      %1950 = vmatprep.mubr.f32.mxu0 0.0
      %1951 = vmatmul.mubr.f32.gmra.mrb[0].mxu0 %v1824
      %v1952 = vpop.f32.mrb[0].mxu0
      %v1953 = vadd.f32 0.0, %v1952
      %v1954 = vpop.f32.mrb[0].mxu0
      %1955 = vmatprep.mubr.f32.mxu0 0.0
      %1956 = vmatmul.mubr.f32.gmra.mrb[0].mxu0 %v1827
      %v1957 = vpop.f32.mrb[0].mxu0
      %v1958 = vadd.f32 0.0, %v1957
      %v1959 = vpop.f32.mrb[0].mxu0
      %1960 = vmatprep.mubr.f32.mxu0 0.0
      %1961 = vmatmul.mubr.f32.gmra.mrb[0].mxu0 %v1830
      %v1962 = vpop.f32.mrb[0].mxu0
      %v1963 = vadd.f32 0.0, %v1962
      %v1964 = vpop.f32.mrb[0].mxu0
      %1965 = vmatprep.mubr.f32.mxu0 0.0
      %1966 = vmatmul.mubr.f32.gmra.mrb[0].mxu0 %v1833
      %v1967 = vpop.f32.mrb[0].mxu0
      %v1968 = vadd.f32 0.0, %v1967
      %v1969 = vpop.f32.mrb[0].mxu0
      %1970 = vmatprep.mubr.f32.mxu0 0.0
      %1971 = vmatmul.mubr.f32.gmra.mrb[0].mxu0 %v1836
      %v1972 = vpop.f32.mrb[0].mxu0
      %v1973 = vadd.f32 0.0, %v1972
      %v1974 = vpop.f32.mrb[0].mxu0
      %1975 = vmatprep.mubr.f32.mxu0 0.0
      %1976 = vmatmul.mubr.f32.gmra.mrb[0].mxu0 %v1839
      %v1977 = vpop.f32.mrb[0].mxu0
      %v1978 = vadd.f32 0.0, %v1977
      %v1979 = vpop.f32.mrb[0].mxu0
      %1980 = vmatprep.mubr.f32.mxu0 0.0
      %1981 = vmatmul.mubr.f32.gmra.mrb[0].mxu0 %v1842
      %v1982 = vpop.f32.mrb[0].mxu0
      %v1983 = vadd.f32 0.0, %v1982
      %v1984 = vpop.f32.mrb[0].mxu0
      %1985 = vmatprep.mubr.f32.mxu0 0.0
      %1986 = vmatmul.mubr.f32.gmra.mrb[0].mxu0 %v1845
      %v1987 = vpop.f32.mrb[0].mxu0
      %v1988 = vadd.f32 0.0, %v1987
      %v1989 = vpop.f32.mrb[0].mxu0
      %1990 = vmatprep.mubr.f32.mxu0 0.0
      %1991 = vmatmul.mubr.f32.gmra.mrb[0].mxu0 %v1848
      %v1992 = vpop.f32.mrb[0].mxu0
      %v1993 = vadd.f32 0.0, %v1992
      %v1994 = vpop.f32.mrb[0].mxu0
      %1995 = vmatprep.mubr.f32.mxu0 0.0
      %1996 = vmatmul.mubr.f32.gmra.mrb[0].mxu0 %v1851
      %v1997 = vpop.f32.mrb[0].mxu0
      %v1998 = vadd.f32 0.0, %v1997
      %v1999 = vpop.f32.mrb[0].mxu0
      %2000 = vdwg.mxu0
      %v2001 = vadd.f32 %v1757, %v1923
      %v2002 = vadd.f32 %v1758, %v1928
      %v2003 = vadd.f32 %v1759, %v1933
      %v2004 = vadd.f32 %v1760, %v1938
      %v2005 = vadd.f32 %v1761, %v1943
      %v2006 = vadd.f32 %v1762, %v1948
      %v2007 = vadd.f32 %v1763, %v1953
      %v2008 = vadd.f32 %v1764, %v1958
      %v2009 = vadd.f32 %v1765, %v1963
      %v2010 = vadd.f32 %v1766, %v1968
      %v2011 = vadd.f32 %v1767, %v1973
      %v2012 = vadd.f32 %v1768, %v1978
      %v2013 = vadd.f32 %v1769, %v1983
      %v2014 = vadd.f32 %v1770, %v1988
      %v2015 = vadd.f32 %v1771, %v1993
      %v2016 = vadd.f32 %v1772, %v1998
      %v2018 = vsel %vm712, %v1789, 0
      %v2021 = vsel %vm712, %v1790, 0
      %v2024 = vsel %vm712, %v1791, 0
      %v2027 = vsel %vm712, %v1792, 0
      %v2030 = vsel %vm712, %v1793, 0
      %v2033 = vsel %vm712, %v1794, 0
      %v2036 = vsel %vm712, %v1795, 0
      %v2039 = vsel %vm712, %v1796, 0
      %v2042 = vsel %vm712, %v1797, 0
      %v2045 = vsel %vm712, %v1798, 0
      %v2048 = vsel %vm712, %v1799, 0
      %v2051 = vsel %vm712, %v1800, 0
      %v2054 = vsel %vm712, %v1801, 0
      %v2057 = vsel %vm712, %v1802, 0
      %v2060 = vsel %vm712, %v1803, 0
      %v2063 = vsel %vm712, %v1804, 0
      %v2066 = vsel %vm972, %v885, 0
      %2068 = vmatprep.subr.mxu0 0.0
      %2069 = vmatpush1.msra.mxu0 %v2066
      %2070 = vmatprep.subr.mxu0 0.0
      %2071 = vmatpush1.msra.mxu0 0.0
      %2072 = vmatprep.subr.mxu0 0.0
      %2073 = vmatpush1.msra.mxu0 0.0
      %2074 = vmatprep.subr.mxu0 0.0
      %2075 = vmatpush1.msra.mxu0 0.0
      %2076 = vmatprep.subr.mxu0 0.0
      %2077 = vmatpush1.msra.mxu0 0.0
      %2078 = vmatprep.subr.mxu0 0.0
      %2079 = vmatpush1.msra.mxu0 0.0
      %2080 = vmatprep.subr.mxu0 0.0
      %2081 = vmatpush1.msra.mxu0 0.0
      %2082 = vmatprep.subr.mxu0 0.0
      %2083 = vmatpush1.msra.mxu0 0.0
      %2084 = vmatprep.subr.mxu0 0.0
      %2085 = vmatpush1.msra.mxu0 0.0
      %2086 = vmatprep.subr.mxu0 0.0
      %2087 = vmatpush1.msra.mxu0 0.0
      %2088 = vmatprep.subr.mxu0 0.0
      %2089 = vmatpush1.msra.mxu0 0.0
      %2090 = vmatprep.subr.mxu0 0.0
      %2091 = vmatpush1.msra.mxu0 0.0
      %2092 = vmatprep.subr.mxu0 0.0
      %2093 = vmatpush1.msra.mxu0 0.0
      %2094 = vmatprep.subr.mxu0 0.0
      %2095 = vmatpush1.msra.mxu0 0.0
      %2096 = vmatprep.subr.mxu0 0.0
      %2097 = vmatpush1.msra.mxu0 0.0
      %2098 = vmatprep.subr.mxu0 0.0
      %2099 = vmatpush1.msra.mxu0 0.0
      %2100 = vmatprep.subr.mxu0 0.0
      %2101 = vmatpush1.msra.mxu0 0.0
      %2102 = vmatprep.subr.mxu0 0.0
      %2103 = vmatpush1.msra.mxu0 0.0
      %2104 = vmatprep.subr.mxu0 0.0
      %2105 = vmatpush1.msra.mxu0 0.0
      %2106 = vmatprep.subr.mxu0 0.0
      %2107 = vmatpush1.msra.mxu0 0.0
      %2108 = vmatprep.subr.mxu0 0.0
      %2109 = vmatpush1.msra.mxu0 0.0
      %2110 = vmatprep.subr.mxu0 0.0
      %2111 = vmatpush1.msra.mxu0 0.0
      %2112 = vmatprep.subr.mxu0 0.0
      %2113 = vmatpush1.msra.mxu0 0.0
      %2114 = vmatprep.subr.mxu0 0.0
      %2115 = vmatpush1.msra.mxu0 0.0
      %2116 = vmatprep.subr.mxu0 0.0
      %2117 = vmatpush1.msra.mxu0 0.0
      %2118 = vmatprep.subr.mxu0 0.0
      %2119 = vmatpush1.msra.mxu0 0.0
      %2120 = vmatprep.subr.mxu0 0.0
      %2121 = vmatpush1.msra.mxu0 0.0
      %2122 = vmatprep.subr.mxu0 0.0
      %2123 = vmatpush1.msra.mxu0 0.0
      %2124 = vmatprep.subr.mxu0 0.0
      %2125 = vmatpush1.msra.mxu0 0.0
      %2126 = vmatprep.subr.mxu0 0.0
      %2127 = vmatpush1.msra.mxu0 0.0
      %2128 = vmatprep.subr.mxu0 0.0
      %2129 = vmatpush1.msra.mxu0 0.0
      %2130 = vmatprep.subr.mxu0 0.0
      %2131 = vmatpush1.msra.mxu0 0.0
      %2132 = vmatprep.mubr.f32.mxu0 0.0
      %2133 = vmatmul.mubr.f32.gmra.mrb[0].mxu0 %v2018
      %v2134 = vpop.f32.mrb[0].mxu0
      %v2135 = vadd.f32 0.0, %v2134
      %v2136 = vpop.f32.mrb[0].mxu0
      %2137 = vmatprep.mubr.f32.mxu0 0.0
      %2138 = vmatmul.mubr.f32.gmra.mrb[0].mxu0 %v2021
      %v2139 = vpop.f32.mrb[0].mxu0
      %v2140 = vadd.f32 0.0, %v2139
      %v2141 = vpop.f32.mrb[0].mxu0
      %2142 = vmatprep.mubr.f32.mxu0 0.0
      %2143 = vmatmul.mubr.f32.gmra.mrb[0].mxu0 %v2024
      %v2144 = vpop.f32.mrb[0].mxu0
      %v2145 = vadd.f32 0.0, %v2144
      %v2146 = vpop.f32.mrb[0].mxu0
      %2147 = vmatprep.mubr.f32.mxu0 0.0
      %2148 = vmatmul.mubr.f32.gmra.mrb[0].mxu0 %v2027
      %v2149 = vpop.f32.mrb[0].mxu0
      %v2150 = vadd.f32 0.0, %v2149
      %v2151 = vpop.f32.mrb[0].mxu0
      %2152 = vmatprep.mubr.f32.mxu0 0.0
      %2153 = vmatmul.mubr.f32.gmra.mrb[0].mxu0 %v2030
      %v2154 = vpop.f32.mrb[0].mxu0
      %v2155 = vadd.f32 0.0, %v2154
      %v2156 = vpop.f32.mrb[0].mxu0
      %2157 = vmatprep.mubr.f32.mxu0 0.0
      %2158 = vmatmul.mubr.f32.gmra.mrb[0].mxu0 %v2033
      %v2159 = vpop.f32.mrb[0].mxu0
      %v2160 = vadd.f32 0.0, %v2159
      %v2161 = vpop.f32.mrb[0].mxu0
      %2162 = vmatprep.mubr.f32.mxu0 0.0
      %2163 = vmatmul.mubr.f32.gmra.mrb[0].mxu0 %v2036
      %v2164 = vpop.f32.mrb[0].mxu0
      %v2165 = vadd.f32 0.0, %v2164
      %v2166 = vpop.f32.mrb[0].mxu0
      %2167 = vmatprep.mubr.f32.mxu0 0.0
      %2168 = vmatmul.mubr.f32.gmra.mrb[0].mxu0 %v2039
      %v2169 = vpop.f32.mrb[0].mxu0
      %v2170 = vadd.f32 0.0, %v2169
      %v2171 = vpop.f32.mrb[0].mxu0
      %2172 = vmatprep.mubr.f32.mxu0 0.0
      %2173 = vmatmul.mubr.f32.gmra.mrb[0].mxu0 %v2042
      %v2174 = vpop.f32.mrb[0].mxu0
      %v2175 = vadd.f32 0.0, %v2174
      %v2176 = vpop.f32.mrb[0].mxu0
      %2177 = vmatprep.mubr.f32.mxu0 0.0
      %2178 = vmatmul.mubr.f32.gmra.mrb[0].mxu0 %v2045
      %v2179 = vpop.f32.mrb[0].mxu0
      %v2180 = vadd.f32 0.0, %v2179
      %v2181 = vpop.f32.mrb[0].mxu0
      %2182 = vmatprep.mubr.f32.mxu0 0.0
      %2183 = vmatmul.mubr.f32.gmra.mrb[0].mxu0 %v2048
      %v2184 = vpop.f32.mrb[0].mxu0
      %v2185 = vadd.f32 0.0, %v2184
      %v2186 = vpop.f32.mrb[0].mxu0
      %2187 = vmatprep.mubr.f32.mxu0 0.0
      %2188 = vmatmul.mubr.f32.gmra.mrb[0].mxu0 %v2051
      %v2189 = vpop.f32.mrb[0].mxu0
      %v2190 = vadd.f32 0.0, %v2189
      %v2191 = vpop.f32.mrb[0].mxu0
      %2192 = vmatprep.mubr.f32.mxu0 0.0
      %2193 = vmatmul.mubr.f32.gmra.mrb[0].mxu0 %v2054
      %v2194 = vpop.f32.mrb[0].mxu0
      %v2195 = vadd.f32 0.0, %v2194
      %v2196 = vpop.f32.mrb[0].mxu0
      %2197 = vmatprep.mubr.f32.mxu0 0.0
      %2198 = vmatmul.mubr.f32.gmra.mrb[0].mxu0 %v2057
      %v2199 = vpop.f32.mrb[0].mxu0
      %v2200 = vadd.f32 0.0, %v2199
      %v2201 = vpop.f32.mrb[0].mxu0
      %2202 = vmatprep.mubr.f32.mxu0 0.0
      %2203 = vmatmul.mubr.f32.gmra.mrb[0].mxu0 %v2060
      %v2204 = vpop.f32.mrb[0].mxu0
      %v2205 = vadd.f32 0.0, %v2204
      %v2206 = vpop.f32.mrb[0].mxu0
      %2207 = vmatprep.mubr.f32.mxu0 0.0
      %2208 = vmatmul.mubr.f32.gmra.mrb[0].mxu0 %v2063
      %v2209 = vpop.f32.mrb[0].mxu0
      %v2210 = vadd.f32 0.0, %v2209
      %v2211 = vpop.f32.mrb[0].mxu0
      %2212 = vdwg.mxu0
      %v2213 = vadd.f32 %v2001, %v2135
      %v2214 = vadd.f32 %v2002, %v2140
      %v2215 = vadd.f32 %v2003, %v2145
      %v2216 = vadd.f32 %v2004, %v2150
      %v2217 = vadd.f32 %v2005, %v2155
      %v2218 = vadd.f32 %v2006, %v2160
      %v2219 = vadd.f32 %v2007, %v2165
      %v2220 = vadd.f32 %v2008, %v2170
      %v2221 = vadd.f32 %v2009, %v2175
      %v2222 = vadd.f32 %v2010, %v2180
      %v2223 = vadd.f32 %v2011, %v2185
      %v2224 = vadd.f32 %v2012, %v2190
      %v2225 = vadd.f32 %v2013, %v2195
      %v2226 = vadd.f32 %v2014, %v2200
      %v2227 = vadd.f32 %v2015, %v2205
      %v2228 = vadd.f32 %v2016, %v2210
      %v2229 = vld [vmem:[%s760] sm:$0xff]
      %v2230 = vld [vmem:[%s760 + $0x8] sm:$0xff]
      %v2231 = vld [vmem:[%s760 + $0x18] sm:$0xff]
      %v2232 = vld [vmem:[%s760 + $0x20] sm:$0xff]
      %v2233 = vld [vmem:[%s760 + $0x30] sm:$0xff]
      %v2234 = vld [vmem:[%s760 + $0x38] sm:$0xff]
      %v2235 = vld [vmem:[%s760 + $0x48] sm:$0xff]
      %v2236 = vld [vmem:[%s760 + $0x50] sm:$0xff]
      %v2237 = vld [vmem:[%s760 + $0x60] sm:$0xff]
      %v2238 = vld [vmem:[%s760 + $0x68] sm:$0xff]
      %v2239 = vld [vmem:[%s760 + $0x78] sm:$0xff]
      %v2240 = vld [vmem:[%s760 + $0x80] sm:$0xff]
      %v2241 = vld [vmem:[%s760 + $0x90] sm:$0xff]
      %v2242 = vld [vmem:[%s760 + $0x98] sm:$0xff]
      %v2243 = vld [vmem:[%s760 + $0xa8] sm:$0xff]
      %v2244 = vld [vmem:[%s760 + $0xb0] sm:$0xff]
      %v2245 = vld [vmem:[%s844] sm:$0xff]
      %v2246 = vld [vmem:[%s844 + $0x8] sm:$0xff]
      %v2247 = vld [vmem:[%s844 + $0x18] sm:$0xff]
      %v2248 = vld [vmem:[%s844 + $0x20] sm:$0xff]
      %v2249 = vld [vmem:[%s844 + $0x30] sm:$0xff]
      %v2250 = vld [vmem:[%s844 + $0x38] sm:$0xff]
      %v2251 = vld [vmem:[%s844 + $0x48] sm:$0xff]
      %v2252 = vld [vmem:[%s844 + $0x50] sm:$0xff]
      %v2253 = vld [vmem:[%s844 + $0x60] sm:$0xff]
      %v2254 = vld [vmem:[%s844 + $0x68] sm:$0xff]
      %v2255 = vld [vmem:[%s844 + $0x78] sm:$0xff]
      %v2256 = vld [vmem:[%s844 + $0x80] sm:$0xff]
      %v2257 = vld [vmem:[%s844 + $0x90] sm:$0xff]
      %v2258 = vld [vmem:[%s844 + $0x98] sm:$0xff]
      %v2259 = vld [vmem:[%s844 + $0xa8] sm:$0xff]
      %v2260 = vld [vmem:[%s844 + $0xb0] sm:$0xff]
      %v2262 = vsel %vm712, %v2229, 0
      %v2265 = vsel %vm712, %v2230, 0
      %v2268 = vsel %vm712, %v2231, 0
      %v2271 = vsel %vm712, %v2232, 0
      %v2274 = vsel %vm712, %v2233, 0
      %v2277 = vsel %vm712, %v2234, 0
      %v2280 = vsel %vm712, %v2235, 0
      %v2283 = vsel %vm712, %v2236, 0
      %v2286 = vsel %vm712, %v2237, 0
      %v2289 = vsel %vm712, %v2238, 0
      %v2292 = vsel %vm712, %v2239, 0
      %v2295 = vsel %vm712, %v2240, 0
      %v2298 = vsel %vm712, %v2241, 0
      %v2301 = vsel %vm712, %v2242, 0
      %v2304 = vsel %vm712, %v2243, 0
      %v2307 = vsel %vm712, %v2244, 0
      %v2310 = vsel %vm972, %v877, 0
      %2312 = vmatprep.subr.mxu0 0.0
      %2313 = vmatpush1.msra.mxu0 %v2310
      %2314 = vmatprep.subr.mxu0 0.0
      %2315 = vmatpush1.msra.mxu0 0.0
      %2316 = vmatprep.subr.mxu0 0.0
      %2317 = vmatpush1.msra.mxu0 0.0
      %2318 = vmatprep.subr.mxu0 0.0
      %2319 = vmatpush1.msra.mxu0 0.0
      %2320 = vmatprep.subr.mxu0 0.0
      %2321 = vmatpush1.msra.mxu0 0.0
      %2322 = vmatprep.subr.mxu0 0.0
      %2323 = vmatpush1.msra.mxu0 0.0
      %2324 = vmatprep.subr.mxu0 0.0
      %2325 = vmatpush1.msra.mxu0 0.0
      %2326 = vmatprep.subr.mxu0 0.0
      %2327 = vmatpush1.msra.mxu0 0.0
      %2328 = vmatprep.subr.mxu0 0.0
      %2329 = vmatpush1.msra.mxu0 0.0
      %2330 = vmatprep.subr.mxu0 0.0
      %2331 = vmatpush1.msra.mxu0 0.0
      %2332 = vmatprep.subr.mxu0 0.0
      %2333 = vmatpush1.msra.mxu0 0.0
      %2334 = vmatprep.subr.mxu0 0.0
      %2335 = vmatpush1.msra.mxu0 0.0
      %2336 = vmatprep.subr.mxu0 0.0
      %2337 = vmatpush1.msra.mxu0 0.0
      %2338 = vmatprep.subr.mxu0 0.0
      %2339 = vmatpush1.msra.mxu0 0.0
      %2340 = vmatprep.subr.mxu0 0.0
      %2341 = vmatpush1.msra.mxu0 0.0
      %2342 = vmatprep.subr.mxu0 0.0
      %2343 = vmatpush1.msra.mxu0 0.0
      %2344 = vmatprep.subr.mxu0 0.0
      %2345 = vmatpush1.msra.mxu0 0.0
      %2346 = vmatprep.subr.mxu0 0.0
      %2347 = vmatpush1.msra.mxu0 0.0
      %2348 = vmatprep.subr.mxu0 0.0
      %2349 = vmatpush1.msra.mxu0 0.0
      %2350 = vmatprep.subr.mxu0 0.0
      %2351 = vmatpush1.msra.mxu0 0.0
      %2352 = vmatprep.subr.mxu0 0.0
      %2353 = vmatpush1.msra.mxu0 0.0
      %2354 = vmatprep.subr.mxu0 0.0
      %2355 = vmatpush1.msra.mxu0 0.0
      %2356 = vmatprep.subr.mxu0 0.0
      %2357 = vmatpush1.msra.mxu0 0.0
      %2358 = vmatprep.subr.mxu0 0.0
      %2359 = vmatpush1.msra.mxu0 0.0
      %2360 = vmatprep.subr.mxu0 0.0
      %2361 = vmatpush1.msra.mxu0 0.0
      %2362 = vmatprep.subr.mxu0 0.0
      %2363 = vmatpush1.msra.mxu0 0.0
      %2364 = vmatprep.subr.mxu0 0.0
      %2365 = vmatpush1.msra.mxu0 0.0
      %2366 = vmatprep.subr.mxu0 0.0
      %2367 = vmatpush1.msra.mxu0 0.0
      %2368 = vmatprep.subr.mxu0 0.0
      %2369 = vmatpush1.msra.mxu0 0.0
      %2370 = vmatprep.subr.mxu0 0.0
      %2371 = vmatpush1.msra.mxu0 0.0
      %2372 = vmatprep.subr.mxu0 0.0
      %2373 = vmatpush1.msra.mxu0 0.0
      %2374 = vmatprep.subr.mxu0 0.0
      %2375 = vmatpush1.msra.mxu0 0.0
      %2376 = vmatprep.mubr.f32.mxu0 0.0
      %2377 = vmatmul.mubr.f32.gmra.mrb[0].mxu0 %v2262
      %v2378 = vpop.f32.mrb[0].mxu0
      %v2379 = vadd.f32 0.0, %v2378
      %v2380 = vpop.f32.mrb[0].mxu0
      %2381 = vmatprep.mubr.f32.mxu0 0.0
      %2382 = vmatmul.mubr.f32.gmra.mrb[0].mxu0 %v2265
      %v2383 = vpop.f32.mrb[0].mxu0
      %v2384 = vadd.f32 0.0, %v2383
      %v2385 = vpop.f32.mrb[0].mxu0
      %2386 = vmatprep.mubr.f32.mxu0 0.0
      %2387 = vmatmul.mubr.f32.gmra.mrb[0].mxu0 %v2268
      %v2388 = vpop.f32.mrb[0].mxu0
      %v2389 = vadd.f32 0.0, %v2388
      %v2390 = vpop.f32.mrb[0].mxu0
      %2391 = vmatprep.mubr.f32.mxu0 0.0
      %2392 = vmatmul.mubr.f32.gmra.mrb[0].mxu0 %v2271
      %v2393 = vpop.f32.mrb[0].mxu0
      %v2394 = vadd.f32 0.0, %v2393
      %v2395 = vpop.f32.mrb[0].mxu0
      %2396 = vmatprep.mubr.f32.mxu0 0.0
      %2397 = vmatmul.mubr.f32.gmra.mrb[0].mxu0 %v2274
      %v2398 = vpop.f32.mrb[0].mxu0
      %v2399 = vadd.f32 0.0, %v2398
      %v2400 = vpop.f32.mrb[0].mxu0
      %2401 = vmatprep.mubr.f32.mxu0 0.0
      %2402 = vmatmul.mubr.f32.gmra.mrb[0].mxu0 %v2277
      %v2403 = vpop.f32.mrb[0].mxu0
      %v2404 = vadd.f32 0.0, %v2403
      %v2405 = vpop.f32.mrb[0].mxu0
      %2406 = vmatprep.mubr.f32.mxu0 0.0
      %2407 = vmatmul.mubr.f32.gmra.mrb[0].mxu0 %v2280
      %v2408 = vpop.f32.mrb[0].mxu0
      %v2409 = vadd.f32 0.0, %v2408
      %v2410 = vpop.f32.mrb[0].mxu0
      %2411 = vmatprep.mubr.f32.mxu0 0.0
      %2412 = vmatmul.mubr.f32.gmra.mrb[0].mxu0 %v2283
      %v2413 = vpop.f32.mrb[0].mxu0
      %v2414 = vadd.f32 0.0, %v2413
      %v2415 = vpop.f32.mrb[0].mxu0
      %2416 = vmatprep.mubr.f32.mxu0 0.0
      %2417 = vmatmul.mubr.f32.gmra.mrb[0].mxu0 %v2286
      %v2418 = vpop.f32.mrb[0].mxu0
      %v2419 = vadd.f32 0.0, %v2418
      %v2420 = vpop.f32.mrb[0].mxu0
      %2421 = vmatprep.mubr.f32.mxu0 0.0
      %2422 = vmatmul.mubr.f32.gmra.mrb[0].mxu0 %v2289
      %v2423 = vpop.f32.mrb[0].mxu0
      %v2424 = vadd.f32 0.0, %v2423
      %v2425 = vpop.f32.mrb[0].mxu0
      %2426 = vmatprep.mubr.f32.mxu0 0.0
      %2427 = vmatmul.mubr.f32.gmra.mrb[0].mxu0 %v2292
      %v2428 = vpop.f32.mrb[0].mxu0
      %v2429 = vadd.f32 0.0, %v2428
      %v2430 = vpop.f32.mrb[0].mxu0
      %2431 = vmatprep.mubr.f32.mxu0 0.0
      %2432 = vmatmul.mubr.f32.gmra.mrb[0].mxu0 %v2295
      %v2433 = vpop.f32.mrb[0].mxu0
      %v2434 = vadd.f32 0.0, %v2433
      %v2435 = vpop.f32.mrb[0].mxu0
      %2436 = vmatprep.mubr.f32.mxu0 0.0
      %2437 = vmatmul.mubr.f32.gmra.mrb[0].mxu0 %v2298
      %v2438 = vpop.f32.mrb[0].mxu0
      %v2439 = vadd.f32 0.0, %v2438
      %v2440 = vpop.f32.mrb[0].mxu0
      %2441 = vmatprep.mubr.f32.mxu0 0.0
      %2442 = vmatmul.mubr.f32.gmra.mrb[0].mxu0 %v2301
      %v2443 = vpop.f32.mrb[0].mxu0
      %v2444 = vadd.f32 0.0, %v2443
      %v2445 = vpop.f32.mrb[0].mxu0
      %2446 = vmatprep.mubr.f32.mxu0 0.0
      %2447 = vmatmul.mubr.f32.gmra.mrb[0].mxu0 %v2304
      %v2448 = vpop.f32.mrb[0].mxu0
      %v2449 = vadd.f32 0.0, %v2448
      %v2450 = vpop.f32.mrb[0].mxu0
      %2451 = vmatprep.mubr.f32.mxu0 0.0
      %2452 = vmatmul.mubr.f32.gmra.mrb[0].mxu0 %v2307
      %v2453 = vpop.f32.mrb[0].mxu0
      %v2454 = vadd.f32 0.0, %v2453
      %v2455 = vpop.f32.mrb[0].mxu0
      %2456 = vdwg.mxu0
      %v2457 = vadd.f32 %v2213, %v2379
      %v2458 = vadd.f32 %v2214, %v2384
      %v2459 = vadd.f32 %v2215, %v2389
      %v2460 = vadd.f32 %v2216, %v2394
      %v2461 = vadd.f32 %v2217, %v2399
      %v2462 = vadd.f32 %v2218, %v2404
      %v2463 = vadd.f32 %v2219, %v2409
      %v2464 = vadd.f32 %v2220, %v2414
      %v2465 = vadd.f32 %v2221, %v2419
      %v2466 = vadd.f32 %v2222, %v2424
      %v2467 = vadd.f32 %v2223, %v2429
      %v2468 = vadd.f32 %v2224, %v2434
      %v2469 = vadd.f32 %v2225, %v2439
      %v2470 = vadd.f32 %v2226, %v2444
      %v2471 = vadd.f32 %v2227, %v2449
      %v2472 = vadd.f32 %v2228, %v2454
      %v2474 = vsel %vm712, %v2245, 0
      %v2477 = vsel %vm712, %v2246, 0
      %v2480 = vsel %vm712, %v2247, 0
      %v2483 = vsel %vm712, %v2248, 0
      %v2486 = vsel %vm712, %v2249, 0
      %v2489 = vsel %vm712, %v2250, 0
      %v2492 = vsel %vm712, %v2251, 0
      %v2495 = vsel %vm712, %v2252, 0
      %v2498 = vsel %vm712, %v2253, 0
      %v2501 = vsel %vm712, %v2254, 0
      %v2504 = vsel %vm712, %v2255, 0
      %v2507 = vsel %vm712, %v2256, 0
      %v2510 = vsel %vm712, %v2257, 0
      %v2513 = vsel %vm712, %v2258, 0
      %v2516 = vsel %vm712, %v2259, 0
      %v2519 = vsel %vm712, %v2260, 0
      %v2522 = vsel %vm972, %v886, 0
      %2524 = vmatprep.subr.mxu0 0.0
      %2525 = vmatpush1.msra.mxu0 %v2522
      %2526 = vmatprep.subr.mxu0 0.0
      %2527 = vmatpush1.msra.mxu0 0.0
      %2528 = vmatprep.subr.mxu0 0.0
      %2529 = vmatpush1.msra.mxu0 0.0
      %2530 = vmatprep.subr.mxu0 0.0
      %2531 = vmatpush1.msra.mxu0 0.0
      %2532 = vmatprep.subr.mxu0 0.0
      %2533 = vmatpush1.msra.mxu0 0.0
      %2534 = vmatprep.subr.mxu0 0.0
      %2535 = vmatpush1.msra.mxu0 0.0
      %2536 = vmatprep.subr.mxu0 0.0
      %2537 = vmatpush1.msra.mxu0 0.0
      %2538 = vmatprep.subr.mxu0 0.0
      %2539 = vmatpush1.msra.mxu0 0.0
      %2540 = vmatprep.subr.mxu0 0.0
      %2541 = vmatpush1.msra.mxu0 0.0
      %2542 = vmatprep.subr.mxu0 0.0
      %2543 = vmatpush1.msra.mxu0 0.0
      %2544 = vmatprep.subr.mxu0 0.0
      %2545 = vmatpush1.msra.mxu0 0.0
      %2546 = vmatprep.subr.mxu0 0.0
      %2547 = vmatpush1.msra.mxu0 0.0
      %2548 = vmatprep.subr.mxu0 0.0
      %2549 = vmatpush1.msra.mxu0 0.0
      %2550 = vmatprep.subr.mxu0 0.0
      %2551 = vmatpush1.msra.mxu0 0.0
      %2552 = vmatprep.subr.mxu0 0.0
      %2553 = vmatpush1.msra.mxu0 0.0
      %2554 = vmatprep.subr.mxu0 0.0
      %2555 = vmatpush1.msra.mxu0 0.0
      %2556 = vmatprep.subr.mxu0 0.0
      %2557 = vmatpush1.msra.mxu0 0.0
      %2558 = vmatprep.subr.mxu0 0.0
      %2559 = vmatpush1.msra.mxu0 0.0
      %2560 = vmatprep.subr.mxu0 0.0
      %2561 = vmatpush1.msra.mxu0 0.0
      %2562 = vmatprep.subr.mxu0 0.0
      %2563 = vmatpush1.msra.mxu0 0.0
      %2564 = vmatprep.subr.mxu0 0.0
      %2565 = vmatpush1.msra.mxu0 0.0
      %2566 = vmatprep.subr.mxu0 0.0
      %2567 = vmatpush1.msra.mxu0 0.0
      %2568 = vmatprep.subr.mxu0 0.0
      %2569 = vmatpush1.msra.mxu0 0.0
      %2570 = vmatprep.subr.mxu0 0.0
      %2571 = vmatpush1.msra.mxu0 0.0
      %2572 = vmatprep.subr.mxu0 0.0
      %2573 = vmatpush1.msra.mxu0 0.0
      %2574 = vmatprep.subr.mxu0 0.0
      %2575 = vmatpush1.msra.mxu0 0.0
      %2576 = vmatprep.subr.mxu0 0.0
      %2577 = vmatpush1.msra.mxu0 0.0
      %2578 = vmatprep.subr.mxu0 0.0
      %2579 = vmatpush1.msra.mxu0 0.0
      %2580 = vmatprep.subr.mxu0 0.0
      %2581 = vmatpush1.msra.mxu0 0.0
      %2582 = vmatprep.subr.mxu0 0.0
      %2583 = vmatpush1.msra.mxu0 0.0
      %2584 = vmatprep.subr.mxu0 0.0
      %2585 = vmatpush1.msra.mxu0 0.0
      %2586 = vmatprep.subr.mxu0 0.0
      %2587 = vmatpush1.msra.mxu0 0.0
      %2588 = vmatprep.mubr.f32.mxu0 0.0
      %2589 = vmatmul.mubr.f32.gmra.mrb[0].mxu0 %v2474
      %v2590 = vpop.f32.mrb[0].mxu0
      %v2591 = vadd.f32 0.0, %v2590
      %v2592 = vpop.f32.mrb[0].mxu0
      %2593 = vmatprep.mubr.f32.mxu0 0.0
      %2594 = vmatmul.mubr.f32.gmra.mrb[0].mxu0 %v2477
      %v2595 = vpop.f32.mrb[0].mxu0
      %v2596 = vadd.f32 0.0, %v2595
      %v2597 = vpop.f32.mrb[0].mxu0
      %2598 = vmatprep.mubr.f32.mxu0 0.0
      %2599 = vmatmul.mubr.f32.gmra.mrb[0].mxu0 %v2480
      %v2600 = vpop.f32.mrb[0].mxu0
      %v2601 = vadd.f32 0.0, %v2600
      %v2602 = vpop.f32.mrb[0].mxu0
      %2603 = vmatprep.mubr.f32.mxu0 0.0
      %2604 = vmatmul.mubr.f32.gmra.mrb[0].mxu0 %v2483
      %v2605 = vpop.f32.mrb[0].mxu0
      %v2606 = vadd.f32 0.0, %v2605
      %v2607 = vpop.f32.mrb[0].mxu0
      %2608 = vmatprep.mubr.f32.mxu0 0.0
      %2609 = vmatmul.mubr.f32.gmra.mrb[0].mxu0 %v2486
      %v2610 = vpop.f32.mrb[0].mxu0
      %v2611 = vadd.f32 0.0, %v2610
      %v2612 = vpop.f32.mrb[0].mxu0
      %2613 = vmatprep.mubr.f32.mxu0 0.0
      %2614 = vmatmul.mubr.f32.gmra.mrb[0].mxu0 %v2489
      %v2615 = vpop.f32.mrb[0].mxu0
      %v2616 = vadd.f32 0.0, %v2615
      %v2617 = vpop.f32.mrb[0].mxu0
      %2618 = vmatprep.mubr.f32.mxu0 0.0
      %2619 = vmatmul.mubr.f32.gmra.mrb[0].mxu0 %v2492
      %v2620 = vpop.f32.mrb[0].mxu0
      %v2621 = vadd.f32 0.0, %v2620
      %v2622 = vpop.f32.mrb[0].mxu0
      %2623 = vmatprep.mubr.f32.mxu0 0.0
      %2624 = vmatmul.mubr.f32.gmra.mrb[0].mxu0 %v2495
      %v2625 = vpop.f32.mrb[0].mxu0
      %v2626 = vadd.f32 0.0, %v2625
      %v2627 = vpop.f32.mrb[0].mxu0
      %2628 = vmatprep.mubr.f32.mxu0 0.0
      %2629 = vmatmul.mubr.f32.gmra.mrb[0].mxu0 %v2498
      %v2630 = vpop.f32.mrb[0].mxu0
      %v2631 = vadd.f32 0.0, %v2630
      %v2632 = vpop.f32.mrb[0].mxu0
      %2633 = vmatprep.mubr.f32.mxu0 0.0
      %2634 = vmatmul.mubr.f32.gmra.mrb[0].mxu0 %v2501
      %v2635 = vpop.f32.mrb[0].mxu0
      %v2636 = vadd.f32 0.0, %v2635
      %v2637 = vpop.f32.mrb[0].mxu0
      %2638 = vmatprep.mubr.f32.mxu0 0.0
      %2639 = vmatmul.mubr.f32.gmra.mrb[0].mxu0 %v2504
      %v2640 = vpop.f32.mrb[0].mxu0
      %v2641 = vadd.f32 0.0, %v2640
      %v2642 = vpop.f32.mrb[0].mxu0
      %2643 = vmatprep.mubr.f32.mxu0 0.0
      %2644 = vmatmul.mubr.f32.gmra.mrb[0].mxu0 %v2507
      %v2645 = vpop.f32.mrb[0].mxu0
      %v2646 = vadd.f32 0.0, %v2645
      %v2647 = vpop.f32.mrb[0].mxu0
      %2648 = vmatprep.mubr.f32.mxu0 0.0
      %2649 = vmatmul.mubr.f32.gmra.mrb[0].mxu0 %v2510
      %v2650 = vpop.f32.mrb[0].mxu0
      %v2651 = vadd.f32 0.0, %v2650
      %v2652 = vpop.f32.mrb[0].mxu0
      %2653 = vmatprep.mubr.f32.mxu0 0.0
      %2654 = vmatmul.mubr.f32.gmra.mrb[0].mxu0 %v2513
      %v2655 = vpop.f32.mrb[0].mxu0
      %v2656 = vadd.f32 0.0, %v2655
      %v2657 = vpop.f32.mrb[0].mxu0
      %2658 = vmatprep.mubr.f32.mxu0 0.0
      %2659 = vmatmul.mubr.f32.gmra.mrb[0].mxu0 %v2516
      %v2660 = vpop.f32.mrb[0].mxu0
      %v2661 = vadd.f32 0.0, %v2660
      %v2662 = vpop.f32.mrb[0].mxu0
      %2663 = vmatprep.mubr.f32.mxu0 0.0
      %2664 = vmatmul.mubr.f32.gmra.mrb[0].mxu0 %v2519
      %v2665 = vpop.f32.mrb[0].mxu0
      %v2666 = vadd.f32 0.0, %v2665
      %v2667 = vpop.f32.mrb[0].mxu0
      %2668 = vdwg.mxu0
      %v2669 = vadd.f32 %v2457, %v2591
      %v2670 = vadd.f32 %v2458, %v2596
      %v2671 = vadd.f32 %v2459, %v2601
      %v2672 = vadd.f32 %v2460, %v2606
      %v2673 = vadd.f32 %v2461, %v2611
      %v2674 = vadd.f32 %v2462, %v2616
      %v2675 = vadd.f32 %v2463, %v2621
      %v2676 = vadd.f32 %v2464, %v2626
      %v2677 = vadd.f32 %v2465, %v2631
      %v2678 = vadd.f32 %v2466, %v2636
      %v2679 = vadd.f32 %v2467, %v2641
      %v2680 = vadd.f32 %v2468, %v2646
      %v2681 = vadd.f32 %v2469, %v2651
      %v2682 = vadd.f32 %v2470, %v2656
      %v2683 = vadd.f32 %v2471, %v2661
      %v2684 = vadd.f32 %v2472, %v2666
      %v2685 = vld [vmem:[%s760 + $0x1] sm:$0xff]
      %v2686 = vld [vmem:[%s760 + $0x9] sm:$0xff]
      %v2687 = vld [vmem:[%s760 + $0x19] sm:$0xff]
      %v2688 = vld [vmem:[%s760 + $0x21] sm:$0xff]
      %v2689 = vld [vmem:[%s760 + $0x31] sm:$0xff]
      %v2690 = vld [vmem:[%s760 + $0x39] sm:$0xff]
      %v2691 = vld [vmem:[%s760 + $0x49] sm:$0xff]
      %v2692 = vld [vmem:[%s760 + $0x51] sm:$0xff]
      %v2693 = vld [vmem:[%s760 + $0x61] sm:$0xff]
      %v2694 = vld [vmem:[%s760 + $0x69] sm:$0xff]
      %v2695 = vld [vmem:[%s760 + $0x79] sm:$0xff]
      %v2696 = vld [vmem:[%s760 + $0x81] sm:$0xff]
      %v2697 = vld [vmem:[%s760 + $0x91] sm:$0xff]
      %v2698 = vld [vmem:[%s760 + $0x99] sm:$0xff]
      %v2699 = vld [vmem:[%s760 + $0xa9] sm:$0xff]
      %v2700 = vld [vmem:[%s760 + $0xb1] sm:$0xff]
      %v2701 = vld [vmem:[%s844 + $0x1] sm:$0xff]
      %v2702 = vld [vmem:[%s844 + $0x9] sm:$0xff]
      %v2703 = vld [vmem:[%s844 + $0x19] sm:$0xff]
      %v2704 = vld [vmem:[%s844 + $0x21] sm:$0xff]
      %v2705 = vld [vmem:[%s844 + $0x31] sm:$0xff]
      %v2706 = vld [vmem:[%s844 + $0x39] sm:$0xff]
      %v2707 = vld [vmem:[%s844 + $0x49] sm:$0xff]
      %v2708 = vld [vmem:[%s844 + $0x51] sm:$0xff]
      %v2709 = vld [vmem:[%s844 + $0x61] sm:$0xff]
      %v2710 = vld [vmem:[%s844 + $0x69] sm:$0xff]
      %v2711 = vld [vmem:[%s844 + $0x79] sm:$0xff]
      %v2712 = vld [vmem:[%s844 + $0x81] sm:$0xff]
      %v2713 = vld [vmem:[%s844 + $0x91] sm:$0xff]
      %v2714 = vld [vmem:[%s844 + $0x99] sm:$0xff]
      %v2715 = vld [vmem:[%s844 + $0xa9] sm:$0xff]
      %v2716 = vld [vmem:[%s844 + $0xb1] sm:$0xff]
      %v2718 = vsel %vm712, %v2685, 0
      %v2721 = vsel %vm712, %v2686, 0
      %v2724 = vsel %vm712, %v2687, 0
      %v2727 = vsel %vm712, %v2688, 0
      %v2730 = vsel %vm712, %v2689, 0
      %v2733 = vsel %vm712, %v2690, 0
      %v2736 = vsel %vm712, %v2691, 0
      %v2739 = vsel %vm712, %v2692, 0
      %v2742 = vsel %vm712, %v2693, 0
      %v2745 = vsel %vm712, %v2694, 0
      %v2748 = vsel %vm712, %v2695, 0
      %v2751 = vsel %vm712, %v2696, 0
      %v2754 = vsel %vm712, %v2697, 0
      %v2757 = vsel %vm712, %v2698, 0
      %v2760 = vsel %vm712, %v2699, 0
      %v2763 = vsel %vm712, %v2700, 0
      %v2766 = vsel %vm972, %v878, 0
      %2768 = vmatprep.subr.mxu0 0.0
      %2769 = vmatpush1.msra.mxu0 %v2766
      %2770 = vmatprep.subr.mxu0 0.0
      %2771 = vmatpush1.msra.mxu0 0.0
      %2772 = vmatprep.subr.mxu0 0.0
      %2773 = vmatpush1.msra.mxu0 0.0
      %2774 = vmatprep.subr.mxu0 0.0
      %2775 = vmatpush1.msra.mxu0 0.0
      %2776 = vmatprep.subr.mxu0 0.0
      %2777 = vmatpush1.msra.mxu0 0.0
      %2778 = vmatprep.subr.mxu0 0.0
      %2779 = vmatpush1.msra.mxu0 0.0
      %2780 = vmatprep.subr.mxu0 0.0
      %2781 = vmatpush1.msra.mxu0 0.0
      %2782 = vmatprep.subr.mxu0 0.0
      %2783 = vmatpush1.msra.mxu0 0.0
      %2784 = vmatprep.subr.mxu0 0.0
      %2785 = vmatpush1.msra.mxu0 0.0
      %2786 = vmatprep.subr.mxu0 0.0
      %2787 = vmatpush1.msra.mxu0 0.0
      %2788 = vmatprep.subr.mxu0 0.0
      %2789 = vmatpush1.msra.mxu0 0.0
      %2790 = vmatprep.subr.mxu0 0.0
      %2791 = vmatpush1.msra.mxu0 0.0
      %2792 = vmatprep.subr.mxu0 0.0
      %2793 = vmatpush1.msra.mxu0 0.0
      %2794 = vmatprep.subr.mxu0 0.0
      %2795 = vmatpush1.msra.mxu0 0.0
      %2796 = vmatprep.subr.mxu0 0.0
      %2797 = vmatpush1.msra.mxu0 0.0
      %2798 = vmatprep.subr.mxu0 0.0
      %2799 = vmatpush1.msra.mxu0 0.0
      %2800 = vmatprep.subr.mxu0 0.0
      %2801 = vmatpush1.msra.mxu0 0.0
      %2802 = vmatprep.subr.mxu0 0.0
      %2803 = vmatpush1.msra.mxu0 0.0
      %2804 = vmatprep.subr.mxu0 0.0
      %2805 = vmatpush1.msra.mxu0 0.0
      %2806 = vmatprep.subr.mxu0 0.0
      %2807 = vmatpush1.msra.mxu0 0.0
      %2808 = vmatprep.subr.mxu0 0.0
      %2809 = vmatpush1.msra.mxu0 0.0
      %2810 = vmatprep.subr.mxu0 0.0
      %2811 = vmatpush1.msra.mxu0 0.0
      %2812 = vmatprep.subr.mxu0 0.0
      %2813 = vmatpush1.msra.mxu0 0.0
      %2814 = vmatprep.subr.mxu0 0.0
      %2815 = vmatpush1.msra.mxu0 0.0
      %2816 = vmatprep.subr.mxu0 0.0
      %2817 = vmatpush1.msra.mxu0 0.0
      %2818 = vmatprep.subr.mxu0 0.0
      %2819 = vmatpush1.msra.mxu0 0.0
      %2820 = vmatprep.subr.mxu0 0.0
      %2821 = vmatpush1.msra.mxu0 0.0
      %2822 = vmatprep.subr.mxu0 0.0
      %2823 = vmatpush1.msra.mxu0 0.0
      %2824 = vmatprep.subr.mxu0 0.0
      %2825 = vmatpush1.msra.mxu0 0.0
      %2826 = vmatprep.subr.mxu0 0.0
      %2827 = vmatpush1.msra.mxu0 0.0
      %2828 = vmatprep.subr.mxu0 0.0
      %2829 = vmatpush1.msra.mxu0 0.0
      %2830 = vmatprep.subr.mxu0 0.0
      %2831 = vmatpush1.msra.mxu0 0.0
      %2832 = vmatprep.mubr.f32.mxu0 0.0
      %2833 = vmatmul.mubr.f32.gmra.mrb[0].mxu0 %v2718
      %v2834 = vpop.f32.mrb[0].mxu0
      %v2835 = vadd.f32 0.0, %v2834
      %v2836 = vpop.f32.mrb[0].mxu0
      %2837 = vmatprep.mubr.f32.mxu0 0.0
      %2838 = vmatmul.mubr.f32.gmra.mrb[0].mxu0 %v2721
      %v2839 = vpop.f32.mrb[0].mxu0
      %v2840 = vadd.f32 0.0, %v2839
      %v2841 = vpop.f32.mrb[0].mxu0
      %2842 = vmatprep.mubr.f32.mxu0 0.0
      %2843 = vmatmul.mubr.f32.gmra.mrb[0].mxu0 %v2724
      %v2844 = vpop.f32.mrb[0].mxu0
      %v2845 = vadd.f32 0.0, %v2844
      %v2846 = vpop.f32.mrb[0].mxu0
      %2847 = vmatprep.mubr.f32.mxu0 0.0
      %2848 = vmatmul.mubr.f32.gmra.mrb[0].mxu0 %v2727
      %v2849 = vpop.f32.mrb[0].mxu0
      %v2850 = vadd.f32 0.0, %v2849
      %v2851 = vpop.f32.mrb[0].mxu0
      %2852 = vmatprep.mubr.f32.mxu0 0.0
      %2853 = vmatmul.mubr.f32.gmra.mrb[0].mxu0 %v2730
      %v2854 = vpop.f32.mrb[0].mxu0
      %v2855 = vadd.f32 0.0, %v2854
      %v2856 = vpop.f32.mrb[0].mxu0
      %2857 = vmatprep.mubr.f32.mxu0 0.0
      %2858 = vmatmul.mubr.f32.gmra.mrb[0].mxu0 %v2733
      %v2859 = vpop.f32.mrb[0].mxu0
      %v2860 = vadd.f32 0.0, %v2859
      %v2861 = vpop.f32.mrb[0].mxu0
      %2862 = vmatprep.mubr.f32.mxu0 0.0
      %2863 = vmatmul.mubr.f32.gmra.mrb[0].mxu0 %v2736
      %v2864 = vpop.f32.mrb[0].mxu0
      %v2865 = vadd.f32 0.0, %v2864
      %v2866 = vpop.f32.mrb[0].mxu0
      %2867 = vmatprep.mubr.f32.mxu0 0.0
      %2868 = vmatmul.mubr.f32.gmra.mrb[0].mxu0 %v2739
      %v2869 = vpop.f32.mrb[0].mxu0
      %v2870 = vadd.f32 0.0, %v2869
      %v2871 = vpop.f32.mrb[0].mxu0
      %2872 = vmatprep.mubr.f32.mxu0 0.0
      %2873 = vmatmul.mubr.f32.gmra.mrb[0].mxu0 %v2742
      %v2874 = vpop.f32.mrb[0].mxu0
      %v2875 = vadd.f32 0.0, %v2874
      %v2876 = vpop.f32.mrb[0].mxu0
      %2877 = vmatprep.mubr.f32.mxu0 0.0
      %2878 = vmatmul.mubr.f32.gmra.mrb[0].mxu0 %v2745
      %v2879 = vpop.f32.mrb[0].mxu0
      %v2880 = vadd.f32 0.0, %v2879
      %v2881 = vpop.f32.mrb[0].mxu0
      %2882 = vmatprep.mubr.f32.mxu0 0.0
      %2883 = vmatmul.mubr.f32.gmra.mrb[0].mxu0 %v2748
      %v2884 = vpop.f32.mrb[0].mxu0
      %v2885 = vadd.f32 0.0, %v2884
      %v2886 = vpop.f32.mrb[0].mxu0
      %2887 = vmatprep.mubr.f32.mxu0 0.0
      %2888 = vmatmul.mubr.f32.gmra.mrb[0].mxu0 %v2751
      %v2889 = vpop.f32.mrb[0].mxu0
      %v2890 = vadd.f32 0.0, %v2889
      %v2891 = vpop.f32.mrb[0].mxu0
      %2892 = vmatprep.mubr.f32.mxu0 0.0
      %2893 = vmatmul.mubr.f32.gmra.mrb[0].mxu0 %v2754
      %v2894 = vpop.f32.mrb[0].mxu0
      %v2895 = vadd.f32 0.0, %v2894
      %v2896 = vpop.f32.mrb[0].mxu0
      %2897 = vmatprep.mubr.f32.mxu0 0.0
      %2898 = vmatmul.mubr.f32.gmra.mrb[0].mxu0 %v2757
      %v2899 = vpop.f32.mrb[0].mxu0
      %v2900 = vadd.f32 0.0, %v2899
      %v2901 = vpop.f32.mrb[0].mxu0
      %2902 = vmatprep.mubr.f32.mxu0 0.0
      %2903 = vmatmul.mubr.f32.gmra.mrb[0].mxu0 %v2760
      %v2904 = vpop.f32.mrb[0].mxu0
      %v2905 = vadd.f32 0.0, %v2904
      %v2906 = vpop.f32.mrb[0].mxu0
      %2907 = vmatprep.mubr.f32.mxu0 0.0
      %2908 = vmatmul.mubr.f32.gmra.mrb[0].mxu0 %v2763
      %v2909 = vpop.f32.mrb[0].mxu0
      %v2910 = vadd.f32 0.0, %v2909
      %v2911 = vpop.f32.mrb[0].mxu0
      %2912 = vdwg.mxu0
      %v2913 = vadd.f32 %v2669, %v2835
      %v2914 = vadd.f32 %v2670, %v2840
      %v2915 = vadd.f32 %v2671, %v2845
      %v2916 = vadd.f32 %v2672, %v2850
      %v2917 = vadd.f32 %v2673, %v2855
      %v2918 = vadd.f32 %v2674, %v2860
      %v2919 = vadd.f32 %v2675, %v2865
      %v2920 = vadd.f32 %v2676, %v2870
      %v2921 = vadd.f32 %v2677, %v2875
      %v2922 = vadd.f32 %v2678, %v2880
      %v2923 = vadd.f32 %v2679, %v2885
      %v2924 = vadd.f32 %v2680, %v2890
      %v2925 = vadd.f32 %v2681, %v2895
      %v2926 = vadd.f32 %v2682, %v2900
      %v2927 = vadd.f32 %v2683, %v2905
      %v2928 = vadd.f32 %v2684, %v2910
      %v2930 = vsel %vm712, %v2701, 0
      %v2933 = vsel %vm712, %v2702, 0
      %v2936 = vsel %vm712, %v2703, 0
      %v2939 = vsel %vm712, %v2704, 0
      %v2942 = vsel %vm712, %v2705, 0
      %v2945 = vsel %vm712, %v2706, 0
      %v2948 = vsel %vm712, %v2707, 0
      %v2951 = vsel %vm712, %v2708, 0
      %v2954 = vsel %vm712, %v2709, 0
      %v2957 = vsel %vm712, %v2710, 0
      %v2960 = vsel %vm712, %v2711, 0
      %v2963 = vsel %vm712, %v2712, 0
      %v2966 = vsel %vm712, %v2713, 0
      %v2969 = vsel %vm712, %v2714, 0
      %v2972 = vsel %vm712, %v2715, 0
      %v2975 = vsel %vm712, %v2716, 0
      %v2978 = vsel %vm972, %v887, 0
      %2980 = vmatprep.subr.mxu0 0.0
      %2981 = vmatpush1.msra.mxu0 %v2978
      %2982 = vmatprep.subr.mxu0 0.0
      %2983 = vmatpush1.msra.mxu0 0.0
      %2984 = vmatprep.subr.mxu0 0.0
      %2985 = vmatpush1.msra.mxu0 0.0
      %2986 = vmatprep.subr.mxu0 0.0
      %2987 = vmatpush1.msra.mxu0 0.0
      %2988 = vmatprep.subr.mxu0 0.0
      %2989 = vmatpush1.msra.mxu0 0.0
      %2990 = vmatprep.subr.mxu0 0.0
      %2991 = vmatpush1.msra.mxu0 0.0
      %2992 = vmatprep.subr.mxu0 0.0
      %2993 = vmatpush1.msra.mxu0 0.0
      %2994 = vmatprep.subr.mxu0 0.0
      %2995 = vmatpush1.msra.mxu0 0.0
      %2996 = vmatprep.subr.mxu0 0.0
      %2997 = vmatpush1.msra.mxu0 0.0
      %2998 = vmatprep.subr.mxu0 0.0
      %2999 = vmatpush1.msra.mxu0 0.0
      %3000 = vmatprep.subr.mxu0 0.0
      %3001 = vmatpush1.msra.mxu0 0.0
      %3002 = vmatprep.subr.mxu0 0.0
      %3003 = vmatpush1.msra.mxu0 0.0
      %3004 = vmatprep.subr.mxu0 0.0
      %3005 = vmatpush1.msra.mxu0 0.0
      %3006 = vmatprep.subr.mxu0 0.0
      %3007 = vmatpush1.msra.mxu0 0.0
      %3008 = vmatprep.subr.mxu0 0.0
      %3009 = vmatpush1.msra.mxu0 0.0
      %3010 = vmatprep.subr.mxu0 0.0
      %3011 = vmatpush1.msra.mxu0 0.0
      %3012 = vmatprep.subr.mxu0 0.0
      %3013 = vmatpush1.msra.mxu0 0.0
      %3014 = vmatprep.subr.mxu0 0.0
      %3015 = vmatpush1.msra.mxu0 0.0
      %3016 = vmatprep.subr.mxu0 0.0
      %3017 = vmatpush1.msra.mxu0 0.0
      %3018 = vmatprep.subr.mxu0 0.0
      %3019 = vmatpush1.msra.mxu0 0.0
      %3020 = vmatprep.subr.mxu0 0.0
      %3021 = vmatpush1.msra.mxu0 0.0
      %3022 = vmatprep.subr.mxu0 0.0
      %3023 = vmatpush1.msra.mxu0 0.0
      %3024 = vmatprep.subr.mxu0 0.0
      %3025 = vmatpush1.msra.mxu0 0.0
      %3026 = vmatprep.subr.mxu0 0.0
      %3027 = vmatpush1.msra.mxu0 0.0
      %3028 = vmatprep.subr.mxu0 0.0
      %3029 = vmatpush1.msra.mxu0 0.0
      %3030 = vmatprep.subr.mxu0 0.0
      %3031 = vmatpush1.msra.mxu0 0.0
      %3032 = vmatprep.subr.mxu0 0.0
      %3033 = vmatpush1.msra.mxu0 0.0
      %3034 = vmatprep.subr.mxu0 0.0
      %3035 = vmatpush1.msra.mxu0 0.0
      %3036 = vmatprep.subr.mxu0 0.0
      %3037 = vmatpush1.msra.mxu0 0.0
      %3038 = vmatprep.subr.mxu0 0.0
      %3039 = vmatpush1.msra.mxu0 0.0
      %3040 = vmatprep.subr.mxu0 0.0
      %3041 = vmatpush1.msra.mxu0 0.0
      %3042 = vmatprep.subr.mxu0 0.0
      %3043 = vmatpush1.msra.mxu0 0.0
      %3044 = vmatprep.mubr.f32.mxu0 0.0
      %3045 = vmatmul.mubr.f32.gmra.mrb[0].mxu0 %v2930
      %v3046 = vpop.f32.mrb[0].mxu0
      %v3047 = vadd.f32 0.0, %v3046
      %v3048 = vpop.f32.mrb[0].mxu0
      %3049 = vmatprep.mubr.f32.mxu0 0.0
      %3050 = vmatmul.mubr.f32.gmra.mrb[0].mxu0 %v2933
      %v3051 = vpop.f32.mrb[0].mxu0
      %v3052 = vadd.f32 0.0, %v3051
      %v3053 = vpop.f32.mrb[0].mxu0
      %3054 = vmatprep.mubr.f32.mxu0 0.0
      %3055 = vmatmul.mubr.f32.gmra.mrb[0].mxu0 %v2936
      %v3056 = vpop.f32.mrb[0].mxu0
      %v3057 = vadd.f32 0.0, %v3056
      %v3058 = vpop.f32.mrb[0].mxu0
      %3059 = vmatprep.mubr.f32.mxu0 0.0
      %3060 = vmatmul.mubr.f32.gmra.mrb[0].mxu0 %v2939
      %v3061 = vpop.f32.mrb[0].mxu0
      %v3062 = vadd.f32 0.0, %v3061
      %v3063 = vpop.f32.mrb[0].mxu0
      %3064 = vmatprep.mubr.f32.mxu0 0.0
      %3065 = vmatmul.mubr.f32.gmra.mrb[0].mxu0 %v2942
      %v3066 = vpop.f32.mrb[0].mxu0
      %v3067 = vadd.f32 0.0, %v3066
      %v3068 = vpop.f32.mrb[0].mxu0
      %3069 = vmatprep.mubr.f32.mxu0 0.0
      %3070 = vmatmul.mubr.f32.gmra.mrb[0].mxu0 %v2945
      %v3071 = vpop.f32.mrb[0].mxu0
      %v3072 = vadd.f32 0.0, %v3071
      %v3073 = vpop.f32.mrb[0].mxu0
      %3074 = vmatprep.mubr.f32.mxu0 0.0
      %3075 = vmatmul.mubr.f32.gmra.mrb[0].mxu0 %v2948
      %v3076 = vpop.f32.mrb[0].mxu0
      %v3077 = vadd.f32 0.0, %v3076
      %v3078 = vpop.f32.mrb[0].mxu0
      %3079 = vmatprep.mubr.f32.mxu0 0.0
      %3080 = vmatmul.mubr.f32.gmra.mrb[0].mxu0 %v2951
      %v3081 = vpop.f32.mrb[0].mxu0
      %v3082 = vadd.f32 0.0, %v3081
      %v3083 = vpop.f32.mrb[0].mxu0
      %3084 = vmatprep.mubr.f32.mxu0 0.0
      %3085 = vmatmul.mubr.f32.gmra.mrb[0].mxu0 %v2954
      %v3086 = vpop.f32.mrb[0].mxu0
      %v3087 = vadd.f32 0.0, %v3086
      %v3088 = vpop.f32.mrb[0].mxu0
      %3089 = vmatprep.mubr.f32.mxu0 0.0
      %3090 = vmatmul.mubr.f32.gmra.mrb[0].mxu0 %v2957
      %v3091 = vpop.f32.mrb[0].mxu0
      %v3092 = vadd.f32 0.0, %v3091
      %v3093 = vpop.f32.mrb[0].mxu0
      %3094 = vmatprep.mubr.f32.mxu0 0.0
      %3095 = vmatmul.mubr.f32.gmra.mrb[0].mxu0 %v2960
      %v3096 = vpop.f32.mrb[0].mxu0
      %v3097 = vadd.f32 0.0, %v3096
      %v3098 = vpop.f32.mrb[0].mxu0
      %3099 = vmatprep.mubr.f32.mxu0 0.0
      %3100 = vmatmul.mubr.f32.gmra.mrb[0].mxu0 %v2963
      %v3101 = vpop.f32.mrb[0].mxu0
      %v3102 = vadd.f32 0.0, %v3101
      %v3103 = vpop.f32.mrb[0].mxu0
      %3104 = vmatprep.mubr.f32.mxu0 0.0
      %3105 = vmatmul.mubr.f32.gmra.mrb[0].mxu0 %v2966
      %v3106 = vpop.f32.mrb[0].mxu0
      %v3107 = vadd.f32 0.0, %v3106
      %v3108 = vpop.f32.mrb[0].mxu0
      %3109 = vmatprep.mubr.f32.mxu0 0.0
      %3110 = vmatmul.mubr.f32.gmra.mrb[0].mxu0 %v2969
      %v3111 = vpop.f32.mrb[0].mxu0
      %v3112 = vadd.f32 0.0, %v3111
      %v3113 = vpop.f32.mrb[0].mxu0
      %3114 = vmatprep.mubr.f32.mxu0 0.0
      %3115 = vmatmul.mubr.f32.gmra.mrb[0].mxu0 %v2972
      %v3116 = vpop.f32.mrb[0].mxu0
      %v3117 = vadd.f32 0.0, %v3116
      %v3118 = vpop.f32.mrb[0].mxu0
      %3119 = vmatprep.mubr.f32.mxu0 0.0
      %3120 = vmatmul.mubr.f32.gmra.mrb[0].mxu0 %v2975
      %v3121 = vpop.f32.mrb[0].mxu0
      %v3122 = vadd.f32 0.0, %v3121
      %v3123 = vpop.f32.mrb[0].mxu0
      %3124 = vdwg.mxu0
      %v3125 = vadd.f32 %v2913, %v3047
      %v3126 = vadd.f32 %v2914, %v3052
      %v3127 = vadd.f32 %v2915, %v3057
      %v3128 = vadd.f32 %v2916, %v3062
      %v3129 = vadd.f32 %v2917, %v3067
      %v3130 = vadd.f32 %v2918, %v3072
      %v3131 = vadd.f32 %v2919, %v3077
      %v3132 = vadd.f32 %v2920, %v3082
      %v3133 = vadd.f32 %v2921, %v3087
      %v3134 = vadd.f32 %v2922, %v3092
      %v3135 = vadd.f32 %v2923, %v3097
      %v3136 = vadd.f32 %v2924, %v3102
      %v3137 = vadd.f32 %v2925, %v3107
      %v3138 = vadd.f32 %v2926, %v3112
      %v3139 = vadd.f32 %v2927, %v3117
      %v3140 = vadd.f32 %v2928, %v3122
      %v3141 = vld [vmem:[%s760 + $0x2] sm:$0xff]
      %v3142 = vld [vmem:[%s760 + $0xa] sm:$0xff]
      %v3143 = vld [vmem:[%s760 + $0x1a] sm:$0xff]
      %v3144 = vld [vmem:[%s760 + $0x22] sm:$0xff]
      %v3145 = vld [vmem:[%s760 + $0x32] sm:$0xff]
      %v3146 = vld [vmem:[%s760 + $0x3a] sm:$0xff]
      %v3147 = vld [vmem:[%s760 + $0x4a] sm:$0xff]
      %v3148 = vld [vmem:[%s760 + $0x52] sm:$0xff]
      %v3149 = vld [vmem:[%s760 + $0x62] sm:$0xff]
      %v3150 = vld [vmem:[%s760 + $0x6a] sm:$0xff]
      %v3151 = vld [vmem:[%s760 + $0x7a] sm:$0xff]
      %v3152 = vld [vmem:[%s760 + $0x82] sm:$0xff]
      %v3153 = vld [vmem:[%s760 + $0x92] sm:$0xff]
      %v3154 = vld [vmem:[%s760 + $0x9a] sm:$0xff]
      %v3155 = vld [vmem:[%s760 + $0xaa] sm:$0xff]
      %v3156 = vld [vmem:[%s760 + $0xb2] sm:$0xff]
      %v3157 = vld [vmem:[%s844 + $0x2] sm:$0xff]
      %v3158 = vld [vmem:[%s844 + $0xa] sm:$0xff]
      %v3159 = vld [vmem:[%s844 + $0x1a] sm:$0xff]
      %v3160 = vld [vmem:[%s844 + $0x22] sm:$0xff]
      %v3161 = vld [vmem:[%s844 + $0x32] sm:$0xff]
      %v3162 = vld [vmem:[%s844 + $0x3a] sm:$0xff]
      %v3163 = vld [vmem:[%s844 + $0x4a] sm:$0xff]
      %v3164 = vld [vmem:[%s844 + $0x52] sm:$0xff]
      %v3165 = vld [vmem:[%s844 + $0x62] sm:$0xff]
      %v3166 = vld [vmem:[%s844 + $0x6a] sm:$0xff]
      %v3167 = vld [vmem:[%s844 + $0x7a] sm:$0xff]
      %v3168 = vld [vmem:[%s844 + $0x82] sm:$0xff]
      %v3169 = vld [vmem:[%s844 + $0x92] sm:$0xff]
      %v3170 = vld [vmem:[%s844 + $0x9a] sm:$0xff]
      %v3171 = vld [vmem:[%s844 + $0xaa] sm:$0xff]
      %v3172 = vld [vmem:[%s844 + $0xb2] sm:$0xff]
      %v3174 = vsel %vm712, %v3141, 0
      %v3177 = vsel %vm712, %v3142, 0
      %v3180 = vsel %vm712, %v3143, 0
      %v3183 = vsel %vm712, %v3144, 0
      %v3186 = vsel %vm712, %v3145, 0
      %v3189 = vsel %vm712, %v3146, 0
      %v3192 = vsel %vm712, %v3147, 0
      %v3195 = vsel %vm712, %v3148, 0
      %v3198 = vsel %vm712, %v3149, 0
      %v3201 = vsel %vm712, %v3150, 0
      %v3204 = vsel %vm712, %v3151, 0
      %v3207 = vsel %vm712, %v3152, 0
      %v3210 = vsel %vm712, %v3153, 0
      %v3213 = vsel %vm712, %v3154, 0
      %v3216 = vsel %vm712, %v3155, 0
      %v3219 = vsel %vm712, %v3156, 0
      %v3222 = vsel %vm972, %v879, 0
      %3224 = vmatprep.subr.mxu0 0.0
      %3225 = vmatpush1.msra.mxu0 %v3222
      %3226 = vmatprep.subr.mxu0 0.0
      %3227 = vmatpush1.msra.mxu0 0.0
      %3228 = vmatprep.subr.mxu0 0.0
      %3229 = vmatpush1.msra.mxu0 0.0
      %3230 = vmatprep.subr.mxu0 0.0
      %3231 = vmatpush1.msra.mxu0 0.0
      %3232 = vmatprep.subr.mxu0 0.0
      %3233 = vmatpush1.msra.mxu0 0.0
      %3234 = vmatprep.subr.mxu0 0.0
      %3235 = vmatpush1.msra.mxu0 0.0
      %3236 = vmatprep.subr.mxu0 0.0
      %3237 = vmatpush1.msra.mxu0 0.0
      %3238 = vmatprep.subr.mxu0 0.0
      %3239 = vmatpush1.msra.mxu0 0.0
      %3240 = vmatprep.subr.mxu0 0.0
      %3241 = vmatpush1.msra.mxu0 0.0
      %3242 = vmatprep.subr.mxu0 0.0
      %3243 = vmatpush1.msra.mxu0 0.0
      %3244 = vmatprep.subr.mxu0 0.0
      %3245 = vmatpush1.msra.mxu0 0.0
      %3246 = vmatprep.subr.mxu0 0.0
      %3247 = vmatpush1.msra.mxu0 0.0
      %3248 = vmatprep.subr.mxu0 0.0
      %3249 = vmatpush1.msra.mxu0 0.0
      %3250 = vmatprep.subr.mxu0 0.0
      %3251 = vmatpush1.msra.mxu0 0.0
      %3252 = vmatprep.subr.mxu0 0.0
      %3253 = vmatpush1.msra.mxu0 0.0
      %3254 = vmatprep.subr.mxu0 0.0
      %3255 = vmatpush1.msra.mxu0 0.0
      %3256 = vmatprep.subr.mxu0 0.0
      %3257 = vmatpush1.msra.mxu0 0.0
      %3258 = vmatprep.subr.mxu0 0.0
      %3259 = vmatpush1.msra.mxu0 0.0
      %3260 = vmatprep.subr.mxu0 0.0
      %3261 = vmatpush1.msra.mxu0 0.0
      %3262 = vmatprep.subr.mxu0 0.0
      %3263 = vmatpush1.msra.mxu0 0.0
      %3264 = vmatprep.subr.mxu0 0.0
      %3265 = vmatpush1.msra.mxu0 0.0
      %3266 = vmatprep.subr.mxu0 0.0
      %3267 = vmatpush1.msra.mxu0 0.0
      %3268 = vmatprep.subr.mxu0 0.0
      %3269 = vmatpush1.msra.mxu0 0.0
      %3270 = vmatprep.subr.mxu0 0.0
      %3271 = vmatpush1.msra.mxu0 0.0
      %3272 = vmatprep.subr.mxu0 0.0
      %3273 = vmatpush1.msra.mxu0 0.0
      %3274 = vmatprep.subr.mxu0 0.0
      %3275 = vmatpush1.msra.mxu0 0.0
      %3276 = vmatprep.subr.mxu0 0.0
      %3277 = vmatpush1.msra.mxu0 0.0
      %3278 = vmatprep.subr.mxu0 0.0
      %3279 = vmatpush1.msra.mxu0 0.0
      %3280 = vmatprep.subr.mxu0 0.0
      %3281 = vmatpush1.msra.mxu0 0.0
      %3282 = vmatprep.subr.mxu0 0.0
      %3283 = vmatpush1.msra.mxu0 0.0
      %3284 = vmatprep.subr.mxu0 0.0
      %3285 = vmatpush1.msra.mxu0 0.0
      %3286 = vmatprep.subr.mxu0 0.0
      %3287 = vmatpush1.msra.mxu0 0.0
      %3288 = vmatprep.mubr.f32.mxu0 0.0
      %3289 = vmatmul.mubr.f32.gmra.mrb[0].mxu0 %v3174
      %v3290 = vpop.f32.mrb[0].mxu0
      %v3291 = vadd.f32 0.0, %v3290
      %v3292 = vpop.f32.mrb[0].mxu0
      %3293 = vmatprep.mubr.f32.mxu0 0.0
      %3294 = vmatmul.mubr.f32.gmra.mrb[0].mxu0 %v3177
      %v3295 = vpop.f32.mrb[0].mxu0
      %v3296 = vadd.f32 0.0, %v3295
      %v3297 = vpop.f32.mrb[0].mxu0
      %3298 = vmatprep.mubr.f32.mxu0 0.0
      %3299 = vmatmul.mubr.f32.gmra.mrb[0].mxu0 %v3180
      %v3300 = vpop.f32.mrb[0].mxu0
      %v3301 = vadd.f32 0.0, %v3300
      %v3302 = vpop.f32.mrb[0].mxu0
      %3303 = vmatprep.mubr.f32.mxu0 0.0
      %3304 = vmatmul.mubr.f32.gmra.mrb[0].mxu0 %v3183
      %v3305 = vpop.f32.mrb[0].mxu0
      %v3306 = vadd.f32 0.0, %v3305
      %v3307 = vpop.f32.mrb[0].mxu0
      %3308 = vmatprep.mubr.f32.mxu0 0.0
      %3309 = vmatmul.mubr.f32.gmra.mrb[0].mxu0 %v3186
      %v3310 = vpop.f32.mrb[0].mxu0
      %v3311 = vadd.f32 0.0, %v3310
      %v3312 = vpop.f32.mrb[0].mxu0
      %3313 = vmatprep.mubr.f32.mxu0 0.0
      %3314 = vmatmul.mubr.f32.gmra.mrb[0].mxu0 %v3189
      %v3315 = vpop.f32.mrb[0].mxu0
      %v3316 = vadd.f32 0.0, %v3315
      %v3317 = vpop.f32.mrb[0].mxu0
      %3318 = vmatprep.mubr.f32.mxu0 0.0
      %3319 = vmatmul.mubr.f32.gmra.mrb[0].mxu0 %v3192
      %v3320 = vpop.f32.mrb[0].mxu0
      %v3321 = vadd.f32 0.0, %v3320
      %v3322 = vpop.f32.mrb[0].mxu0
      %3323 = vmatprep.mubr.f32.mxu0 0.0
      %3324 = vmatmul.mubr.f32.gmra.mrb[0].mxu0 %v3195
      %v3325 = vpop.f32.mrb[0].mxu0
      %v3326 = vadd.f32 0.0, %v3325
      %v3327 = vpop.f32.mrb[0].mxu0
      %3328 = vmatprep.mubr.f32.mxu0 0.0
      %3329 = vmatmul.mubr.f32.gmra.mrb[0].mxu0 %v3198
      %v3330 = vpop.f32.mrb[0].mxu0
      %v3331 = vadd.f32 0.0, %v3330
      %v3332 = vpop.f32.mrb[0].mxu0
      %3333 = vmatprep.mubr.f32.mxu0 0.0
      %3334 = vmatmul.mubr.f32.gmra.mrb[0].mxu0 %v3201
      %v3335 = vpop.f32.mrb[0].mxu0
      %v3336 = vadd.f32 0.0, %v3335
      %v3337 = vpop.f32.mrb[0].mxu0
      %3338 = vmatprep.mubr.f32.mxu0 0.0
      %3339 = vmatmul.mubr.f32.gmra.mrb[0].mxu0 %v3204
      %v3340 = vpop.f32.mrb[0].mxu0
      %v3341 = vadd.f32 0.0, %v3340
      %v3342 = vpop.f32.mrb[0].mxu0
      %3343 = vmatprep.mubr.f32.mxu0 0.0
      %3344 = vmatmul.mubr.f32.gmra.mrb[0].mxu0 %v3207
      %v3345 = vpop.f32.mrb[0].mxu0
      %v3346 = vadd.f32 0.0, %v3345
      %v3347 = vpop.f32.mrb[0].mxu0
      %3348 = vmatprep.mubr.f32.mxu0 0.0
      %3349 = vmatmul.mubr.f32.gmra.mrb[0].mxu0 %v3210
      %v3350 = vpop.f32.mrb[0].mxu0
      %v3351 = vadd.f32 0.0, %v3350
      %v3352 = vpop.f32.mrb[0].mxu0
      %3353 = vmatprep.mubr.f32.mxu0 0.0
      %3354 = vmatmul.mubr.f32.gmra.mrb[0].mxu0 %v3213
      %v3355 = vpop.f32.mrb[0].mxu0
      %v3356 = vadd.f32 0.0, %v3355
      %v3357 = vpop.f32.mrb[0].mxu0
      %3358 = vmatprep.mubr.f32.mxu0 0.0
      %3359 = vmatmul.mubr.f32.gmra.mrb[0].mxu0 %v3216
      %v3360 = vpop.f32.mrb[0].mxu0
      %v3361 = vadd.f32 0.0, %v3360
      %v3362 = vpop.f32.mrb[0].mxu0
      %3363 = vmatprep.mubr.f32.mxu0 0.0
      %3364 = vmatmul.mubr.f32.gmra.mrb[0].mxu0 %v3219
      %v3365 = vpop.f32.mrb[0].mxu0
      %v3366 = vadd.f32 0.0, %v3365
      %v3367 = vpop.f32.mrb[0].mxu0
      %3368 = vdwg.mxu0
      %v3369 = vadd.f32 %v3125, %v3291
      %v3370 = vadd.f32 %v3126, %v3296
      %v3371 = vadd.f32 %v3127, %v3301
      %v3372 = vadd.f32 %v3128, %v3306
      %v3373 = vadd.f32 %v3129, %v3311
      %v3374 = vadd.f32 %v3130, %v3316
      %v3375 = vadd.f32 %v3131, %v3321
      %v3376 = vadd.f32 %v3132, %v3326
      %v3377 = vadd.f32 %v3133, %v3331
      %v3378 = vadd.f32 %v3134, %v3336
      %v3379 = vadd.f32 %v3135, %v3341
      %v3380 = vadd.f32 %v3136, %v3346
      %v3381 = vadd.f32 %v3137, %v3351
      %v3382 = vadd.f32 %v3138, %v3356
      %v3383 = vadd.f32 %v3139, %v3361
      %v3384 = vadd.f32 %v3140, %v3366
      %v3386 = vsel %vm712, %v3157, 0
      %v3389 = vsel %vm712, %v3158, 0
      %v3392 = vsel %vm712, %v3159, 0
      %v3395 = vsel %vm712, %v3160, 0
      %v3398 = vsel %vm712, %v3161, 0
      %v3401 = vsel %vm712, %v3162, 0
      %v3404 = vsel %vm712, %v3163, 0
      %v3407 = vsel %vm712, %v3164, 0
      %v3410 = vsel %vm712, %v3165, 0
      %v3413 = vsel %vm712, %v3166, 0
      %v3416 = vsel %vm712, %v3167, 0
      %v3419 = vsel %vm712, %v3168, 0
      %v3422 = vsel %vm712, %v3169, 0
      %v3425 = vsel %vm712, %v3170, 0
      %v3428 = vsel %vm712, %v3171, 0
      %v3431 = vsel %vm712, %v3172, 0
      %v3434 = vsel %vm972, %v888, 0
      %3436 = vmatprep.subr.mxu0 0.0
      %3437 = vmatpush1.msra.mxu0 %v3434
      %3438 = vmatprep.subr.mxu0 0.0
      %3439 = vmatpush1.msra.mxu0 0.0
      %3440 = vmatprep.subr.mxu0 0.0
      %3441 = vmatpush1.msra.mxu0 0.0
      %3442 = vmatprep.subr.mxu0 0.0
      %3443 = vmatpush1.msra.mxu0 0.0
      %3444 = vmatprep.subr.mxu0 0.0
      %3445 = vmatpush1.msra.mxu0 0.0
      %3446 = vmatprep.subr.mxu0 0.0
      %3447 = vmatpush1.msra.mxu0 0.0
      %3448 = vmatprep.subr.mxu0 0.0
      %3449 = vmatpush1.msra.mxu0 0.0
      %3450 = vmatprep.subr.mxu0 0.0
      %3451 = vmatpush1.msra.mxu0 0.0
      %3452 = vmatprep.subr.mxu0 0.0
      %3453 = vmatpush1.msra.mxu0 0.0
      %3454 = vmatprep.subr.mxu0 0.0
      %3455 = vmatpush1.msra.mxu0 0.0
      %3456 = vmatprep.subr.mxu0 0.0
      %3457 = vmatpush1.msra.mxu0 0.0
      %3458 = vmatprep.subr.mxu0 0.0
      %3459 = vmatpush1.msra.mxu0 0.0
      %3460 = vmatprep.subr.mxu0 0.0
      %3461 = vmatpush1.msra.mxu0 0.0
      %3462 = vmatprep.subr.mxu0 0.0
      %3463 = vmatpush1.msra.mxu0 0.0
      %3464 = vmatprep.subr.mxu0 0.0
      %3465 = vmatpush1.msra.mxu0 0.0
      %3466 = vmatprep.subr.mxu0 0.0
      %3467 = vmatpush1.msra.mxu0 0.0
      %3468 = vmatprep.subr.mxu0 0.0
      %3469 = vmatpush1.msra.mxu0 0.0
      %3470 = vmatprep.subr.mxu0 0.0
      %3471 = vmatpush1.msra.mxu0 0.0
      %3472 = vmatprep.subr.mxu0 0.0
      %3473 = vmatpush1.msra.mxu0 0.0
      %3474 = vmatprep.subr.mxu0 0.0
      %3475 = vmatpush1.msra.mxu0 0.0
      %3476 = vmatprep.subr.mxu0 0.0
      %3477 = vmatpush1.msra.mxu0 0.0
      %3478 = vmatprep.subr.mxu0 0.0
      %3479 = vmatpush1.msra.mxu0 0.0
      %3480 = vmatprep.subr.mxu0 0.0
      %3481 = vmatpush1.msra.mxu0 0.0
      %3482 = vmatprep.subr.mxu0 0.0
      %3483 = vmatpush1.msra.mxu0 0.0
      %3484 = vmatprep.subr.mxu0 0.0
      %3485 = vmatpush1.msra.mxu0 0.0
      %3486 = vmatprep.subr.mxu0 0.0
      %3487 = vmatpush1.msra.mxu0 0.0
      %3488 = vmatprep.subr.mxu0 0.0
      %3489 = vmatpush1.msra.mxu0 0.0
      %3490 = vmatprep.subr.mxu0 0.0
      %3491 = vmatpush1.msra.mxu0 0.0
      %3492 = vmatprep.subr.mxu0 0.0
      %3493 = vmatpush1.msra.mxu0 0.0
      %3494 = vmatprep.subr.mxu0 0.0
      %3495 = vmatpush1.msra.mxu0 0.0
      %3496 = vmatprep.subr.mxu0 0.0
      %3497 = vmatpush1.msra.mxu0 0.0
      %3498 = vmatprep.subr.mxu0 0.0
      %3499 = vmatpush1.msra.mxu0 0.0
      %3500 = vmatprep.mubr.f32.mxu0 0.0
      %3501 = vmatmul.mubr.f32.gmra.mrb[0].mxu0 %v3386
      %v3502 = vpop.f32.mrb[0].mxu0
      %v3503 = vadd.f32 0.0, %v3502
      %v3504 = vpop.f32.mrb[0].mxu0
      %3505 = vmatprep.mubr.f32.mxu0 0.0
      %3506 = vmatmul.mubr.f32.gmra.mrb[0].mxu0 %v3389
      %v3507 = vpop.f32.mrb[0].mxu0
      %v3508 = vadd.f32 0.0, %v3507
      %v3509 = vpop.f32.mrb[0].mxu0
      %3510 = vmatprep.mubr.f32.mxu0 0.0
      %3511 = vmatmul.mubr.f32.gmra.mrb[0].mxu0 %v3392
      %v3512 = vpop.f32.mrb[0].mxu0
      %v3513 = vadd.f32 0.0, %v3512
      %v3514 = vpop.f32.mrb[0].mxu0
      %3515 = vmatprep.mubr.f32.mxu0 0.0
      %3516 = vmatmul.mubr.f32.gmra.mrb[0].mxu0 %v3395
      %v3517 = vpop.f32.mrb[0].mxu0
      %v3518 = vadd.f32 0.0, %v3517
      %v3519 = vpop.f32.mrb[0].mxu0
      %3520 = vmatprep.mubr.f32.mxu0 0.0
      %3521 = vmatmul.mubr.f32.gmra.mrb[0].mxu0 %v3398
      %v3522 = vpop.f32.mrb[0].mxu0
      %v3523 = vadd.f32 0.0, %v3522
      %v3524 = vpop.f32.mrb[0].mxu0
      %3525 = vmatprep.mubr.f32.mxu0 0.0
      %3526 = vmatmul.mubr.f32.gmra.mrb[0].mxu0 %v3401
      %v3527 = vpop.f32.mrb[0].mxu0
      %v3528 = vadd.f32 0.0, %v3527
      %v3529 = vpop.f32.mrb[0].mxu0
      %3530 = vmatprep.mubr.f32.mxu0 0.0
      %3531 = vmatmul.mubr.f32.gmra.mrb[0].mxu0 %v3404
      %v3532 = vpop.f32.mrb[0].mxu0
      %v3533 = vadd.f32 0.0, %v3532
      %v3534 = vpop.f32.mrb[0].mxu0
      %3535 = vmatprep.mubr.f32.mxu0 0.0
      %3536 = vmatmul.mubr.f32.gmra.mrb[0].mxu0 %v3407
      %v3537 = vpop.f32.mrb[0].mxu0
      %v3538 = vadd.f32 0.0, %v3537
      %v3539 = vpop.f32.mrb[0].mxu0
      %3540 = vmatprep.mubr.f32.mxu0 0.0
      %3541 = vmatmul.mubr.f32.gmra.mrb[0].mxu0 %v3410
      %v3542 = vpop.f32.mrb[0].mxu0
      %v3543 = vadd.f32 0.0, %v3542
      %v3544 = vpop.f32.mrb[0].mxu0
      %3545 = vmatprep.mubr.f32.mxu0 0.0
      %3546 = vmatmul.mubr.f32.gmra.mrb[0].mxu0 %v3413
      %v3547 = vpop.f32.mrb[0].mxu0
      %v3548 = vadd.f32 0.0, %v3547
      %v3549 = vpop.f32.mrb[0].mxu0
      %3550 = vmatprep.mubr.f32.mxu0 0.0
      %3551 = vmatmul.mubr.f32.gmra.mrb[0].mxu0 %v3416
      %v3552 = vpop.f32.mrb[0].mxu0
      %v3553 = vadd.f32 0.0, %v3552
      %v3554 = vpop.f32.mrb[0].mxu0
      %3555 = vmatprep.mubr.f32.mxu0 0.0
      %3556 = vmatmul.mubr.f32.gmra.mrb[0].mxu0 %v3419
      %v3557 = vpop.f32.mrb[0].mxu0
      %v3558 = vadd.f32 0.0, %v3557
      %v3559 = vpop.f32.mrb[0].mxu0
      %3560 = vmatprep.mubr.f32.mxu0 0.0
      %3561 = vmatmul.mubr.f32.gmra.mrb[0].mxu0 %v3422
      %v3562 = vpop.f32.mrb[0].mxu0
      %v3563 = vadd.f32 0.0, %v3562
      %v3564 = vpop.f32.mrb[0].mxu0
      %3565 = vmatprep.mubr.f32.mxu0 0.0
      %3566 = vmatmul.mubr.f32.gmra.mrb[0].mxu0 %v3425
      %v3567 = vpop.f32.mrb[0].mxu0
      %v3568 = vadd.f32 0.0, %v3567
      %v3569 = vpop.f32.mrb[0].mxu0
      %3570 = vmatprep.mubr.f32.mxu0 0.0
      %3571 = vmatmul.mubr.f32.gmra.mrb[0].mxu0 %v3428
      %v3572 = vpop.f32.mrb[0].mxu0
      %v3573 = vadd.f32 0.0, %v3572
      %v3574 = vpop.f32.mrb[0].mxu0
      %3575 = vmatprep.mubr.f32.mxu0 0.0
      %3576 = vmatmul.mubr.f32.gmra.mrb[0].mxu0 %v3431
      %v3577 = vpop.f32.mrb[0].mxu0
      %v3578 = vadd.f32 0.0, %v3577
      %v3579 = vpop.f32.mrb[0].mxu0
      %3580 = vdwg.mxu0
      %v3581 = vadd.f32 %v3369, %v3503
      %v3582 = vadd.f32 %v3370, %v3508
      %v3583 = vadd.f32 %v3371, %v3513
      %v3584 = vadd.f32 %v3372, %v3518
      %v3585 = vadd.f32 %v3373, %v3523
      %v3586 = vadd.f32 %v3374, %v3528
      %v3587 = vadd.f32 %v3375, %v3533
      %v3588 = vadd.f32 %v3376, %v3538
      %v3589 = vadd.f32 %v3377, %v3543
      %v3590 = vadd.f32 %v3378, %v3548
      %v3591 = vadd.f32 %v3379, %v3553
      %v3592 = vadd.f32 %v3380, %v3558
      %v3593 = vadd.f32 %v3381, %v3563
      %v3594 = vadd.f32 %v3382, %v3568
      %v3595 = vadd.f32 %v3383, %v3573
      %v3596 = vadd.f32 %v3384, %v3578
      %s3597 = scalar_lea.vmem [#allocation2], 48
      %v3598 = vld [vmem:[%s3597] sm:$0xff]
      %v3599 = vld [vmem:[%s3597 + $0x8] sm:$0xff]
      %v3600 = vld [vmem:[%s3597 + $0x18] sm:$0xff]
      %v3601 = vld [vmem:[%s3597 + $0x20] sm:$0xff]
      %v3602 = vld [vmem:[%s3597 + $0x30] sm:$0xff]
      %v3603 = vld [vmem:[%s3597 + $0x38] sm:$0xff]
      %v3604 = vld [vmem:[%s3597 + $0x48] sm:$0xff]
      %v3605 = vld [vmem:[%s3597 + $0x50] sm:$0xff]
      %v3606 = vld [vmem:[%s3597 + $0x60] sm:$0xff]
      %v3607 = vld [vmem:[%s3597 + $0x68] sm:$0xff]
      %v3608 = vld [vmem:[%s3597 + $0x78] sm:$0xff]
      %v3609 = vld [vmem:[%s3597 + $0x80] sm:$0xff]
      %v3610 = vld [vmem:[%s3597 + $0x90] sm:$0xff]
      %v3611 = vld [vmem:[%s3597 + $0x98] sm:$0xff]
      %v3612 = vld [vmem:[%s3597 + $0xa8] sm:$0xff]
      %v3613 = vld [vmem:[%s3597 + $0xb0] sm:$0xff]
      %s3614 = scalar_lea.vmem [#allocation3], 48
      %v3615 = vld [vmem:[%s3614] sm:$0xff]
      %v3616 = vld [vmem:[%s3614 + $0x8] sm:$0xff]
      %v3617 = vld [vmem:[%s3614 + $0x18] sm:$0xff]
      %v3618 = vld [vmem:[%s3614 + $0x20] sm:$0xff]
      %v3619 = vld [vmem:[%s3614 + $0x30] sm:$0xff]
      %v3620 = vld [vmem:[%s3614 + $0x38] sm:$0xff]
      %v3621 = vld [vmem:[%s3614 + $0x48] sm:$0xff]
      %v3622 = vld [vmem:[%s3614 + $0x50] sm:$0xff]
      %v3623 = vld [vmem:[%s3614 + $0x60] sm:$0xff]
      %v3624 = vld [vmem:[%s3614 + $0x68] sm:$0xff]
      %v3625 = vld [vmem:[%s3614 + $0x78] sm:$0xff]
      %v3626 = vld [vmem:[%s3614 + $0x80] sm:$0xff]
      %v3627 = vld [vmem:[%s3614 + $0x90] sm:$0xff]
      %v3628 = vld [vmem:[%s3614 + $0x98] sm:$0xff]
      %v3629 = vld [vmem:[%s3614 + $0xa8] sm:$0xff]
      %v3630 = vld [vmem:[%s3614 + $0xb0] sm:$0xff]
      %v3632 = vsel %vm712, %v3598, 0
      %v3635 = vsel %vm712, %v3599, 0
      %v3638 = vsel %vm712, %v3600, 0
      %v3641 = vsel %vm712, %v3601, 0
      %v3644 = vsel %vm712, %v3602, 0
      %v3647 = vsel %vm712, %v3603, 0
      %v3650 = vsel %vm712, %v3604, 0
      %v3653 = vsel %vm712, %v3605, 0
      %v3656 = vsel %vm712, %v3606, 0
      %v3659 = vsel %vm712, %v3607, 0
      %v3662 = vsel %vm712, %v3608, 0
      %v3665 = vsel %vm712, %v3609, 0
      %v3668 = vsel %vm712, %v3610, 0
      %v3671 = vsel %vm712, %v3611, 0
      %v3674 = vsel %vm712, %v3612, 0
      %v3677 = vsel %vm712, %v3613, 0
      %v3680 = vsel %vm972, %v880, 0
      %3682 = vmatprep.subr.mxu0 0.0
      %3683 = vmatpush1.msra.mxu0 %v3680
      %3684 = vmatprep.subr.mxu0 0.0
      %3685 = vmatpush1.msra.mxu0 0.0
      %3686 = vmatprep.subr.mxu0 0.0
      %3687 = vmatpush1.msra.mxu0 0.0
      %3688 = vmatprep.subr.mxu0 0.0
      %3689 = vmatpush1.msra.mxu0 0.0
      %3690 = vmatprep.subr.mxu0 0.0
      %3691 = vmatpush1.msra.mxu0 0.0
      %3692 = vmatprep.subr.mxu0 0.0
      %3693 = vmatpush1.msra.mxu0 0.0
      %3694 = vmatprep.subr.mxu0 0.0
      %3695 = vmatpush1.msra.mxu0 0.0
      %3696 = vmatprep.subr.mxu0 0.0
      %3697 = vmatpush1.msra.mxu0 0.0
      %3698 = vmatprep.subr.mxu0 0.0
      %3699 = vmatpush1.msra.mxu0 0.0
      %3700 = vmatprep.subr.mxu0 0.0
      %3701 = vmatpush1.msra.mxu0 0.0
      %3702 = vmatprep.subr.mxu0 0.0
      %3703 = vmatpush1.msra.mxu0 0.0
      %3704 = vmatprep.subr.mxu0 0.0
      %3705 = vmatpush1.msra.mxu0 0.0
      %3706 = vmatprep.subr.mxu0 0.0
      %3707 = vmatpush1.msra.mxu0 0.0
      %3708 = vmatprep.subr.mxu0 0.0
      %3709 = vmatpush1.msra.mxu0 0.0
      %3710 = vmatprep.subr.mxu0 0.0
      %3711 = vmatpush1.msra.mxu0 0.0
      %3712 = vmatprep.subr.mxu0 0.0
      %3713 = vmatpush1.msra.mxu0 0.0
      %3714 = vmatprep.subr.mxu0 0.0
      %3715 = vmatpush1.msra.mxu0 0.0
      %3716 = vmatprep.subr.mxu0 0.0
      %3717 = vmatpush1.msra.mxu0 0.0
      %3718 = vmatprep.subr.mxu0 0.0
      %3719 = vmatpush1.msra.mxu0 0.0
      %3720 = vmatprep.subr.mxu0 0.0
      %3721 = vmatpush1.msra.mxu0 0.0
      %3722 = vmatprep.subr.mxu0 0.0
      %3723 = vmatpush1.msra.mxu0 0.0
      %3724 = vmatprep.subr.mxu0 0.0
      %3725 = vmatpush1.msra.mxu0 0.0
      %3726 = vmatprep.subr.mxu0 0.0
      %3727 = vmatpush1.msra.mxu0 0.0
      %3728 = vmatprep.subr.mxu0 0.0
      %3729 = vmatpush1.msra.mxu0 0.0
      %3730 = vmatprep.subr.mxu0 0.0
      %3731 = vmatpush1.msra.mxu0 0.0
      %3732 = vmatprep.subr.mxu0 0.0
      %3733 = vmatpush1.msra.mxu0 0.0
      %3734 = vmatprep.subr.mxu0 0.0
      %3735 = vmatpush1.msra.mxu0 0.0
      %3736 = vmatprep.subr.mxu0 0.0
      %3737 = vmatpush1.msra.mxu0 0.0
      %3738 = vmatprep.subr.mxu0 0.0
      %3739 = vmatpush1.msra.mxu0 0.0
      %3740 = vmatprep.subr.mxu0 0.0
      %3741 = vmatpush1.msra.mxu0 0.0
      %3742 = vmatprep.subr.mxu0 0.0
      %3743 = vmatpush1.msra.mxu0 0.0
      %3744 = vmatprep.subr.mxu0 0.0
      %3745 = vmatpush1.msra.mxu0 0.0
      %3746 = vmatprep.mubr.f32.mxu0 0.0
      %3747 = vmatmul.mubr.f32.gmra.mrb[0].mxu0 %v3632
      %v3748 = vpop.f32.mrb[0].mxu0
      %v3749 = vadd.f32 0.0, %v3748
      %v3750 = vpop.f32.mrb[0].mxu0
      %3751 = vmatprep.mubr.f32.mxu0 0.0
      %3752 = vmatmul.mubr.f32.gmra.mrb[0].mxu0 %v3635
      %v3753 = vpop.f32.mrb[0].mxu0
      %v3754 = vadd.f32 0.0, %v3753
      %v3755 = vpop.f32.mrb[0].mxu0
      %3756 = vmatprep.mubr.f32.mxu0 0.0
      %3757 = vmatmul.mubr.f32.gmra.mrb[0].mxu0 %v3638
      %v3758 = vpop.f32.mrb[0].mxu0
      %v3759 = vadd.f32 0.0, %v3758
      %v3760 = vpop.f32.mrb[0].mxu0
      %3761 = vmatprep.mubr.f32.mxu0 0.0
      %3762 = vmatmul.mubr.f32.gmra.mrb[0].mxu0 %v3641
      %v3763 = vpop.f32.mrb[0].mxu0
      %v3764 = vadd.f32 0.0, %v3763
      %v3765 = vpop.f32.mrb[0].mxu0
      %3766 = vmatprep.mubr.f32.mxu0 0.0
      %3767 = vmatmul.mubr.f32.gmra.mrb[0].mxu0 %v3644
      %v3768 = vpop.f32.mrb[0].mxu0
      %v3769 = vadd.f32 0.0, %v3768
      %v3770 = vpop.f32.mrb[0].mxu0
      %3771 = vmatprep.mubr.f32.mxu0 0.0
      %3772 = vmatmul.mubr.f32.gmra.mrb[0].mxu0 %v3647
      %v3773 = vpop.f32.mrb[0].mxu0
      %v3774 = vadd.f32 0.0, %v3773
      %v3775 = vpop.f32.mrb[0].mxu0
      %3776 = vmatprep.mubr.f32.mxu0 0.0
      %3777 = vmatmul.mubr.f32.gmra.mrb[0].mxu0 %v3650
      %v3778 = vpop.f32.mrb[0].mxu0
      %v3779 = vadd.f32 0.0, %v3778
      %v3780 = vpop.f32.mrb[0].mxu0
      %3781 = vmatprep.mubr.f32.mxu0 0.0
      %3782 = vmatmul.mubr.f32.gmra.mrb[0].mxu0 %v3653
      %v3783 = vpop.f32.mrb[0].mxu0
      %v3784 = vadd.f32 0.0, %v3783
      %v3785 = vpop.f32.mrb[0].mxu0
      %3786 = vmatprep.mubr.f32.mxu0 0.0
      %3787 = vmatmul.mubr.f32.gmra.mrb[0].mxu0 %v3656
      %v3788 = vpop.f32.mrb[0].mxu0
      %v3789 = vadd.f32 0.0, %v3788
      %v3790 = vpop.f32.mrb[0].mxu0
      %3791 = vmatprep.mubr.f32.mxu0 0.0
      %3792 = vmatmul.mubr.f32.gmra.mrb[0].mxu0 %v3659
      %v3793 = vpop.f32.mrb[0].mxu0
      %v3794 = vadd.f32 0.0, %v3793
      %v3795 = vpop.f32.mrb[0].mxu0
      %3796 = vmatprep.mubr.f32.mxu0 0.0
      %3797 = vmatmul.mubr.f32.gmra.mrb[0].mxu0 %v3662
      %v3798 = vpop.f32.mrb[0].mxu0
      %v3799 = vadd.f32 0.0, %v3798
      %v3800 = vpop.f32.mrb[0].mxu0
      %3801 = vmatprep.mubr.f32.mxu0 0.0
      %3802 = vmatmul.mubr.f32.gmra.mrb[0].mxu0 %v3665
      %v3803 = vpop.f32.mrb[0].mxu0
      %v3804 = vadd.f32 0.0, %v3803
      %v3805 = vpop.f32.mrb[0].mxu0
      %3806 = vmatprep.mubr.f32.mxu0 0.0
      %3807 = vmatmul.mubr.f32.gmra.mrb[0].mxu0 %v3668
      %v3808 = vpop.f32.mrb[0].mxu0
      %v3809 = vadd.f32 0.0, %v3808
      %v3810 = vpop.f32.mrb[0].mxu0
      %3811 = vmatprep.mubr.f32.mxu0 0.0
      %3812 = vmatmul.mubr.f32.gmra.mrb[0].mxu0 %v3671
      %v3813 = vpop.f32.mrb[0].mxu0
      %v3814 = vadd.f32 0.0, %v3813
      %v3815 = vpop.f32.mrb[0].mxu0
      %3816 = vmatprep.mubr.f32.mxu0 0.0
      %3817 = vmatmul.mubr.f32.gmra.mrb[0].mxu0 %v3674
      %v3818 = vpop.f32.mrb[0].mxu0
      %v3819 = vadd.f32 0.0, %v3818
      %v3820 = vpop.f32.mrb[0].mxu0
      %3821 = vmatprep.mubr.f32.mxu0 0.0
      %3822 = vmatmul.mubr.f32.gmra.mrb[0].mxu0 %v3677
      %v3823 = vpop.f32.mrb[0].mxu0
      %v3824 = vadd.f32 0.0, %v3823
      %v3825 = vpop.f32.mrb[0].mxu0
      %3826 = vdwg.mxu0
      %v3827 = vadd.f32 %v3581, %v3749
      %v3828 = vadd.f32 %v3582, %v3754
      %v3829 = vadd.f32 %v3583, %v3759
      %v3830 = vadd.f32 %v3584, %v3764
      %v3831 = vadd.f32 %v3585, %v3769
      %v3832 = vadd.f32 %v3586, %v3774
      %v3833 = vadd.f32 %v3587, %v3779
      %v3834 = vadd.f32 %v3588, %v3784
      %v3835 = vadd.f32 %v3589, %v3789
      %v3836 = vadd.f32 %v3590, %v3794
      %v3837 = vadd.f32 %v3591, %v3799
      %v3838 = vadd.f32 %v3592, %v3804
      %v3839 = vadd.f32 %v3593, %v3809
      %v3840 = vadd.f32 %v3594, %v3814
      %v3841 = vadd.f32 %v3595, %v3819
      %v3842 = vadd.f32 %v3596, %v3824
      %v3844 = vsel %vm712, %v3615, 0
      %v3847 = vsel %vm712, %v3616, 0
      %v3850 = vsel %vm712, %v3617, 0
      %v3853 = vsel %vm712, %v3618, 0
      %v3856 = vsel %vm712, %v3619, 0
      %v3859 = vsel %vm712, %v3620, 0
      %v3862 = vsel %vm712, %v3621, 0
      %v3865 = vsel %vm712, %v3622, 0
      %v3868 = vsel %vm712, %v3623, 0
      %v3871 = vsel %vm712, %v3624, 0
      %v3874 = vsel %vm712, %v3625, 0
      %v3877 = vsel %vm712, %v3626, 0
      %v3880 = vsel %vm712, %v3627, 0
      %v3883 = vsel %vm712, %v3628, 0
      %v3886 = vsel %vm712, %v3629, 0
      %v3889 = vsel %vm712, %v3630, 0
      %v3892 = vsel %vm972, %v889, 0
      %3894 = vmatprep.subr.mxu0 0.0
      %3895 = vmatpush1.msra.mxu0 %v3892
      %3896 = vmatprep.subr.mxu0 0.0
      %3897 = vmatpush1.msra.mxu0 0.0
      %3898 = vmatprep.subr.mxu0 0.0
      %3899 = vmatpush1.msra.mxu0 0.0
      %3900 = vmatprep.subr.mxu0 0.0
      %3901 = vmatpush1.msra.mxu0 0.0
      %3902 = vmatprep.subr.mxu0 0.0
      %3903 = vmatpush1.msra.mxu0 0.0
      %3904 = vmatprep.subr.mxu0 0.0
      %3905 = vmatpush1.msra.mxu0 0.0
      %3906 = vmatprep.subr.mxu0 0.0
      %3907 = vmatpush1.msra.mxu0 0.0
      %3908 = vmatprep.subr.mxu0 0.0
      %3909 = vmatpush1.msra.mxu0 0.0
      %3910 = vmatprep.subr.mxu0 0.0
      %3911 = vmatpush1.msra.mxu0 0.0
      %3912 = vmatprep.subr.mxu0 0.0
      %3913 = vmatpush1.msra.mxu0 0.0
      %3914 = vmatprep.subr.mxu0 0.0
      %3915 = vmatpush1.msra.mxu0 0.0
      %3916 = vmatprep.subr.mxu0 0.0
      %3917 = vmatpush1.msra.mxu0 0.0
      %3918 = vmatprep.subr.mxu0 0.0
      %3919 = vmatpush1.msra.mxu0 0.0
      %3920 = vmatprep.subr.mxu0 0.0
      %3921 = vmatpush1.msra.mxu0 0.0
      %3922 = vmatprep.subr.mxu0 0.0
      %3923 = vmatpush1.msra.mxu0 0.0
      %3924 = vmatprep.subr.mxu0 0.0
      %3925 = vmatpush1.msra.mxu0 0.0
      %3926 = vmatprep.subr.mxu0 0.0
      %3927 = vmatpush1.msra.mxu0 0.0
      %3928 = vmatprep.subr.mxu0 0.0
      %3929 = vmatpush1.msra.mxu0 0.0
      %3930 = vmatprep.subr.mxu0 0.0
      %3931 = vmatpush1.msra.mxu0 0.0
      %3932 = vmatprep.subr.mxu0 0.0
      %3933 = vmatpush1.msra.mxu0 0.0
      %3934 = vmatprep.subr.mxu0 0.0
      %3935 = vmatpush1.msra.mxu0 0.0
      %3936 = vmatprep.subr.mxu0 0.0
      %3937 = vmatpush1.msra.mxu0 0.0
      %3938 = vmatprep.subr.mxu0 0.0
      %3939 = vmatpush1.msra.mxu0 0.0
      %3940 = vmatprep.subr.mxu0 0.0
      %3941 = vmatpush1.msra.mxu0 0.0
      %3942 = vmatprep.subr.mxu0 0.0
      %3943 = vmatpush1.msra.mxu0 0.0
      %3944 = vmatprep.subr.mxu0 0.0
      %3945 = vmatpush1.msra.mxu0 0.0
      %3946 = vmatprep.subr.mxu0 0.0
      %3947 = vmatpush1.msra.mxu0 0.0
      %3948 = vmatprep.subr.mxu0 0.0
      %3949 = vmatpush1.msra.mxu0 0.0
      %3950 = vmatprep.subr.mxu0 0.0
      %3951 = vmatpush1.msra.mxu0 0.0
      %3952 = vmatprep.subr.mxu0 0.0
      %3953 = vmatpush1.msra.mxu0 0.0
      %3954 = vmatprep.subr.mxu0 0.0
      %3955 = vmatpush1.msra.mxu0 0.0
      %3956 = vmatprep.subr.mxu0 0.0
      %3957 = vmatpush1.msra.mxu0 0.0
      %3958 = vmatprep.mubr.f32.mxu0 0.0
      %3959 = vmatmul.mubr.f32.gmra.mrb[0].mxu0 %v3844
      %v3960 = vpop.f32.mrb[0].mxu0
      %v3961 = vadd.f32 0.0, %v3960
      %v3962 = vpop.f32.mrb[0].mxu0
      %3963 = vmatprep.mubr.f32.mxu0 0.0
      %3964 = vmatmul.mubr.f32.gmra.mrb[0].mxu0 %v3847
      %v3965 = vpop.f32.mrb[0].mxu0
      %v3966 = vadd.f32 0.0, %v3965
      %v3967 = vpop.f32.mrb[0].mxu0
      %3968 = vmatprep.mubr.f32.mxu0 0.0
      %3969 = vmatmul.mubr.f32.gmra.mrb[0].mxu0 %v3850
      %v3970 = vpop.f32.mrb[0].mxu0
      %v3971 = vadd.f32 0.0, %v3970
      %v3972 = vpop.f32.mrb[0].mxu0
      %3973 = vmatprep.mubr.f32.mxu0 0.0
      %3974 = vmatmul.mubr.f32.gmra.mrb[0].mxu0 %v3853
      %v3975 = vpop.f32.mrb[0].mxu0
      %v3976 = vadd.f32 0.0, %v3975
      %v3977 = vpop.f32.mrb[0].mxu0
      %3978 = vmatprep.mubr.f32.mxu0 0.0
      %3979 = vmatmul.mubr.f32.gmra.mrb[0].mxu0 %v3856
      %v3980 = vpop.f32.mrb[0].mxu0
      %v3981 = vadd.f32 0.0, %v3980
      %v3982 = vpop.f32.mrb[0].mxu0
      %3983 = vmatprep.mubr.f32.mxu0 0.0
      %3984 = vmatmul.mubr.f32.gmra.mrb[0].mxu0 %v3859
      %v3985 = vpop.f32.mrb[0].mxu0
      %v3986 = vadd.f32 0.0, %v3985
      %v3987 = vpop.f32.mrb[0].mxu0
      %3988 = vmatprep.mubr.f32.mxu0 0.0
      %3989 = vmatmul.mubr.f32.gmra.mrb[0].mxu0 %v3862
      %v3990 = vpop.f32.mrb[0].mxu0
      %v3991 = vadd.f32 0.0, %v3990
      %v3992 = vpop.f32.mrb[0].mxu0
      %3993 = vmatprep.mubr.f32.mxu0 0.0
      %3994 = vmatmul.mubr.f32.gmra.mrb[0].mxu0 %v3865
      %v3995 = vpop.f32.mrb[0].mxu0
      %v3996 = vadd.f32 0.0, %v3995
      %v3997 = vpop.f32.mrb[0].mxu0
      %3998 = vmatprep.mubr.f32.mxu0 0.0
      %3999 = vmatmul.mubr.f32.gmra.mrb[0].mxu0 %v3868
      %v4000 = vpop.f32.mrb[0].mxu0
      %v4001 = vadd.f32 0.0, %v4000
      %v4002 = vpop.f32.mrb[0].mxu0
      %4003 = vmatprep.mubr.f32.mxu0 0.0
      %4004 = vmatmul.mubr.f32.gmra.mrb[0].mxu0 %v3871
      %v4005 = vpop.f32.mrb[0].mxu0
      %v4006 = vadd.f32 0.0, %v4005
      %v4007 = vpop.f32.mrb[0].mxu0
      %4008 = vmatprep.mubr.f32.mxu0 0.0
      %4009 = vmatmul.mubr.f32.gmra.mrb[0].mxu0 %v3874
      %v4010 = vpop.f32.mrb[0].mxu0
      %v4011 = vadd.f32 0.0, %v4010
      %v4012 = vpop.f32.mrb[0].mxu0
      %4013 = vmatprep.mubr.f32.mxu0 0.0
      %4014 = vmatmul.mubr.f32.gmra.mrb[0].mxu0 %v3877
      %v4015 = vpop.f32.mrb[0].mxu0
      %v4016 = vadd.f32 0.0, %v4015
      %v4017 = vpop.f32.mrb[0].mxu0
      %4018 = vmatprep.mubr.f32.mxu0 0.0
      %4019 = vmatmul.mubr.f32.gmra.mrb[0].mxu0 %v3880
      %v4020 = vpop.f32.mrb[0].mxu0
      %v4021 = vadd.f32 0.0, %v4020
      %v4022 = vpop.f32.mrb[0].mxu0
      %4023 = vmatprep.mubr.f32.mxu0 0.0
      %4024 = vmatmul.mubr.f32.gmra.mrb[0].mxu0 %v3883
      %v4025 = vpop.f32.mrb[0].mxu0
      %v4026 = vadd.f32 0.0, %v4025
      %v4027 = vpop.f32.mrb[0].mxu0
      %4028 = vmatprep.mubr.f32.mxu0 0.0
      %4029 = vmatmul.mubr.f32.gmra.mrb[0].mxu0 %v3886
      %v4030 = vpop.f32.mrb[0].mxu0
      %v4031 = vadd.f32 0.0, %v4030
      %v4032 = vpop.f32.mrb[0].mxu0
      %4033 = vmatprep.mubr.f32.mxu0 0.0
      %4034 = vmatmul.mubr.f32.gmra.mrb[0].mxu0 %v3889
      %v4035 = vpop.f32.mrb[0].mxu0
      %v4036 = vadd.f32 0.0, %v4035
      %v4037 = vpop.f32.mrb[0].mxu0
      %4038 = vdwg.mxu0
      %v4039 = vadd.f32 %v3827, %v3961
      %v4040 = vadd.f32 %v3828, %v3966
      %v4041 = vadd.f32 %v3829, %v3971
      %v4042 = vadd.f32 %v3830, %v3976
      %v4043 = vadd.f32 %v3831, %v3981
      %v4044 = vadd.f32 %v3832, %v3986
      %v4045 = vadd.f32 %v3833, %v3991
      %v4046 = vadd.f32 %v3834, %v3996
      %v4047 = vadd.f32 %v3835, %v4001
      %v4048 = vadd.f32 %v3836, %v4006
      %v4049 = vadd.f32 %v3837, %v4011
      %v4050 = vadd.f32 %v3838, %v4016
      %v4051 = vadd.f32 %v3839, %v4021
      %v4052 = vadd.f32 %v3840, %v4026
      %v4053 = vadd.f32 %v3841, %v4031
      %v4054 = vadd.f32 %v3842, %v4036
      %v4055 = vld [vmem:[%s3597 + $0x1] sm:$0xff]
      %v4056 = vld [vmem:[%s3597 + $0x9] sm:$0xff]
      %v4057 = vld [vmem:[%s3597 + $0x19] sm:$0xff]
      %v4058 = vld [vmem:[%s3597 + $0x21] sm:$0xff]
      %v4059 = vld [vmem:[%s3597 + $0x31] sm:$0xff]
      %v4060 = vld [vmem:[%s3597 + $0x39] sm:$0xff]
      %v4061 = vld [vmem:[%s3597 + $0x49] sm:$0xff]
      %v4062 = vld [vmem:[%s3597 + $0x51] sm:$0xff]
      %v4063 = vld [vmem:[%s3597 + $0x61] sm:$0xff]
      %v4064 = vld [vmem:[%s3597 + $0x69] sm:$0xff]
      %v4065 = vld [vmem:[%s3597 + $0x79] sm:$0xff]
      %v4066 = vld [vmem:[%s3597 + $0x81] sm:$0xff]
      %v4067 = vld [vmem:[%s3597 + $0x91] sm:$0xff]
      %v4068 = vld [vmem:[%s3597 + $0x99] sm:$0xff]
      %v4069 = vld [vmem:[%s3597 + $0xa9] sm:$0xff]
      %v4070 = vld [vmem:[%s3597 + $0xb1] sm:$0xff]
      %v4071 = vld [vmem:[%s3614 + $0x1] sm:$0xff]
      %v4072 = vld [vmem:[%s3614 + $0x9] sm:$0xff]
      %v4073 = vld [vmem:[%s3614 + $0x19] sm:$0xff]
      %v4074 = vld [vmem:[%s3614 + $0x21] sm:$0xff]
      %v4075 = vld [vmem:[%s3614 + $0x31] sm:$0xff]
      %v4076 = vld [vmem:[%s3614 + $0x39] sm:$0xff]
      %v4077 = vld [vmem:[%s3614 + $0x49] sm:$0xff]
      %v4078 = vld [vmem:[%s3614 + $0x51] sm:$0xff]
      %v4079 = vld [vmem:[%s3614 + $0x61] sm:$0xff]
      %v4080 = vld [vmem:[%s3614 + $0x69] sm:$0xff]
      %v4081 = vld [vmem:[%s3614 + $0x79] sm:$0xff]
      %v4082 = vld [vmem:[%s3614 + $0x81] sm:$0xff]
      %v4083 = vld [vmem:[%s3614 + $0x91] sm:$0xff]
      %v4084 = vld [vmem:[%s3614 + $0x99] sm:$0xff]
      %v4085 = vld [vmem:[%s3614 + $0xa9] sm:$0xff]
      %v4086 = vld [vmem:[%s3614 + $0xb1] sm:$0xff]
      %v4088 = vsel %vm712, %v4055, 0
      %v4091 = vsel %vm712, %v4056, 0
      %v4094 = vsel %vm712, %v4057, 0
      %v4097 = vsel %vm712, %v4058, 0
      %v4100 = vsel %vm712, %v4059, 0
      %v4103 = vsel %vm712, %v4060, 0
      %v4106 = vsel %vm712, %v4061, 0
      %v4109 = vsel %vm712, %v4062, 0
      %v4112 = vsel %vm712, %v4063, 0
      %v4115 = vsel %vm712, %v4064, 0
      %v4118 = vsel %vm712, %v4065, 0
      %v4121 = vsel %vm712, %v4066, 0
      %v4124 = vsel %vm712, %v4067, 0
      %v4127 = vsel %vm712, %v4068, 0
      %v4130 = vsel %vm712, %v4069, 0
      %v4133 = vsel %vm712, %v4070, 0
      %v4136 = vsel %vm972, %v881, 0
      %4138 = vmatprep.subr.mxu0 0.0
      %4139 = vmatpush1.msra.mxu0 %v4136
      %4140 = vmatprep.subr.mxu0 0.0
      %4141 = vmatpush1.msra.mxu0 0.0
      %4142 = vmatprep.subr.mxu0 0.0
      %4143 = vmatpush1.msra.mxu0 0.0
      %4144 = vmatprep.subr.mxu0 0.0
      %4145 = vmatpush1.msra.mxu0 0.0
      %4146 = vmatprep.subr.mxu0 0.0
      %4147 = vmatpush1.msra.mxu0 0.0
      %4148 = vmatprep.subr.mxu0 0.0
      %4149 = vmatpush1.msra.mxu0 0.0
      %4150 = vmatprep.subr.mxu0 0.0
      %4151 = vmatpush1.msra.mxu0 0.0
      %4152 = vmatprep.subr.mxu0 0.0
      %4153 = vmatpush1.msra.mxu0 0.0
      %4154 = vmatprep.subr.mxu0 0.0
      %4155 = vmatpush1.msra.mxu0 0.0
      %4156 = vmatprep.subr.mxu0 0.0
      %4157 = vmatpush1.msra.mxu0 0.0
      %4158 = vmatprep.subr.mxu0 0.0
      %4159 = vmatpush1.msra.mxu0 0.0
      %4160 = vmatprep.subr.mxu0 0.0
      %4161 = vmatpush1.msra.mxu0 0.0
      %4162 = vmatprep.subr.mxu0 0.0
      %4163 = vmatpush1.msra.mxu0 0.0
      %4164 = vmatprep.subr.mxu0 0.0
      %4165 = vmatpush1.msra.mxu0 0.0
      %4166 = vmatprep.subr.mxu0 0.0
      %4167 = vmatpush1.msra.mxu0 0.0
      %4168 = vmatprep.subr.mxu0 0.0
      %4169 = vmatpush1.msra.mxu0 0.0
      %4170 = vmatprep.subr.mxu0 0.0
      %4171 = vmatpush1.msra.mxu0 0.0
      %4172 = vmatprep.subr.mxu0 0.0
      %4173 = vmatpush1.msra.mxu0 0.0
      %4174 = vmatprep.subr.mxu0 0.0
      %4175 = vmatpush1.msra.mxu0 0.0
      %4176 = vmatprep.subr.mxu0 0.0
      %4177 = vmatpush1.msra.mxu0 0.0
      %4178 = vmatprep.subr.mxu0 0.0
      %4179 = vmatpush1.msra.mxu0 0.0
      %4180 = vmatprep.subr.mxu0 0.0
      %4181 = vmatpush1.msra.mxu0 0.0
      %4182 = vmatprep.subr.mxu0 0.0
      %4183 = vmatpush1.msra.mxu0 0.0
      %4184 = vmatprep.subr.mxu0 0.0
      %4185 = vmatpush1.msra.mxu0 0.0
      %4186 = vmatprep.subr.mxu0 0.0
      %4187 = vmatpush1.msra.mxu0 0.0
      %4188 = vmatprep.subr.mxu0 0.0
      %4189 = vmatpush1.msra.mxu0 0.0
      %4190 = vmatprep.subr.mxu0 0.0
      %4191 = vmatpush1.msra.mxu0 0.0
      %4192 = vmatprep.subr.mxu0 0.0
      %4193 = vmatpush1.msra.mxu0 0.0
      %4194 = vmatprep.subr.mxu0 0.0
      %4195 = vmatpush1.msra.mxu0 0.0
      %4196 = vmatprep.subr.mxu0 0.0
      %4197 = vmatpush1.msra.mxu0 0.0
      %4198 = vmatprep.subr.mxu0 0.0
      %4199 = vmatpush1.msra.mxu0 0.0
      %4200 = vmatprep.subr.mxu0 0.0
      %4201 = vmatpush1.msra.mxu0 0.0
      %4202 = vmatprep.mubr.f32.mxu0 0.0
      %4203 = vmatmul.mubr.f32.gmra.mrb[0].mxu0 %v4088
      %v4204 = vpop.f32.mrb[0].mxu0
      %v4205 = vadd.f32 0.0, %v4204
      %v4206 = vpop.f32.mrb[0].mxu0
      %4207 = vmatprep.mubr.f32.mxu0 0.0
      %4208 = vmatmul.mubr.f32.gmra.mrb[0].mxu0 %v4091
      %v4209 = vpop.f32.mrb[0].mxu0
      %v4210 = vadd.f32 0.0, %v4209
      %v4211 = vpop.f32.mrb[0].mxu0
      %4212 = vmatprep.mubr.f32.mxu0 0.0
      %4213 = vmatmul.mubr.f32.gmra.mrb[0].mxu0 %v4094
      %v4214 = vpop.f32.mrb[0].mxu0
      %v4215 = vadd.f32 0.0, %v4214
      %v4216 = vpop.f32.mrb[0].mxu0
      %4217 = vmatprep.mubr.f32.mxu0 0.0
      %4218 = vmatmul.mubr.f32.gmra.mrb[0].mxu0 %v4097
      %v4219 = vpop.f32.mrb[0].mxu0
      %v4220 = vadd.f32 0.0, %v4219
      %v4221 = vpop.f32.mrb[0].mxu0
      %4222 = vmatprep.mubr.f32.mxu0 0.0
      %4223 = vmatmul.mubr.f32.gmra.mrb[0].mxu0 %v4100
      %v4224 = vpop.f32.mrb[0].mxu0
      %v4225 = vadd.f32 0.0, %v4224
      %v4226 = vpop.f32.mrb[0].mxu0
      %4227 = vmatprep.mubr.f32.mxu0 0.0
      %4228 = vmatmul.mubr.f32.gmra.mrb[0].mxu0 %v4103
      %v4229 = vpop.f32.mrb[0].mxu0
      %v4230 = vadd.f32 0.0, %v4229
      %v4231 = vpop.f32.mrb[0].mxu0
      %4232 = vmatprep.mubr.f32.mxu0 0.0
      %4233 = vmatmul.mubr.f32.gmra.mrb[0].mxu0 %v4106
      %v4234 = vpop.f32.mrb[0].mxu0
      %v4235 = vadd.f32 0.0, %v4234
      %v4236 = vpop.f32.mrb[0].mxu0
      %4237 = vmatprep.mubr.f32.mxu0 0.0
      %4238 = vmatmul.mubr.f32.gmra.mrb[0].mxu0 %v4109
      %v4239 = vpop.f32.mrb[0].mxu0
      %v4240 = vadd.f32 0.0, %v4239
      %v4241 = vpop.f32.mrb[0].mxu0
      %4242 = vmatprep.mubr.f32.mxu0 0.0
      %4243 = vmatmul.mubr.f32.gmra.mrb[0].mxu0 %v4112
      %v4244 = vpop.f32.mrb[0].mxu0
      %v4245 = vadd.f32 0.0, %v4244
      %v4246 = vpop.f32.mrb[0].mxu0
      %4247 = vmatprep.mubr.f32.mxu0 0.0
      %4248 = vmatmul.mubr.f32.gmra.mrb[0].mxu0 %v4115
      %v4249 = vpop.f32.mrb[0].mxu0
      %v4250 = vadd.f32 0.0, %v4249
      %v4251 = vpop.f32.mrb[0].mxu0
      %4252 = vmatprep.mubr.f32.mxu0 0.0
      %4253 = vmatmul.mubr.f32.gmra.mrb[0].mxu0 %v4118
      %v4254 = vpop.f32.mrb[0].mxu0
      %v4255 = vadd.f32 0.0, %v4254
      %v4256 = vpop.f32.mrb[0].mxu0
      %4257 = vmatprep.mubr.f32.mxu0 0.0
      %4258 = vmatmul.mubr.f32.gmra.mrb[0].mxu0 %v4121
      %v4259 = vpop.f32.mrb[0].mxu0
      %v4260 = vadd.f32 0.0, %v4259
      %v4261 = vpop.f32.mrb[0].mxu0
      %4262 = vmatprep.mubr.f32.mxu0 0.0
      %4263 = vmatmul.mubr.f32.gmra.mrb[0].mxu0 %v4124
      %v4264 = vpop.f32.mrb[0].mxu0
      %v4265 = vadd.f32 0.0, %v4264
      %v4266 = vpop.f32.mrb[0].mxu0
      %4267 = vmatprep.mubr.f32.mxu0 0.0
      %4268 = vmatmul.mubr.f32.gmra.mrb[0].mxu0 %v4127
      %v4269 = vpop.f32.mrb[0].mxu0
      %v4270 = vadd.f32 0.0, %v4269
      %v4271 = vpop.f32.mrb[0].mxu0
      %4272 = vmatprep.mubr.f32.mxu0 0.0
      %4273 = vmatmul.mubr.f32.gmra.mrb[0].mxu0 %v4130
      %v4274 = vpop.f32.mrb[0].mxu0
      %v4275 = vadd.f32 0.0, %v4274
      %v4276 = vpop.f32.mrb[0].mxu0
      %4277 = vmatprep.mubr.f32.mxu0 0.0
      %4278 = vmatmul.mubr.f32.gmra.mrb[0].mxu0 %v4133
      %v4279 = vpop.f32.mrb[0].mxu0
      %v4280 = vadd.f32 0.0, %v4279
      %v4281 = vpop.f32.mrb[0].mxu0
      %4282 = vdwg.mxu0
      %v4283 = vadd.f32 %v4039, %v4205
      %v4284 = vadd.f32 %v4040, %v4210
      %v4285 = vadd.f32 %v4041, %v4215
      %v4286 = vadd.f32 %v4042, %v4220
      %v4287 = vadd.f32 %v4043, %v4225
      %v4288 = vadd.f32 %v4044, %v4230
      %v4289 = vadd.f32 %v4045, %v4235
      %v4290 = vadd.f32 %v4046, %v4240
      %v4291 = vadd.f32 %v4047, %v4245
      %v4292 = vadd.f32 %v4048, %v4250
      %v4293 = vadd.f32 %v4049, %v4255
      %v4294 = vadd.f32 %v4050, %v4260
      %v4295 = vadd.f32 %v4051, %v4265
      %v4296 = vadd.f32 %v4052, %v4270
      %v4297 = vadd.f32 %v4053, %v4275
      %v4298 = vadd.f32 %v4054, %v4280
      %v4300 = vsel %vm712, %v4071, 0
      %v4303 = vsel %vm712, %v4072, 0
      %v4306 = vsel %vm712, %v4073, 0
      %v4309 = vsel %vm712, %v4074, 0
      %v4312 = vsel %vm712, %v4075, 0
      %v4315 = vsel %vm712, %v4076, 0
      %v4318 = vsel %vm712, %v4077, 0
      %v4321 = vsel %vm712, %v4078, 0
      %v4324 = vsel %vm712, %v4079, 0
      %v4327 = vsel %vm712, %v4080, 0
      %v4330 = vsel %vm712, %v4081, 0
      %v4333 = vsel %vm712, %v4082, 0
      %v4336 = vsel %vm712, %v4083, 0
      %v4339 = vsel %vm712, %v4084, 0
      %v4342 = vsel %vm712, %v4085, 0
      %v4345 = vsel %vm712, %v4086, 0
      %v4348 = vsel %vm972, %v890, 0
      %4350 = vmatprep.subr.mxu0 0.0
      %4351 = vmatpush1.msra.mxu0 %v4348
      %4352 = vmatprep.subr.mxu0 0.0
      %4353 = vmatpush1.msra.mxu0 0.0
      %4354 = vmatprep.subr.mxu0 0.0
      %4355 = vmatpush1.msra.mxu0 0.0
      %4356 = vmatprep.subr.mxu0 0.0
      %4357 = vmatpush1.msra.mxu0 0.0
      %4358 = vmatprep.subr.mxu0 0.0
      %4359 = vmatpush1.msra.mxu0 0.0
      %4360 = vmatprep.subr.mxu0 0.0
      %4361 = vmatpush1.msra.mxu0 0.0
      %4362 = vmatprep.subr.mxu0 0.0
      %4363 = vmatpush1.msra.mxu0 0.0
      %4364 = vmatprep.subr.mxu0 0.0
      %4365 = vmatpush1.msra.mxu0 0.0
      %4366 = vmatprep.subr.mxu0 0.0
      %4367 = vmatpush1.msra.mxu0 0.0
      %4368 = vmatprep.subr.mxu0 0.0
      %4369 = vmatpush1.msra.mxu0 0.0
      %4370 = vmatprep.subr.mxu0 0.0
      %4371 = vmatpush1.msra.mxu0 0.0
      %4372 = vmatprep.subr.mxu0 0.0
      %4373 = vmatpush1.msra.mxu0 0.0
      %4374 = vmatprep.subr.mxu0 0.0
      %4375 = vmatpush1.msra.mxu0 0.0
      %4376 = vmatprep.subr.mxu0 0.0
      %4377 = vmatpush1.msra.mxu0 0.0
      %4378 = vmatprep.subr.mxu0 0.0
      %4379 = vmatpush1.msra.mxu0 0.0
      %4380 = vmatprep.subr.mxu0 0.0
      %4381 = vmatpush1.msra.mxu0 0.0
      %4382 = vmatprep.subr.mxu0 0.0
      %4383 = vmatpush1.msra.mxu0 0.0
      %4384 = vmatprep.subr.mxu0 0.0
      %4385 = vmatpush1.msra.mxu0 0.0
      %4386 = vmatprep.subr.mxu0 0.0
      %4387 = vmatpush1.msra.mxu0 0.0
      %4388 = vmatprep.subr.mxu0 0.0
      %4389 = vmatpush1.msra.mxu0 0.0
      %4390 = vmatprep.subr.mxu0 0.0
      %4391 = vmatpush1.msra.mxu0 0.0
      %4392 = vmatprep.subr.mxu0 0.0
      %4393 = vmatpush1.msra.mxu0 0.0
      %4394 = vmatprep.subr.mxu0 0.0
      %4395 = vmatpush1.msra.mxu0 0.0
      %4396 = vmatprep.subr.mxu0 0.0
      %4397 = vmatpush1.msra.mxu0 0.0
      %4398 = vmatprep.subr.mxu0 0.0
      %4399 = vmatpush1.msra.mxu0 0.0
      %4400 = vmatprep.subr.mxu0 0.0
      %4401 = vmatpush1.msra.mxu0 0.0
      %4402 = vmatprep.subr.mxu0 0.0
      %4403 = vmatpush1.msra.mxu0 0.0
      %4404 = vmatprep.subr.mxu0 0.0
      %4405 = vmatpush1.msra.mxu0 0.0
      %4406 = vmatprep.subr.mxu0 0.0
      %4407 = vmatpush1.msra.mxu0 0.0
      %4408 = vmatprep.subr.mxu0 0.0
      %4409 = vmatpush1.msra.mxu0 0.0
      %4410 = vmatprep.subr.mxu0 0.0
      %4411 = vmatpush1.msra.mxu0 0.0
      %4412 = vmatprep.subr.mxu0 0.0
      %4413 = vmatpush1.msra.mxu0 0.0
      %4414 = vmatprep.mubr.f32.mxu0 0.0
      %4415 = vmatmul.mubr.f32.gmra.mrb[0].mxu0 %v4300
      %v4416 = vpop.f32.mrb[0].mxu0
      %v4417 = vadd.f32 0.0, %v4416
      %v4418 = vpop.f32.mrb[0].mxu0
      %4419 = vmatprep.mubr.f32.mxu0 0.0
      %4420 = vmatmul.mubr.f32.gmra.mrb[0].mxu0 %v4303
      %v4421 = vpop.f32.mrb[0].mxu0
      %v4422 = vadd.f32 0.0, %v4421
      %v4423 = vpop.f32.mrb[0].mxu0
      %4424 = vmatprep.mubr.f32.mxu0 0.0
      %4425 = vmatmul.mubr.f32.gmra.mrb[0].mxu0 %v4306
      %v4426 = vpop.f32.mrb[0].mxu0
      %v4427 = vadd.f32 0.0, %v4426
      %v4428 = vpop.f32.mrb[0].mxu0
      %4429 = vmatprep.mubr.f32.mxu0 0.0
      %4430 = vmatmul.mubr.f32.gmra.mrb[0].mxu0 %v4309
      %v4431 = vpop.f32.mrb[0].mxu0
      %v4432 = vadd.f32 0.0, %v4431
      %v4433 = vpop.f32.mrb[0].mxu0
      %4434 = vmatprep.mubr.f32.mxu0 0.0
      %4435 = vmatmul.mubr.f32.gmra.mrb[0].mxu0 %v4312
      %v4436 = vpop.f32.mrb[0].mxu0
      %v4437 = vadd.f32 0.0, %v4436
      %v4438 = vpop.f32.mrb[0].mxu0
      %4439 = vmatprep.mubr.f32.mxu0 0.0
      %4440 = vmatmul.mubr.f32.gmra.mrb[0].mxu0 %v4315
      %v4441 = vpop.f32.mrb[0].mxu0
      %v4442 = vadd.f32 0.0, %v4441
      %v4443 = vpop.f32.mrb[0].mxu0
      %4444 = vmatprep.mubr.f32.mxu0 0.0
      %4445 = vmatmul.mubr.f32.gmra.mrb[0].mxu0 %v4318
      %v4446 = vpop.f32.mrb[0].mxu0
      %v4447 = vadd.f32 0.0, %v4446
      %v4448 = vpop.f32.mrb[0].mxu0
      %4449 = vmatprep.mubr.f32.mxu0 0.0
      %4450 = vmatmul.mubr.f32.gmra.mrb[0].mxu0 %v4321
      %v4451 = vpop.f32.mrb[0].mxu0
      %v4452 = vadd.f32 0.0, %v4451
      %v4453 = vpop.f32.mrb[0].mxu0
      %4454 = vmatprep.mubr.f32.mxu0 0.0
      %4455 = vmatmul.mubr.f32.gmra.mrb[0].mxu0 %v4324
      %v4456 = vpop.f32.mrb[0].mxu0
      %v4457 = vadd.f32 0.0, %v4456
      %v4458 = vpop.f32.mrb[0].mxu0
      %4459 = vmatprep.mubr.f32.mxu0 0.0
      %4460 = vmatmul.mubr.f32.gmra.mrb[0].mxu0 %v4327
      %v4461 = vpop.f32.mrb[0].mxu0
      %v4462 = vadd.f32 0.0, %v4461
      %v4463 = vpop.f32.mrb[0].mxu0
      %4464 = vmatprep.mubr.f32.mxu0 0.0
      %4465 = vmatmul.mubr.f32.gmra.mrb[0].mxu0 %v4330
      %v4466 = vpop.f32.mrb[0].mxu0
      %v4467 = vadd.f32 0.0, %v4466
      %v4468 = vpop.f32.mrb[0].mxu0
      %4469 = vmatprep.mubr.f32.mxu0 0.0
      %4470 = vmatmul.mubr.f32.gmra.mrb[0].mxu0 %v4333
      %v4471 = vpop.f32.mrb[0].mxu0
      %v4472 = vadd.f32 0.0, %v4471
      %v4473 = vpop.f32.mrb[0].mxu0
      %4474 = vmatprep.mubr.f32.mxu0 0.0
      %4475 = vmatmul.mubr.f32.gmra.mrb[0].mxu0 %v4336
      %v4476 = vpop.f32.mrb[0].mxu0
      %v4477 = vadd.f32 0.0, %v4476
      %v4478 = vpop.f32.mrb[0].mxu0
      %4479 = vmatprep.mubr.f32.mxu0 0.0
      %4480 = vmatmul.mubr.f32.gmra.mrb[0].mxu0 %v4339
      %v4481 = vpop.f32.mrb[0].mxu0
      %v4482 = vadd.f32 0.0, %v4481
      %v4483 = vpop.f32.mrb[0].mxu0
      %4484 = vmatprep.mubr.f32.mxu0 0.0
      %4485 = vmatmul.mubr.f32.gmra.mrb[0].mxu0 %v4342
      %v4486 = vpop.f32.mrb[0].mxu0
      %v4487 = vadd.f32 0.0, %v4486
      %v4488 = vpop.f32.mrb[0].mxu0
      %4489 = vmatprep.mubr.f32.mxu0 0.0
      %4490 = vmatmul.mubr.f32.gmra.mrb[0].mxu0 %v4345
      %v4491 = vpop.f32.mrb[0].mxu0
      %v4492 = vadd.f32 0.0, %v4491
      %v4493 = vpop.f32.mrb[0].mxu0
      %4494 = vdwg.mxu0
      %v4495 = vadd.f32 %v4283, %v4417
      %v4496 = vadd.f32 %v4284, %v4422
      %v4497 = vadd.f32 %v4285, %v4427
      %v4498 = vadd.f32 %v4286, %v4432
      %v4499 = vadd.f32 %v4287, %v4437
      %v4500 = vadd.f32 %v4288, %v4442
      %v4501 = vadd.f32 %v4289, %v4447
      %v4502 = vadd.f32 %v4290, %v4452
      %v4503 = vadd.f32 %v4291, %v4457
      %v4504 = vadd.f32 %v4292, %v4462
      %v4505 = vadd.f32 %v4293, %v4467
      %v4506 = vadd.f32 %v4294, %v4472
      %v4507 = vadd.f32 %v4295, %v4477
      %v4508 = vadd.f32 %v4296, %v4482
      %v4509 = vadd.f32 %v4297, %v4487
      %v4510 = vadd.f32 %v4298, %v4492
      %v4511 = vld [vmem:[%s3597 + $0x2] sm:$0xff]
      %v4512 = vld [vmem:[%s3597 + $0xa] sm:$0xff]
      %v4513 = vld [vmem:[%s3597 + $0x1a] sm:$0xff]
      %v4514 = vld [vmem:[%s3597 + $0x22] sm:$0xff]
      %v4515 = vld [vmem:[%s3597 + $0x32] sm:$0xff]
      %v4516 = vld [vmem:[%s3597 + $0x3a] sm:$0xff]
      %v4517 = vld [vmem:[%s3597 + $0x4a] sm:$0xff]
      %v4518 = vld [vmem:[%s3597 + $0x52] sm:$0xff]
      %v4519 = vld [vmem:[%s3597 + $0x62] sm:$0xff]
      %v4520 = vld [vmem:[%s3597 + $0x6a] sm:$0xff]
      %v4521 = vld [vmem:[%s3597 + $0x7a] sm:$0xff]
      %v4522 = vld [vmem:[%s3597 + $0x82] sm:$0xff]
      %v4523 = vld [vmem:[%s3597 + $0x92] sm:$0xff]
      %v4524 = vld [vmem:[%s3597 + $0x9a] sm:$0xff]
      %v4525 = vld [vmem:[%s3597 + $0xaa] sm:$0xff]
      %v4526 = vld [vmem:[%s3597 + $0xb2] sm:$0xff]
      %v4527 = vld [vmem:[%s3614 + $0x2] sm:$0xff]
      %v4528 = vld [vmem:[%s3614 + $0xa] sm:$0xff]
      %v4529 = vld [vmem:[%s3614 + $0x1a] sm:$0xff]
      %v4530 = vld [vmem:[%s3614 + $0x22] sm:$0xff]
      %v4531 = vld [vmem:[%s3614 + $0x32] sm:$0xff]
      %v4532 = vld [vmem:[%s3614 + $0x3a] sm:$0xff]
      %v4533 = vld [vmem:[%s3614 + $0x4a] sm:$0xff]
      %v4534 = vld [vmem:[%s3614 + $0x52] sm:$0xff]
      %v4535 = vld [vmem:[%s3614 + $0x62] sm:$0xff]
      %v4536 = vld [vmem:[%s3614 + $0x6a] sm:$0xff]
      %v4537 = vld [vmem:[%s3614 + $0x7a] sm:$0xff]
      %v4538 = vld [vmem:[%s3614 + $0x82] sm:$0xff]
      %v4539 = vld [vmem:[%s3614 + $0x92] sm:$0xff]
      %v4540 = vld [vmem:[%s3614 + $0x9a] sm:$0xff]
      %v4541 = vld [vmem:[%s3614 + $0xaa] sm:$0xff]
      %v4542 = vld [vmem:[%s3614 + $0xb2] sm:$0xff]
      %v4544 = vsel %vm712, %v4511, 0
      %v4547 = vsel %vm712, %v4512, 0
      %v4550 = vsel %vm712, %v4513, 0
      %v4553 = vsel %vm712, %v4514, 0
      %v4556 = vsel %vm712, %v4515, 0
      %v4559 = vsel %vm712, %v4516, 0
      %v4562 = vsel %vm712, %v4517, 0
      %v4565 = vsel %vm712, %v4518, 0
      %v4568 = vsel %vm712, %v4519, 0
      %v4571 = vsel %vm712, %v4520, 0
      %v4574 = vsel %vm712, %v4521, 0
      %v4577 = vsel %vm712, %v4522, 0
      %v4580 = vsel %vm712, %v4523, 0
      %v4583 = vsel %vm712, %v4524, 0
      %v4586 = vsel %vm712, %v4525, 0
      %v4589 = vsel %vm712, %v4526, 0
      %v4592 = vsel %vm972, %v882, 0
      %4594 = vmatprep.subr.mxu0 0.0
      %4595 = vmatpush1.msra.mxu0 %v4592
      %4596 = vmatprep.subr.mxu0 0.0
      %4597 = vmatpush1.msra.mxu0 0.0
      %4598 = vmatprep.subr.mxu0 0.0
      %4599 = vmatpush1.msra.mxu0 0.0
      %4600 = vmatprep.subr.mxu0 0.0
      %4601 = vmatpush1.msra.mxu0 0.0
      %4602 = vmatprep.subr.mxu0 0.0
      %4603 = vmatpush1.msra.mxu0 0.0
      %4604 = vmatprep.subr.mxu0 0.0
      %4605 = vmatpush1.msra.mxu0 0.0
      %4606 = vmatprep.subr.mxu0 0.0
      %4607 = vmatpush1.msra.mxu0 0.0
      %4608 = vmatprep.subr.mxu0 0.0
      %4609 = vmatpush1.msra.mxu0 0.0
      %4610 = vmatprep.subr.mxu0 0.0
      %4611 = vmatpush1.msra.mxu0 0.0
      %4612 = vmatprep.subr.mxu0 0.0
      %4613 = vmatpush1.msra.mxu0 0.0
      %4614 = vmatprep.subr.mxu0 0.0
      %4615 = vmatpush1.msra.mxu0 0.0
      %4616 = vmatprep.subr.mxu0 0.0
      %4617 = vmatpush1.msra.mxu0 0.0
      %4618 = vmatprep.subr.mxu0 0.0
      %4619 = vmatpush1.msra.mxu0 0.0
      %4620 = vmatprep.subr.mxu0 0.0
      %4621 = vmatpush1.msra.mxu0 0.0
      %4622 = vmatprep.subr.mxu0 0.0
      %4623 = vmatpush1.msra.mxu0 0.0
      %4624 = vmatprep.subr.mxu0 0.0
      %4625 = vmatpush1.msra.mxu0 0.0
      %4626 = vmatprep.subr.mxu0 0.0
      %4627 = vmatpush1.msra.mxu0 0.0
      %4628 = vmatprep.subr.mxu0 0.0
      %4629 = vmatpush1.msra.mxu0 0.0
      %4630 = vmatprep.subr.mxu0 0.0
      %4631 = vmatpush1.msra.mxu0 0.0
      %4632 = vmatprep.subr.mxu0 0.0
      %4633 = vmatpush1.msra.mxu0 0.0
      %4634 = vmatprep.subr.mxu0 0.0
      %4635 = vmatpush1.msra.mxu0 0.0
      %4636 = vmatprep.subr.mxu0 0.0
      %4637 = vmatpush1.msra.mxu0 0.0
      %4638 = vmatprep.subr.mxu0 0.0
      %4639 = vmatpush1.msra.mxu0 0.0
      %4640 = vmatprep.subr.mxu0 0.0
      %4641 = vmatpush1.msra.mxu0 0.0
      %4642 = vmatprep.subr.mxu0 0.0
      %4643 = vmatpush1.msra.mxu0 0.0
      %4644 = vmatprep.subr.mxu0 0.0
      %4645 = vmatpush1.msra.mxu0 0.0
      %4646 = vmatprep.subr.mxu0 0.0
      %4647 = vmatpush1.msra.mxu0 0.0
      %4648 = vmatprep.subr.mxu0 0.0
      %4649 = vmatpush1.msra.mxu0 0.0
      %4650 = vmatprep.subr.mxu0 0.0
      %4651 = vmatpush1.msra.mxu0 0.0
      %4652 = vmatprep.subr.mxu0 0.0
      %4653 = vmatpush1.msra.mxu0 0.0
      %4654 = vmatprep.subr.mxu0 0.0
      %4655 = vmatpush1.msra.mxu0 0.0
      %4656 = vmatprep.subr.mxu0 0.0
      %4657 = vmatpush1.msra.mxu0 0.0
      %4658 = vmatprep.mubr.f32.mxu0 0.0
      %4659 = vmatmul.mubr.f32.gmra.mrb[0].mxu0 %v4544
      %v4660 = vpop.f32.mrb[0].mxu0
      %v4661 = vadd.f32 0.0, %v4660
      %v4662 = vpop.f32.mrb[0].mxu0
      %4663 = vmatprep.mubr.f32.mxu0 0.0
      %4664 = vmatmul.mubr.f32.gmra.mrb[0].mxu0 %v4547
      %v4665 = vpop.f32.mrb[0].mxu0
      %v4666 = vadd.f32 0.0, %v4665
      %v4667 = vpop.f32.mrb[0].mxu0
      %4668 = vmatprep.mubr.f32.mxu0 0.0
      %4669 = vmatmul.mubr.f32.gmra.mrb[0].mxu0 %v4550
      %v4670 = vpop.f32.mrb[0].mxu0
      %v4671 = vadd.f32 0.0, %v4670
      %v4672 = vpop.f32.mrb[0].mxu0
      %4673 = vmatprep.mubr.f32.mxu0 0.0
      %4674 = vmatmul.mubr.f32.gmra.mrb[0].mxu0 %v4553
      %v4675 = vpop.f32.mrb[0].mxu0
      %v4676 = vadd.f32 0.0, %v4675
      %v4677 = vpop.f32.mrb[0].mxu0
      %4678 = vmatprep.mubr.f32.mxu0 0.0
      %4679 = vmatmul.mubr.f32.gmra.mrb[0].mxu0 %v4556
      %v4680 = vpop.f32.mrb[0].mxu0
      %v4681 = vadd.f32 0.0, %v4680
      %v4682 = vpop.f32.mrb[0].mxu0
      %4683 = vmatprep.mubr.f32.mxu0 0.0
      %4684 = vmatmul.mubr.f32.gmra.mrb[0].mxu0 %v4559
      %v4685 = vpop.f32.mrb[0].mxu0
      %v4686 = vadd.f32 0.0, %v4685
      %v4687 = vpop.f32.mrb[0].mxu0
      %4688 = vmatprep.mubr.f32.mxu0 0.0
      %4689 = vmatmul.mubr.f32.gmra.mrb[0].mxu0 %v4562
      %v4690 = vpop.f32.mrb[0].mxu0
      %v4691 = vadd.f32 0.0, %v4690
      %v4692 = vpop.f32.mrb[0].mxu0
      %4693 = vmatprep.mubr.f32.mxu0 0.0
      %4694 = vmatmul.mubr.f32.gmra.mrb[0].mxu0 %v4565
      %v4695 = vpop.f32.mrb[0].mxu0
      %v4696 = vadd.f32 0.0, %v4695
      %v4697 = vpop.f32.mrb[0].mxu0
      %4698 = vmatprep.mubr.f32.mxu0 0.0
      %4699 = vmatmul.mubr.f32.gmra.mrb[0].mxu0 %v4568
      %v4700 = vpop.f32.mrb[0].mxu0
      %v4701 = vadd.f32 0.0, %v4700
      %v4702 = vpop.f32.mrb[0].mxu0
      %4703 = vmatprep.mubr.f32.mxu0 0.0
      %4704 = vmatmul.mubr.f32.gmra.mrb[0].mxu0 %v4571
      %v4705 = vpop.f32.mrb[0].mxu0
      %v4706 = vadd.f32 0.0, %v4705
      %v4707 = vpop.f32.mrb[0].mxu0
      %4708 = vmatprep.mubr.f32.mxu0 0.0
      %4709 = vmatmul.mubr.f32.gmra.mrb[0].mxu0 %v4574
      %v4710 = vpop.f32.mrb[0].mxu0
      %v4711 = vadd.f32 0.0, %v4710
      %v4712 = vpop.f32.mrb[0].mxu0
      %4713 = vmatprep.mubr.f32.mxu0 0.0
      %4714 = vmatmul.mubr.f32.gmra.mrb[0].mxu0 %v4577
      %v4715 = vpop.f32.mrb[0].mxu0
      %v4716 = vadd.f32 0.0, %v4715
      %v4717 = vpop.f32.mrb[0].mxu0
      %4718 = vmatprep.mubr.f32.mxu0 0.0
      %4719 = vmatmul.mubr.f32.gmra.mrb[0].mxu0 %v4580
      %v4720 = vpop.f32.mrb[0].mxu0
      %v4721 = vadd.f32 0.0, %v4720
      %v4722 = vpop.f32.mrb[0].mxu0
      %4723 = vmatprep.mubr.f32.mxu0 0.0
      %4724 = vmatmul.mubr.f32.gmra.mrb[0].mxu0 %v4583
      %v4725 = vpop.f32.mrb[0].mxu0
      %v4726 = vadd.f32 0.0, %v4725
      %v4727 = vpop.f32.mrb[0].mxu0
      %4728 = vmatprep.mubr.f32.mxu0 0.0
      %4729 = vmatmul.mubr.f32.gmra.mrb[0].mxu0 %v4586
      %v4730 = vpop.f32.mrb[0].mxu0
      %v4731 = vadd.f32 0.0, %v4730
      %v4732 = vpop.f32.mrb[0].mxu0
      %4733 = vmatprep.mubr.f32.mxu0 0.0
      %4734 = vmatmul.mubr.f32.gmra.mrb[0].mxu0 %v4589
      %v4735 = vpop.f32.mrb[0].mxu0
      %v4736 = vadd.f32 0.0, %v4735
      %v4737 = vpop.f32.mrb[0].mxu0
      %4738 = vdwg.mxu0
      %v4739 = vadd.f32 %v4495, %v4661
      %v4740 = vadd.f32 %v4496, %v4666
      %v4741 = vadd.f32 %v4497, %v4671
      %v4742 = vadd.f32 %v4498, %v4676
      %v4743 = vadd.f32 %v4499, %v4681
      %v4744 = vadd.f32 %v4500, %v4686
      %v4745 = vadd.f32 %v4501, %v4691
      %v4746 = vadd.f32 %v4502, %v4696
      %v4747 = vadd.f32 %v4503, %v4701
      %v4748 = vadd.f32 %v4504, %v4706
      %v4749 = vadd.f32 %v4505, %v4711
      %v4750 = vadd.f32 %v4506, %v4716
      %v4751 = vadd.f32 %v4507, %v4721
      %v4752 = vadd.f32 %v4508, %v4726
      %v4753 = vadd.f32 %v4509, %v4731
      %v4754 = vadd.f32 %v4510, %v4736
      %v4756 = vsel %vm712, %v4527, 0
      %v4759 = vsel %vm712, %v4528, 0
      %v4762 = vsel %vm712, %v4529, 0
      %v4765 = vsel %vm712, %v4530, 0
      %v4768 = vsel %vm712, %v4531, 0
      %v4771 = vsel %vm712, %v4532, 0
      %v4774 = vsel %vm712, %v4533, 0
      %v4777 = vsel %vm712, %v4534, 0
      %v4780 = vsel %vm712, %v4535, 0
      %v4783 = vsel %vm712, %v4536, 0
      %v4786 = vsel %vm712, %v4537, 0
      %v4789 = vsel %vm712, %v4538, 0
      %v4792 = vsel %vm712, %v4539, 0
      %v4795 = vsel %vm712, %v4540, 0
      %v4798 = vsel %vm712, %v4541, 0
      %v4801 = vsel %vm712, %v4542, 0
      %v4804 = vsel %vm972, %v891, 0
      %4806 = vmatprep.subr.mxu0 0.0
      %4807 = vmatpush1.msra.mxu0 %v4804
      %4808 = vmatprep.subr.mxu0 0.0
      %4809 = vmatpush1.msra.mxu0 0.0
      %4810 = vmatprep.subr.mxu0 0.0
      %4811 = vmatpush1.msra.mxu0 0.0
      %4812 = vmatprep.subr.mxu0 0.0
      %4813 = vmatpush1.msra.mxu0 0.0
      %4814 = vmatprep.subr.mxu0 0.0
      %4815 = vmatpush1.msra.mxu0 0.0
      %4816 = vmatprep.subr.mxu0 0.0
      %4817 = vmatpush1.msra.mxu0 0.0
      %4818 = vmatprep.subr.mxu0 0.0
      %4819 = vmatpush1.msra.mxu0 0.0
      %4820 = vmatprep.subr.mxu0 0.0
      %4821 = vmatpush1.msra.mxu0 0.0
      %4822 = vmatprep.subr.mxu0 0.0
      %4823 = vmatpush1.msra.mxu0 0.0
      %4824 = vmatprep.subr.mxu0 0.0
      %4825 = vmatpush1.msra.mxu0 0.0
      %4826 = vmatprep.subr.mxu0 0.0
      %4827 = vmatpush1.msra.mxu0 0.0
      %4828 = vmatprep.subr.mxu0 0.0
      %4829 = vmatpush1.msra.mxu0 0.0
      %4830 = vmatprep.subr.mxu0 0.0
      %4831 = vmatpush1.msra.mxu0 0.0
      %4832 = vmatprep.subr.mxu0 0.0
      %4833 = vmatpush1.msra.mxu0 0.0
      %4834 = vmatprep.subr.mxu0 0.0
      %4835 = vmatpush1.msra.mxu0 0.0
      %4836 = vmatprep.subr.mxu0 0.0
      %4837 = vmatpush1.msra.mxu0 0.0
      %4838 = vmatprep.subr.mxu0 0.0
      %4839 = vmatpush1.msra.mxu0 0.0
      %4840 = vmatprep.subr.mxu0 0.0
      %4841 = vmatpush1.msra.mxu0 0.0
      %4842 = vmatprep.subr.mxu0 0.0
      %4843 = vmatpush1.msra.mxu0 0.0
      %4844 = vmatprep.subr.mxu0 0.0
      %4845 = vmatpush1.msra.mxu0 0.0
      %4846 = vmatprep.subr.mxu0 0.0
      %4847 = vmatpush1.msra.mxu0 0.0
      %4848 = vmatprep.subr.mxu0 0.0
      %4849 = vmatpush1.msra.mxu0 0.0
      %4850 = vmatprep.subr.mxu0 0.0
      %4851 = vmatpush1.msra.mxu0 0.0
      %4852 = vmatprep.subr.mxu0 0.0
      %4853 = vmatpush1.msra.mxu0 0.0
      %4854 = vmatprep.subr.mxu0 0.0
      %4855 = vmatpush1.msra.mxu0 0.0
      %4856 = vmatprep.subr.mxu0 0.0
      %4857 = vmatpush1.msra.mxu0 0.0
      %4858 = vmatprep.subr.mxu0 0.0
      %4859 = vmatpush1.msra.mxu0 0.0
      %4860 = vmatprep.subr.mxu0 0.0
      %4861 = vmatpush1.msra.mxu0 0.0
      %4862 = vmatprep.subr.mxu0 0.0
      %4863 = vmatpush1.msra.mxu0 0.0
      %4864 = vmatprep.subr.mxu0 0.0
      %4865 = vmatpush1.msra.mxu0 0.0
      %4866 = vmatprep.subr.mxu0 0.0
      %4867 = vmatpush1.msra.mxu0 0.0
      %4868 = vmatprep.subr.mxu0 0.0
      %4869 = vmatpush1.msra.mxu0 0.0
      %4870 = vmatprep.mubr.f32.mxu0 0.0
      %4871 = vmatmul.mubr.f32.gmra.mrb[0].mxu0 %v4756
      %v4872 = vpop.f32.mrb[0].mxu0
      %v4873 = vadd.f32 0.0, %v4872
      %v4874 = vpop.f32.mrb[0].mxu0
      %4875 = vmatprep.mubr.f32.mxu0 0.0
      %4876 = vmatmul.mubr.f32.gmra.mrb[0].mxu0 %v4759
      %v4877 = vpop.f32.mrb[0].mxu0
      %v4878 = vadd.f32 0.0, %v4877
      %v4879 = vpop.f32.mrb[0].mxu0
      %4880 = vmatprep.mubr.f32.mxu0 0.0
      %4881 = vmatmul.mubr.f32.gmra.mrb[0].mxu0 %v4762
      %v4882 = vpop.f32.mrb[0].mxu0
      %v4883 = vadd.f32 0.0, %v4882
      %v4884 = vpop.f32.mrb[0].mxu0
      %4885 = vmatprep.mubr.f32.mxu0 0.0
      %4886 = vmatmul.mubr.f32.gmra.mrb[0].mxu0 %v4765
      %v4887 = vpop.f32.mrb[0].mxu0
      %v4888 = vadd.f32 0.0, %v4887
      %v4889 = vpop.f32.mrb[0].mxu0
      %4890 = vmatprep.mubr.f32.mxu0 0.0
      %4891 = vmatmul.mubr.f32.gmra.mrb[0].mxu0 %v4768
      %v4892 = vpop.f32.mrb[0].mxu0
      %v4893 = vadd.f32 0.0, %v4892
      %v4894 = vpop.f32.mrb[0].mxu0
      %4895 = vmatprep.mubr.f32.mxu0 0.0
      %4896 = vmatmul.mubr.f32.gmra.mrb[0].mxu0 %v4771
      %v4897 = vpop.f32.mrb[0].mxu0
      %v4898 = vadd.f32 0.0, %v4897
      %v4899 = vpop.f32.mrb[0].mxu0
      %4900 = vmatprep.mubr.f32.mxu0 0.0
      %4901 = vmatmul.mubr.f32.gmra.mrb[0].mxu0 %v4774
      %v4902 = vpop.f32.mrb[0].mxu0
      %v4903 = vadd.f32 0.0, %v4902
      %v4904 = vpop.f32.mrb[0].mxu0
      %4905 = vmatprep.mubr.f32.mxu0 0.0
      %4906 = vmatmul.mubr.f32.gmra.mrb[0].mxu0 %v4777
      %v4907 = vpop.f32.mrb[0].mxu0
      %v4908 = vadd.f32 0.0, %v4907
      %v4909 = vpop.f32.mrb[0].mxu0
      %4910 = vmatprep.mubr.f32.mxu0 0.0
      %4911 = vmatmul.mubr.f32.gmra.mrb[0].mxu0 %v4780
      %v4912 = vpop.f32.mrb[0].mxu0
      %v4913 = vadd.f32 0.0, %v4912
      %v4914 = vpop.f32.mrb[0].mxu0
      %4915 = vmatprep.mubr.f32.mxu0 0.0
      %4916 = vmatmul.mubr.f32.gmra.mrb[0].mxu0 %v4783
      %v4917 = vpop.f32.mrb[0].mxu0
      %v4918 = vadd.f32 0.0, %v4917
      %v4919 = vpop.f32.mrb[0].mxu0
      %4920 = vmatprep.mubr.f32.mxu0 0.0
      %4921 = vmatmul.mubr.f32.gmra.mrb[0].mxu0 %v4786
      %v4922 = vpop.f32.mrb[0].mxu0
      %v4923 = vadd.f32 0.0, %v4922
      %v4924 = vpop.f32.mrb[0].mxu0
      %4925 = vmatprep.mubr.f32.mxu0 0.0
      %4926 = vmatmul.mubr.f32.gmra.mrb[0].mxu0 %v4789
      %v4927 = vpop.f32.mrb[0].mxu0
      %v4928 = vadd.f32 0.0, %v4927
      %v4929 = vpop.f32.mrb[0].mxu0
      %4930 = vmatprep.mubr.f32.mxu0 0.0
      %4931 = vmatmul.mubr.f32.gmra.mrb[0].mxu0 %v4792
      %v4932 = vpop.f32.mrb[0].mxu0
      %v4933 = vadd.f32 0.0, %v4932
      %v4934 = vpop.f32.mrb[0].mxu0
      %4935 = vmatprep.mubr.f32.mxu0 0.0
      %4936 = vmatmul.mubr.f32.gmra.mrb[0].mxu0 %v4795
      %v4937 = vpop.f32.mrb[0].mxu0
      %v4938 = vadd.f32 0.0, %v4937
      %v4939 = vpop.f32.mrb[0].mxu0
      %4940 = vmatprep.mubr.f32.mxu0 0.0
      %4941 = vmatmul.mubr.f32.gmra.mrb[0].mxu0 %v4798
      %v4942 = vpop.f32.mrb[0].mxu0
      %v4943 = vadd.f32 0.0, %v4942
      %v4944 = vpop.f32.mrb[0].mxu0
      %4945 = vmatprep.mubr.f32.mxu0 0.0
      %4946 = vmatmul.mubr.f32.gmra.mrb[0].mxu0 %v4801
      %v4947 = vpop.f32.mrb[0].mxu0
      %v4948 = vadd.f32 0.0, %v4947
      %v4949 = vpop.f32.mrb[0].mxu0
      %4950 = vdwg.mxu0
      %v4951 = vadd.f32 %v4739, %v4873
      %v4952 = vadd.f32 %v4740, %v4878
      %v4953 = vadd.f32 %v4741, %v4883
      %v4954 = vadd.f32 %v4742, %v4888
      %v4955 = vadd.f32 %v4743, %v4893
      %v4956 = vadd.f32 %v4744, %v4898
      %v4957 = vadd.f32 %v4745, %v4903
      %v4958 = vadd.f32 %v4746, %v4908
      %v4959 = vadd.f32 %v4747, %v4913
      %v4960 = vadd.f32 %v4748, %v4918
      %v4961 = vadd.f32 %v4749, %v4923
      %v4962 = vadd.f32 %v4750, %v4928
      %v4963 = vadd.f32 %v4751, %v4933
      %v4964 = vadd.f32 %v4752, %v4938
      %v4965 = vadd.f32 %v4753, %v4943
      %v4966 = vadd.f32 %v4754, %v4948
      %v4967 = vld [vmem:[%s8] sm:$0x1]
      %v4969 = vlaneseq
      %v4970 = vshrl.u32 %v4969, 7
      %v4971 = vsub.s32 0, %v4970
      %v4972 = vrot.slane %v4967, %v4971
      %v4974 = vadd.f32 %v4951, %v4972
      %v4975 = vadd.f32 %v4952, %v4972
      %v4976 = vadd.f32 %v4953, %v4972
      %v4977 = vadd.f32 %v4954, %v4972
      %v4978 = vadd.f32 %v4955, %v4972
      %v4979 = vadd.f32 %v4956, %v4972
      %v4980 = vadd.f32 %v4957, %v4972
      %v4981 = vadd.f32 %v4958, %v4972
      %v4982 = vadd.f32 %v4959, %v4972
      %v4983 = vadd.f32 %v4960, %v4972
      %v4984 = vadd.f32 %v4961, %v4972
      %v4985 = vadd.f32 %v4962, %v4972
      %v4986 = vadd.f32 %v4963, %v4972
      %v4987 = vadd.f32 %v4964, %v4972
      %v4988 = vadd.f32 %v4965, %v4972
      %v4989 = vadd.f32 %v4966, %v4972
      %vm4990 = vcmask 64512
      %v4991 = vsel %vm4990, %v4974, 0.0
      %v4992 = vsel %vm4990, %v4975, 0.0
      %v4993 = vadd.f32 %v4991, %v4992
      %v4994 = vsel %vm4990, %v4976, 0.0
      %v4995 = vadd.f32 %v4993, %v4994
      %v4996 = vsel %vm4990, %v4977, 0.0
      %v4997 = vadd.f32 %v4995, %v4996
      %v4998 = vsel %vm4990, %v4978, 0.0
      %v4999 = vadd.f32 %v4997, %v4998
      %v5000 = vsel %vm4990, %v4979, 0.0
      %v5001 = vadd.f32 %v4999, %v5000
      %v5002 = vsel %vm4990, %v4980, 0.0
      %v5003 = vadd.f32 %v5001, %v5002
      %v5004 = vsel %vm4990, %v4981, 0.0
      %v5005 = vadd.f32 %v5003, %v5004
      %v5006 = vsel %vm4990, %v4982, 0.0
      %v5007 = vadd.f32 %v5005, %v5006
      %v5008 = vsel %vm4990, %v4983, 0.0
      %v5009 = vadd.f32 %v5007, %v5008
      %v5010 = vsel %vm4990, %v4984, 0.0
      %v5011 = vadd.f32 %v5009, %v5010
      %v5012 = vsel %vm4990, %v4985, 0.0
      %v5013 = vadd.f32 %v5011, %v5012
      %v5014 = vsel %vm4990, %v4986, 0.0
      %v5015 = vadd.f32 %v5013, %v5014
      %v5016 = vsel %vm4990, %v4987, 0.0
      %v5017 = vadd.f32 %v5015, %v5016
      %v5018 = vsel %vm4990, %v4988, 0.0
      %v5019 = vadd.f32 %v5017, %v5018
      %v5020 = vsel %vm4990, %v4989, 0.0
      %v5021 = vadd.f32 %v5019, %v5020
      %v5022 = vrot.slane %v5021, 4
      %v5023 = vadd.f32 %v5021, %v5022
      %v5024 = vrot.slane %v5023, 2
      %v5025 = vadd.f32 %v5023, %v5024
      %v5026 = vrot.slane %v5025, 1
      %v5027 = vadd.f32 %v5025, %v5026
      %vm5028 = vcmask 57344
      %5029 = vst.msk [vmem:[%s711] sm:$0x1] %vm5028, %v5027
      %v5030 = vmul.f32 %v4974, %v4974
      %v5031 = vmul.f32 %v4975, %v4975
      %v5032 = vmul.f32 %v4976, %v4976
      %v5033 = vmul.f32 %v4977, %v4977
      %v5034 = vmul.f32 %v4978, %v4978
      %v5035 = vmul.f32 %v4979, %v4979
      %v5036 = vmul.f32 %v4980, %v4980
      %v5037 = vmul.f32 %v4981, %v4981
      %v5038 = vmul.f32 %v4982, %v4982
      %v5039 = vmul.f32 %v4983, %v4983
      %v5040 = vmul.f32 %v4984, %v4984
      %v5041 = vmul.f32 %v4985, %v4985
      %v5042 = vmul.f32 %v4986, %v4986
      %v5043 = vmul.f32 %v4987, %v4987
      %v5044 = vmul.f32 %v4988, %v4988
      %v5045 = vmul.f32 %v4989, %v4989
      %v5046 = vsel %vm4990, %v5030, 0.0
      %v5047 = vsel %vm4990, %v5031, 0.0
      %v5048 = vadd.f32 %v5046, %v5047
      %v5049 = vsel %vm4990, %v5032, 0.0
      %v5050 = vadd.f32 %v5048, %v5049
      %v5051 = vsel %vm4990, %v5033, 0.0
      %v5052 = vadd.f32 %v5050, %v5051
      %v5053 = vsel %vm4990, %v5034, 0.0
      %v5054 = vadd.f32 %v5052, %v5053
      %v5055 = vsel %vm4990, %v5035, 0.0
      %v5056 = vadd.f32 %v5054, %v5055
      %v5057 = vsel %vm4990, %v5036, 0.0
      %v5058 = vadd.f32 %v5056, %v5057
      %v5059 = vsel %vm4990, %v5037, 0.0
      %v5060 = vadd.f32 %v5058, %v5059
      %v5061 = vsel %vm4990, %v5038, 0.0
      %v5062 = vadd.f32 %v5060, %v5061
      %v5063 = vsel %vm4990, %v5039, 0.0
      %v5064 = vadd.f32 %v5062, %v5063
      %v5065 = vsel %vm4990, %v5040, 0.0
      %v5066 = vadd.f32 %v5064, %v5065
      %v5067 = vsel %vm4990, %v5041, 0.0
      %v5068 = vadd.f32 %v5066, %v5067
      %v5069 = vsel %vm4990, %v5042, 0.0
      %v5070 = vadd.f32 %v5068, %v5069
      %v5071 = vsel %vm4990, %v5043, 0.0
      %v5072 = vadd.f32 %v5070, %v5071
      %v5073 = vsel %vm4990, %v5044, 0.0
      %v5074 = vadd.f32 %v5072, %v5073
      %v5075 = vsel %vm4990, %v5045, 0.0
      %v5076 = vadd.f32 %v5074, %v5075
      %v5077 = vrot.slane %v5076, 4
      %v5078 = vadd.f32 %v5076, %v5077
      %v5079 = vrot.slane %v5078, 2
      %v5080 = vadd.f32 %v5078, %v5079
      %v5081 = vrot.slane %v5080, 1
      %v5082 = vadd.f32 %v5080, %v5081
      %5083 = vst.msk [vmem:[%s711 + $0x1] sm:$0x1] %vm5028, %v5082
      %5084 = vst.msk [vmem:[%s702] sm:$0xff] %vm4990, %v4974
      %5085 = vst.msk [vmem:[%s702 + $0x8] sm:$0xff] %vm4990, %v4975
      %5086 = vst.msk [vmem:[%s702 + $0x10] sm:$0xff] %vm4990, %v4976
      %5087 = vst.msk [vmem:[%s702 + $0x18] sm:$0xff] %vm4990, %v4977
      %5088 = vst.msk [vmem:[%s702 + $0x20] sm:$0xff] %vm4990, %v4978
      %5089 = vst.msk [vmem:[%s702 + $0x28] sm:$0xff] %vm4990, %v4979
      %5090 = vst.msk [vmem:[%s702 + $0x30] sm:$0xff] %vm4990, %v4980
      %5091 = vst.msk [vmem:[%s702 + $0x38] sm:$0xff] %vm4990, %v4981
      %5092 = vst.msk [vmem:[%s702 + $0x40] sm:$0xff] %vm4990, %v4982
      %5093 = vst.msk [vmem:[%s702 + $0x48] sm:$0xff] %vm4990, %v4983
      %5094 = vst.msk [vmem:[%s702 + $0x50] sm:$0xff] %vm4990, %v4984
      %5095 = vst.msk [vmem:[%s702 + $0x58] sm:$0xff] %vm4990, %v4985
      %5096 = vst.msk [vmem:[%s702 + $0x60] sm:$0xff] %vm4990, %v4986
      %5097 = vst.msk [vmem:[%s702 + $0x68] sm:$0xff] %vm4990, %v4987
      %5098 = vst.msk [vmem:[%s702 + $0x70] sm:$0xff] %vm4990, %v4988
      %5099 = vst.msk [vmem:[%s702 + $0x78] sm:$0xff] %vm4990, %v4989
      %s5100 = smul.u32 8, %s27
      %p5101 = scmp.lt.s32.totalorder %s26, 1
      %s5102 = scalar_select %p5101, %s26, 1
      %p5103 = scmp.lt.s32.totalorder %s5100, 15
      %s5104 = scalar_select %p5103, %s5100, 15
      %s5105 = smul.addr %s5104, 2
      %s5106 = smul.addr %s5102, 32
      %s5107 = sadd.s32 %s5105, %s5106
      %s5108 = smul.addr %s5107, 8
      %s5109 = scalar_lea.vmem %s9, %s5108
      %p5110 = scmp.lt.s32.totalorder %s26, 1
      %s5111 = scalar_select %p5110, %s26, 1
      %p5112 = scmp.lt.s32.totalorder %s27, 1
      %s5113 = scalar_select %p5112, %s27, 1
      %s5114 = smul.addr %s5111, 2
      %s5115 = sadd.s32 %s5113, %s5114
      %s5116 = smul.addr %s5115, 2
      %s5117 = scalar_lea.vmem %s10, %s5116
      // Predicated region
      $region57: #{up_forward.5} parent=55 // pred_check
        %p5118 = pneg %p317
      $region58: #{up_forward.5} parent=55 // pred_check_branch
        %5120 = sbr.rel (%p5118) target = $region60
      $region59: #{up_forward.5} parent=55 // pred_region
        %s5121 = smul.u32 8, %s27
      $region60: #{up_forward.5} parent=55 // pred_fallthru
        _
      // Predicated region
      $region61: #{up_forward.5} parent=55 // pred_check
        %p5122 = pneg %p345
      $region62: #{up_forward.5} parent=55 // pred_check_branch
        %5124 = sbr.rel (%p5122) target = $region64
      $region63: #{up_forward.5} parent=55 // pred_region
        _
      $region64: #{up_forward.5} parent=55 // pred_fallthru
        _
    $region56: #{up_forward.5} parent=5 // pred_fallthru
      _
    %p5125 = scmp.le.s32.totalorder 2, %s17
    // Predicated region
    $region65: #{up_forward.5} parent=5 // pred_check
      %p5126 = pneg %p5125
    $region66: #{up_forward.5} parent=5 // pred_check_branch
      %5128 = sbr.rel (%p5126) target = $region68
    $region67: #{up_forward.5} parent=5 // pred_region
      %s5129 = ssub.s32 %s17, 2
      // Predicated region
      $region69: #{up_forward.5} parent=67 // pred_check
        %p5130 = pneg %p323
      $region70: #{up_forward.5} parent=67 // pred_check_branch
        %5132 = sbr.rel (%p5130) target = $region72
      $region71: #{up_forward.5} parent=67 // pred_region
        %s5133 = smul.u32 8, %s29
        %p5134 = scmp.lt.s32.totalorder %s28, 1
        %s5135 = scalar_select %p5134, %s28, 1
        %p5136 = scmp.lt.s32.totalorder %s5133, 15
        %s5137 = scalar_select %p5136, %s5133, 15
        %s5138 = smul.addr %s5137, 2
        %s5139 = smul.addr %s5135, 32
        %s5140 = sadd.s32 %s5138, %s5139
        %s5141 = smul.addr %s5140, 8
        %s5142 = scalar_lea.vmem %s9, %s5141
      $region72: #{up_forward.5} parent=67 // pred_fallthru
        _
      // Predicated region
      $region73: #{up_forward.5} parent=67 // pred_check
        %p5143 = pneg %p351
      $region74: #{up_forward.5} parent=67 // pred_check_branch
        %5145 = sbr.rel (%p5143) target = $region76
      $region75: #{up_forward.5} parent=67 // pred_region
        %p5146 = scmp.lt.s32.totalorder %s28, 1
        %s5147 = scalar_select %p5146, %s28, 1
        %p5148 = scmp.lt.s32.totalorder %s29, 1
        %s5149 = scalar_select %p5148, %s29, 1
        %s5150 = smul.addr %s5147, 2
        %s5151 = sadd.s32 %s5149, %s5150
        %s5152 = smul.addr %s5151, 2
        %s5153 = scalar_lea.vmem %s10, %s5152
      $region76: #{up_forward.5} parent=67 // pred_fallthru
        _
    $region68: #{up_forward.5} parent=5 // pred_fallthru
      _
  $region6: #{up_forward.5} parent=0 // loop_footer
    %s21 = sadd.s32 1, %s17
  $region7: #{up_forward.5} parent=0 // loop_footer_branch
    %16 = sbr.rel target = $region3
  $region8: #{up_forward.5} parent=0 // loop_exit
    _

</llo_original>
